<compile_context>
chip_gen: v7x
topology: tpu7x:2x2x1
jax: 0.10.0
libtpu: 0.0.40
codegen_flags: <defaults>
</compile_context>

<pallas_src>
import functools

import jax
import jax.numpy as jnp
from jax import lax
from jax.experimental import pallas as pl
from jax.experimental.pallas import tpu as pltpu


def _basic_block_kernel(x_ref, w1_ref, t1_ref, w2_ref, t2_ref, out_ref,
                        xpad_s, mid_s, *, H, W):
    """Fused BasicBlock forward for one image (one grid step).

    x_ref  : (1, H, W, Cin)      input image (unpadded, NHWC)
    w1_ref : (9, Cin, Cmid)      conv1 weights (tap-major) with BN1 scale folded
    t1_ref : (1, Cmid)           BN1 shift
    w2_ref : (9, Cmid, Cout)     conv2 weights with BN2 scale folded
    t2_ref : (1, Cout)           BN2 shift
    out_ref: (1, H, W, Cout)     output image
    xpad_s : (H+2, W+2, Cin)     VMEM scratch: zero-padded input
    mid_s  : (H+2, W+2, Cmid)    VMEM scratch: zero-padded conv1 activation
    """
    Hp, Wp = H + 2, W + 2
    Cin = x_ref.shape[3]
    Cmid = w1_ref.shape[2]
    Cout = w2_ref.shape[2]

    x_val = x_ref[0]                                     # (H, W, Cin)

    # Build the zero-padded input directly in VMEM (no jnp.pad / HBM pass).
    xpad_s[...] = jnp.zeros_like(xpad_s)
    xpad_s[1:H + 1, 1:W + 1, :] = x_val.astype(xpad_s.dtype)

    def conv3x3(src_ref, w_ref, c_out):
        """3x3 / stride-1 / pad-1 conv over the padded VMEM block `src_ref`.

        Returns an (H*W, c_out) f32 accumulator.  Each tap is one MXU matmul
        with M = H*W rows.  The (Hp, W, c) -> (Hp*W, c) reshape is a free
        relabel when W % 8 == 0, and the per-ky row slices start at multiples
        of W (sublane-aligned for W % 8 == 0).
        """
        src = src_ref[...]                               # (Hp, Wp, c_in)
        c_in = src.shape[-1]
        acc = jnp.zeros((H * W, c_out), jnp.float32)
        for kx in range(3):
            cols = src[:, kx:kx + W, :].reshape(Hp * W, c_in)
            for ky in range(3):
                lhs = cols[ky * W:(ky + H) * W, :]       # (H*W, c_in)
                acc = acc + jnp.dot(lhs, w_ref[ky * 3 + kx],
                                    preferred_element_type=jnp.float32)
        return acc

    # conv1 (+ folded BN1 scale) + shift + ReLU; stays in VMEM.
    mid = conv3x3(xpad_s, w1_ref, Cmid) + t1_ref[...]
    mid = jnp.maximum(mid, 0.0)
    mid_s[...] = jnp.zeros_like(mid_s)
    mid_s[1:H + 1, 1:W + 1, :] = mid.reshape(H, W, Cmid)

    # conv2 (+ folded BN2 scale) + shift + residual + ReLU.
    out = conv3x3(mid_s, w2_ref, Cout) + t2_ref[...]
    out = out + x_val.reshape(H * W, Cin).astype(jnp.float32)   # identity path
    out = jnp.maximum(out, 0.0)
    out_ref[0] = out.reshape(H, W, Cout).astype(out_ref.dtype)


def basic_block_forward_nhwc(x_nhwc, params):
    """Fused BasicBlock forward (stride=1, no downsample, no SE), NHWC in/out."""
    B, H, W, Cin = x_nhwc.shape
    Cmid = params["w1"].shape[2]
    Cout = params["w2"].shape[2]
    assert Cin == Cout, "identity residual requires inplanes == planes"

    kernel = functools.partial(_basic_block_kernel, H=H, W=W)

    return pl.pallas_call(
        kernel,
        out_shape=jax.ShapeDtypeStruct((B, H, W, Cout), x_nhwc.dtype),
        grid=(B,),
        in_specs=[
            pl.BlockSpec((1, H, W, Cin), lambda b: (b, 0, 0, 0)),
            pl.BlockSpec((9, Cin, Cmid), lambda b: (0, 0, 0)),
            pl.BlockSpec((1, Cmid), lambda b: (0, 0)),
            pl.BlockSpec((9, Cmid, Cout), lambda b: (0, 0, 0)),
            pl.BlockSpec((1, Cout), lambda b: (0, 0)),
        ],
        out_specs=pl.BlockSpec((1, H, W, Cout), lambda b: (b, 0, 0, 0)),
        scratch_shapes=[
            pltpu.VMEM((H + 2, W + 2, Cin), jnp.float32),
            pltpu.VMEM((H + 2, W + 2, Cmid), jnp.float32),
        ],
        # No cross-step accumulation: every grid step owns a distinct output
        # block, so the batch axis can be sharded across TensorCores (v7x).
        # TODO(synk): for large layers, raise vmem_limit_bytes and tile rows /
        # Cout instead of whole-image blocks.
        compiler_params=pltpu.CompilerParams(
            dimension_semantics=("parallel",)),
    )(x_nhwc, params["w1"], params["t1"], params["w2"], params["t2"])


def basic_block_forward(x_nchw, params):
    """NCHW wrapper matching the PyTorch module interface."""
    x = jnp.transpose(x_nchw, (0, 2, 3, 1))              # -> NHWC
    y = basic_block_forward_nhwc(x, params)
    return jnp.transpose(y, (0, 3, 1, 2))                # -> NCHW


def fold_bn(gamma, beta, mean, var, eps=1e-5):
    """Eval-mode BN folding: y = x * scale + shift."""
    scale = gamma / jnp.sqrt(var + eps)
    shift = beta - mean * scale
    return scale, shift


def fold_bn_into_conv(w_hwio, scale, shift):
    """Fold BN scale into HWIO conv weights; returns (9, Cin, Cout) weights + shift."""
    kh, kw, cin, cout = w_hwio.shape
    w_folded = (w_hwio * scale).reshape(kh * kw, cin, cout)
    return w_folded, shift.reshape(1, cout)


# ---------------------------------------------------------------------------
# Pure-JAX reference for correctness checking (unfolded conv + BN + ReLU).
# ---------------------------------------------------------------------------
def _ref_forward(x_nchw, w1_hwio, s1, t1, w2_hwio, s2, t2):
    x = jnp.transpose(x_nchw, (0, 2, 3, 1))
    dn = ("NHWC", "HWIO", "NHWC")
    y = lax.conv_general_dilated(x, w1_hwio, (1, 1), "SAME", dimension_numbers=dn)
    y = jnp.maximum(y * s1.reshape(1, 1, 1, -1) + t1.reshape(1, 1, 1, -1), 0.0)
    y = lax.conv_general_dilated(y, w2_hwio, (1, 1), "SAME", dimension_numbers=dn)
    y = y * s2.reshape(1, 1, 1, -1) + t2.reshape(1, 1, 1, -1)
    y = jnp.maximum(y + x, 0.0)
    return jnp.transpose(y, (0, 3, 1, 2))


if __name__ == "__main__":
    B, C, H, W = 2, 4, 16, 16          # inplanes = planes = 4, stride = 1
    key = jax.random.PRNGKey(0)
    keys = jax.random.split(key, 12)

    x = jax.random.normal(keys[0], (B, C, H, W), jnp.float32)

    # conv weights, PyTorch OIHW -> HWIO
    w1_oihw = 0.2 * jax.random.normal(keys[1], (C, C, 3, 3), jnp.float32)
    w2_oihw = 0.2 * jax.random.normal(keys[2], (C, C, 3, 3), jnp.float32)
    w1_hwio = jnp.transpose(w1_oihw, (2, 3, 1, 0))
    w2_hwio = jnp.transpose(w2_oihw, (2, 3, 1, 0))

    # BatchNorm parameters / running stats (eval-mode folding)
    g1 = 1.0 + 0.1 * jax.random.normal(keys[3], (C,), jnp.float32)
    b1 = 0.1 * jax.random.normal(keys[4], (C,), jnp.float32)
    m1 = 0.1 * jax.random.normal(keys[5], (C,), jnp.float32)
    v1 = jax.random.uniform(keys[6], (C,), jnp.float32, 0.5, 1.5)
    g2 = 1.0 + 0.1 * jax.random.normal(keys[7], (C,), jnp.float32)
    b2 = 0.1 * jax.random.normal(keys[8], (C,), jnp.float32)
    m2 = 0.1 * jax.random.normal(keys[9], (C,), jnp.float32)
    v2 = jax.random.uniform(keys[10], (C,), jnp.float32, 0.5, 1.5)

    s1, t1 = fold_bn(g1, b1, m1, v1)
    s2, t2 = fold_bn(g2, b2, m2, v2)

    w1_f, t1_f = fold_bn_into_conv(w1_hwio, s1, t1)
    w2_f, t2_f = fold_bn_into_conv(w2_hwio, s2, t2)

    params = {"w1": w1_f, "t1": t1_f, "w2": w2_f, "t2": t2_f}

    out = jax.jit(basic_block_forward)(x, params)
    out = jax.block_until_ready(out)

    ref = _ref_forward(x, w1_hwio, s1, t1, w2_hwio, s2, t2)
    assert out.shape == (B, C, H, W)
    assert jnp.allclose(out, ref, atol=1e-4, rtol=1e-4), \
        float(jnp.max(jnp.abs(out - ref)))

    print("KERNEL_OK")
</pallas_src>

<mosaic_0001>
module attributes {stable_mosaic.version = 11 : i64} {
  func.func @_basic_block_kernel(%arg0: i32, %arg1: memref<1x16x16x4xf32, #tpu.memory_space<vmem>>, %arg2: memref<9x4x4xf32, #tpu.memory_space<vmem>>, %arg3: memref<1x4xf32, #tpu.memory_space<vmem>>, %arg4: memref<9x4x4xf32, #tpu.memory_space<vmem>>, %arg5: memref<1x4xf32, #tpu.memory_space<vmem>>, %arg6: memref<1x16x16x4xf32, #tpu.memory_space<vmem>>, %arg7: memref<18x18x4xf32, #tpu.memory_space<vmem>>, %arg8: memref<18x18x4xf32, #tpu.memory_space<vmem>>) attributes {dimension_semantics = [#tpu.dimension_semantics<parallel>], iteration_bounds = array<i64: 2>, scalar_prefetch = 0 : i64, scratch_operands = 2 : i64, tpu.core_type = #tpu.core_type<tc>, window_params = [{transform_indices = @transform_0, window_bounds = array<i64: 1, 16, 16, 4>}, {pipeline_mode = #tpu.pipeline_mode<synchronous>, transform_indices = @transform_1, window_bounds = array<i64: 9, 4, 4>}, {pipeline_mode = #tpu.pipeline_mode<synchronous>, transform_indices = @transform_2, window_bounds = array<i64: 1, 4>}, {pipeline_mode = #tpu.pipeline_mode<synchronous>, transform_indices = @transform_3, window_bounds = array<i64: 9, 4, 4>}, {pipeline_mode = #tpu.pipeline_mode<synchronous>, transform_indices = @transform_4, window_bounds = array<i64: 1, 4>}, {transform_indices = @transform_5, window_bounds = array<i64: 1, 16, 16, 4>}]} {
    %c0 = arith.constant 0 : index
    %c0_0 = arith.constant 0 : index
    %c0_1 = arith.constant 0 : index
    %c0_2 = arith.constant 0 : index
    %0 = vector.load %arg1[%c0, %c0_0, %c0_1, %c0_2] : memref<1x16x16x4xf32, #tpu.memory_space<vmem>>, vector<1x16x16x4xf32>
    %1 = vector.shape_cast %0 : vector<1x16x16x4xf32> to vector<16x16x4xf32>
    %cst = arith.constant 0.000000e+00 : f32
    %2 = vector.broadcast %cst : f32 to vector<18x18x4xf32>
    %c0_3 = arith.constant 0 : index
    %c0_4 = arith.constant 0 : index
    %c0_5 = arith.constant 0 : index
    %3 = vector.load %arg7[%c0_3, %c0_4, %c0_5] : memref<18x18x4xf32, #tpu.memory_space<vmem>>, vector<18x18x4xf32>
    tpu.vector_store %arg7[%c0_3, %c0_4, %c0_5], %2 {strides = array<i32>} : memref<18x18x4xf32, #tpu.memory_space<vmem>>, vector<18x18x4xf32>,
    %c1 = arith.constant 1 : index
    %c1_6 = arith.constant 1 : index
    %c0_7 = arith.constant 0 : index
    %4 = vector.load %arg7[%c1, %c1_6, %c0_7] : memref<18x18x4xf32, #tpu.memory_space<vmem>>, vector<16x16x4xf32>
    tpu.vector_store %arg7[%c1, %c1_6, %c0_7], %1 {strides = array<i32>} : memref<18x18x4xf32, #tpu.memory_space<vmem>>, vector<16x16x4xf32>,
    %c0_8 = arith.constant 0 : index
    %c0_9 = arith.constant 0 : index
    %c0_10 = arith.constant 0 : index
    %5 = vector.load %arg7[%c0_8, %c0_9, %c0_10] : memref<18x18x4xf32, #tpu.memory_space<vmem>>, vector<18x18x4xf32>
    %cst_11 = arith.constant 0.000000e+00 : f32
    %6 = vector.broadcast %cst_11 : f32 to vector<256x4xf32>
    %7 = vector.extract_strided_slice %5 {offsets = [0, 0, 0], sizes = [18, 16, 4], strides = [1, 1, 1]} : vector<18x18x4xf32> to vector<18x16x4xf32>
    %8 = vector.shape_cast %7 : vector<18x16x4xf32> to vector<288x4xf32>
    %9 = vector.extract_strided_slice %8 {offsets = [0, 0], sizes = [256, 4], strides = [1, 1]} : vector<288x4xf32> to vector<256x4xf32>
    %c0_12 = arith.constant 0 : index
    %c0_13 = arith.constant 0 : index
    %c0_14 = arith.constant 0 : index
    %10 = vector.load %arg2[%c0_12, %c0_13, %c0_14] : memref<9x4x4xf32, #tpu.memory_space<vmem>>, vector<1x4x4xf32>
    %11 = vector.shape_cast %10 : vector<1x4x4xf32> to vector<4x4xf32>
    %cst_15 = arith.constant dense<0.000000e+00> : vector<256x4xf32>
    %12 = tpu.matmul %9, %11, %cst_15 {dimension_numbers = #tpu.dot_dimension_numbers<[1], [0], [0], [1], [0, 0, 1, 1], [], []>} : vector<256x4xf32>, vector<4x4xf32>, vector<256x4xf32> -> vector<256x4xf32>
    %13 = arith.addf %6, %12 : vector<256x4xf32>
    %14 = vector.extract_strided_slice %8 {offsets = [16, 0], sizes = [256, 4], strides = [1, 1]} : vector<288x4xf32> to vector<256x4xf32>
    %c3 = arith.constant 3 : index
    %c0_16 = arith.constant 0 : index
    %c0_17 = arith.constant 0 : index
    %15 = vector.load %arg2[%c3, %c0_16, %c0_17] : memref<9x4x4xf32, #tpu.memory_space<vmem>>, vector<1x4x4xf32>
    %16 = vector.shape_cast %15 : vector<1x4x4xf32> to vector<4x4xf32>
    %cst_18 = arith.constant dense<0.000000e+00> : vector<256x4xf32>
    %17 = tpu.matmul %14, %16, %cst_18 {dimension_numbers = #tpu.dot_dimension_numbers<[1], [0], [0], [1], [0, 0, 1, 1], [], []>} : vector<256x4xf32>, vector<4x4xf32>, vector<256x4xf32> -> vector<256x4xf32>
    %18 = arith.addf %13, %17 : vector<256x4xf32>
    %19 = vector.extract_strided_slice %8 {offsets = [32, 0], sizes = [256, 4], strides = [1, 1]} : vector<288x4xf32> to vector<256x4xf32>
    %c6 = arith.constant 6 : index
    %c0_19 = arith.constant 0 : index
    %c0_20 = arith.constant 0 : index
    %20 = vector.load %arg2[%c6, %c0_19, %c0_20] : memref<9x4x4xf32, #tpu.memory_space<vmem>>, vector<1x4x4xf32>
    %21 = vector.shape_cast %20 : vector<1x4x4xf32> to vector<4x4xf32>
    %cst_21 = arith.constant dense<0.000000e+00> : vector<256x4xf32>
    %22 = tpu.matmul %19, %21, %cst_21 {dimension_numbers = #tpu.dot_dimension_numbers<[1], [0], [0], [1], [0, 0, 1, 1], [], []>} : vector<256x4xf32>, vector<4x4xf32>, vector<256x4xf32> -> vector<256x4xf32>
    %23 = arith.addf %18, %22 : vector<256x4xf32>
    %24 = vector.extract_strided_slice %5 {offsets = [0, 1, 0], sizes = [18, 16, 4], strides = [1, 1, 1]} : vector<18x18x4xf32> to vector<18x16x4xf32>
    %25 = vector.shape_cast %24 : vector<18x16x4xf32> to vector<288x4xf32>
    %26 = vector.extract_strided_slice %25 {offsets = [0, 0], sizes = [256, 4], strides = [1, 1]} : vector<288x4xf32> to vector<256x4xf32>
    %c1_22 = arith.constant 1 : index
    %c0_23 = arith.constant 0 : index
    %c0_24 = arith.constant 0 : index
    %27 = vector.load %arg2[%c1_22, %c0_23, %c0_24] : memref<9x4x4xf32, #tpu.memory_space<vmem>>, vector<1x4x4xf32>
    %28 = vector.shape_cast %27 : vector<1x4x4xf32> to vector<4x4xf32>
    %cst_25 = arith.constant dense<0.000000e+00> : vector<256x4xf32>
    %29 = tpu.matmul %26, %28, %cst_25 {dimension_numbers = #tpu.dot_dimension_numbers<[1], [0], [0], [1], [0, 0, 1, 1], [], []>} : vector<256x4xf32>, vector<4x4xf32>, vector<256x4xf32> -> vector<256x4xf32>
    %30 = arith.addf %23, %29 : vector<256x4xf32>
    %31 = vector.extract_strided_slice %25 {offsets = [16, 0], sizes = [256, 4], strides = [1, 1]} : vector<288x4xf32> to vector<256x4xf32>
    %c4 = arith.constant 4 : index
    %c0_26 = arith.constant 0 : index
    %c0_27 = arith.constant 0 : index
    %32 = vector.load %arg2[%c4, %c0_26, %c0_27] : memref<9x4x4xf32, #tpu.memory_space<vmem>>, vector<1x4x4xf32>
    %33 = vector.shape_cast %32 : vector<1x4x4xf32> to vector<4x4xf32>
    %cst_28 = arith.constant dense<0.000000e+00> : vector<256x4xf32>
    %34 = tpu.matmul %31, %33, %cst_28 {dimension_numbers = #tpu.dot_dimension_numbers<[1], [0], [0], [1], [0, 0, 1, 1], [], []>} : vector<256x4xf32>, vector<4x4xf32>, vector<256x4xf32> -> vector<256x4xf32>
    %35 = arith.addf %30, %34 : vector<256x4xf32>
    %36 = vector.extract_strided_slice %25 {offsets = [32, 0], sizes = [256, 4], strides = [1, 1]} : vector<288x4xf32> to vector<256x4xf32>
    %c7 = arith.constant 7 : index
    %c0_29 = arith.constant 0 : index
    %c0_30 = arith.constant 0 : index
    %37 = vector.load %arg2[%c7, %c0_29, %c0_30] : memref<9x4x4xf32, #tpu.memory_space<vmem>>, vector<1x4x4xf32>
    %38 = vector.shape_cast %37 : vector<1x4x4xf32> to vector<4x4xf32>
    %cst_31 = arith.constant dense<0.000000e+00> : vector<256x4xf32>
    %39 = tpu.matmul %36, %38, %cst_31 {dimension_numbers = #tpu.dot_dimension_numbers<[1], [0], [0], [1], [0, 0, 1, 1], [], []>} : vector<256x4xf32>, vector<4x4xf32>, vector<256x4xf32> -> vector<256x4xf32>
    %40 = arith.addf %35, %39 : vector<256x4xf32>
    %41 = vector.extract_strided_slice %5 {offsets = [0, 2, 0], sizes = [18, 16, 4], strides = [1, 1, 1]} : vector<18x18x4xf32> to vector<18x16x4xf32>
    %42 = vector.shape_cast %41 : vector<18x16x4xf32> to vector<288x4xf32>
    %43 = vector.extract_strided_slice %42 {offsets = [0, 0], sizes = [256, 4], strides = [1, 1]} : vector<288x4xf32> to vector<256x4xf32>
    %c2 = arith.constant 2 : index
    %c0_32 = arith.constant 0 : index
    %c0_33 = arith.constant 0 : index
    %44 = vector.load %arg2[%c2, %c0_32, %c0_33] : memref<9x4x4xf32, #tpu.memory_space<vmem>>, vector<1x4x4xf32>
    %45 = vector.shape_cast %44 : vector<1x4x4xf32> to vector<4x4xf32>
    %cst_34 = arith.constant dense<0.000000e+00> : vector<256x4xf32>
    %46 = tpu.matmul %43, %45, %cst_34 {dimension_numbers = #tpu.dot_dimension_numbers<[1], [0], [0], [1], [0, 0, 1, 1], [], []>} : vector<256x4xf32>, vector<4x4xf32>, vector<256x4xf32> -> vector<256x4xf32>
    %47 = arith.addf %40, %46 : vector<256x4xf32>
    %48 = vector.extract_strided_slice %42 {offsets = [16, 0], sizes = [256, 4], strides = [1, 1]} : vector<288x4xf32> to vector<256x4xf32>
    %c5 = arith.constant 5 : index
    %c0_35 = arith.constant 0 : index
    %c0_36 = arith.constant 0 : index
    %49 = vector.load %arg2[%c5, %c0_35, %c0_36] : memref<9x4x4xf32, #tpu.memory_space<vmem>>, vector<1x4x4xf32>
    %50 = vector.shape_cast %49 : vector<1x4x4xf32> to vector<4x4xf32>
    %cst_37 = arith.constant dense<0.000000e+00> : vector<256x4xf32>
    %51 = tpu.matmul %48, %50, %cst_37 {dimension_numbers = #tpu.dot_dimension_numbers<[1], [0], [0], [1], [0, 0, 1, 1], [], []>} : vector<256x4xf32>, vector<4x4xf32>, vector<256x4xf32> -> vector<256x4xf32>
    %52 = arith.addf %47, %51 : vector<256x4xf32>
    %53 = vector.extract_strided_slice %42 {offsets = [32, 0], sizes = [256, 4], strides = [1, 1]} : vector<288x4xf32> to vector<256x4xf32>
    %c8 = arith.constant 8 : index
    %c0_38 = arith.constant 0 : index
    %c0_39 = arith.constant 0 : index
    %54 = vector.load %arg2[%c8, %c0_38, %c0_39] : memref<9x4x4xf32, #tpu.memory_space<vmem>>, vector<1x4x4xf32>
    %55 = vector.shape_cast %54 : vector<1x4x4xf32> to vector<4x4xf32>
    %cst_40 = arith.constant dense<0.000000e+00> : vector<256x4xf32>
    %56 = tpu.matmul %53, %55, %cst_40 {dimension_numbers = #tpu.dot_dimension_numbers<[1], [0], [0], [1], [0, 0, 1, 1], [], []>} : vector<256x4xf32>, vector<4x4xf32>, vector<256x4xf32> -> vector<256x4xf32>
    %57 = arith.addf %52, %56 : vector<256x4xf32>
    %c0_41 = arith.constant 0 : index
    %c0_42 = arith.constant 0 : index
    %58 = vector.load %arg3[%c0_41, %c0_42] : memref<1x4xf32, #tpu.memory_space<vmem>>, vector<1x4xf32>
    %59 = vector.broadcast %58 : vector<1x4xf32> to vector<256x4xf32>
    %60 = arith.addf %57, %59 : vector<256x4xf32>
    %cst_43 = arith.constant 0.000000e+00 : f32
    %61 = vector.broadcast %cst_43 : f32 to vector<256x4xf32>
    %62 = arith.maximumf %60, %61 : vector<256x4xf32>
    %cst_44 = arith.constant 0.000000e+00 : f32
    %63 = vector.broadcast %cst_44 : f32 to vector<18x18x4xf32>
    %c0_45 = arith.constant 0 : index
    %c0_46 = arith.constant 0 : index
    %c0_47 = arith.constant 0 : index
    %64 = vector.load %arg8[%c0_45, %c0_46, %c0_47] : memref<18x18x4xf32, #tpu.memory_space<vmem>>, vector<18x18x4xf32>
    tpu.vector_store %arg8[%c0_45, %c0_46, %c0_47], %63 {strides = array<i32>} : memref<18x18x4xf32, #tpu.memory_space<vmem>>, vector<18x18x4xf32>,
    %65 = vector.shape_cast %62 : vector<256x4xf32> to vector<16x16x4xf32>
    %c1_48 = arith.constant 1 : index
    %c1_49 = arith.constant 1 : index
    %c0_50 = arith.constant 0 : index
    %66 = vector.load %arg8[%c1_48, %c1_49, %c0_50] : memref<18x18x4xf32, #tpu.memory_space<vmem>>, vector<16x16x4xf32>
    tpu.vector_store %arg8[%c1_48, %c1_49, %c0_50], %65 {strides = array<i32>} : memref<18x18x4xf32, #tpu.memory_space<vmem>>, vector<16x16x4xf32>,
    %c0_51 = arith.constant 0 : index
    %c0_52 = arith.constant 0 : index
    %c0_53 = arith.constant 0 : index
    %67 = vector.load %arg8[%c0_51, %c0_52, %c0_53] : memref<18x18x4xf32, #tpu.memory_space<vmem>>, vector<18x18x4xf32>
    %cst_54 = arith.constant 0.000000e+00 : f32
    %68 = vector.broadcast %cst_54 : f32 to vector<256x4xf32>
    %69 = vector.extract_strided_slice %67 {offsets = [0, 0, 0], sizes = [18, 16, 4], strides = [1, 1, 1]} : vector<18x18x4xf32> to vector<18x16x4xf32>
    %70 = vector.shape_cast %69 : vector<18x16x4xf32> to vector<288x4xf32>
    %71 = vector.extract_strided_slice %70 {offsets = [0, 0], sizes = [256, 4], strides = [1, 1]} : vector<288x4xf32> to vector<256x4xf32>
    %c0_55 = arith.constant 0 : index
    %c0_56 = arith.constant 0 : index
    %c0_57 = arith.constant 0 : index
    %72 = vector.load %arg4[%c0_55, %c0_56, %c0_57] : memref<9x4x4xf32, #tpu.memory_space<vmem>>, vector<1x4x4xf32>
    %73 = vector.shape_cast %72 : vector<1x4x4xf32> to vector<4x4xf32>
    %cst_58 = arith.constant dense<0.000000e+00> : vector<256x4xf32>
    %74 = tpu.matmul %71, %73, %cst_58 {dimension_numbers = #tpu.dot_dimension_numbers<[1], [0], [0], [1], [0, 0, 1, 1], [], []>} : vector<256x4xf32>, vector<4x4xf32>, vector<256x4xf32> -> vector<256x4xf32>
    %75 = arith.addf %68, %74 : vector<256x4xf32>
    %76 = vector.extract_strided_slice %70 {offsets = [16, 0], sizes = [256, 4], strides = [1, 1]} : vector<288x4xf32> to vector<256x4xf32>
    %c3_59 = arith.constant 3 : index
    %c0_60 = arith.constant 0 : index
    %c0_61 = arith.constant 0 : index
    %77 = vector.load %arg4[%c3_59, %c0_60, %c0_61] : memref<9x4x4xf32, #tpu.memory_space<vmem>>, vector<1x4x4xf32>
    %78 = vector.shape_cast %77 : vector<1x4x4xf32> to vector<4x4xf32>
    %cst_62 = arith.constant dense<0.000000e+00> : vector<256x4xf32>
    %79 = tpu.matmul %76, %78, %cst_62 {dimension_numbers = #tpu.dot_dimension_numbers<[1], [0], [0], [1], [0, 0, 1, 1], [], []>} : vector<256x4xf32>, vector<4x4xf32>, vector<256x4xf32> -> vector<256x4xf32>
    %80 = arith.addf %75, %79 : vector<256x4xf32>
    %81 = vector.extract_strided_slice %70 {offsets = [32, 0], sizes = [256, 4], strides = [1, 1]} : vector<288x4xf32> to vector<256x4xf32>
    %c6_63 = arith.constant 6 : index
    %c0_64 = arith.constant 0 : index
    %c0_65 = arith.constant 0 : index
    %82 = vector.load %arg4[%c6_63, %c0_64, %c0_65] : memref<9x4x4xf32, #tpu.memory_space<vmem>>, vector<1x4x4xf32>
    %83 = vector.shape_cast %82 : vector<1x4x4xf32> to vector<4x4xf32>
    %cst_66 = arith.constant dense<0.000000e+00> : vector<256x4xf32>
    %84 = tpu.matmul %81, %83, %cst_66 {dimension_numbers = #tpu.dot_dimension_numbers<[1], [0], [0], [1], [0, 0, 1, 1], [], []>} : vector<256x4xf32>, vector<4x4xf32>, vector<256x4xf32> -> vector<256x4xf32>
    %85 = arith.addf %80, %84 : vector<256x4xf32>
    %86 = vector.extract_strided_slice %67 {offsets = [0, 1, 0], sizes = [18, 16, 4], strides = [1, 1, 1]} : vector<18x18x4xf32> to vector<18x16x4xf32>
    %87 = vector.shape_cast %86 : vector<18x16x4xf32> to vector<288x4xf32>
    %88 = vector.extract_strided_slice %87 {offsets = [0, 0], sizes = [256, 4], strides = [1, 1]} : vector<288x4xf32> to vector<256x4xf32>
    %c1_67 = arith.constant 1 : index
    %c0_68 = arith.constant 0 : index
    %c0_69 = arith.constant 0 : index
    %89 = vector.load %arg4[%c1_67, %c0_68, %c0_69] : memref<9x4x4xf32, #tpu.memory_space<vmem>>, vector<1x4x4xf32>
    %90 = vector.shape_cast %89 : vector<1x4x4xf32> to vector<4x4xf32>
    %cst_70 = arith.constant dense<0.000000e+00> : vector<256x4xf32>
    %91 = tpu.matmul %88, %90, %cst_70 {dimension_numbers = #tpu.dot_dimension_numbers<[1], [0], [0], [1], [0, 0, 1, 1], [], []>} : vector<256x4xf32>, vector<4x4xf32>, vector<256x4xf32> -> vector<256x4xf32>
    %92 = arith.addf %85, %91 : vector<256x4xf32>
    %93 = vector.extract_strided_slice %87 {offsets = [16, 0], sizes = [256, 4], strides = [1, 1]} : vector<288x4xf32> to vector<256x4xf32>
    %c4_71 = arith.constant 4 : index
    %c0_72 = arith.constant 0 : index
    %c0_73 = arith.constant 0 : index
    %94 = vector.load %arg4[%c4_71, %c0_72, %c0_73] : memref<9x4x4xf32, #tpu.memory_space<vmem>>, vector<1x4x4xf32>
    %95 = vector.shape_cast %94 : vector<1x4x4xf32> to vector<4x4xf32>
    %cst_74 = arith.constant dense<0.000000e+00> : vector<256x4xf32>
    %96 = tpu.matmul %93, %95, %cst_74 {dimension_numbers = #tpu.dot_dimension_numbers<[1], [0], [0], [1], [0, 0, 1, 1], [], []>} : vector<256x4xf32>, vector<4x4xf32>, vector<256x4xf32> -> vector<256x4xf32>
    %97 = arith.addf %92, %96 : vector<256x4xf32>
    %98 = vector.extract_strided_slice %87 {offsets = [32, 0], sizes = [256, 4], strides = [1, 1]} : vector<288x4xf32> to vector<256x4xf32>
    %c7_75 = arith.constant 7 : index
    %c0_76 = arith.constant 0 : index
    %c0_77 = arith.constant 0 : index
    %99 = vector.load %arg4[%c7_75, %c0_76, %c0_77] : memref<9x4x4xf32, #tpu.memory_space<vmem>>, vector<1x4x4xf32>
    %100 = vector.shape_cast %99 : vector<1x4x4xf32> to vector<4x4xf32>
    %cst_78 = arith.constant dense<0.000000e+00> : vector<256x4xf32>
    %101 = tpu.matmul %98, %100, %cst_78 {dimension_numbers = #tpu.dot_dimension_numbers<[1], [0], [0], [1], [0, 0, 1, 1], [], []>} : vector<256x4xf32>, vector<4x4xf32>, vector<256x4xf32> -> vector<256x4xf32>
    %102 = arith.addf %97, %101 : vector<256x4xf32>
    %103 = vector.extract_strided_slice %67 {offsets = [0, 2, 0], sizes = [18, 16, 4], strides = [1, 1, 1]} : vector<18x18x4xf32> to vector<18x16x4xf32>
    %104 = vector.shape_cast %103 : vector<18x16x4xf32> to vector<288x4xf32>
    %105 = vector.extract_strided_slice %104 {offsets = [0, 0], sizes = [256, 4], strides = [1, 1]} : vector<288x4xf32> to vector<256x4xf32>
    %c2_79 = arith.constant 2 : index
    %c0_80 = arith.constant 0 : index
    %c0_81 = arith.constant 0 : index
    %106 = vector.load %arg4[%c2_79, %c0_80, %c0_81] : memref<9x4x4xf32, #tpu.memory_space<vmem>>, vector<1x4x4xf32>
    %107 = vector.shape_cast %106 : vector<1x4x4xf32> to vector<4x4xf32>
    %cst_82 = arith.constant dense<0.000000e+00> : vector<256x4xf32>
    %108 = tpu.matmul %105, %107, %cst_82 {dimension_numbers = #tpu.dot_dimension_numbers<[1], [0], [0], [1], [0, 0, 1, 1], [], []>} : vector<256x4xf32>, vector<4x4xf32>, vector<256x4xf32> -> vector<256x4xf32>
    %109 = arith.addf %102, %108 : vector<256x4xf32>
    %110 = vector.extract_strided_slice %104 {offsets = [16, 0], sizes = [256, 4], strides = [1, 1]} : vector<288x4xf32> to vector<256x4xf32>
    %c5_83 = arith.constant 5 : index
    %c0_84 = arith.constant 0 : index
    %c0_85 = arith.constant 0 : index
    %111 = vector.load %arg4[%c5_83, %c0_84, %c0_85] : memref<9x4x4xf32, #tpu.memory_space<vmem>>, vector<1x4x4xf32>
    %112 = vector.shape_cast %111 : vector<1x4x4xf32> to vector<4x4xf32>
    %cst_86 = arith.constant dense<0.000000e+00> : vector<256x4xf32>
    %113 = tpu.matmul %110, %112, %cst_86 {dimension_numbers = #tpu.dot_dimension_numbers<[1], [0], [0], [1], [0, 0, 1, 1], [], []>} : vector<256x4xf32>, vector<4x4xf32>, vector<256x4xf32> -> vector<256x4xf32>
    %114 = arith.addf %109, %113 : vector<256x4xf32>
    %115 = vector.extract_strided_slice %104 {offsets = [32, 0], sizes = [256, 4], strides = [1, 1]} : vector<288x4xf32> to vector<256x4xf32>
    %c8_87 = arith.constant 8 : index
    %c0_88 = arith.constant 0 : index
    %c0_89 = arith.constant 0 : index
    %116 = vector.load %arg4[%c8_87, %c0_88, %c0_89] : memref<9x4x4xf32, #tpu.memory_space<vmem>>, vector<1x4x4xf32>
    %117 = vector.shape_cast %116 : vector<1x4x4xf32> to vector<4x4xf32>
    %cst_90 = arith.constant dense<0.000000e+00> : vector<256x4xf32>
    %118 = tpu.matmul %115, %117, %cst_90 {dimension_numbers = #tpu.dot_dimension_numbers<[1], [0], [0], [1], [0, 0, 1, 1], [], []>} : vector<256x4xf32>, vector<4x4xf32>, vector<256x4xf32> -> vector<256x4xf32>
    %119 = arith.addf %114, %118 : vector<256x4xf32>
    %c0_91 = arith.constant 0 : index
    %c0_92 = arith.constant 0 : index
    %120 = vector.load %arg5[%c0_91, %c0_92] : memref<1x4xf32, #tpu.memory_space<vmem>>, vector<1x4xf32>
    %121 = vector.broadcast %120 : vector<1x4xf32> to vector<256x4xf32>
    %122 = arith.addf %119, %121 : vector<256x4xf32>
    %123 = vector.shape_cast %1 : vector<16x16x4xf32> to vector<256x4xf32>
    %124 = arith.addf %122, %123 : vector<256x4xf32>
    %cst_93 = arith.constant 0.000000e+00 : f32
    %125 = vector.broadcast %cst_93 : f32 to vector<256x4xf32>
    %126 = arith.maximumf %124, %125 : vector<256x4xf32>
    %127 = vector.shape_cast %126 : vector<256x4xf32> to vector<16x16x4xf32>
    %c0_94 = arith.constant 0 : index
    %c0_95 = arith.constant 0 : index
    %c0_96 = arith.constant 0 : index
    %c0_97 = arith.constant 0 : index
    %128 = vector.load %arg6[%c0_94, %c0_95, %c0_96, %c0_97] : memref<1x16x16x4xf32, #tpu.memory_space<vmem>>, vector<1x16x16x4xf32>
    %129 = vector.shape_cast %128 : vector<1x16x16x4xf32> to vector<16x16x4xf32>
    %130 = vector.shape_cast %127 : vector<16x16x4xf32> to vector<1x16x16x4xf32>
    tpu.vector_store %arg6[%c0_94, %c0_95, %c0_96, %c0_97], %130 {strides = array<i32>} : memref<1x16x16x4xf32, #tpu.memory_space<vmem>>, vector<1x16x16x4xf32>,
    return
  }
  func.func @transform_0(%arg0: i32) -> (i32, i32, i32, i32) {
    %c0_i32 = arith.constant 0 : i32
    %c0_i32_0 = arith.constant 0 : i32
    %c0_i32_1 = arith.constant 0 : i32
    %c0_i32_2 = arith.constant 0 : i32
    return %arg0, %c0_i32, %c0_i32_0, %c0_i32_1 : i32, i32, i32, i32
  }
  func.func @transform_1(%arg0: i32) -> (i32, i32, i32) {
    %c0_i32 = arith.constant 0 : i32
    %c0_i32_0 = arith.constant 0 : i32
    %c0_i32_1 = arith.constant 0 : i32
    %c0_i32_2 = arith.constant 0 : i32
    return %c0_i32, %c0_i32_0, %c0_i32_1 : i32, i32, i32
  }
  func.func @transform_2(%arg0: i32) -> (i32, i32) {
    %c0_i32 = arith.constant 0 : i32
    %c0_i32_0 = arith.constant 0 : i32
    %c0_i32_1 = arith.constant 0 : i32
    return %c0_i32, %c0_i32_0 : i32, i32
  }
  func.func @transform_3(%arg0: i32) -> (i32, i32, i32) {
    %c0_i32 = arith.constant 0 : i32
    %c0_i32_0 = arith.constant 0 : i32
    %c0_i32_1 = arith.constant 0 : i32
    %c0_i32_2 = arith.constant 0 : i32
    return %c0_i32, %c0_i32_0, %c0_i32_1 : i32, i32, i32
  }
  func.func @transform_4(%arg0: i32) -> (i32, i32) {
    %c0_i32 = arith.constant 0 : i32
    %c0_i32_0 = arith.constant 0 : i32
    %c0_i32_1 = arith.constant 0 : i32
    return %c0_i32, %c0_i32_0 : i32, i32
  }
  func.func @transform_5(%arg0: i32) -> (i32, i32, i32, i32) {
    %c0_i32 = arith.constant 0 : i32
    %c0_i32_0 = arith.constant 0 : i32
    %c0_i32_1 = arith.constant 0 : i32
    %c0_i32_2 = arith.constant 0 : i32
    return %arg0, %c0_i32, %c0_i32_0, %c0_i32_1 : i32, i32, i32, i32
  }
}

</mosaic_0001>

<llo_original>
// kernel: basic_block_forward.1
$region0: #{basic_block_forward.1}
  #allocation0 [shape = 'u32[]', space=smem, size = 0x4, offset = 0x4, fixed_abs, tag = 'smem constant byte address 0x4 - core index']
  #allocation1 [shape = 'u32[144,128]{1,0:T(1,128)}', space=vmem, size = 0x12000, scoped, tag = 'internal scratch']
  #allocation2 [shape = 'f32[18,18,4]{2,1,0:T(8,128)}', space=vmem, size = 0x36000, scoped, tag = 'scratch operand']
  #allocation3 [shape = 'f32[18,18,4]{2,1,0:T(8,128)}', space=vmem, size = 0x36000, scoped, tag = 'scratch operand']
  %s0 = inlined_call_operand.vmem [shape: f32[2,16,16,4], index: 0, kind: input, shape index: {}]
  %s1 = inlined_call_operand.vmem [shape: f32[9,4,4], index: 1, kind: input, shape index: {}]
  %s2 = inlined_call_operand.vmem [shape: f32[1,4], index: 2, kind: input, shape index: {}]
  %s3 = inlined_call_operand.vmem [shape: f32[9,4,4], index: 3, kind: input, shape index: {}]
  %s4 = inlined_call_operand.vmem [shape: f32[1,4], index: 4, kind: input, shape index: {}]
  %s5 = inlined_call_operand.vmem [shape: f32[2,16,16,4], index: 5, kind: output, shape index: {}]
  %s6 = sld [smem:[#allocation0]]
  $region53: #{basic_block_forward.1} parent=0
    _
  %s8 = ssub.s32 1, %s6
  %s9 = scalar_select 0, %s8, %s6
  loop: start=0, step=1, limit=4
  $region2: #{basic_block_forward.1} parent=0 // loop_pre_header
    _
  $region3: #{basic_block_forward.1} parent=0 // loop_header
    %s11 = sphi 0, %s15
    %p12 = scmp.ge.s32.totalorder %s11, 4
    %s21 = sphi 0, %s23
    %s24 = sphi 0, %s21
    %s25 = sphi 0, %s24
    %s41 = sphi 0, %s25
    %s45 = sphi 0, %s45
    %s47 = sphi 0, %s45
    %s48 = sphi 0, %s47
    %s62 = sphi 0, %s48
    %s66 = sphi 0, %s66
    %s68 = sphi 0, %s66
    %s69 = sphi 0, %s68
    %s83 = sphi 0, %s69
    %s87 = sphi 0, %s87
    %s89 = sphi 0, %s87
    %s90 = sphi 0, %s89
    %s104 = sphi 0, %s90
    %s108 = sphi 0, %s108
    %s110 = sphi 0, %s108
    %s111 = sphi 0, %s110
    %s125 = sphi 0, %s111
    %s131 = sphi 0, %s133
    %s134 = sphi 0, %s131
    %s135 = sphi 0, %s134
    %s151 = sphi 0, %s135
  $region4: #{basic_block_forward.1} parent=0 // loop_header_branch
    %14 = sbr.rel (%p12) target = $region8
  $region5: #{basic_block_forward.1} parent=0 // loop_body
    %s16 = ssub.s32 %s11, 1
    %s17 = ssub.s32 %s11, 2
    %s18 = sadd.s32 %s11, 1
    %s19 = ssub.s32 %s11, %s18
    %p20 = scmp.eq.s32.totalorder %s19, 0
    %s22 = sadd.s32 %s21, 1
    %s23 = scalar_select %p20, %s21, %s22
    %p26 = pneg %p20
    %p27 = scmp.eq.s32.totalorder %s11, 1
    %p28 = por %p26, %p27
    %p29 = scmp.ne.s32.totalorder %s21, %s24
    %p30 = scmp.eq.s32.totalorder %s11, 0
    %p31 = por %p29, %p30
    %p32 = scmp.ne.s32.totalorder %s21, %s24
    %p33 = scmp.eq.s32.totalorder %s16, 1
    %p34 = por %p32, %p33
    %p35 = scmp.ne.s32.totalorder %s24, %s25
    %p36 = scmp.eq.s32.totalorder %s16, 0
    %p37 = por %p35, %p36
    %p38 = scmp.ne.s32.totalorder %s24, %s25
    %p39 = scmp.eq.s32.totalorder %s17, 1
    %p40 = por %p38, %p39
    %p42 = scmp.ne.s32.totalorder %s25, %s41
    %p43 = scmp.eq.s32.totalorder %s17, 0
    %p44 = por %p42, %p43
    %s46 = sadd.s32 %s45, 1
    %p49 = scmp.eq.s32.totalorder %s11, 1
    %p50 = scmp.ne.s32.totalorder %s45, %s47
    %p51 = scmp.eq.s32.totalorder %s11, 0
    %p52 = por %p50, %p51
    %p53 = scmp.ne.s32.totalorder %s45, %s47
    %p54 = scmp.eq.s32.totalorder %s16, 1
    %p55 = por %p53, %p54
    %p56 = scmp.ne.s32.totalorder %s47, %s48
    %p57 = scmp.eq.s32.totalorder %s16, 0
    %p58 = por %p56, %p57
    %p59 = scmp.ne.s32.totalorder %s47, %s48
    %p60 = scmp.eq.s32.totalorder %s17, 1
    %p61 = por %p59, %p60
    %p63 = scmp.ne.s32.totalorder %s48, %s62
    %p64 = scmp.eq.s32.totalorder %s17, 0
    %p65 = por %p63, %p64
    %s67 = sadd.s32 %s66, 1
    %p70 = scmp.eq.s32.totalorder %s11, 1
    %p71 = scmp.ne.s32.totalorder %s66, %s68
    %p72 = scmp.eq.s32.totalorder %s11, 0
    %p73 = por %p71, %p72
    %p74 = scmp.ne.s32.totalorder %s66, %s68
    %p75 = scmp.eq.s32.totalorder %s16, 1
    %p76 = por %p74, %p75
    %p77 = scmp.ne.s32.totalorder %s68, %s69
    %p78 = scmp.eq.s32.totalorder %s16, 0
    %p79 = por %p77, %p78
    %p80 = scmp.ne.s32.totalorder %s68, %s69
    %p81 = scmp.eq.s32.totalorder %s17, 1
    %p82 = por %p80, %p81
    %p84 = scmp.ne.s32.totalorder %s69, %s83
    %p85 = scmp.eq.s32.totalorder %s17, 0
    %p86 = por %p84, %p85
    %s88 = sadd.s32 %s87, 1
    %p91 = scmp.eq.s32.totalorder %s11, 1
    %p92 = scmp.ne.s32.totalorder %s87, %s89
    %p93 = scmp.eq.s32.totalorder %s11, 0
    %p94 = por %p92, %p93
    %p95 = scmp.ne.s32.totalorder %s87, %s89
    %p96 = scmp.eq.s32.totalorder %s16, 1
    %p97 = por %p95, %p96
    %p98 = scmp.ne.s32.totalorder %s89, %s90
    %p99 = scmp.eq.s32.totalorder %s16, 0
    %p100 = por %p98, %p99
    %p101 = scmp.ne.s32.totalorder %s89, %s90
    %p102 = scmp.eq.s32.totalorder %s17, 1
    %p103 = por %p101, %p102
    %p105 = scmp.ne.s32.totalorder %s90, %s104
    %p106 = scmp.eq.s32.totalorder %s17, 0
    %p107 = por %p105, %p106
    %s109 = sadd.s32 %s108, 1
    %p112 = scmp.eq.s32.totalorder %s11, 1
    %p113 = scmp.ne.s32.totalorder %s108, %s110
    %p114 = scmp.eq.s32.totalorder %s11, 0
    %p115 = por %p113, %p114
    %p116 = scmp.ne.s32.totalorder %s108, %s110
    %p117 = scmp.eq.s32.totalorder %s16, 1
    %p118 = por %p116, %p117
    %p119 = scmp.ne.s32.totalorder %s110, %s111
    %p120 = scmp.eq.s32.totalorder %s16, 0
    %p121 = por %p119, %p120
    %p122 = scmp.ne.s32.totalorder %s110, %s111
    %p123 = scmp.eq.s32.totalorder %s17, 1
    %p124 = por %p122, %p123
    %p126 = scmp.ne.s32.totalorder %s111, %s125
    %p127 = scmp.eq.s32.totalorder %s17, 0
    %p128 = por %p126, %p127
    %s129 = ssub.s32 %s11, %s18
    %p130 = scmp.eq.s32.totalorder %s129, 0
    %s132 = sadd.s32 %s131, 1
    %s133 = scalar_select %p130, %s131, %s132
    %p136 = pneg %p130
    %p137 = scmp.eq.s32.totalorder %s11, 1
    %p138 = por %p136, %p137
    %p139 = scmp.ne.s32.totalorder %s131, %s134
    %p140 = scmp.eq.s32.totalorder %s11, 0
    %p141 = por %p139, %p140
    %p142 = scmp.ne.s32.totalorder %s131, %s134
    %p143 = scmp.eq.s32.totalorder %s16, 1
    %p144 = por %p142, %p143
    %p145 = scmp.ne.s32.totalorder %s134, %s135
    %p146 = scmp.eq.s32.totalorder %s16, 0
    %p147 = por %p145, %p146
    %p148 = scmp.ne.s32.totalorder %s134, %s135
    %p149 = scmp.eq.s32.totalorder %s17, 1
    %p150 = por %p148, %p149
    %p152 = scmp.ne.s32.totalorder %s135, %s151
    %p153 = scmp.eq.s32.totalorder %s17, 0
    %p154 = por %p152, %p153
    %p155 = scmp.le.s32.totalorder 1, %s11
    %p156 = scmp.lt.s32.totalorder %s11, 3
    %p157 = pnand %p155, %p156
    %p158 = pneg %p157
    // Predicated region
    $region9: #{basic_block_forward.1} parent=5 // pred_check
      _
    $region10: #{basic_block_forward.1} parent=5 // pred_check_branch
      %160 = sbr.rel (%p157) target = $region12
    $region11: #{basic_block_forward.1} parent=5 // pred_region
      %s161 = ssub.s32 %s11, 1
      // Predicated region
      $region13: #{basic_block_forward.1} parent=11 // pred_check
        %p162 = pneg %p58
      $region14: #{basic_block_forward.1} parent=11 // pred_check_branch
        %164 = sbr.rel (%p162) target = $region16
      $region15: #{basic_block_forward.1} parent=11 // pred_region
        _
      $region16: #{basic_block_forward.1} parent=11 // pred_fallthru
        _
      // Predicated region
      $region17: #{basic_block_forward.1} parent=11 // pred_check
        %p165 = pneg %p79
      $region18: #{basic_block_forward.1} parent=11 // pred_check_branch
        %167 = sbr.rel (%p165) target = $region20
      $region19: #{basic_block_forward.1} parent=11 // pred_region
        _
      $region20: #{basic_block_forward.1} parent=11 // pred_fallthru
        _
      // Predicated region
      $region21: #{basic_block_forward.1} parent=11 // pred_check
        %p168 = pneg %p100
      $region22: #{basic_block_forward.1} parent=11 // pred_check_branch
        %170 = sbr.rel (%p168) target = $region24
      $region23: #{basic_block_forward.1} parent=11 // pred_region
        _
      $region24: #{basic_block_forward.1} parent=11 // pred_fallthru
        _
      // Predicated region
      $region25: #{basic_block_forward.1} parent=11 // pred_check
        %p171 = pneg %p121
      $region26: #{basic_block_forward.1} parent=11 // pred_check_branch
        %173 = sbr.rel (%p171) target = $region28
      $region27: #{basic_block_forward.1} parent=11 // pred_region
        _
      $region28: #{basic_block_forward.1} parent=11 // pred_fallthru
        _
    $region12: #{basic_block_forward.1} parent=5 // pred_fallthru
      _
    %p174 = scmp.lt.s32.totalorder %s11, 2
    // Predicated region
    $region29: #{basic_block_forward.1} parent=5 // pred_check
      %p175 = pneg %p174
    $region30: #{basic_block_forward.1} parent=5 // pred_check_branch
      %177 = sbr.rel (%p175) target = $region32
    $region31: #{basic_block_forward.1} parent=5 // pred_region
      // Predicated region
      $region33: #{basic_block_forward.1} parent=31 // pred_check
        %p178 = pneg %p31
      $region34: #{basic_block_forward.1} parent=31 // pred_check_branch
        %180 = sbr.rel (%p178) target = $region36
      $region35: #{basic_block_forward.1} parent=31 // pred_region
        %p181 = scmp.lt.s32.totalorder %s11, 1
        %s182 = scalar_select %p181, %s11, 1
        %s183 = smul.addr %s182, 32
        %s184 = smul.addr %s183, 8
        %s185 = scalar_lea.vmem %s0, %s184
      $region36: #{basic_block_forward.1} parent=31 // pred_fallthru
        _
    $region32: #{basic_block_forward.1} parent=5 // pred_fallthru
      _
    %p186 = scmp.le.s32.totalorder 1, %s11
    %p187 = scmp.lt.s32.totalorder %s11, 3
    %p188 = pnand %p186, %p187
    %p189 = pneg %p188
    // Predicated region
    $region37: #{basic_block_forward.1} parent=5 // pred_check
      _
    $region38: #{basic_block_forward.1} parent=5 // pred_check_branch
      %191 = sbr.rel (%p188) target = $region40
    $region39: #{basic_block_forward.1} parent=5 // pred_region
      %s192 = ssub.s32 %s11, 1
      %p193 = scmp.lt.s32.totalorder %s16, 1
      %s194 = scalar_select %p193, %s16, 1
      %s195 = smul.addr %s194, 32
      %s196 = smul.addr %s195, 8
      %s197 = scalar_lea.vmem %s0, %s196
      %p198 = pneg %p37
      %p199 = pneg %p34
      %p200 = pneg %p58
      %p201 = pneg %p55
      %p202 = pneg %p79
      %p203 = pneg %p76
      %p204 = pneg %p100
      %p205 = pneg %p97
      %p206 = pneg %p121
      %p207 = pneg %p118
      %p208 = pneg %p147
      %p209 = pneg %p144
      %p210 = scmp.lt.s32.totalorder %s16, 1
      %s211 = scalar_select %p210, %s16, 1
      %s212 = smul.addr %s211, 32
      %s213 = smul.addr %s212, 8
      %s214 = scalar_lea.vmem %s5, %s213
      %p215 = scmp.lt.s32.totalorder %s16, 1
      %s216 = scalar_select %p215, %s16, 1
      %s217 = smul.addr %s216, 32
      %s218 = smul.addr %s217, 8
      %s219 = scalar_lea.vmem %s0, %s218
      %p220 = scmp.lt.s32.totalorder %s16, 1
      %s221 = scalar_select %p220, %s16, 1
      %s222 = smul.addr %s221, 32
      %s223 = smul.addr %s222, 8
      %s224 = scalar_lea.vmem %s5, %s223
      %v225 = vld [vmem:[%s219] sm:$0xff]
      %v226 = vld [vmem:[%s219 + $0x8] sm:$0xff]
      %v227 = vld [vmem:[%s219 + $0x10] sm:$0xff]
      %v228 = vld [vmem:[%s219 + $0x18] sm:$0xff]
      %v229 = vld [vmem:[%s219 + $0x20] sm:$0xff]
      %v230 = vld [vmem:[%s219 + $0x28] sm:$0xff]
      %v231 = vld [vmem:[%s219 + $0x30] sm:$0xff]
      %v232 = vld [vmem:[%s219 + $0x38] sm:$0xff]
      %v233 = vld [vmem:[%s219 + $0x40] sm:$0xff]
      %v234 = vld [vmem:[%s219 + $0x48] sm:$0xff]
      %v235 = vld [vmem:[%s219 + $0x50] sm:$0xff]
      %v236 = vld [vmem:[%s219 + $0x58] sm:$0xff]
      %v237 = vld [vmem:[%s219 + $0x60] sm:$0xff]
      %v238 = vld [vmem:[%s219 + $0x68] sm:$0xff]
      %v239 = vld [vmem:[%s219 + $0x70] sm:$0xff]
      %v240 = vld [vmem:[%s219 + $0x78] sm:$0xff]
      %v241 = vld [vmem:[%s219 + $0x80] sm:$0xff]
      %v242 = vld [vmem:[%s219 + $0x88] sm:$0xff]
      %v243 = vld [vmem:[%s219 + $0x90] sm:$0xff]
      %v244 = vld [vmem:[%s219 + $0x98] sm:$0xff]
      %v245 = vld [vmem:[%s219 + $0xa0] sm:$0xff]
      %v246 = vld [vmem:[%s219 + $0xa8] sm:$0xff]
      %v247 = vld [vmem:[%s219 + $0xb0] sm:$0xff]
      %v248 = vld [vmem:[%s219 + $0xb8] sm:$0xff]
      %v249 = vld [vmem:[%s219 + $0xc0] sm:$0xff]
      %v250 = vld [vmem:[%s219 + $0xc8] sm:$0xff]
      %v251 = vld [vmem:[%s219 + $0xd0] sm:$0xff]
      %v252 = vld [vmem:[%s219 + $0xd8] sm:$0xff]
      %v253 = vld [vmem:[%s219 + $0xe0] sm:$0xff]
      %v254 = vld [vmem:[%s219 + $0xe8] sm:$0xff]
      %v255 = vld [vmem:[%s219 + $0xf0] sm:$0xff]
      %v256 = vld [vmem:[%s219 + $0xf8] sm:$0xff]
      %vm257 = vcmask 31744
      %258 = vst.msk [vmem:[#allocation2] sm:$0xff] %vm257, 0.0
      %259 = vst.msk [vmem:[#allocation2 + $0x8] sm:$0xff] %vm257, 0.0
      %vm260 = vcmask 25600
      %261 = vst.msk [vmem:[#allocation2 + $0x10] sm:$0x3] %vm260, 0.0
      %262 = vst.msk [vmem:[#allocation2 + $0x18] sm:$0xff] %vm257, 0.0
      %263 = vst.msk [vmem:[#allocation2 + $0x20] sm:$0xff] %vm257, 0.0
      %264 = vst.msk [vmem:[#allocation2 + $0x28] sm:$0x3] %vm260, 0.0
      %265 = vst.msk [vmem:[#allocation2 + $0x30] sm:$0xff] %vm257, 0.0
      %266 = vst.msk [vmem:[#allocation2 + $0x38] sm:$0xff] %vm257, 0.0
      %267 = vst.msk [vmem:[#allocation2 + $0x40] sm:$0x3] %vm260, 0.0
      %268 = vst.msk [vmem:[#allocation2 + $0x48] sm:$0xff] %vm257, 0.0
      %269 = vst.msk [vmem:[#allocation2 + $0x50] sm:$0xff] %vm257, 0.0
      %270 = vst.msk [vmem:[#allocation2 + $0x58] sm:$0x3] %vm260, 0.0
      %271 = vst.msk [vmem:[#allocation2 + $0x60] sm:$0xff] %vm257, 0.0
      %272 = vst.msk [vmem:[#allocation2 + $0x68] sm:$0xff] %vm257, 0.0
      %273 = vst.msk [vmem:[#allocation2 + $0x70] sm:$0x3] %vm260, 0.0
      %274 = vst.msk [vmem:[#allocation2 + $0x78] sm:$0xff] %vm257, 0.0
      %275 = vst.msk [vmem:[#allocation2 + $0x80] sm:$0xff] %vm257, 0.0
      %276 = vst.msk [vmem:[#allocation2 + $0x88] sm:$0x3] %vm260, 0.0
      %277 = vst.msk [vmem:[#allocation2 + $0x90] sm:$0xff] %vm257, 0.0
      %278 = vst.msk [vmem:[#allocation2 + $0x98] sm:$0xff] %vm257, 0.0
      %279 = vst.msk [vmem:[#allocation2 + $0xa0] sm:$0x3] %vm260, 0.0
      %280 = vst.msk [vmem:[#allocation2 + $0xa8] sm:$0xff] %vm257, 0.0
      %281 = vst.msk [vmem:[#allocation2 + $0xb0] sm:$0xff] %vm257, 0.0
      %282 = vst.msk [vmem:[#allocation2 + $0xb8] sm:$0x3] %vm260, 0.0
      %283 = vst.msk [vmem:[#allocation2 + $0xc0] sm:$0xff] %vm257, 0.0
      %284 = vst.msk [vmem:[#allocation2 + $0xc8] sm:$0xff] %vm257, 0.0
      %285 = vst.msk [vmem:[#allocation2 + $0xd0] sm:$0x3] %vm260, 0.0
      %286 = vst.msk [vmem:[#allocation2 + $0xd8] sm:$0xff] %vm257, 0.0
      %287 = vst.msk [vmem:[#allocation2 + $0xe0] sm:$0xff] %vm257, 0.0
      %288 = vst.msk [vmem:[#allocation2 + $0xe8] sm:$0x3] %vm260, 0.0
      %289 = vst.msk [vmem:[#allocation2 + $0xf0] sm:$0xff] %vm257, 0.0
      %290 = vst.msk [vmem:[#allocation2 + $0xf8] sm:$0xff] %vm257, 0.0
      %291 = vst.msk [vmem:[#allocation2 + $0x100] sm:$0x3] %vm260, 0.0
      %292 = vst.msk [vmem:[#allocation2 + $0x108] sm:$0xff] %vm257, 0.0
      %293 = vst.msk [vmem:[#allocation2 + $0x110] sm:$0xff] %vm257, 0.0
      %294 = vst.msk [vmem:[#allocation2 + $0x118] sm:$0x3] %vm260, 0.0
      %295 = vst.msk [vmem:[#allocation2 + $0x120] sm:$0xff] %vm257, 0.0
      %296 = vst.msk [vmem:[#allocation2 + $0x128] sm:$0xff] %vm257, 0.0
      %297 = vst.msk [vmem:[#allocation2 + $0x130] sm:$0x3] %vm260, 0.0
      %298 = vst.msk [vmem:[#allocation2 + $0x138] sm:$0xff] %vm257, 0.0
      %299 = vst.msk [vmem:[#allocation2 + $0x140] sm:$0xff] %vm257, 0.0
      %300 = vst.msk [vmem:[#allocation2 + $0x148] sm:$0x3] %vm260, 0.0
      %301 = vst.msk [vmem:[#allocation2 + $0x150] sm:$0xff] %vm257, 0.0
      %302 = vst.msk [vmem:[#allocation2 + $0x158] sm:$0xff] %vm257, 0.0
      %303 = vst.msk [vmem:[#allocation2 + $0x160] sm:$0x3] %vm260, 0.0
      %304 = vst.msk [vmem:[#allocation2 + $0x168] sm:$0xff] %vm257, 0.0
      %305 = vst.msk [vmem:[#allocation2 + $0x170] sm:$0xff] %vm257, 0.0
      %306 = vst.msk [vmem:[#allocation2 + $0x178] sm:$0x3] %vm260, 0.0
      %307 = vst.msk [vmem:[#allocation2 + $0x180] sm:$0xff] %vm257, 0.0
      %308 = vst.msk [vmem:[#allocation2 + $0x188] sm:$0xff] %vm257, 0.0
      %309 = vst.msk [vmem:[#allocation2 + $0x190] sm:$0x3] %vm260, 0.0
      %310 = vst.msk [vmem:[#allocation2 + $0x198] sm:$0xff] %vm257, 0.0
      %311 = vst.msk [vmem:[#allocation2 + $0x1a0] sm:$0xff] %vm257, 0.0
      %312 = vst.msk [vmem:[#allocation2 + $0x1a8] sm:$0x3] %vm260, 0.0
      %s313 = scalar_lea.vmem [#allocation2], 24
      %314 = vst.msk [vmem:[%s313 + $0x1] sm:$0xff] %vm257, %v225
      %315 = vst.msk [vmem:[%s313 + $0x9] sm:$0xff] %vm257, %v226
      %316 = vst.msk [vmem:[%s313 + $0x19] sm:$0xff] %vm257, %v227
      %317 = vst.msk [vmem:[%s313 + $0x21] sm:$0xff] %vm257, %v228
      %318 = vst.msk [vmem:[%s313 + $0x31] sm:$0xff] %vm257, %v229
      %319 = vst.msk [vmem:[%s313 + $0x39] sm:$0xff] %vm257, %v230
      %320 = vst.msk [vmem:[%s313 + $0x49] sm:$0xff] %vm257, %v231
      %321 = vst.msk [vmem:[%s313 + $0x51] sm:$0xff] %vm257, %v232
      %322 = vst.msk [vmem:[%s313 + $0x61] sm:$0xff] %vm257, %v233
      %323 = vst.msk [vmem:[%s313 + $0x69] sm:$0xff] %vm257, %v234
      %324 = vst.msk [vmem:[%s313 + $0x79] sm:$0xff] %vm257, %v235
      %325 = vst.msk [vmem:[%s313 + $0x81] sm:$0xff] %vm257, %v236
      %326 = vst.msk [vmem:[%s313 + $0x91] sm:$0xff] %vm257, %v237
      %327 = vst.msk [vmem:[%s313 + $0x99] sm:$0xff] %vm257, %v238
      %328 = vst.msk [vmem:[%s313 + $0xa9] sm:$0xff] %vm257, %v239
      %329 = vst.msk [vmem:[%s313 + $0xb1] sm:$0xff] %vm257, %v240
      %330 = vst.msk [vmem:[%s313 + $0xc1] sm:$0xff] %vm257, %v241
      %331 = vst.msk [vmem:[%s313 + $0xc9] sm:$0xff] %vm257, %v242
      %332 = vst.msk [vmem:[%s313 + $0xd9] sm:$0xff] %vm257, %v243
      %333 = vst.msk [vmem:[%s313 + $0xe1] sm:$0xff] %vm257, %v244
      %334 = vst.msk [vmem:[%s313 + $0xf1] sm:$0xff] %vm257, %v245
      %335 = vst.msk [vmem:[%s313 + $0xf9] sm:$0xff] %vm257, %v246
      %336 = vst.msk [vmem:[%s313 + $0x109] sm:$0xff] %vm257, %v247
      %337 = vst.msk [vmem:[%s313 + $0x111] sm:$0xff] %vm257, %v248
      %338 = vst.msk [vmem:[%s313 + $0x121] sm:$0xff] %vm257, %v249
      %339 = vst.msk [vmem:[%s313 + $0x129] sm:$0xff] %vm257, %v250
      %340 = vst.msk [vmem:[%s313 + $0x139] sm:$0xff] %vm257, %v251
      %341 = vst.msk [vmem:[%s313 + $0x141] sm:$0xff] %vm257, %v252
      %342 = vst.msk [vmem:[%s313 + $0x151] sm:$0xff] %vm257, %v253
      %343 = vst.msk [vmem:[%s313 + $0x159] sm:$0xff] %vm257, %v254
      %344 = vst.msk [vmem:[%s313 + $0x169] sm:$0xff] %vm257, %v255
      %345 = vst.msk [vmem:[%s313 + $0x171] sm:$0xff] %vm257, %v256
      %v346 = vld [vmem:[#allocation2] sm:$0xff]
      %v347 = vld [vmem:[#allocation2 + $0x8] sm:$0xff]
      %v348 = vld [vmem:[#allocation2 + $0x10] sm:$0x3]
      %v349 = vld [vmem:[#allocation2 + $0x18] sm:$0xff]
      %v350 = vld [vmem:[#allocation2 + $0x20] sm:$0xff]
      %v351 = vld [vmem:[#allocation2 + $0x28] sm:$0x3]
      %v352 = vld [vmem:[#allocation2 + $0x30] sm:$0xff]
      %v353 = vld [vmem:[#allocation2 + $0x38] sm:$0xff]
      %v354 = vld [vmem:[#allocation2 + $0x40] sm:$0x3]
      %v355 = vld [vmem:[#allocation2 + $0x48] sm:$0xff]
      %v356 = vld [vmem:[#allocation2 + $0x50] sm:$0xff]
      %v357 = vld [vmem:[#allocation2 + $0x58] sm:$0x3]
      %v358 = vld [vmem:[#allocation2 + $0x60] sm:$0xff]
      %v359 = vld [vmem:[#allocation2 + $0x68] sm:$0xff]
      %v360 = vld [vmem:[#allocation2 + $0x70] sm:$0x3]
      %v361 = vld [vmem:[#allocation2 + $0x78] sm:$0xff]
      %v362 = vld [vmem:[#allocation2 + $0x80] sm:$0xff]
      %v363 = vld [vmem:[#allocation2 + $0x88] sm:$0x3]
      %v364 = vld [vmem:[#allocation2 + $0x90] sm:$0xff]
      %v365 = vld [vmem:[#allocation2 + $0x98] sm:$0xff]
      %v366 = vld [vmem:[#allocation2 + $0xa0] sm:$0x3]
      %v367 = vld [vmem:[#allocation2 + $0xa8] sm:$0xff]
      %v368 = vld [vmem:[#allocation2 + $0xb0] sm:$0xff]
      %v369 = vld [vmem:[#allocation2 + $0xb8] sm:$0x3]
      %v370 = vld [vmem:[#allocation2 + $0xc0] sm:$0xff]
      %v371 = vld [vmem:[#allocation2 + $0xc8] sm:$0xff]
      %v372 = vld [vmem:[#allocation2 + $0xd0] sm:$0x3]
      %v373 = vld [vmem:[#allocation2 + $0xd8] sm:$0xff]
      %v374 = vld [vmem:[#allocation2 + $0xe0] sm:$0xff]
      %v375 = vld [vmem:[#allocation2 + $0xe8] sm:$0x3]
      %v376 = vld [vmem:[#allocation2 + $0xf0] sm:$0xff]
      %v377 = vld [vmem:[#allocation2 + $0xf8] sm:$0xff]
      %v378 = vld [vmem:[#allocation2 + $0x100] sm:$0x3]
      %v379 = vld [vmem:[#allocation2 + $0x108] sm:$0xff]
      %v380 = vld [vmem:[#allocation2 + $0x110] sm:$0xff]
      %v381 = vld [vmem:[#allocation2 + $0x118] sm:$0x3]
      %v382 = vld [vmem:[#allocation2 + $0x120] sm:$0xff]
      %v383 = vld [vmem:[#allocation2 + $0x128] sm:$0xff]
      %v384 = vld [vmem:[#allocation2 + $0x130] sm:$0x3]
      %v385 = vld [vmem:[#allocation2 + $0x138] sm:$0xff]
      %v386 = vld [vmem:[#allocation2 + $0x140] sm:$0xff]
      %v387 = vld [vmem:[#allocation2 + $0x148] sm:$0x3]
      %v388 = vld [vmem:[#allocation2 + $0x150] sm:$0xff]
      %v389 = vld [vmem:[#allocation2 + $0x158] sm:$0xff]
      %v390 = vld [vmem:[#allocation2 + $0x160] sm:$0x3]
      %v391 = vld [vmem:[#allocation2 + $0x168] sm:$0xff]
      %v392 = vld [vmem:[#allocation2 + $0x170] sm:$0xff]
      %v393 = vld [vmem:[#allocation2 + $0x178] sm:$0x3]
      %v394 = vld [vmem:[#allocation2 + $0x180] sm:$0xff]
      %v395 = vld [vmem:[#allocation2 + $0x188] sm:$0xff]
      %v396 = vld [vmem:[#allocation2 + $0x190] sm:$0x3]
      %v397 = vld [vmem:[#allocation2 + $0x198] sm:$0xff]
      %v398 = vld [vmem:[#allocation2 + $0x1a0] sm:$0xff]
      %v399 = vld [vmem:[#allocation2 + $0x1a8] sm:$0x3]
      %v400 = vld [vmem:[%s1] sm:$0xf]
      %s401 = scalar_lea.vmem %s1, 12
      %v402 = vld [vmem:[%s401] sm:$0xf]
      %v404 = vsel %vm257, %v349, 0
      %v407 = vsel %vm257, %v350, 0
      %v410 = vsel %vm257, %v352, 0
      %v413 = vsel %vm257, %v353, 0
      %v416 = vsel %vm257, %v355, 0
      %v419 = vsel %vm257, %v356, 0
      %v422 = vsel %vm257, %v358, 0
      %v425 = vsel %vm257, %v359, 0
      %v428 = vsel %vm257, %v361, 0
      %v431 = vsel %vm257, %v362, 0
      %v434 = vsel %vm257, %v364, 0
      %v437 = vsel %vm257, %v365, 0
      %v440 = vsel %vm257, %v367, 0
      %v443 = vsel %vm257, %v368, 0
      %v446 = vsel %vm257, %v370, 0
      %v449 = vsel %vm257, %v371, 0
      %v452 = vsel %vm257, %v373, 0
      %v455 = vsel %vm257, %v374, 0
      %v458 = vsel %vm257, %v376, 0
      %v461 = vsel %vm257, %v377, 0
      %v464 = vsel %vm257, %v379, 0
      %v467 = vsel %vm257, %v380, 0
      %v470 = vsel %vm257, %v382, 0
      %v473 = vsel %vm257, %v383, 0
      %v476 = vsel %vm257, %v385, 0
      %v479 = vsel %vm257, %v386, 0
      %v482 = vsel %vm257, %v388, 0
      %v485 = vsel %vm257, %v389, 0
      %v488 = vsel %vm257, %v391, 0
      %v491 = vsel %vm257, %v392, 0
      %v494 = vsel %vm257, %v394, 0
      %v497 = vsel %vm257, %v395, 0
      %vm499 = vcmask 1043456
      %v501 = vsel %vm499, %v402, 0
      %503 = vmatprep.subr.mxu0 0.0
      %504 = vmatpush1.msra.mxu0 %v501
      %505 = vmatprep.subr.mxu0 0.0
      %506 = vmatpush1.msra.mxu0 0.0
      %507 = vmatprep.subr.mxu0 0.0
      %508 = vmatpush1.msra.mxu0 0.0
      %509 = vmatprep.subr.mxu0 0.0
      %510 = vmatpush1.msra.mxu0 0.0
      %511 = vmatprep.subr.mxu0 0.0
      %512 = vmatpush1.msra.mxu0 0.0
      %513 = vmatprep.subr.mxu0 0.0
      %514 = vmatpush1.msra.mxu0 0.0
      %515 = vmatprep.subr.mxu0 0.0
      %516 = vmatpush1.msra.mxu0 0.0
      %517 = vmatprep.subr.mxu0 0.0
      %518 = vmatpush1.msra.mxu0 0.0
      %519 = vmatprep.subr.mxu0 0.0
      %520 = vmatpush1.msra.mxu0 0.0
      %521 = vmatprep.subr.mxu0 0.0
      %522 = vmatpush1.msra.mxu0 0.0
      %523 = vmatprep.subr.mxu0 0.0
      %524 = vmatpush1.msra.mxu0 0.0
      %525 = vmatprep.subr.mxu0 0.0
      %526 = vmatpush1.msra.mxu0 0.0
      %527 = vmatprep.subr.mxu0 0.0
      %528 = vmatpush1.msra.mxu0 0.0
      %529 = vmatprep.subr.mxu0 0.0
      %530 = vmatpush1.msra.mxu0 0.0
      %531 = vmatprep.subr.mxu0 0.0
      %532 = vmatpush1.msra.mxu0 0.0
      %533 = vmatprep.subr.mxu0 0.0
      %534 = vmatpush1.msra.mxu0 0.0
      %535 = vmatprep.subr.mxu0 0.0
      %536 = vmatpush1.msra.mxu0 0.0
      %537 = vmatprep.subr.mxu0 0.0
      %538 = vmatpush1.msra.mxu0 0.0
      %539 = vmatprep.subr.mxu0 0.0
      %540 = vmatpush1.msra.mxu0 0.0
      %541 = vmatprep.subr.mxu0 0.0
      %542 = vmatpush1.msra.mxu0 0.0
      %543 = vmatprep.subr.mxu0 0.0
      %544 = vmatpush1.msra.mxu0 0.0
      %545 = vmatprep.subr.mxu0 0.0
      %546 = vmatpush1.msra.mxu0 0.0
      %547 = vmatprep.subr.mxu0 0.0
      %548 = vmatpush1.msra.mxu0 0.0
      %549 = vmatprep.subr.mxu0 0.0
      %550 = vmatpush1.msra.mxu0 0.0
      %551 = vmatprep.subr.mxu0 0.0
      %552 = vmatpush1.msra.mxu0 0.0
      %553 = vmatprep.subr.mxu0 0.0
      %554 = vmatpush1.msra.mxu0 0.0
      %555 = vmatprep.subr.mxu0 0.0
      %556 = vmatpush1.msra.mxu0 0.0
      %557 = vmatprep.subr.mxu0 0.0
      %558 = vmatpush1.msra.mxu0 0.0
      %559 = vmatprep.subr.mxu0 0.0
      %560 = vmatpush1.msra.mxu0 0.0
      %561 = vmatprep.subr.mxu0 0.0
      %562 = vmatpush1.msra.mxu0 0.0
      %563 = vmatprep.subr.mxu0 0.0
      %564 = vmatpush1.msra.mxu0 0.0
      %565 = vmatprep.subr.mxu0 0.0
      %566 = vmatpush1.msra.mxu0 0.0
      %567 = vmatprep.mubr.f32.mxu0 0.0
      %568 = vmatmul.mubr.f32.gmra.mrb[0].mxu0 %v404
      %v569 = vpop.f32.mrb[0].mxu0
      %v570 = vadd.f32 0.0, %v569
      %v571 = vpop.f32.mrb[0].mxu0
      %572 = vmatprep.mubr.f32.mxu0 0.0
      %573 = vmatmul.mubr.f32.gmra.mrb[0].mxu0 %v407
      %v574 = vpop.f32.mrb[0].mxu0
      %v575 = vadd.f32 0.0, %v574
      %v576 = vpop.f32.mrb[0].mxu0
      %577 = vmatprep.mubr.f32.mxu0 0.0
      %578 = vmatmul.mubr.f32.gmra.mrb[0].mxu0 %v410
      %v579 = vpop.f32.mrb[0].mxu0
      %v580 = vadd.f32 0.0, %v579
      %v581 = vpop.f32.mrb[0].mxu0
      %582 = vmatprep.mubr.f32.mxu0 0.0
      %583 = vmatmul.mubr.f32.gmra.mrb[0].mxu0 %v413
      %v584 = vpop.f32.mrb[0].mxu0
      %v585 = vadd.f32 0.0, %v584
      %v586 = vpop.f32.mrb[0].mxu0
      %587 = vmatprep.mubr.f32.mxu0 0.0
      %588 = vmatmul.mubr.f32.gmra.mrb[0].mxu0 %v416
      %v589 = vpop.f32.mrb[0].mxu0
      %v590 = vadd.f32 0.0, %v589
      %v591 = vpop.f32.mrb[0].mxu0
      %592 = vmatprep.mubr.f32.mxu0 0.0
      %593 = vmatmul.mubr.f32.gmra.mrb[0].mxu0 %v419
      %v594 = vpop.f32.mrb[0].mxu0
      %v595 = vadd.f32 0.0, %v594
      %v596 = vpop.f32.mrb[0].mxu0
      %597 = vmatprep.mubr.f32.mxu0 0.0
      %598 = vmatmul.mubr.f32.gmra.mrb[0].mxu0 %v422
      %v599 = vpop.f32.mrb[0].mxu0
      %v600 = vadd.f32 0.0, %v599
      %v601 = vpop.f32.mrb[0].mxu0
      %602 = vmatprep.mubr.f32.mxu0 0.0
      %603 = vmatmul.mubr.f32.gmra.mrb[0].mxu0 %v425
      %v604 = vpop.f32.mrb[0].mxu0
      %v605 = vadd.f32 0.0, %v604
      %v606 = vpop.f32.mrb[0].mxu0
      %607 = vmatprep.mubr.f32.mxu0 0.0
      %608 = vmatmul.mubr.f32.gmra.mrb[0].mxu0 %v428
      %v609 = vpop.f32.mrb[0].mxu0
      %v610 = vadd.f32 0.0, %v609
      %v611 = vpop.f32.mrb[0].mxu0
      %612 = vmatprep.mubr.f32.mxu0 0.0
      %613 = vmatmul.mubr.f32.gmra.mrb[0].mxu0 %v431
      %v614 = vpop.f32.mrb[0].mxu0
      %v615 = vadd.f32 0.0, %v614
      %v616 = vpop.f32.mrb[0].mxu0
      %617 = vmatprep.mubr.f32.mxu0 0.0
      %618 = vmatmul.mubr.f32.gmra.mrb[0].mxu0 %v434
      %v619 = vpop.f32.mrb[0].mxu0
      %v620 = vadd.f32 0.0, %v619
      %v621 = vpop.f32.mrb[0].mxu0
      %622 = vmatprep.mubr.f32.mxu0 0.0
      %623 = vmatmul.mubr.f32.gmra.mrb[0].mxu0 %v437
      %v624 = vpop.f32.mrb[0].mxu0
      %v625 = vadd.f32 0.0, %v624
      %v626 = vpop.f32.mrb[0].mxu0
      %627 = vmatprep.mubr.f32.mxu0 0.0
      %628 = vmatmul.mubr.f32.gmra.mrb[0].mxu0 %v440
      %v629 = vpop.f32.mrb[0].mxu0
      %v630 = vadd.f32 0.0, %v629
      %v631 = vpop.f32.mrb[0].mxu0
      %632 = vmatprep.mubr.f32.mxu0 0.0
      %633 = vmatmul.mubr.f32.gmra.mrb[0].mxu0 %v443
      %v634 = vpop.f32.mrb[0].mxu0
      %v635 = vadd.f32 0.0, %v634
      %v636 = vpop.f32.mrb[0].mxu0
      %637 = vmatprep.mubr.f32.mxu0 0.0
      %638 = vmatmul.mubr.f32.gmra.mrb[0].mxu0 %v446
      %v639 = vpop.f32.mrb[0].mxu0
      %v640 = vadd.f32 0.0, %v639
      %v641 = vpop.f32.mrb[0].mxu0
      %642 = vmatprep.mubr.f32.mxu0 0.0
      %643 = vmatmul.mubr.f32.gmra.mrb[0].mxu0 %v449
      %v644 = vpop.f32.mrb[0].mxu0
      %v645 = vadd.f32 0.0, %v644
      %v646 = vpop.f32.mrb[0].mxu0
      %647 = vmatprep.mubr.f32.mxu0 0.0
      %648 = vmatmul.mubr.f32.gmra.mrb[0].mxu0 %v452
      %v649 = vpop.f32.mrb[0].mxu0
      %v650 = vadd.f32 0.0, %v649
      %v651 = vpop.f32.mrb[0].mxu0
      %652 = vmatprep.mubr.f32.mxu0 0.0
      %653 = vmatmul.mubr.f32.gmra.mrb[0].mxu0 %v455
      %v654 = vpop.f32.mrb[0].mxu0
      %v655 = vadd.f32 0.0, %v654
      %v656 = vpop.f32.mrb[0].mxu0
      %657 = vmatprep.mubr.f32.mxu0 0.0
      %658 = vmatmul.mubr.f32.gmra.mrb[0].mxu0 %v458
      %v659 = vpop.f32.mrb[0].mxu0
      %v660 = vadd.f32 0.0, %v659
      %v661 = vpop.f32.mrb[0].mxu0
      %662 = vmatprep.mubr.f32.mxu0 0.0
      %663 = vmatmul.mubr.f32.gmra.mrb[0].mxu0 %v461
      %v664 = vpop.f32.mrb[0].mxu0
      %v665 = vadd.f32 0.0, %v664
      %v666 = vpop.f32.mrb[0].mxu0
      %667 = vmatprep.mubr.f32.mxu0 0.0
      %668 = vmatmul.mubr.f32.gmra.mrb[0].mxu0 %v464
      %v669 = vpop.f32.mrb[0].mxu0
      %v670 = vadd.f32 0.0, %v669
      %v671 = vpop.f32.mrb[0].mxu0
      %672 = vmatprep.mubr.f32.mxu0 0.0
      %673 = vmatmul.mubr.f32.gmra.mrb[0].mxu0 %v467
      %v674 = vpop.f32.mrb[0].mxu0
      %v675 = vadd.f32 0.0, %v674
      %v676 = vpop.f32.mrb[0].mxu0
      %677 = vmatprep.mubr.f32.mxu0 0.0
      %678 = vmatmul.mubr.f32.gmra.mrb[0].mxu0 %v470
      %v679 = vpop.f32.mrb[0].mxu0
      %v680 = vadd.f32 0.0, %v679
      %v681 = vpop.f32.mrb[0].mxu0
      %682 = vmatprep.mubr.f32.mxu0 0.0
      %683 = vmatmul.mubr.f32.gmra.mrb[0].mxu0 %v473
      %v684 = vpop.f32.mrb[0].mxu0
      %v685 = vadd.f32 0.0, %v684
      %v686 = vpop.f32.mrb[0].mxu0
      %687 = vmatprep.mubr.f32.mxu0 0.0
      %688 = vmatmul.mubr.f32.gmra.mrb[0].mxu0 %v476
      %v689 = vpop.f32.mrb[0].mxu0
      %v690 = vadd.f32 0.0, %v689
      %v691 = vpop.f32.mrb[0].mxu0
      %692 = vmatprep.mubr.f32.mxu0 0.0
      %693 = vmatmul.mubr.f32.gmra.mrb[0].mxu0 %v479
      %v694 = vpop.f32.mrb[0].mxu0
      %v695 = vadd.f32 0.0, %v694
      %v696 = vpop.f32.mrb[0].mxu0
      %697 = vmatprep.mubr.f32.mxu0 0.0
      %698 = vmatmul.mubr.f32.gmra.mrb[0].mxu0 %v482
      %v699 = vpop.f32.mrb[0].mxu0
      %v700 = vadd.f32 0.0, %v699
      %v701 = vpop.f32.mrb[0].mxu0
      %702 = vmatprep.mubr.f32.mxu0 0.0
      %703 = vmatmul.mubr.f32.gmra.mrb[0].mxu0 %v485
      %v704 = vpop.f32.mrb[0].mxu0
      %v705 = vadd.f32 0.0, %v704
      %v706 = vpop.f32.mrb[0].mxu0
      %707 = vmatprep.mubr.f32.mxu0 0.0
      %708 = vmatmul.mubr.f32.gmra.mrb[0].mxu0 %v488
      %v709 = vpop.f32.mrb[0].mxu0
      %v710 = vadd.f32 0.0, %v709
      %v711 = vpop.f32.mrb[0].mxu0
      %712 = vmatprep.mubr.f32.mxu0 0.0
      %713 = vmatmul.mubr.f32.gmra.mrb[0].mxu0 %v491
      %v714 = vpop.f32.mrb[0].mxu0
      %v715 = vadd.f32 0.0, %v714
      %v716 = vpop.f32.mrb[0].mxu0
      %717 = vmatprep.mubr.f32.mxu0 0.0
      %718 = vmatmul.mubr.f32.gmra.mrb[0].mxu0 %v494
      %v719 = vpop.f32.mrb[0].mxu0
      %v720 = vadd.f32 0.0, %v719
      %v721 = vpop.f32.mrb[0].mxu0
      %722 = vmatprep.mubr.f32.mxu0 0.0
      %723 = vmatmul.mubr.f32.gmra.mrb[0].mxu0 %v497
      %v724 = vpop.f32.mrb[0].mxu0
      %v725 = vadd.f32 0.0, %v724
      %v726 = vpop.f32.mrb[0].mxu0
      %727 = vdwg.mxu0
      %v729 = vsel %vm257, %v346, 0
      %v732 = vsel %vm257, %v347, 0
      %v735 = vsel %vm499, %v400, 0
      %737 = vmatprep.subr.mxu0 0.0
      %738 = vmatpush1.msra.mxu0 %v735
      %739 = vmatprep.subr.mxu0 0.0
      %740 = vmatpush1.msra.mxu0 0.0
      %741 = vmatprep.subr.mxu0 0.0
      %742 = vmatpush1.msra.mxu0 0.0
      %743 = vmatprep.subr.mxu0 0.0
      %744 = vmatpush1.msra.mxu0 0.0
      %745 = vmatprep.subr.mxu0 0.0
      %746 = vmatpush1.msra.mxu0 0.0
      %747 = vmatprep.subr.mxu0 0.0
      %748 = vmatpush1.msra.mxu0 0.0
      %749 = vmatprep.subr.mxu0 0.0
      %750 = vmatpush1.msra.mxu0 0.0
      %751 = vmatprep.subr.mxu0 0.0
      %752 = vmatpush1.msra.mxu0 0.0
      %753 = vmatprep.subr.mxu0 0.0
      %754 = vmatpush1.msra.mxu0 0.0
      %755 = vmatprep.subr.mxu0 0.0
      %756 = vmatpush1.msra.mxu0 0.0
      %757 = vmatprep.subr.mxu0 0.0
      %758 = vmatpush1.msra.mxu0 0.0
      %759 = vmatprep.subr.mxu0 0.0
      %760 = vmatpush1.msra.mxu0 0.0
      %761 = vmatprep.subr.mxu0 0.0
      %762 = vmatpush1.msra.mxu0 0.0
      %763 = vmatprep.subr.mxu0 0.0
      %764 = vmatpush1.msra.mxu0 0.0
      %765 = vmatprep.subr.mxu0 0.0
      %766 = vmatpush1.msra.mxu0 0.0
      %767 = vmatprep.subr.mxu0 0.0
      %768 = vmatpush1.msra.mxu0 0.0
      %769 = vmatprep.subr.mxu0 0.0
      %770 = vmatpush1.msra.mxu0 0.0
      %771 = vmatprep.subr.mxu0 0.0
      %772 = vmatpush1.msra.mxu0 0.0
      %773 = vmatprep.subr.mxu0 0.0
      %774 = vmatpush1.msra.mxu0 0.0
      %775 = vmatprep.subr.mxu0 0.0
      %776 = vmatpush1.msra.mxu0 0.0
      %777 = vmatprep.subr.mxu0 0.0
      %778 = vmatpush1.msra.mxu0 0.0
      %779 = vmatprep.subr.mxu0 0.0
      %780 = vmatpush1.msra.mxu0 0.0
      %781 = vmatprep.subr.mxu0 0.0
      %782 = vmatpush1.msra.mxu0 0.0
      %783 = vmatprep.subr.mxu0 0.0
      %784 = vmatpush1.msra.mxu0 0.0
      %785 = vmatprep.subr.mxu0 0.0
      %786 = vmatpush1.msra.mxu0 0.0
      %787 = vmatprep.subr.mxu0 0.0
      %788 = vmatpush1.msra.mxu0 0.0
      %789 = vmatprep.subr.mxu0 0.0
      %790 = vmatpush1.msra.mxu0 0.0
      %791 = vmatprep.subr.mxu0 0.0
      %792 = vmatpush1.msra.mxu0 0.0
      %793 = vmatprep.subr.mxu0 0.0
      %794 = vmatpush1.msra.mxu0 0.0
      %795 = vmatprep.subr.mxu0 0.0
      %796 = vmatpush1.msra.mxu0 0.0
      %797 = vmatprep.subr.mxu0 0.0
      %798 = vmatpush1.msra.mxu0 0.0
      %799 = vmatprep.subr.mxu0 0.0
      %800 = vmatpush1.msra.mxu0 0.0
      %801 = vmatprep.mubr.f32.mxu0 0.0
      %802 = vmatmul.mubr.f32.gmra.mrb[0].mxu0 %v729
      %v803 = vpop.f32.mrb[0].mxu0
      %v804 = vadd.f32 %v570, %v803
      %v805 = vpop.f32.mrb[0].mxu0
      %806 = vmatprep.mubr.f32.mxu0 0.0
      %807 = vmatmul.mubr.f32.gmra.mrb[0].mxu0 %v732
      %v808 = vpop.f32.mrb[0].mxu0
      %v809 = vadd.f32 %v575, %v808
      %v810 = vpop.f32.mrb[0].mxu0
      %811 = vmatprep.mubr.f32.mxu0 0.0
      %812 = vmatmul.mubr.f32.gmra.mrb[0].mxu0 %v404
      %v813 = vpop.f32.mrb[0].mxu0
      %v814 = vadd.f32 %v580, %v813
      %v815 = vpop.f32.mrb[0].mxu0
      %816 = vmatprep.mubr.f32.mxu0 0.0
      %817 = vmatmul.mubr.f32.gmra.mrb[0].mxu0 %v407
      %v818 = vpop.f32.mrb[0].mxu0
      %v819 = vadd.f32 %v585, %v818
      %v820 = vpop.f32.mrb[0].mxu0
      %821 = vmatprep.mubr.f32.mxu0 0.0
      %822 = vmatmul.mubr.f32.gmra.mrb[0].mxu0 %v410
      %v823 = vpop.f32.mrb[0].mxu0
      %v824 = vadd.f32 %v590, %v823
      %v825 = vpop.f32.mrb[0].mxu0
      %826 = vmatprep.mubr.f32.mxu0 0.0
      %827 = vmatmul.mubr.f32.gmra.mrb[0].mxu0 %v413
      %v828 = vpop.f32.mrb[0].mxu0
      %v829 = vadd.f32 %v595, %v828
      %v830 = vpop.f32.mrb[0].mxu0
      %831 = vmatprep.mubr.f32.mxu0 0.0
      %832 = vmatmul.mubr.f32.gmra.mrb[0].mxu0 %v416
      %v833 = vpop.f32.mrb[0].mxu0
      %v834 = vadd.f32 %v600, %v833
      %v835 = vpop.f32.mrb[0].mxu0
      %836 = vmatprep.mubr.f32.mxu0 0.0
      %837 = vmatmul.mubr.f32.gmra.mrb[0].mxu0 %v419
      %v838 = vpop.f32.mrb[0].mxu0
      %v839 = vadd.f32 %v605, %v838
      %v840 = vpop.f32.mrb[0].mxu0
      %841 = vmatprep.mubr.f32.mxu0 0.0
      %842 = vmatmul.mubr.f32.gmra.mrb[0].mxu0 %v422
      %v843 = vpop.f32.mrb[0].mxu0
      %v844 = vadd.f32 %v610, %v843
      %v845 = vpop.f32.mrb[0].mxu0
      %846 = vmatprep.mubr.f32.mxu0 0.0
      %847 = vmatmul.mubr.f32.gmra.mrb[0].mxu0 %v425
      %v848 = vpop.f32.mrb[0].mxu0
      %v849 = vadd.f32 %v615, %v848
      %v850 = vpop.f32.mrb[0].mxu0
      %851 = vmatprep.mubr.f32.mxu0 0.0
      %852 = vmatmul.mubr.f32.gmra.mrb[0].mxu0 %v428
      %v853 = vpop.f32.mrb[0].mxu0
      %v854 = vadd.f32 %v620, %v853
      %v855 = vpop.f32.mrb[0].mxu0
      %856 = vmatprep.mubr.f32.mxu0 0.0
      %857 = vmatmul.mubr.f32.gmra.mrb[0].mxu0 %v431
      %v858 = vpop.f32.mrb[0].mxu0
      %v859 = vadd.f32 %v625, %v858
      %v860 = vpop.f32.mrb[0].mxu0
      %861 = vmatprep.mubr.f32.mxu0 0.0
      %862 = vmatmul.mubr.f32.gmra.mrb[0].mxu0 %v434
      %v863 = vpop.f32.mrb[0].mxu0
      %v864 = vadd.f32 %v630, %v863
      %v865 = vpop.f32.mrb[0].mxu0
      %866 = vmatprep.mubr.f32.mxu0 0.0
      %867 = vmatmul.mubr.f32.gmra.mrb[0].mxu0 %v437
      %v868 = vpop.f32.mrb[0].mxu0
      %v869 = vadd.f32 %v635, %v868
      %v870 = vpop.f32.mrb[0].mxu0
      %871 = vmatprep.mubr.f32.mxu0 0.0
      %872 = vmatmul.mubr.f32.gmra.mrb[0].mxu0 %v440
      %v873 = vpop.f32.mrb[0].mxu0
      %v874 = vadd.f32 %v640, %v873
      %v875 = vpop.f32.mrb[0].mxu0
      %876 = vmatprep.mubr.f32.mxu0 0.0
      %877 = vmatmul.mubr.f32.gmra.mrb[0].mxu0 %v443
      %v878 = vpop.f32.mrb[0].mxu0
      %v879 = vadd.f32 %v645, %v878
      %v880 = vpop.f32.mrb[0].mxu0
      %881 = vmatprep.mubr.f32.mxu0 0.0
      %882 = vmatmul.mubr.f32.gmra.mrb[0].mxu0 %v446
      %v883 = vpop.f32.mrb[0].mxu0
      %v884 = vadd.f32 %v650, %v883
      %v885 = vpop.f32.mrb[0].mxu0
      %886 = vmatprep.mubr.f32.mxu0 0.0
      %887 = vmatmul.mubr.f32.gmra.mrb[0].mxu0 %v449
      %v888 = vpop.f32.mrb[0].mxu0
      %v889 = vadd.f32 %v655, %v888
      %v890 = vpop.f32.mrb[0].mxu0
      %891 = vmatprep.mubr.f32.mxu0 0.0
      %892 = vmatmul.mubr.f32.gmra.mrb[0].mxu0 %v452
      %v893 = vpop.f32.mrb[0].mxu0
      %v894 = vadd.f32 %v660, %v893
      %v895 = vpop.f32.mrb[0].mxu0
      %896 = vmatprep.mubr.f32.mxu0 0.0
      %897 = vmatmul.mubr.f32.gmra.mrb[0].mxu0 %v455
      %v898 = vpop.f32.mrb[0].mxu0
      %v899 = vadd.f32 %v665, %v898
      %v900 = vpop.f32.mrb[0].mxu0
      %901 = vmatprep.mubr.f32.mxu0 0.0
      %902 = vmatmul.mubr.f32.gmra.mrb[0].mxu0 %v458
      %v903 = vpop.f32.mrb[0].mxu0
      %v904 = vadd.f32 %v670, %v903
      %v905 = vpop.f32.mrb[0].mxu0
      %906 = vmatprep.mubr.f32.mxu0 0.0
      %907 = vmatmul.mubr.f32.gmra.mrb[0].mxu0 %v461
      %v908 = vpop.f32.mrb[0].mxu0
      %v909 = vadd.f32 %v675, %v908
      %v910 = vpop.f32.mrb[0].mxu0
      %911 = vmatprep.mubr.f32.mxu0 0.0
      %912 = vmatmul.mubr.f32.gmra.mrb[0].mxu0 %v464
      %v913 = vpop.f32.mrb[0].mxu0
      %v914 = vadd.f32 %v680, %v913
      %v915 = vpop.f32.mrb[0].mxu0
      %916 = vmatprep.mubr.f32.mxu0 0.0
      %917 = vmatmul.mubr.f32.gmra.mrb[0].mxu0 %v467
      %v918 = vpop.f32.mrb[0].mxu0
      %v919 = vadd.f32 %v685, %v918
      %v920 = vpop.f32.mrb[0].mxu0
      %921 = vmatprep.mubr.f32.mxu0 0.0
      %922 = vmatmul.mubr.f32.gmra.mrb[0].mxu0 %v470
      %v923 = vpop.f32.mrb[0].mxu0
      %v924 = vadd.f32 %v690, %v923
      %v925 = vpop.f32.mrb[0].mxu0
      %926 = vmatprep.mubr.f32.mxu0 0.0
      %927 = vmatmul.mubr.f32.gmra.mrb[0].mxu0 %v473
      %v928 = vpop.f32.mrb[0].mxu0
      %v929 = vadd.f32 %v695, %v928
      %v930 = vpop.f32.mrb[0].mxu0
      %931 = vmatprep.mubr.f32.mxu0 0.0
      %932 = vmatmul.mubr.f32.gmra.mrb[0].mxu0 %v476
      %v933 = vpop.f32.mrb[0].mxu0
      %v934 = vadd.f32 %v700, %v933
      %v935 = vpop.f32.mrb[0].mxu0
      %936 = vmatprep.mubr.f32.mxu0 0.0
      %937 = vmatmul.mubr.f32.gmra.mrb[0].mxu0 %v479
      %v938 = vpop.f32.mrb[0].mxu0
      %v939 = vadd.f32 %v705, %v938
      %v940 = vpop.f32.mrb[0].mxu0
      %941 = vmatprep.mubr.f32.mxu0 0.0
      %942 = vmatmul.mubr.f32.gmra.mrb[0].mxu0 %v482
      %v943 = vpop.f32.mrb[0].mxu0
      %v944 = vadd.f32 %v710, %v943
      %v945 = vpop.f32.mrb[0].mxu0
      %946 = vmatprep.mubr.f32.mxu0 0.0
      %947 = vmatmul.mubr.f32.gmra.mrb[0].mxu0 %v485
      %v948 = vpop.f32.mrb[0].mxu0
      %v949 = vadd.f32 %v715, %v948
      %v950 = vpop.f32.mrb[0].mxu0
      %951 = vmatprep.mubr.f32.mxu0 0.0
      %952 = vmatmul.mubr.f32.gmra.mrb[0].mxu0 %v488
      %v953 = vpop.f32.mrb[0].mxu0
      %v954 = vadd.f32 %v720, %v953
      %v955 = vpop.f32.mrb[0].mxu0
      %956 = vmatprep.mubr.f32.mxu0 0.0
      %957 = vmatmul.mubr.f32.gmra.mrb[0].mxu0 %v491
      %v958 = vpop.f32.mrb[0].mxu0
      %v959 = vadd.f32 %v725, %v958
      %v960 = vpop.f32.mrb[0].mxu0
      %961 = vdwg.mxu0
      %s962 = scalar_lea.vmem %s1, 24
      %v963 = vld [vmem:[%s962] sm:$0xf]
      %v965 = vsel %vm257, %v397, 0
      %v968 = vsel %vm257, %v398, 0
      %v971 = vsel %vm499, %v963, 0
      %973 = vmatprep.subr.mxu0 0.0
      %974 = vmatpush1.msra.mxu0 %v971
      %975 = vmatprep.subr.mxu0 0.0
      %976 = vmatpush1.msra.mxu0 0.0
      %977 = vmatprep.subr.mxu0 0.0
      %978 = vmatpush1.msra.mxu0 0.0
      %979 = vmatprep.subr.mxu0 0.0
      %980 = vmatpush1.msra.mxu0 0.0
      %981 = vmatprep.subr.mxu0 0.0
      %982 = vmatpush1.msra.mxu0 0.0
      %983 = vmatprep.subr.mxu0 0.0
      %984 = vmatpush1.msra.mxu0 0.0
      %985 = vmatprep.subr.mxu0 0.0
      %986 = vmatpush1.msra.mxu0 0.0
      %987 = vmatprep.subr.mxu0 0.0
      %988 = vmatpush1.msra.mxu0 0.0
      %989 = vmatprep.subr.mxu0 0.0
      %990 = vmatpush1.msra.mxu0 0.0
      %991 = vmatprep.subr.mxu0 0.0
      %992 = vmatpush1.msra.mxu0 0.0
      %993 = vmatprep.subr.mxu0 0.0
      %994 = vmatpush1.msra.mxu0 0.0
      %995 = vmatprep.subr.mxu0 0.0
      %996 = vmatpush1.msra.mxu0 0.0
      %997 = vmatprep.subr.mxu0 0.0
      %998 = vmatpush1.msra.mxu0 0.0
      %999 = vmatprep.subr.mxu0 0.0
      %1000 = vmatpush1.msra.mxu0 0.0
      %1001 = vmatprep.subr.mxu0 0.0
      %1002 = vmatpush1.msra.mxu0 0.0
      %1003 = vmatprep.subr.mxu0 0.0
      %1004 = vmatpush1.msra.mxu0 0.0
      %1005 = vmatprep.subr.mxu0 0.0
      %1006 = vmatpush1.msra.mxu0 0.0
      %1007 = vmatprep.subr.mxu0 0.0
      %1008 = vmatpush1.msra.mxu0 0.0
      %1009 = vmatprep.subr.mxu0 0.0
      %1010 = vmatpush1.msra.mxu0 0.0
      %1011 = vmatprep.subr.mxu0 0.0
      %1012 = vmatpush1.msra.mxu0 0.0
      %1013 = vmatprep.subr.mxu0 0.0
      %1014 = vmatpush1.msra.mxu0 0.0
      %1015 = vmatprep.subr.mxu0 0.0
      %1016 = vmatpush1.msra.mxu0 0.0
      %1017 = vmatprep.subr.mxu0 0.0
      %1018 = vmatpush1.msra.mxu0 0.0
      %1019 = vmatprep.subr.mxu0 0.0
      %1020 = vmatpush1.msra.mxu0 0.0
      %1021 = vmatprep.subr.mxu0 0.0
      %1022 = vmatpush1.msra.mxu0 0.0
      %1023 = vmatprep.subr.mxu0 0.0
      %1024 = vmatpush1.msra.mxu0 0.0
      %1025 = vmatprep.subr.mxu0 0.0
      %1026 = vmatpush1.msra.mxu0 0.0
      %1027 = vmatprep.subr.mxu0 0.0
      %1028 = vmatpush1.msra.mxu0 0.0
      %1029 = vmatprep.subr.mxu0 0.0
      %1030 = vmatpush1.msra.mxu0 0.0
      %1031 = vmatprep.subr.mxu0 0.0
      %1032 = vmatpush1.msra.mxu0 0.0
      %1033 = vmatprep.subr.mxu0 0.0
      %1034 = vmatpush1.msra.mxu0 0.0
      %1035 = vmatprep.subr.mxu0 0.0
      %1036 = vmatpush1.msra.mxu0 0.0
      %1037 = vmatprep.mubr.f32.mxu0 0.0
      %1038 = vmatmul.mubr.f32.gmra.mrb[0].mxu0 %v410
      %v1039 = vpop.f32.mrb[0].mxu0
      %v1040 = vadd.f32 0.0, %v1039
      %v1041 = vpop.f32.mrb[0].mxu0
      %1042 = vmatprep.mubr.f32.mxu0 0.0
      %1043 = vmatmul.mubr.f32.gmra.mrb[0].mxu0 %v413
      %v1044 = vpop.f32.mrb[0].mxu0
      %v1045 = vadd.f32 0.0, %v1044
      %v1046 = vpop.f32.mrb[0].mxu0
      %1047 = vmatprep.mubr.f32.mxu0 0.0
      %1048 = vmatmul.mubr.f32.gmra.mrb[0].mxu0 %v416
      %v1049 = vpop.f32.mrb[0].mxu0
      %v1050 = vadd.f32 0.0, %v1049
      %v1051 = vpop.f32.mrb[0].mxu0
      %1052 = vmatprep.mubr.f32.mxu0 0.0
      %1053 = vmatmul.mubr.f32.gmra.mrb[0].mxu0 %v419
      %v1054 = vpop.f32.mrb[0].mxu0
      %v1055 = vadd.f32 0.0, %v1054
      %v1056 = vpop.f32.mrb[0].mxu0
      %1057 = vmatprep.mubr.f32.mxu0 0.0
      %1058 = vmatmul.mubr.f32.gmra.mrb[0].mxu0 %v422
      %v1059 = vpop.f32.mrb[0].mxu0
      %v1060 = vadd.f32 0.0, %v1059
      %v1061 = vpop.f32.mrb[0].mxu0
      %1062 = vmatprep.mubr.f32.mxu0 0.0
      %1063 = vmatmul.mubr.f32.gmra.mrb[0].mxu0 %v425
      %v1064 = vpop.f32.mrb[0].mxu0
      %v1065 = vadd.f32 0.0, %v1064
      %v1066 = vpop.f32.mrb[0].mxu0
      %1067 = vmatprep.mubr.f32.mxu0 0.0
      %1068 = vmatmul.mubr.f32.gmra.mrb[0].mxu0 %v428
      %v1069 = vpop.f32.mrb[0].mxu0
      %v1070 = vadd.f32 0.0, %v1069
      %v1071 = vpop.f32.mrb[0].mxu0
      %1072 = vmatprep.mubr.f32.mxu0 0.0
      %1073 = vmatmul.mubr.f32.gmra.mrb[0].mxu0 %v431
      %v1074 = vpop.f32.mrb[0].mxu0
      %v1075 = vadd.f32 0.0, %v1074
      %v1076 = vpop.f32.mrb[0].mxu0
      %1077 = vmatprep.mubr.f32.mxu0 0.0
      %1078 = vmatmul.mubr.f32.gmra.mrb[0].mxu0 %v434
      %v1079 = vpop.f32.mrb[0].mxu0
      %v1080 = vadd.f32 0.0, %v1079
      %v1081 = vpop.f32.mrb[0].mxu0
      %1082 = vmatprep.mubr.f32.mxu0 0.0
      %1083 = vmatmul.mubr.f32.gmra.mrb[0].mxu0 %v437
      %v1084 = vpop.f32.mrb[0].mxu0
      %v1085 = vadd.f32 0.0, %v1084
      %v1086 = vpop.f32.mrb[0].mxu0
      %1087 = vmatprep.mubr.f32.mxu0 0.0
      %1088 = vmatmul.mubr.f32.gmra.mrb[0].mxu0 %v440
      %v1089 = vpop.f32.mrb[0].mxu0
      %v1090 = vadd.f32 0.0, %v1089
      %v1091 = vpop.f32.mrb[0].mxu0
      %1092 = vmatprep.mubr.f32.mxu0 0.0
      %1093 = vmatmul.mubr.f32.gmra.mrb[0].mxu0 %v443
      %v1094 = vpop.f32.mrb[0].mxu0
      %v1095 = vadd.f32 0.0, %v1094
      %v1096 = vpop.f32.mrb[0].mxu0
      %1097 = vmatprep.mubr.f32.mxu0 0.0
      %1098 = vmatmul.mubr.f32.gmra.mrb[0].mxu0 %v446
      %v1099 = vpop.f32.mrb[0].mxu0
      %v1100 = vadd.f32 0.0, %v1099
      %v1101 = vpop.f32.mrb[0].mxu0
      %1102 = vmatprep.mubr.f32.mxu0 0.0
      %1103 = vmatmul.mubr.f32.gmra.mrb[0].mxu0 %v449
      %v1104 = vpop.f32.mrb[0].mxu0
      %v1105 = vadd.f32 0.0, %v1104
      %v1106 = vpop.f32.mrb[0].mxu0
      %1107 = vmatprep.mubr.f32.mxu0 0.0
      %1108 = vmatmul.mubr.f32.gmra.mrb[0].mxu0 %v452
      %v1109 = vpop.f32.mrb[0].mxu0
      %v1110 = vadd.f32 0.0, %v1109
      %v1111 = vpop.f32.mrb[0].mxu0
      %1112 = vmatprep.mubr.f32.mxu0 0.0
      %1113 = vmatmul.mubr.f32.gmra.mrb[0].mxu0 %v455
      %v1114 = vpop.f32.mrb[0].mxu0
      %v1115 = vadd.f32 0.0, %v1114
      %v1116 = vpop.f32.mrb[0].mxu0
      %1117 = vmatprep.mubr.f32.mxu0 0.0
      %1118 = vmatmul.mubr.f32.gmra.mrb[0].mxu0 %v458
      %v1119 = vpop.f32.mrb[0].mxu0
      %v1120 = vadd.f32 0.0, %v1119
      %v1121 = vpop.f32.mrb[0].mxu0
      %1122 = vmatprep.mubr.f32.mxu0 0.0
      %1123 = vmatmul.mubr.f32.gmra.mrb[0].mxu0 %v461
      %v1124 = vpop.f32.mrb[0].mxu0
      %v1125 = vadd.f32 0.0, %v1124
      %v1126 = vpop.f32.mrb[0].mxu0
      %1127 = vmatprep.mubr.f32.mxu0 0.0
      %1128 = vmatmul.mubr.f32.gmra.mrb[0].mxu0 %v464
      %v1129 = vpop.f32.mrb[0].mxu0
      %v1130 = vadd.f32 0.0, %v1129
      %v1131 = vpop.f32.mrb[0].mxu0
      %1132 = vmatprep.mubr.f32.mxu0 0.0
      %1133 = vmatmul.mubr.f32.gmra.mrb[0].mxu0 %v467
      %v1134 = vpop.f32.mrb[0].mxu0
      %v1135 = vadd.f32 0.0, %v1134
      %v1136 = vpop.f32.mrb[0].mxu0
      %1137 = vmatprep.mubr.f32.mxu0 0.0
      %1138 = vmatmul.mubr.f32.gmra.mrb[0].mxu0 %v470
      %v1139 = vpop.f32.mrb[0].mxu0
      %v1140 = vadd.f32 0.0, %v1139
      %v1141 = vpop.f32.mrb[0].mxu0
      %1142 = vmatprep.mubr.f32.mxu0 0.0
      %1143 = vmatmul.mubr.f32.gmra.mrb[0].mxu0 %v473
      %v1144 = vpop.f32.mrb[0].mxu0
      %v1145 = vadd.f32 0.0, %v1144
      %v1146 = vpop.f32.mrb[0].mxu0
      %1147 = vmatprep.mubr.f32.mxu0 0.0
      %1148 = vmatmul.mubr.f32.gmra.mrb[0].mxu0 %v476
      %v1149 = vpop.f32.mrb[0].mxu0
      %v1150 = vadd.f32 0.0, %v1149
      %v1151 = vpop.f32.mrb[0].mxu0
      %1152 = vmatprep.mubr.f32.mxu0 0.0
      %1153 = vmatmul.mubr.f32.gmra.mrb[0].mxu0 %v479
      %v1154 = vpop.f32.mrb[0].mxu0
      %v1155 = vadd.f32 0.0, %v1154
      %v1156 = vpop.f32.mrb[0].mxu0
      %1157 = vmatprep.mubr.f32.mxu0 0.0
      %1158 = vmatmul.mubr.f32.gmra.mrb[0].mxu0 %v482
      %v1159 = vpop.f32.mrb[0].mxu0
      %v1160 = vadd.f32 0.0, %v1159
      %v1161 = vpop.f32.mrb[0].mxu0
      %1162 = vmatprep.mubr.f32.mxu0 0.0
      %1163 = vmatmul.mubr.f32.gmra.mrb[0].mxu0 %v485
      %v1164 = vpop.f32.mrb[0].mxu0
      %v1165 = vadd.f32 0.0, %v1164
      %v1166 = vpop.f32.mrb[0].mxu0
      %1167 = vmatprep.mubr.f32.mxu0 0.0
      %1168 = vmatmul.mubr.f32.gmra.mrb[0].mxu0 %v488
      %v1169 = vpop.f32.mrb[0].mxu0
      %v1170 = vadd.f32 0.0, %v1169
      %v1171 = vpop.f32.mrb[0].mxu0
      %1172 = vmatprep.mubr.f32.mxu0 0.0
      %1173 = vmatmul.mubr.f32.gmra.mrb[0].mxu0 %v491
      %v1174 = vpop.f32.mrb[0].mxu0
      %v1175 = vadd.f32 0.0, %v1174
      %v1176 = vpop.f32.mrb[0].mxu0
      %1177 = vmatprep.mubr.f32.mxu0 0.0
      %1178 = vmatmul.mubr.f32.gmra.mrb[0].mxu0 %v494
      %v1179 = vpop.f32.mrb[0].mxu0
      %v1180 = vadd.f32 0.0, %v1179
      %v1181 = vpop.f32.mrb[0].mxu0
      %1182 = vmatprep.mubr.f32.mxu0 0.0
      %1183 = vmatmul.mubr.f32.gmra.mrb[0].mxu0 %v497
      %v1184 = vpop.f32.mrb[0].mxu0
      %v1185 = vadd.f32 0.0, %v1184
      %v1186 = vpop.f32.mrb[0].mxu0
      %1187 = vmatprep.mubr.f32.mxu0 0.0
      %1188 = vmatmul.mubr.f32.gmra.mrb[0].mxu0 %v965
      %v1189 = vpop.f32.mrb[0].mxu0
      %v1190 = vadd.f32 0.0, %v1189
      %v1191 = vpop.f32.mrb[0].mxu0
      %1192 = vmatprep.mubr.f32.mxu0 0.0
      %1193 = vmatmul.mubr.f32.gmra.mrb[0].mxu0 %v968
      %v1194 = vpop.f32.mrb[0].mxu0
      %v1195 = vadd.f32 0.0, %v1194
      %v1196 = vpop.f32.mrb[0].mxu0
      %1197 = vdwg.mxu0
      %v1198 = vadd.f32 %v804, %v1040
      %v1199 = vadd.f32 %v809, %v1045
      %v1200 = vadd.f32 %v814, %v1050
      %v1201 = vadd.f32 %v819, %v1055
      %v1202 = vadd.f32 %v824, %v1060
      %v1203 = vadd.f32 %v829, %v1065
      %v1204 = vadd.f32 %v834, %v1070
      %v1205 = vadd.f32 %v839, %v1075
      %v1206 = vadd.f32 %v844, %v1080
      %v1207 = vadd.f32 %v849, %v1085
      %v1208 = vadd.f32 %v854, %v1090
      %v1209 = vadd.f32 %v859, %v1095
      %v1210 = vadd.f32 %v864, %v1100
      %v1211 = vadd.f32 %v869, %v1105
      %v1212 = vadd.f32 %v874, %v1110
      %v1213 = vadd.f32 %v879, %v1115
      %v1214 = vadd.f32 %v884, %v1120
      %v1215 = vadd.f32 %v889, %v1125
      %v1216 = vadd.f32 %v894, %v1130
      %v1217 = vadd.f32 %v899, %v1135
      %v1218 = vadd.f32 %v904, %v1140
      %v1219 = vadd.f32 %v909, %v1145
      %v1220 = vadd.f32 %v914, %v1150
      %v1221 = vadd.f32 %v919, %v1155
      %v1222 = vadd.f32 %v924, %v1160
      %v1223 = vadd.f32 %v929, %v1165
      %v1224 = vadd.f32 %v934, %v1170
      %v1225 = vadd.f32 %v939, %v1175
      %v1226 = vadd.f32 %v944, %v1180
      %v1227 = vadd.f32 %v949, %v1185
      %v1228 = vadd.f32 %v954, %v1190
      %v1229 = vadd.f32 %v959, %v1195
      %vm1248 = vcmask 1046528
      %v1249 = vrot.slane %v346, 1
      %v1250 = vrot.slane %v347, 1
      %v1251 = vsel %vm1248, %v1249, %v1250
      %v1252 = vrot.slane %v348, 1
      %v1253 = vsel %vm1248, %v1250, %v1252
      %v1254 = vrot.slane %v349, 1
      %v1255 = vrot.slane %v350, 1
      %v1256 = vsel %vm1248, %v1254, %v1255
      %v1257 = vrot.slane %v351, 1
      %v1258 = vsel %vm1248, %v1255, %v1257
      %v1259 = vrot.slane %v352, 1
      %v1260 = vrot.slane %v353, 1
      %v1261 = vsel %vm1248, %v1259, %v1260
      %v1262 = vrot.slane %v354, 1
      %v1263 = vsel %vm1248, %v1260, %v1262
      %v1264 = vrot.slane %v355, 1
      %v1265 = vrot.slane %v356, 1
      %v1266 = vsel %vm1248, %v1264, %v1265
      %v1267 = vrot.slane %v357, 1
      %v1268 = vsel %vm1248, %v1265, %v1267
      %v1269 = vrot.slane %v358, 1
      %v1270 = vrot.slane %v359, 1
      %v1271 = vsel %vm1248, %v1269, %v1270
      %v1272 = vrot.slane %v360, 1
      %v1273 = vsel %vm1248, %v1270, %v1272
      %v1274 = vrot.slane %v361, 1
      %v1275 = vrot.slane %v362, 1
      %v1276 = vsel %vm1248, %v1274, %v1275
      %v1277 = vrot.slane %v363, 1
      %v1278 = vsel %vm1248, %v1275, %v1277
      %v1279 = vrot.slane %v364, 1
      %v1280 = vrot.slane %v365, 1
      %v1281 = vsel %vm1248, %v1279, %v1280
      %v1282 = vrot.slane %v366, 1
      %v1283 = vsel %vm1248, %v1280, %v1282
      %v1284 = vrot.slane %v367, 1
      %v1285 = vrot.slane %v368, 1
      %v1286 = vsel %vm1248, %v1284, %v1285
      %v1287 = vrot.slane %v369, 1
      %v1288 = vsel %vm1248, %v1285, %v1287
      %v1289 = vrot.slane %v370, 1
      %v1290 = vrot.slane %v371, 1
      %v1291 = vsel %vm1248, %v1289, %v1290
      %v1292 = vrot.slane %v372, 1
      %v1293 = vsel %vm1248, %v1290, %v1292
      %v1294 = vrot.slane %v373, 1
      %v1295 = vrot.slane %v374, 1
      %v1296 = vsel %vm1248, %v1294, %v1295
      %v1297 = vrot.slane %v375, 1
      %v1298 = vsel %vm1248, %v1295, %v1297
      %v1299 = vrot.slane %v376, 1
      %v1300 = vrot.slane %v377, 1
      %v1301 = vsel %vm1248, %v1299, %v1300
      %v1302 = vrot.slane %v378, 1
      %v1303 = vsel %vm1248, %v1300, %v1302
      %v1304 = vrot.slane %v379, 1
      %v1305 = vrot.slane %v380, 1
      %v1306 = vsel %vm1248, %v1304, %v1305
      %v1307 = vrot.slane %v381, 1
      %v1308 = vsel %vm1248, %v1305, %v1307
      %v1309 = vrot.slane %v382, 1
      %v1310 = vrot.slane %v383, 1
      %v1311 = vsel %vm1248, %v1309, %v1310
      %v1312 = vrot.slane %v384, 1
      %v1313 = vsel %vm1248, %v1310, %v1312
      %v1314 = vrot.slane %v385, 1
      %v1315 = vrot.slane %v386, 1
      %v1316 = vsel %vm1248, %v1314, %v1315
      %v1317 = vrot.slane %v387, 1
      %v1318 = vsel %vm1248, %v1315, %v1317
      %v1319 = vrot.slane %v388, 1
      %v1320 = vrot.slane %v389, 1
      %v1321 = vsel %vm1248, %v1319, %v1320
      %v1322 = vrot.slane %v390, 1
      %v1323 = vsel %vm1248, %v1320, %v1322
      %v1324 = vrot.slane %v391, 1
      %v1325 = vrot.slane %v392, 1
      %v1326 = vsel %vm1248, %v1324, %v1325
      %v1327 = vrot.slane %v393, 1
      %v1328 = vsel %vm1248, %v1325, %v1327
      %v1329 = vrot.slane %v394, 1
      %v1330 = vrot.slane %v395, 1
      %v1331 = vsel %vm1248, %v1329, %v1330
      %v1332 = vrot.slane %v396, 1
      %v1333 = vsel %vm1248, %v1330, %v1332
      %v1334 = vrot.slane %v397, 1
      %v1335 = vrot.slane %v398, 1
      %v1336 = vsel %vm1248, %v1334, %v1335
      %v1337 = vrot.slane %v399, 1
      %v1338 = vsel %vm1248, %v1335, %v1337
      %s1339 = scalar_lea.vmem %s1, 4
      %v1340 = vld [vmem:[%s1339] sm:$0xf]
      %v1341 = vsel %vm257, %v1251, 0
      %v1343 = vsel %vm257, %v1253, 0
      %v1345 = vsel %vm257, %v1256, 0
      %v1347 = vsel %vm257, %v1258, 0
      %v1349 = vsel %vm257, %v1261, 0
      %v1351 = vsel %vm257, %v1263, 0
      %v1353 = vsel %vm257, %v1266, 0
      %v1355 = vsel %vm257, %v1268, 0
      %v1357 = vsel %vm257, %v1271, 0
      %v1359 = vsel %vm257, %v1273, 0
      %v1361 = vsel %vm257, %v1276, 0
      %v1363 = vsel %vm257, %v1278, 0
      %v1365 = vsel %vm257, %v1281, 0
      %v1367 = vsel %vm257, %v1283, 0
      %v1369 = vsel %vm257, %v1286, 0
      %v1371 = vsel %vm257, %v1288, 0
      %v1373 = vsel %vm257, %v1291, 0
      %v1375 = vsel %vm257, %v1293, 0
      %v1377 = vsel %vm257, %v1296, 0
      %v1379 = vsel %vm257, %v1298, 0
      %v1381 = vsel %vm257, %v1301, 0
      %v1383 = vsel %vm257, %v1303, 0
      %v1385 = vsel %vm257, %v1306, 0
      %v1387 = vsel %vm257, %v1308, 0
      %v1389 = vsel %vm257, %v1311, 0
      %v1391 = vsel %vm257, %v1313, 0
      %v1393 = vsel %vm257, %v1316, 0
      %v1395 = vsel %vm257, %v1318, 0
      %v1397 = vsel %vm257, %v1321, 0
      %v1399 = vsel %vm257, %v1323, 0
      %v1401 = vsel %vm257, %v1326, 0
      %v1403 = vsel %vm257, %v1328, 0
      %v1406 = vsel %vm499, %v1340, 0
      %1408 = vmatprep.subr.mxu0 0.0
      %1409 = vmatpush1.msra.mxu0 %v1406
      %1410 = vmatprep.subr.mxu0 0.0
      %1411 = vmatpush1.msra.mxu0 0.0
      %1412 = vmatprep.subr.mxu0 0.0
      %1413 = vmatpush1.msra.mxu0 0.0
      %1414 = vmatprep.subr.mxu0 0.0
      %1415 = vmatpush1.msra.mxu0 0.0
      %1416 = vmatprep.subr.mxu0 0.0
      %1417 = vmatpush1.msra.mxu0 0.0
      %1418 = vmatprep.subr.mxu0 0.0
      %1419 = vmatpush1.msra.mxu0 0.0
      %1420 = vmatprep.subr.mxu0 0.0
      %1421 = vmatpush1.msra.mxu0 0.0
      %1422 = vmatprep.subr.mxu0 0.0
      %1423 = vmatpush1.msra.mxu0 0.0
      %1424 = vmatprep.subr.mxu0 0.0
      %1425 = vmatpush1.msra.mxu0 0.0
      %1426 = vmatprep.subr.mxu0 0.0
      %1427 = vmatpush1.msra.mxu0 0.0
      %1428 = vmatprep.subr.mxu0 0.0
      %1429 = vmatpush1.msra.mxu0 0.0
      %1430 = vmatprep.subr.mxu0 0.0
      %1431 = vmatpush1.msra.mxu0 0.0
      %1432 = vmatprep.subr.mxu0 0.0
      %1433 = vmatpush1.msra.mxu0 0.0
      %1434 = vmatprep.subr.mxu0 0.0
      %1435 = vmatpush1.msra.mxu0 0.0
      %1436 = vmatprep.subr.mxu0 0.0
      %1437 = vmatpush1.msra.mxu0 0.0
      %1438 = vmatprep.subr.mxu0 0.0
      %1439 = vmatpush1.msra.mxu0 0.0
      %1440 = vmatprep.subr.mxu0 0.0
      %1441 = vmatpush1.msra.mxu0 0.0
      %1442 = vmatprep.subr.mxu0 0.0
      %1443 = vmatpush1.msra.mxu0 0.0
      %1444 = vmatprep.subr.mxu0 0.0
      %1445 = vmatpush1.msra.mxu0 0.0
      %1446 = vmatprep.subr.mxu0 0.0
      %1447 = vmatpush1.msra.mxu0 0.0
      %1448 = vmatprep.subr.mxu0 0.0
      %1449 = vmatpush1.msra.mxu0 0.0
      %1450 = vmatprep.subr.mxu0 0.0
      %1451 = vmatpush1.msra.mxu0 0.0
      %1452 = vmatprep.subr.mxu0 0.0
      %1453 = vmatpush1.msra.mxu0 0.0
      %1454 = vmatprep.subr.mxu0 0.0
      %1455 = vmatpush1.msra.mxu0 0.0
      %1456 = vmatprep.subr.mxu0 0.0
      %1457 = vmatpush1.msra.mxu0 0.0
      %1458 = vmatprep.subr.mxu0 0.0
      %1459 = vmatpush1.msra.mxu0 0.0
      %1460 = vmatprep.subr.mxu0 0.0
      %1461 = vmatpush1.msra.mxu0 0.0
      %1462 = vmatprep.subr.mxu0 0.0
      %1463 = vmatpush1.msra.mxu0 0.0
      %1464 = vmatprep.subr.mxu0 0.0
      %1465 = vmatpush1.msra.mxu0 0.0
      %1466 = vmatprep.subr.mxu0 0.0
      %1467 = vmatpush1.msra.mxu0 0.0
      %1468 = vmatprep.subr.mxu0 0.0
      %1469 = vmatpush1.msra.mxu0 0.0
      %1470 = vmatprep.subr.mxu0 0.0
      %1471 = vmatpush1.msra.mxu0 0.0
      %1472 = vmatprep.mubr.f32.mxu0 0.0
      %1473 = vmatmul.mubr.f32.gmra.mrb[0].mxu0 %v1341
      %v1474 = vpop.f32.mrb[0].mxu0
      %v1475 = vadd.f32 0.0, %v1474
      %v1476 = vpop.f32.mrb[0].mxu0
      %1477 = vmatprep.mubr.f32.mxu0 0.0
      %1478 = vmatmul.mubr.f32.gmra.mrb[0].mxu0 %v1343
      %v1479 = vpop.f32.mrb[0].mxu0
      %v1480 = vadd.f32 0.0, %v1479
      %v1481 = vpop.f32.mrb[0].mxu0
      %1482 = vmatprep.mubr.f32.mxu0 0.0
      %1483 = vmatmul.mubr.f32.gmra.mrb[0].mxu0 %v1345
      %v1484 = vpop.f32.mrb[0].mxu0
      %v1485 = vadd.f32 0.0, %v1484
      %v1486 = vpop.f32.mrb[0].mxu0
      %1487 = vmatprep.mubr.f32.mxu0 0.0
      %1488 = vmatmul.mubr.f32.gmra.mrb[0].mxu0 %v1347
      %v1489 = vpop.f32.mrb[0].mxu0
      %v1490 = vadd.f32 0.0, %v1489
      %v1491 = vpop.f32.mrb[0].mxu0
      %1492 = vmatprep.mubr.f32.mxu0 0.0
      %1493 = vmatmul.mubr.f32.gmra.mrb[0].mxu0 %v1349
      %v1494 = vpop.f32.mrb[0].mxu0
      %v1495 = vadd.f32 0.0, %v1494
      %v1496 = vpop.f32.mrb[0].mxu0
      %1497 = vmatprep.mubr.f32.mxu0 0.0
      %1498 = vmatmul.mubr.f32.gmra.mrb[0].mxu0 %v1351
      %v1499 = vpop.f32.mrb[0].mxu0
      %v1500 = vadd.f32 0.0, %v1499
      %v1501 = vpop.f32.mrb[0].mxu0
      %1502 = vmatprep.mubr.f32.mxu0 0.0
      %1503 = vmatmul.mubr.f32.gmra.mrb[0].mxu0 %v1353
      %v1504 = vpop.f32.mrb[0].mxu0
      %v1505 = vadd.f32 0.0, %v1504
      %v1506 = vpop.f32.mrb[0].mxu0
      %1507 = vmatprep.mubr.f32.mxu0 0.0
      %1508 = vmatmul.mubr.f32.gmra.mrb[0].mxu0 %v1355
      %v1509 = vpop.f32.mrb[0].mxu0
      %v1510 = vadd.f32 0.0, %v1509
      %v1511 = vpop.f32.mrb[0].mxu0
      %1512 = vmatprep.mubr.f32.mxu0 0.0
      %1513 = vmatmul.mubr.f32.gmra.mrb[0].mxu0 %v1357
      %v1514 = vpop.f32.mrb[0].mxu0
      %v1515 = vadd.f32 0.0, %v1514
      %v1516 = vpop.f32.mrb[0].mxu0
      %1517 = vmatprep.mubr.f32.mxu0 0.0
      %1518 = vmatmul.mubr.f32.gmra.mrb[0].mxu0 %v1359
      %v1519 = vpop.f32.mrb[0].mxu0
      %v1520 = vadd.f32 0.0, %v1519
      %v1521 = vpop.f32.mrb[0].mxu0
      %1522 = vmatprep.mubr.f32.mxu0 0.0
      %1523 = vmatmul.mubr.f32.gmra.mrb[0].mxu0 %v1361
      %v1524 = vpop.f32.mrb[0].mxu0
      %v1525 = vadd.f32 0.0, %v1524
      %v1526 = vpop.f32.mrb[0].mxu0
      %1527 = vmatprep.mubr.f32.mxu0 0.0
      %1528 = vmatmul.mubr.f32.gmra.mrb[0].mxu0 %v1363
      %v1529 = vpop.f32.mrb[0].mxu0
      %v1530 = vadd.f32 0.0, %v1529
      %v1531 = vpop.f32.mrb[0].mxu0
      %1532 = vmatprep.mubr.f32.mxu0 0.0
      %1533 = vmatmul.mubr.f32.gmra.mrb[0].mxu0 %v1365
      %v1534 = vpop.f32.mrb[0].mxu0
      %v1535 = vadd.f32 0.0, %v1534
      %v1536 = vpop.f32.mrb[0].mxu0
      %1537 = vmatprep.mubr.f32.mxu0 0.0
      %1538 = vmatmul.mubr.f32.gmra.mrb[0].mxu0 %v1367
      %v1539 = vpop.f32.mrb[0].mxu0
      %v1540 = vadd.f32 0.0, %v1539
      %v1541 = vpop.f32.mrb[0].mxu0
      %1542 = vmatprep.mubr.f32.mxu0 0.0
      %1543 = vmatmul.mubr.f32.gmra.mrb[0].mxu0 %v1369
      %v1544 = vpop.f32.mrb[0].mxu0
      %v1545 = vadd.f32 0.0, %v1544
      %v1546 = vpop.f32.mrb[0].mxu0
      %1547 = vmatprep.mubr.f32.mxu0 0.0
      %1548 = vmatmul.mubr.f32.gmra.mrb[0].mxu0 %v1371
      %v1549 = vpop.f32.mrb[0].mxu0
      %v1550 = vadd.f32 0.0, %v1549
      %v1551 = vpop.f32.mrb[0].mxu0
      %1552 = vmatprep.mubr.f32.mxu0 0.0
      %1553 = vmatmul.mubr.f32.gmra.mrb[0].mxu0 %v1373
      %v1554 = vpop.f32.mrb[0].mxu0
      %v1555 = vadd.f32 0.0, %v1554
      %v1556 = vpop.f32.mrb[0].mxu0
      %1557 = vmatprep.mubr.f32.mxu0 0.0
      %1558 = vmatmul.mubr.f32.gmra.mrb[0].mxu0 %v1375
      %v1559 = vpop.f32.mrb[0].mxu0
      %v1560 = vadd.f32 0.0, %v1559
      %v1561 = vpop.f32.mrb[0].mxu0
      %1562 = vmatprep.mubr.f32.mxu0 0.0
      %1563 = vmatmul.mubr.f32.gmra.mrb[0].mxu0 %v1377
      %v1564 = vpop.f32.mrb[0].mxu0
      %v1565 = vadd.f32 0.0, %v1564
      %v1566 = vpop.f32.mrb[0].mxu0
      %1567 = vmatprep.mubr.f32.mxu0 0.0
      %1568 = vmatmul.mubr.f32.gmra.mrb[0].mxu0 %v1379
      %v1569 = vpop.f32.mrb[0].mxu0
      %v1570 = vadd.f32 0.0, %v1569
      %v1571 = vpop.f32.mrb[0].mxu0
      %1572 = vmatprep.mubr.f32.mxu0 0.0
      %1573 = vmatmul.mubr.f32.gmra.mrb[0].mxu0 %v1381
      %v1574 = vpop.f32.mrb[0].mxu0
      %v1575 = vadd.f32 0.0, %v1574
      %v1576 = vpop.f32.mrb[0].mxu0
      %1577 = vmatprep.mubr.f32.mxu0 0.0
      %1578 = vmatmul.mubr.f32.gmra.mrb[0].mxu0 %v1383
      %v1579 = vpop.f32.mrb[0].mxu0
      %v1580 = vadd.f32 0.0, %v1579
      %v1581 = vpop.f32.mrb[0].mxu0
      %1582 = vmatprep.mubr.f32.mxu0 0.0
      %1583 = vmatmul.mubr.f32.gmra.mrb[0].mxu0 %v1385
      %v1584 = vpop.f32.mrb[0].mxu0
      %v1585 = vadd.f32 0.0, %v1584
      %v1586 = vpop.f32.mrb[0].mxu0
      %1587 = vmatprep.mubr.f32.mxu0 0.0
      %1588 = vmatmul.mubr.f32.gmra.mrb[0].mxu0 %v1387
      %v1589 = vpop.f32.mrb[0].mxu0
      %v1590 = vadd.f32 0.0, %v1589
      %v1591 = vpop.f32.mrb[0].mxu0
      %1592 = vmatprep.mubr.f32.mxu0 0.0
      %1593 = vmatmul.mubr.f32.gmra.mrb[0].mxu0 %v1389
      %v1594 = vpop.f32.mrb[0].mxu0
      %v1595 = vadd.f32 0.0, %v1594
      %v1596 = vpop.f32.mrb[0].mxu0
      %1597 = vmatprep.mubr.f32.mxu0 0.0
      %1598 = vmatmul.mubr.f32.gmra.mrb[0].mxu0 %v1391
      %v1599 = vpop.f32.mrb[0].mxu0
      %v1600 = vadd.f32 0.0, %v1599
      %v1601 = vpop.f32.mrb[0].mxu0
      %1602 = vmatprep.mubr.f32.mxu0 0.0
      %1603 = vmatmul.mubr.f32.gmra.mrb[0].mxu0 %v1393
      %v1604 = vpop.f32.mrb[0].mxu0
      %v1605 = vadd.f32 0.0, %v1604
      %v1606 = vpop.f32.mrb[0].mxu0
      %1607 = vmatprep.mubr.f32.mxu0 0.0
      %1608 = vmatmul.mubr.f32.gmra.mrb[0].mxu0 %v1395
      %v1609 = vpop.f32.mrb[0].mxu0
      %v1610 = vadd.f32 0.0, %v1609
      %v1611 = vpop.f32.mrb[0].mxu0
      %1612 = vmatprep.mubr.f32.mxu0 0.0
      %1613 = vmatmul.mubr.f32.gmra.mrb[0].mxu0 %v1397
      %v1614 = vpop.f32.mrb[0].mxu0
      %v1615 = vadd.f32 0.0, %v1614
      %v1616 = vpop.f32.mrb[0].mxu0
      %1617 = vmatprep.mubr.f32.mxu0 0.0
      %1618 = vmatmul.mubr.f32.gmra.mrb[0].mxu0 %v1399
      %v1619 = vpop.f32.mrb[0].mxu0
      %v1620 = vadd.f32 0.0, %v1619
      %v1621 = vpop.f32.mrb[0].mxu0
      %1622 = vmatprep.mubr.f32.mxu0 0.0
      %1623 = vmatmul.mubr.f32.gmra.mrb[0].mxu0 %v1401
      %v1624 = vpop.f32.mrb[0].mxu0
      %v1625 = vadd.f32 0.0, %v1624
      %v1626 = vpop.f32.mrb[0].mxu0
      %1627 = vmatprep.mubr.f32.mxu0 0.0
      %1628 = vmatmul.mubr.f32.gmra.mrb[0].mxu0 %v1403
      %v1629 = vpop.f32.mrb[0].mxu0
      %v1630 = vadd.f32 0.0, %v1629
      %v1631 = vpop.f32.mrb[0].mxu0
      %1632 = vdwg.mxu0
      %v1633 = vadd.f32 %v1198, %v1475
      %v1634 = vadd.f32 %v1199, %v1480
      %v1635 = vadd.f32 %v1200, %v1485
      %v1636 = vadd.f32 %v1201, %v1490
      %v1637 = vadd.f32 %v1202, %v1495
      %v1638 = vadd.f32 %v1203, %v1500
      %v1639 = vadd.f32 %v1204, %v1505
      %v1640 = vadd.f32 %v1205, %v1510
      %v1641 = vadd.f32 %v1206, %v1515
      %v1642 = vadd.f32 %v1207, %v1520
      %v1643 = vadd.f32 %v1208, %v1525
      %v1644 = vadd.f32 %v1209, %v1530
      %v1645 = vadd.f32 %v1210, %v1535
      %v1646 = vadd.f32 %v1211, %v1540
      %v1647 = vadd.f32 %v1212, %v1545
      %v1648 = vadd.f32 %v1213, %v1550
      %v1649 = vadd.f32 %v1214, %v1555
      %v1650 = vadd.f32 %v1215, %v1560
      %v1651 = vadd.f32 %v1216, %v1565
      %v1652 = vadd.f32 %v1217, %v1570
      %v1653 = vadd.f32 %v1218, %v1575
      %v1654 = vadd.f32 %v1219, %v1580
      %v1655 = vadd.f32 %v1220, %v1585
      %v1656 = vadd.f32 %v1221, %v1590
      %v1657 = vadd.f32 %v1222, %v1595
      %v1658 = vadd.f32 %v1223, %v1600
      %v1659 = vadd.f32 %v1224, %v1605
      %v1660 = vadd.f32 %v1225, %v1610
      %v1661 = vadd.f32 %v1226, %v1615
      %v1662 = vadd.f32 %v1227, %v1620
      %v1663 = vadd.f32 %v1228, %v1625
      %v1664 = vadd.f32 %v1229, %v1630
      %s1665 = scalar_lea.vmem %s1, 16
      %v1666 = vld [vmem:[%s1665] sm:$0xf]
      %v1667 = vsel %vm257, %v1331, 0
      %v1669 = vsel %vm257, %v1333, 0
      %v1672 = vsel %vm499, %v1666, 0
      %1674 = vmatprep.subr.mxu0 0.0
      %1675 = vmatpush1.msra.mxu0 %v1672
      %1676 = vmatprep.subr.mxu0 0.0
      %1677 = vmatpush1.msra.mxu0 0.0
      %1678 = vmatprep.subr.mxu0 0.0
      %1679 = vmatpush1.msra.mxu0 0.0
      %1680 = vmatprep.subr.mxu0 0.0
      %1681 = vmatpush1.msra.mxu0 0.0
      %1682 = vmatprep.subr.mxu0 0.0
      %1683 = vmatpush1.msra.mxu0 0.0
      %1684 = vmatprep.subr.mxu0 0.0
      %1685 = vmatpush1.msra.mxu0 0.0
      %1686 = vmatprep.subr.mxu0 0.0
      %1687 = vmatpush1.msra.mxu0 0.0
      %1688 = vmatprep.subr.mxu0 0.0
      %1689 = vmatpush1.msra.mxu0 0.0
      %1690 = vmatprep.subr.mxu0 0.0
      %1691 = vmatpush1.msra.mxu0 0.0
      %1692 = vmatprep.subr.mxu0 0.0
      %1693 = vmatpush1.msra.mxu0 0.0
      %1694 = vmatprep.subr.mxu0 0.0
      %1695 = vmatpush1.msra.mxu0 0.0
      %1696 = vmatprep.subr.mxu0 0.0
      %1697 = vmatpush1.msra.mxu0 0.0
      %1698 = vmatprep.subr.mxu0 0.0
      %1699 = vmatpush1.msra.mxu0 0.0
      %1700 = vmatprep.subr.mxu0 0.0
      %1701 = vmatpush1.msra.mxu0 0.0
      %1702 = vmatprep.subr.mxu0 0.0
      %1703 = vmatpush1.msra.mxu0 0.0
      %1704 = vmatprep.subr.mxu0 0.0
      %1705 = vmatpush1.msra.mxu0 0.0
      %1706 = vmatprep.subr.mxu0 0.0
      %1707 = vmatpush1.msra.mxu0 0.0
      %1708 = vmatprep.subr.mxu0 0.0
      %1709 = vmatpush1.msra.mxu0 0.0
      %1710 = vmatprep.subr.mxu0 0.0
      %1711 = vmatpush1.msra.mxu0 0.0
      %1712 = vmatprep.subr.mxu0 0.0
      %1713 = vmatpush1.msra.mxu0 0.0
      %1714 = vmatprep.subr.mxu0 0.0
      %1715 = vmatpush1.msra.mxu0 0.0
      %1716 = vmatprep.subr.mxu0 0.0
      %1717 = vmatpush1.msra.mxu0 0.0
      %1718 = vmatprep.subr.mxu0 0.0
      %1719 = vmatpush1.msra.mxu0 0.0
      %1720 = vmatprep.subr.mxu0 0.0
      %1721 = vmatpush1.msra.mxu0 0.0
      %1722 = vmatprep.subr.mxu0 0.0
      %1723 = vmatpush1.msra.mxu0 0.0
      %1724 = vmatprep.subr.mxu0 0.0
      %1725 = vmatpush1.msra.mxu0 0.0
      %1726 = vmatprep.subr.mxu0 0.0
      %1727 = vmatpush1.msra.mxu0 0.0
      %1728 = vmatprep.subr.mxu0 0.0
      %1729 = vmatpush1.msra.mxu0 0.0
      %1730 = vmatprep.subr.mxu0 0.0
      %1731 = vmatpush1.msra.mxu0 0.0
      %1732 = vmatprep.subr.mxu0 0.0
      %1733 = vmatpush1.msra.mxu0 0.0
      %1734 = vmatprep.subr.mxu0 0.0
      %1735 = vmatpush1.msra.mxu0 0.0
      %1736 = vmatprep.subr.mxu0 0.0
      %1737 = vmatpush1.msra.mxu0 0.0
      %1738 = vmatprep.mubr.f32.mxu0 0.0
      %1739 = vmatmul.mubr.f32.gmra.mrb[0].mxu0 %v1345
      %v1740 = vpop.f32.mrb[0].mxu0
      %v1741 = vadd.f32 0.0, %v1740
      %v1742 = vpop.f32.mrb[0].mxu0
      %1743 = vmatprep.mubr.f32.mxu0 0.0
      %1744 = vmatmul.mubr.f32.gmra.mrb[0].mxu0 %v1347
      %v1745 = vpop.f32.mrb[0].mxu0
      %v1746 = vadd.f32 0.0, %v1745
      %v1747 = vpop.f32.mrb[0].mxu0
      %1748 = vmatprep.mubr.f32.mxu0 0.0
      %1749 = vmatmul.mubr.f32.gmra.mrb[0].mxu0 %v1349
      %v1750 = vpop.f32.mrb[0].mxu0
      %v1751 = vadd.f32 0.0, %v1750
      %v1752 = vpop.f32.mrb[0].mxu0
      %1753 = vmatprep.mubr.f32.mxu0 0.0
      %1754 = vmatmul.mubr.f32.gmra.mrb[0].mxu0 %v1351
      %v1755 = vpop.f32.mrb[0].mxu0
      %v1756 = vadd.f32 0.0, %v1755
      %v1757 = vpop.f32.mrb[0].mxu0
      %1758 = vmatprep.mubr.f32.mxu0 0.0
      %1759 = vmatmul.mubr.f32.gmra.mrb[0].mxu0 %v1353
      %v1760 = vpop.f32.mrb[0].mxu0
      %v1761 = vadd.f32 0.0, %v1760
      %v1762 = vpop.f32.mrb[0].mxu0
      %1763 = vmatprep.mubr.f32.mxu0 0.0
      %1764 = vmatmul.mubr.f32.gmra.mrb[0].mxu0 %v1355
      %v1765 = vpop.f32.mrb[0].mxu0
      %v1766 = vadd.f32 0.0, %v1765
      %v1767 = vpop.f32.mrb[0].mxu0
      %1768 = vmatprep.mubr.f32.mxu0 0.0
      %1769 = vmatmul.mubr.f32.gmra.mrb[0].mxu0 %v1357
      %v1770 = vpop.f32.mrb[0].mxu0
      %v1771 = vadd.f32 0.0, %v1770
      %v1772 = vpop.f32.mrb[0].mxu0
      %1773 = vmatprep.mubr.f32.mxu0 0.0
      %1774 = vmatmul.mubr.f32.gmra.mrb[0].mxu0 %v1359
      %v1775 = vpop.f32.mrb[0].mxu0
      %v1776 = vadd.f32 0.0, %v1775
      %v1777 = vpop.f32.mrb[0].mxu0
      %1778 = vmatprep.mubr.f32.mxu0 0.0
      %1779 = vmatmul.mubr.f32.gmra.mrb[0].mxu0 %v1361
      %v1780 = vpop.f32.mrb[0].mxu0
      %v1781 = vadd.f32 0.0, %v1780
      %v1782 = vpop.f32.mrb[0].mxu0
      %1783 = vmatprep.mubr.f32.mxu0 0.0
      %1784 = vmatmul.mubr.f32.gmra.mrb[0].mxu0 %v1363
      %v1785 = vpop.f32.mrb[0].mxu0
      %v1786 = vadd.f32 0.0, %v1785
      %v1787 = vpop.f32.mrb[0].mxu0
      %1788 = vmatprep.mubr.f32.mxu0 0.0
      %1789 = vmatmul.mubr.f32.gmra.mrb[0].mxu0 %v1365
      %v1790 = vpop.f32.mrb[0].mxu0
      %v1791 = vadd.f32 0.0, %v1790
      %v1792 = vpop.f32.mrb[0].mxu0
      %1793 = vmatprep.mubr.f32.mxu0 0.0
      %1794 = vmatmul.mubr.f32.gmra.mrb[0].mxu0 %v1367
      %v1795 = vpop.f32.mrb[0].mxu0
      %v1796 = vadd.f32 0.0, %v1795
      %v1797 = vpop.f32.mrb[0].mxu0
      %1798 = vmatprep.mubr.f32.mxu0 0.0
      %1799 = vmatmul.mubr.f32.gmra.mrb[0].mxu0 %v1369
      %v1800 = vpop.f32.mrb[0].mxu0
      %v1801 = vadd.f32 0.0, %v1800
      %v1802 = vpop.f32.mrb[0].mxu0
      %1803 = vmatprep.mubr.f32.mxu0 0.0
      %1804 = vmatmul.mubr.f32.gmra.mrb[0].mxu0 %v1371
      %v1805 = vpop.f32.mrb[0].mxu0
      %v1806 = vadd.f32 0.0, %v1805
      %v1807 = vpop.f32.mrb[0].mxu0
      %1808 = vmatprep.mubr.f32.mxu0 0.0
      %1809 = vmatmul.mubr.f32.gmra.mrb[0].mxu0 %v1373
      %v1810 = vpop.f32.mrb[0].mxu0
      %v1811 = vadd.f32 0.0, %v1810
      %v1812 = vpop.f32.mrb[0].mxu0
      %1813 = vmatprep.mubr.f32.mxu0 0.0
      %1814 = vmatmul.mubr.f32.gmra.mrb[0].mxu0 %v1375
      %v1815 = vpop.f32.mrb[0].mxu0
      %v1816 = vadd.f32 0.0, %v1815
      %v1817 = vpop.f32.mrb[0].mxu0
      %1818 = vmatprep.mubr.f32.mxu0 0.0
      %1819 = vmatmul.mubr.f32.gmra.mrb[0].mxu0 %v1377
      %v1820 = vpop.f32.mrb[0].mxu0
      %v1821 = vadd.f32 0.0, %v1820
      %v1822 = vpop.f32.mrb[0].mxu0
      %1823 = vmatprep.mubr.f32.mxu0 0.0
      %1824 = vmatmul.mubr.f32.gmra.mrb[0].mxu0 %v1379
      %v1825 = vpop.f32.mrb[0].mxu0
      %v1826 = vadd.f32 0.0, %v1825
      %v1827 = vpop.f32.mrb[0].mxu0
      %1828 = vmatprep.mubr.f32.mxu0 0.0
      %1829 = vmatmul.mubr.f32.gmra.mrb[0].mxu0 %v1381
      %v1830 = vpop.f32.mrb[0].mxu0
      %v1831 = vadd.f32 0.0, %v1830
      %v1832 = vpop.f32.mrb[0].mxu0
      %1833 = vmatprep.mubr.f32.mxu0 0.0
      %1834 = vmatmul.mubr.f32.gmra.mrb[0].mxu0 %v1383
      %v1835 = vpop.f32.mrb[0].mxu0
      %v1836 = vadd.f32 0.0, %v1835
      %v1837 = vpop.f32.mrb[0].mxu0
      %1838 = vmatprep.mubr.f32.mxu0 0.0
      %1839 = vmatmul.mubr.f32.gmra.mrb[0].mxu0 %v1385
      %v1840 = vpop.f32.mrb[0].mxu0
      %v1841 = vadd.f32 0.0, %v1840
      %v1842 = vpop.f32.mrb[0].mxu0
      %1843 = vmatprep.mubr.f32.mxu0 0.0
      %1844 = vmatmul.mubr.f32.gmra.mrb[0].mxu0 %v1387
      %v1845 = vpop.f32.mrb[0].mxu0
      %v1846 = vadd.f32 0.0, %v1845
      %v1847 = vpop.f32.mrb[0].mxu0
      %1848 = vmatprep.mubr.f32.mxu0 0.0
      %1849 = vmatmul.mubr.f32.gmra.mrb[0].mxu0 %v1389
      %v1850 = vpop.f32.mrb[0].mxu0
      %v1851 = vadd.f32 0.0, %v1850
      %v1852 = vpop.f32.mrb[0].mxu0
      %1853 = vmatprep.mubr.f32.mxu0 0.0
      %1854 = vmatmul.mubr.f32.gmra.mrb[0].mxu0 %v1391
      %v1855 = vpop.f32.mrb[0].mxu0
      %v1856 = vadd.f32 0.0, %v1855
      %v1857 = vpop.f32.mrb[0].mxu0
      %1858 = vmatprep.mubr.f32.mxu0 0.0
      %1859 = vmatmul.mubr.f32.gmra.mrb[0].mxu0 %v1393
      %v1860 = vpop.f32.mrb[0].mxu0
      %v1861 = vadd.f32 0.0, %v1860
      %v1862 = vpop.f32.mrb[0].mxu0
      %1863 = vmatprep.mubr.f32.mxu0 0.0
      %1864 = vmatmul.mubr.f32.gmra.mrb[0].mxu0 %v1395
      %v1865 = vpop.f32.mrb[0].mxu0
      %v1866 = vadd.f32 0.0, %v1865
      %v1867 = vpop.f32.mrb[0].mxu0
      %1868 = vmatprep.mubr.f32.mxu0 0.0
      %1869 = vmatmul.mubr.f32.gmra.mrb[0].mxu0 %v1397
      %v1870 = vpop.f32.mrb[0].mxu0
      %v1871 = vadd.f32 0.0, %v1870
      %v1872 = vpop.f32.mrb[0].mxu0
      %1873 = vmatprep.mubr.f32.mxu0 0.0
      %1874 = vmatmul.mubr.f32.gmra.mrb[0].mxu0 %v1399
      %v1875 = vpop.f32.mrb[0].mxu0
      %v1876 = vadd.f32 0.0, %v1875
      %v1877 = vpop.f32.mrb[0].mxu0
      %1878 = vmatprep.mubr.f32.mxu0 0.0
      %1879 = vmatmul.mubr.f32.gmra.mrb[0].mxu0 %v1401
      %v1880 = vpop.f32.mrb[0].mxu0
      %v1881 = vadd.f32 0.0, %v1880
      %v1882 = vpop.f32.mrb[0].mxu0
      %1883 = vmatprep.mubr.f32.mxu0 0.0
      %1884 = vmatmul.mubr.f32.gmra.mrb[0].mxu0 %v1403
      %v1885 = vpop.f32.mrb[0].mxu0
      %v1886 = vadd.f32 0.0, %v1885
      %v1887 = vpop.f32.mrb[0].mxu0
      %1888 = vmatprep.mubr.f32.mxu0 0.0
      %1889 = vmatmul.mubr.f32.gmra.mrb[0].mxu0 %v1667
      %v1890 = vpop.f32.mrb[0].mxu0
      %v1891 = vadd.f32 0.0, %v1890
      %v1892 = vpop.f32.mrb[0].mxu0
      %1893 = vmatprep.mubr.f32.mxu0 0.0
      %1894 = vmatmul.mubr.f32.gmra.mrb[0].mxu0 %v1669
      %v1895 = vpop.f32.mrb[0].mxu0
      %v1896 = vadd.f32 0.0, %v1895
      %v1897 = vpop.f32.mrb[0].mxu0
      %1898 = vdwg.mxu0
      %v1899 = vadd.f32 %v1633, %v1741
      %v1900 = vadd.f32 %v1634, %v1746
      %v1901 = vadd.f32 %v1635, %v1751
      %v1902 = vadd.f32 %v1636, %v1756
      %v1903 = vadd.f32 %v1637, %v1761
      %v1904 = vadd.f32 %v1638, %v1766
      %v1905 = vadd.f32 %v1639, %v1771
      %v1906 = vadd.f32 %v1640, %v1776
      %v1907 = vadd.f32 %v1641, %v1781
      %v1908 = vadd.f32 %v1642, %v1786
      %v1909 = vadd.f32 %v1643, %v1791
      %v1910 = vadd.f32 %v1644, %v1796
      %v1911 = vadd.f32 %v1645, %v1801
      %v1912 = vadd.f32 %v1646, %v1806
      %v1913 = vadd.f32 %v1647, %v1811
      %v1914 = vadd.f32 %v1648, %v1816
      %v1915 = vadd.f32 %v1649, %v1821
      %v1916 = vadd.f32 %v1650, %v1826
      %v1917 = vadd.f32 %v1651, %v1831
      %v1918 = vadd.f32 %v1652, %v1836
      %v1919 = vadd.f32 %v1653, %v1841
      %v1920 = vadd.f32 %v1654, %v1846
      %v1921 = vadd.f32 %v1655, %v1851
      %v1922 = vadd.f32 %v1656, %v1856
      %v1923 = vadd.f32 %v1657, %v1861
      %v1924 = vadd.f32 %v1658, %v1866
      %v1925 = vadd.f32 %v1659, %v1871
      %v1926 = vadd.f32 %v1660, %v1876
      %v1927 = vadd.f32 %v1661, %v1881
      %v1928 = vadd.f32 %v1662, %v1886
      %v1929 = vadd.f32 %v1663, %v1891
      %v1930 = vadd.f32 %v1664, %v1896
      %s1931 = scalar_lea.vmem %s1, 28
      %v1932 = vld [vmem:[%s1931] sm:$0xf]
      %v1933 = vsel %vm257, %v1336, 0
      %v1935 = vsel %vm257, %v1338, 0
      %v1938 = vsel %vm499, %v1932, 0
      %1940 = vmatprep.subr.mxu0 0.0
      %1941 = vmatpush1.msra.mxu0 %v1938
      %1942 = vmatprep.subr.mxu0 0.0
      %1943 = vmatpush1.msra.mxu0 0.0
      %1944 = vmatprep.subr.mxu0 0.0
      %1945 = vmatpush1.msra.mxu0 0.0
      %1946 = vmatprep.subr.mxu0 0.0
      %1947 = vmatpush1.msra.mxu0 0.0
      %1948 = vmatprep.subr.mxu0 0.0
      %1949 = vmatpush1.msra.mxu0 0.0
      %1950 = vmatprep.subr.mxu0 0.0
      %1951 = vmatpush1.msra.mxu0 0.0
      %1952 = vmatprep.subr.mxu0 0.0
      %1953 = vmatpush1.msra.mxu0 0.0
      %1954 = vmatprep.subr.mxu0 0.0
      %1955 = vmatpush1.msra.mxu0 0.0
      %1956 = vmatprep.subr.mxu0 0.0
      %1957 = vmatpush1.msra.mxu0 0.0
      %1958 = vmatprep.subr.mxu0 0.0
      %1959 = vmatpush1.msra.mxu0 0.0
      %1960 = vmatprep.subr.mxu0 0.0
      %1961 = vmatpush1.msra.mxu0 0.0
      %1962 = vmatprep.subr.mxu0 0.0
      %1963 = vmatpush1.msra.mxu0 0.0
      %1964 = vmatprep.subr.mxu0 0.0
      %1965 = vmatpush1.msra.mxu0 0.0
      %1966 = vmatprep.subr.mxu0 0.0
      %1967 = vmatpush1.msra.mxu0 0.0
      %1968 = vmatprep.subr.mxu0 0.0
      %1969 = vmatpush1.msra.mxu0 0.0
      %1970 = vmatprep.subr.mxu0 0.0
      %1971 = vmatpush1.msra.mxu0 0.0
      %1972 = vmatprep.subr.mxu0 0.0
      %1973 = vmatpush1.msra.mxu0 0.0
      %1974 = vmatprep.subr.mxu0 0.0
      %1975 = vmatpush1.msra.mxu0 0.0
      %1976 = vmatprep.subr.mxu0 0.0
      %1977 = vmatpush1.msra.mxu0 0.0
      %1978 = vmatprep.subr.mxu0 0.0
      %1979 = vmatpush1.msra.mxu0 0.0
      %1980 = vmatprep.subr.mxu0 0.0
      %1981 = vmatpush1.msra.mxu0 0.0
      %1982 = vmatprep.subr.mxu0 0.0
      %1983 = vmatpush1.msra.mxu0 0.0
      %1984 = vmatprep.subr.mxu0 0.0
      %1985 = vmatpush1.msra.mxu0 0.0
      %1986 = vmatprep.subr.mxu0 0.0
      %1987 = vmatpush1.msra.mxu0 0.0
      %1988 = vmatprep.subr.mxu0 0.0
      %1989 = vmatpush1.msra.mxu0 0.0
      %1990 = vmatprep.subr.mxu0 0.0
      %1991 = vmatpush1.msra.mxu0 0.0
      %1992 = vmatprep.subr.mxu0 0.0
      %1993 = vmatpush1.msra.mxu0 0.0
      %1994 = vmatprep.subr.mxu0 0.0
      %1995 = vmatpush1.msra.mxu0 0.0
      %1996 = vmatprep.subr.mxu0 0.0
      %1997 = vmatpush1.msra.mxu0 0.0
      %1998 = vmatprep.subr.mxu0 0.0
      %1999 = vmatpush1.msra.mxu0 0.0
      %2000 = vmatprep.subr.mxu0 0.0
      %2001 = vmatpush1.msra.mxu0 0.0
      %2002 = vmatprep.subr.mxu0 0.0
      %2003 = vmatpush1.msra.mxu0 0.0
      %2004 = vmatprep.mubr.f32.mxu0 0.0
      %2005 = vmatmul.mubr.f32.gmra.mrb[0].mxu0 %v1349
      %v2006 = vpop.f32.mrb[0].mxu0
      %v2007 = vadd.f32 0.0, %v2006
      %v2008 = vpop.f32.mrb[0].mxu0
      %2009 = vmatprep.mubr.f32.mxu0 0.0
      %2010 = vmatmul.mubr.f32.gmra.mrb[0].mxu0 %v1351
      %v2011 = vpop.f32.mrb[0].mxu0
      %v2012 = vadd.f32 0.0, %v2011
      %v2013 = vpop.f32.mrb[0].mxu0
      %2014 = vmatprep.mubr.f32.mxu0 0.0
      %2015 = vmatmul.mubr.f32.gmra.mrb[0].mxu0 %v1353
      %v2016 = vpop.f32.mrb[0].mxu0
      %v2017 = vadd.f32 0.0, %v2016
      %v2018 = vpop.f32.mrb[0].mxu0
      %2019 = vmatprep.mubr.f32.mxu0 0.0
      %2020 = vmatmul.mubr.f32.gmra.mrb[0].mxu0 %v1355
      %v2021 = vpop.f32.mrb[0].mxu0
      %v2022 = vadd.f32 0.0, %v2021
      %v2023 = vpop.f32.mrb[0].mxu0
      %2024 = vmatprep.mubr.f32.mxu0 0.0
      %2025 = vmatmul.mubr.f32.gmra.mrb[0].mxu0 %v1357
      %v2026 = vpop.f32.mrb[0].mxu0
      %v2027 = vadd.f32 0.0, %v2026
      %v2028 = vpop.f32.mrb[0].mxu0
      %2029 = vmatprep.mubr.f32.mxu0 0.0
      %2030 = vmatmul.mubr.f32.gmra.mrb[0].mxu0 %v1359
      %v2031 = vpop.f32.mrb[0].mxu0
      %v2032 = vadd.f32 0.0, %v2031
      %v2033 = vpop.f32.mrb[0].mxu0
      %2034 = vmatprep.mubr.f32.mxu0 0.0
      %2035 = vmatmul.mubr.f32.gmra.mrb[0].mxu0 %v1361
      %v2036 = vpop.f32.mrb[0].mxu0
      %v2037 = vadd.f32 0.0, %v2036
      %v2038 = vpop.f32.mrb[0].mxu0
      %2039 = vmatprep.mubr.f32.mxu0 0.0
      %2040 = vmatmul.mubr.f32.gmra.mrb[0].mxu0 %v1363
      %v2041 = vpop.f32.mrb[0].mxu0
      %v2042 = vadd.f32 0.0, %v2041
      %v2043 = vpop.f32.mrb[0].mxu0
      %2044 = vmatprep.mubr.f32.mxu0 0.0
      %2045 = vmatmul.mubr.f32.gmra.mrb[0].mxu0 %v1365
      %v2046 = vpop.f32.mrb[0].mxu0
      %v2047 = vadd.f32 0.0, %v2046
      %v2048 = vpop.f32.mrb[0].mxu0
      %2049 = vmatprep.mubr.f32.mxu0 0.0
      %2050 = vmatmul.mubr.f32.gmra.mrb[0].mxu0 %v1367
      %v2051 = vpop.f32.mrb[0].mxu0
      %v2052 = vadd.f32 0.0, %v2051
      %v2053 = vpop.f32.mrb[0].mxu0
      %2054 = vmatprep.mubr.f32.mxu0 0.0
      %2055 = vmatmul.mubr.f32.gmra.mrb[0].mxu0 %v1369
      %v2056 = vpop.f32.mrb[0].mxu0
      %v2057 = vadd.f32 0.0, %v2056
      %v2058 = vpop.f32.mrb[0].mxu0
      %2059 = vmatprep.mubr.f32.mxu0 0.0
      %2060 = vmatmul.mubr.f32.gmra.mrb[0].mxu0 %v1371
      %v2061 = vpop.f32.mrb[0].mxu0
      %v2062 = vadd.f32 0.0, %v2061
      %v2063 = vpop.f32.mrb[0].mxu0
      %2064 = vmatprep.mubr.f32.mxu0 0.0
      %2065 = vmatmul.mubr.f32.gmra.mrb[0].mxu0 %v1373
      %v2066 = vpop.f32.mrb[0].mxu0
      %v2067 = vadd.f32 0.0, %v2066
      %v2068 = vpop.f32.mrb[0].mxu0
      %2069 = vmatprep.mubr.f32.mxu0 0.0
      %2070 = vmatmul.mubr.f32.gmra.mrb[0].mxu0 %v1375
      %v2071 = vpop.f32.mrb[0].mxu0
      %v2072 = vadd.f32 0.0, %v2071
      %v2073 = vpop.f32.mrb[0].mxu0
      %2074 = vmatprep.mubr.f32.mxu0 0.0
      %2075 = vmatmul.mubr.f32.gmra.mrb[0].mxu0 %v1377
      %v2076 = vpop.f32.mrb[0].mxu0
      %v2077 = vadd.f32 0.0, %v2076
      %v2078 = vpop.f32.mrb[0].mxu0
      %2079 = vmatprep.mubr.f32.mxu0 0.0
      %2080 = vmatmul.mubr.f32.gmra.mrb[0].mxu0 %v1379
      %v2081 = vpop.f32.mrb[0].mxu0
      %v2082 = vadd.f32 0.0, %v2081
      %v2083 = vpop.f32.mrb[0].mxu0
      %2084 = vmatprep.mubr.f32.mxu0 0.0
      %2085 = vmatmul.mubr.f32.gmra.mrb[0].mxu0 %v1381
      %v2086 = vpop.f32.mrb[0].mxu0
      %v2087 = vadd.f32 0.0, %v2086
      %v2088 = vpop.f32.mrb[0].mxu0
      %2089 = vmatprep.mubr.f32.mxu0 0.0
      %2090 = vmatmul.mubr.f32.gmra.mrb[0].mxu0 %v1383
      %v2091 = vpop.f32.mrb[0].mxu0
      %v2092 = vadd.f32 0.0, %v2091
      %v2093 = vpop.f32.mrb[0].mxu0
      %2094 = vmatprep.mubr.f32.mxu0 0.0
      %2095 = vmatmul.mubr.f32.gmra.mrb[0].mxu0 %v1385
      %v2096 = vpop.f32.mrb[0].mxu0
      %v2097 = vadd.f32 0.0, %v2096
      %v2098 = vpop.f32.mrb[0].mxu0
      %2099 = vmatprep.mubr.f32.mxu0 0.0
      %2100 = vmatmul.mubr.f32.gmra.mrb[0].mxu0 %v1387
      %v2101 = vpop.f32.mrb[0].mxu0
      %v2102 = vadd.f32 0.0, %v2101
      %v2103 = vpop.f32.mrb[0].mxu0
      %2104 = vmatprep.mubr.f32.mxu0 0.0
      %2105 = vmatmul.mubr.f32.gmra.mrb[0].mxu0 %v1389
      %v2106 = vpop.f32.mrb[0].mxu0
      %v2107 = vadd.f32 0.0, %v2106
      %v2108 = vpop.f32.mrb[0].mxu0
      %2109 = vmatprep.mubr.f32.mxu0 0.0
      %2110 = vmatmul.mubr.f32.gmra.mrb[0].mxu0 %v1391
      %v2111 = vpop.f32.mrb[0].mxu0
      %v2112 = vadd.f32 0.0, %v2111
      %v2113 = vpop.f32.mrb[0].mxu0
      %2114 = vmatprep.mubr.f32.mxu0 0.0
      %2115 = vmatmul.mubr.f32.gmra.mrb[0].mxu0 %v1393
      %v2116 = vpop.f32.mrb[0].mxu0
      %v2117 = vadd.f32 0.0, %v2116
      %v2118 = vpop.f32.mrb[0].mxu0
      %2119 = vmatprep.mubr.f32.mxu0 0.0
      %2120 = vmatmul.mubr.f32.gmra.mrb[0].mxu0 %v1395
      %v2121 = vpop.f32.mrb[0].mxu0
      %v2122 = vadd.f32 0.0, %v2121
      %v2123 = vpop.f32.mrb[0].mxu0
      %2124 = vmatprep.mubr.f32.mxu0 0.0
      %2125 = vmatmul.mubr.f32.gmra.mrb[0].mxu0 %v1397
      %v2126 = vpop.f32.mrb[0].mxu0
      %v2127 = vadd.f32 0.0, %v2126
      %v2128 = vpop.f32.mrb[0].mxu0
      %2129 = vmatprep.mubr.f32.mxu0 0.0
      %2130 = vmatmul.mubr.f32.gmra.mrb[0].mxu0 %v1399
      %v2131 = vpop.f32.mrb[0].mxu0
      %v2132 = vadd.f32 0.0, %v2131
      %v2133 = vpop.f32.mrb[0].mxu0
      %2134 = vmatprep.mubr.f32.mxu0 0.0
      %2135 = vmatmul.mubr.f32.gmra.mrb[0].mxu0 %v1401
      %v2136 = vpop.f32.mrb[0].mxu0
      %v2137 = vadd.f32 0.0, %v2136
      %v2138 = vpop.f32.mrb[0].mxu0
      %2139 = vmatprep.mubr.f32.mxu0 0.0
      %2140 = vmatmul.mubr.f32.gmra.mrb[0].mxu0 %v1403
      %v2141 = vpop.f32.mrb[0].mxu0
      %v2142 = vadd.f32 0.0, %v2141
      %v2143 = vpop.f32.mrb[0].mxu0
      %2144 = vmatprep.mubr.f32.mxu0 0.0
      %2145 = vmatmul.mubr.f32.gmra.mrb[0].mxu0 %v1667
      %v2146 = vpop.f32.mrb[0].mxu0
      %v2147 = vadd.f32 0.0, %v2146
      %v2148 = vpop.f32.mrb[0].mxu0
      %2149 = vmatprep.mubr.f32.mxu0 0.0
      %2150 = vmatmul.mubr.f32.gmra.mrb[0].mxu0 %v1669
      %v2151 = vpop.f32.mrb[0].mxu0
      %v2152 = vadd.f32 0.0, %v2151
      %v2153 = vpop.f32.mrb[0].mxu0
      %2154 = vmatprep.mubr.f32.mxu0 0.0
      %2155 = vmatmul.mubr.f32.gmra.mrb[0].mxu0 %v1933
      %v2156 = vpop.f32.mrb[0].mxu0
      %v2157 = vadd.f32 0.0, %v2156
      %v2158 = vpop.f32.mrb[0].mxu0
      %2159 = vmatprep.mubr.f32.mxu0 0.0
      %2160 = vmatmul.mubr.f32.gmra.mrb[0].mxu0 %v1935
      %v2161 = vpop.f32.mrb[0].mxu0
      %v2162 = vadd.f32 0.0, %v2161
      %v2163 = vpop.f32.mrb[0].mxu0
      %2164 = vdwg.mxu0
      %v2165 = vadd.f32 %v1899, %v2007
      %v2166 = vadd.f32 %v1900, %v2012
      %v2167 = vadd.f32 %v1901, %v2017
      %v2168 = vadd.f32 %v1902, %v2022
      %v2169 = vadd.f32 %v1903, %v2027
      %v2170 = vadd.f32 %v1904, %v2032
      %v2171 = vadd.f32 %v1905, %v2037
      %v2172 = vadd.f32 %v1906, %v2042
      %v2173 = vadd.f32 %v1907, %v2047
      %v2174 = vadd.f32 %v1908, %v2052
      %v2175 = vadd.f32 %v1909, %v2057
      %v2176 = vadd.f32 %v1910, %v2062
      %v2177 = vadd.f32 %v1911, %v2067
      %v2178 = vadd.f32 %v1912, %v2072
      %v2179 = vadd.f32 %v1913, %v2077
      %v2180 = vadd.f32 %v1914, %v2082
      %v2181 = vadd.f32 %v1915, %v2087
      %v2182 = vadd.f32 %v1916, %v2092
      %v2183 = vadd.f32 %v1917, %v2097
      %v2184 = vadd.f32 %v1918, %v2102
      %v2185 = vadd.f32 %v1919, %v2107
      %v2186 = vadd.f32 %v1920, %v2112
      %v2187 = vadd.f32 %v1921, %v2117
      %v2188 = vadd.f32 %v1922, %v2122
      %v2189 = vadd.f32 %v1923, %v2127
      %v2190 = vadd.f32 %v1924, %v2132
      %v2191 = vadd.f32 %v1925, %v2137
      %v2192 = vadd.f32 %v1926, %v2142
      %v2193 = vadd.f32 %v1927, %v2147
      %v2194 = vadd.f32 %v1928, %v2152
      %v2195 = vadd.f32 %v1929, %v2157
      %v2196 = vadd.f32 %v1930, %v2162
      %vm2197 = vcmask 1045504
      %v2198 = vrot.slane %v346, 2
      %v2199 = vrot.slane %v347, 2
      %v2200 = vsel %vm2197, %v2198, %v2199
      %v2201 = vrot.slane %v348, 2
      %v2202 = vsel %vm2197, %v2199, %v2201
      %v2203 = vrot.slane %v349, 2
      %v2204 = vrot.slane %v350, 2
      %v2205 = vsel %vm2197, %v2203, %v2204
      %v2206 = vrot.slane %v351, 2
      %v2207 = vsel %vm2197, %v2204, %v2206
      %v2208 = vrot.slane %v352, 2
      %v2209 = vrot.slane %v353, 2
      %v2210 = vsel %vm2197, %v2208, %v2209
      %v2211 = vrot.slane %v354, 2
      %v2212 = vsel %vm2197, %v2209, %v2211
      %v2213 = vrot.slane %v355, 2
      %v2214 = vrot.slane %v356, 2
      %v2215 = vsel %vm2197, %v2213, %v2214
      %v2216 = vrot.slane %v357, 2
      %v2217 = vsel %vm2197, %v2214, %v2216
      %v2218 = vrot.slane %v358, 2
      %v2219 = vrot.slane %v359, 2
      %v2220 = vsel %vm2197, %v2218, %v2219
      %v2221 = vrot.slane %v360, 2
      %v2222 = vsel %vm2197, %v2219, %v2221
      %v2223 = vrot.slane %v361, 2
      %v2224 = vrot.slane %v362, 2
      %v2225 = vsel %vm2197, %v2223, %v2224
      %v2226 = vrot.slane %v363, 2
      %v2227 = vsel %vm2197, %v2224, %v2226
      %v2228 = vrot.slane %v364, 2
      %v2229 = vrot.slane %v365, 2
      %v2230 = vsel %vm2197, %v2228, %v2229
      %v2231 = vrot.slane %v366, 2
      %v2232 = vsel %vm2197, %v2229, %v2231
      %v2233 = vrot.slane %v367, 2
      %v2234 = vrot.slane %v368, 2
      %v2235 = vsel %vm2197, %v2233, %v2234
      %v2236 = vrot.slane %v369, 2
      %v2237 = vsel %vm2197, %v2234, %v2236
      %v2238 = vrot.slane %v370, 2
      %v2239 = vrot.slane %v371, 2
      %v2240 = vsel %vm2197, %v2238, %v2239
      %v2241 = vrot.slane %v372, 2
      %v2242 = vsel %vm2197, %v2239, %v2241
      %v2243 = vrot.slane %v373, 2
      %v2244 = vrot.slane %v374, 2
      %v2245 = vsel %vm2197, %v2243, %v2244
      %v2246 = vrot.slane %v375, 2
      %v2247 = vsel %vm2197, %v2244, %v2246
      %v2248 = vrot.slane %v376, 2
      %v2249 = vrot.slane %v377, 2
      %v2250 = vsel %vm2197, %v2248, %v2249
      %v2251 = vrot.slane %v378, 2
      %v2252 = vsel %vm2197, %v2249, %v2251
      %v2253 = vrot.slane %v379, 2
      %v2254 = vrot.slane %v380, 2
      %v2255 = vsel %vm2197, %v2253, %v2254
      %v2256 = vrot.slane %v381, 2
      %v2257 = vsel %vm2197, %v2254, %v2256
      %v2258 = vrot.slane %v382, 2
      %v2259 = vrot.slane %v383, 2
      %v2260 = vsel %vm2197, %v2258, %v2259
      %v2261 = vrot.slane %v384, 2
      %v2262 = vsel %vm2197, %v2259, %v2261
      %v2263 = vrot.slane %v385, 2
      %v2264 = vrot.slane %v386, 2
      %v2265 = vsel %vm2197, %v2263, %v2264
      %v2266 = vrot.slane %v387, 2
      %v2267 = vsel %vm2197, %v2264, %v2266
      %v2268 = vrot.slane %v388, 2
      %v2269 = vrot.slane %v389, 2
      %v2270 = vsel %vm2197, %v2268, %v2269
      %v2271 = vrot.slane %v390, 2
      %v2272 = vsel %vm2197, %v2269, %v2271
      %v2273 = vrot.slane %v391, 2
      %v2274 = vrot.slane %v392, 2
      %v2275 = vsel %vm2197, %v2273, %v2274
      %v2276 = vrot.slane %v393, 2
      %v2277 = vsel %vm2197, %v2274, %v2276
      %v2278 = vrot.slane %v394, 2
      %v2279 = vrot.slane %v395, 2
      %v2280 = vsel %vm2197, %v2278, %v2279
      %v2281 = vrot.slane %v396, 2
      %v2282 = vsel %vm2197, %v2279, %v2281
      %v2283 = vrot.slane %v397, 2
      %v2284 = vrot.slane %v398, 2
      %v2285 = vsel %vm2197, %v2283, %v2284
      %v2286 = vrot.slane %v399, 2
      %v2287 = vsel %vm2197, %v2284, %v2286
      %s2288 = scalar_lea.vmem %s1, 8
      %v2289 = vld [vmem:[%s2288] sm:$0xf]
      %v2290 = vsel %vm257, %v2200, 0
      %v2292 = vsel %vm257, %v2202, 0
      %v2294 = vsel %vm257, %v2205, 0
      %v2296 = vsel %vm257, %v2207, 0
      %v2298 = vsel %vm257, %v2210, 0
      %v2300 = vsel %vm257, %v2212, 0
      %v2302 = vsel %vm257, %v2215, 0
      %v2304 = vsel %vm257, %v2217, 0
      %v2306 = vsel %vm257, %v2220, 0
      %v2308 = vsel %vm257, %v2222, 0
      %v2310 = vsel %vm257, %v2225, 0
      %v2312 = vsel %vm257, %v2227, 0
      %v2314 = vsel %vm257, %v2230, 0
      %v2316 = vsel %vm257, %v2232, 0
      %v2318 = vsel %vm257, %v2235, 0
      %v2320 = vsel %vm257, %v2237, 0
      %v2322 = vsel %vm257, %v2240, 0
      %v2324 = vsel %vm257, %v2242, 0
      %v2326 = vsel %vm257, %v2245, 0
      %v2328 = vsel %vm257, %v2247, 0
      %v2330 = vsel %vm257, %v2250, 0
      %v2332 = vsel %vm257, %v2252, 0
      %v2334 = vsel %vm257, %v2255, 0
      %v2336 = vsel %vm257, %v2257, 0
      %v2338 = vsel %vm257, %v2260, 0
      %v2340 = vsel %vm257, %v2262, 0
      %v2342 = vsel %vm257, %v2265, 0
      %v2344 = vsel %vm257, %v2267, 0
      %v2346 = vsel %vm257, %v2270, 0
      %v2348 = vsel %vm257, %v2272, 0
      %v2350 = vsel %vm257, %v2275, 0
      %v2352 = vsel %vm257, %v2277, 0
      %v2355 = vsel %vm499, %v2289, 0
      %2357 = vmatprep.subr.mxu0 0.0
      %2358 = vmatpush1.msra.mxu0 %v2355
      %2359 = vmatprep.subr.mxu0 0.0
      %2360 = vmatpush1.msra.mxu0 0.0
      %2361 = vmatprep.subr.mxu0 0.0
      %2362 = vmatpush1.msra.mxu0 0.0
      %2363 = vmatprep.subr.mxu0 0.0
      %2364 = vmatpush1.msra.mxu0 0.0
      %2365 = vmatprep.subr.mxu0 0.0
      %2366 = vmatpush1.msra.mxu0 0.0
      %2367 = vmatprep.subr.mxu0 0.0
      %2368 = vmatpush1.msra.mxu0 0.0
      %2369 = vmatprep.subr.mxu0 0.0
      %2370 = vmatpush1.msra.mxu0 0.0
      %2371 = vmatprep.subr.mxu0 0.0
      %2372 = vmatpush1.msra.mxu0 0.0
      %2373 = vmatprep.subr.mxu0 0.0
      %2374 = vmatpush1.msra.mxu0 0.0
      %2375 = vmatprep.subr.mxu0 0.0
      %2376 = vmatpush1.msra.mxu0 0.0
      %2377 = vmatprep.subr.mxu0 0.0
      %2378 = vmatpush1.msra.mxu0 0.0
      %2379 = vmatprep.subr.mxu0 0.0
      %2380 = vmatpush1.msra.mxu0 0.0
      %2381 = vmatprep.subr.mxu0 0.0
      %2382 = vmatpush1.msra.mxu0 0.0
      %2383 = vmatprep.subr.mxu0 0.0
      %2384 = vmatpush1.msra.mxu0 0.0
      %2385 = vmatprep.subr.mxu0 0.0
      %2386 = vmatpush1.msra.mxu0 0.0
      %2387 = vmatprep.subr.mxu0 0.0
      %2388 = vmatpush1.msra.mxu0 0.0
      %2389 = vmatprep.subr.mxu0 0.0
      %2390 = vmatpush1.msra.mxu0 0.0
      %2391 = vmatprep.subr.mxu0 0.0
      %2392 = vmatpush1.msra.mxu0 0.0
      %2393 = vmatprep.subr.mxu0 0.0
      %2394 = vmatpush1.msra.mxu0 0.0
      %2395 = vmatprep.subr.mxu0 0.0
      %2396 = vmatpush1.msra.mxu0 0.0
      %2397 = vmatprep.subr.mxu0 0.0
      %2398 = vmatpush1.msra.mxu0 0.0
      %2399 = vmatprep.subr.mxu0 0.0
      %2400 = vmatpush1.msra.mxu0 0.0
      %2401 = vmatprep.subr.mxu0 0.0
      %2402 = vmatpush1.msra.mxu0 0.0
      %2403 = vmatprep.subr.mxu0 0.0
      %2404 = vmatpush1.msra.mxu0 0.0
      %2405 = vmatprep.subr.mxu0 0.0
      %2406 = vmatpush1.msra.mxu0 0.0
      %2407 = vmatprep.subr.mxu0 0.0
      %2408 = vmatpush1.msra.mxu0 0.0
      %2409 = vmatprep.subr.mxu0 0.0
      %2410 = vmatpush1.msra.mxu0 0.0
      %2411 = vmatprep.subr.mxu0 0.0
      %2412 = vmatpush1.msra.mxu0 0.0
      %2413 = vmatprep.subr.mxu0 0.0
      %2414 = vmatpush1.msra.mxu0 0.0
      %2415 = vmatprep.subr.mxu0 0.0
      %2416 = vmatpush1.msra.mxu0 0.0
      %2417 = vmatprep.subr.mxu0 0.0
      %2418 = vmatpush1.msra.mxu0 0.0
      %2419 = vmatprep.subr.mxu0 0.0
      %2420 = vmatpush1.msra.mxu0 0.0
      %2421 = vmatprep.mubr.f32.mxu0 0.0
      %2422 = vmatmul.mubr.f32.gmra.mrb[0].mxu0 %v2290
      %v2423 = vpop.f32.mrb[0].mxu0
      %v2424 = vadd.f32 0.0, %v2423
      %v2425 = vpop.f32.mrb[0].mxu0
      %2426 = vmatprep.mubr.f32.mxu0 0.0
      %2427 = vmatmul.mubr.f32.gmra.mrb[0].mxu0 %v2292
      %v2428 = vpop.f32.mrb[0].mxu0
      %v2429 = vadd.f32 0.0, %v2428
      %v2430 = vpop.f32.mrb[0].mxu0
      %2431 = vmatprep.mubr.f32.mxu0 0.0
      %2432 = vmatmul.mubr.f32.gmra.mrb[0].mxu0 %v2294
      %v2433 = vpop.f32.mrb[0].mxu0
      %v2434 = vadd.f32 0.0, %v2433
      %v2435 = vpop.f32.mrb[0].mxu0
      %2436 = vmatprep.mubr.f32.mxu0 0.0
      %2437 = vmatmul.mubr.f32.gmra.mrb[0].mxu0 %v2296
      %v2438 = vpop.f32.mrb[0].mxu0
      %v2439 = vadd.f32 0.0, %v2438
      %v2440 = vpop.f32.mrb[0].mxu0
      %2441 = vmatprep.mubr.f32.mxu0 0.0
      %2442 = vmatmul.mubr.f32.gmra.mrb[0].mxu0 %v2298
      %v2443 = vpop.f32.mrb[0].mxu0
      %v2444 = vadd.f32 0.0, %v2443
      %v2445 = vpop.f32.mrb[0].mxu0
      %2446 = vmatprep.mubr.f32.mxu0 0.0
      %2447 = vmatmul.mubr.f32.gmra.mrb[0].mxu0 %v2300
      %v2448 = vpop.f32.mrb[0].mxu0
      %v2449 = vadd.f32 0.0, %v2448
      %v2450 = vpop.f32.mrb[0].mxu0
      %2451 = vmatprep.mubr.f32.mxu0 0.0
      %2452 = vmatmul.mubr.f32.gmra.mrb[0].mxu0 %v2302
      %v2453 = vpop.f32.mrb[0].mxu0
      %v2454 = vadd.f32 0.0, %v2453
      %v2455 = vpop.f32.mrb[0].mxu0
      %2456 = vmatprep.mubr.f32.mxu0 0.0
      %2457 = vmatmul.mubr.f32.gmra.mrb[0].mxu0 %v2304
      %v2458 = vpop.f32.mrb[0].mxu0
      %v2459 = vadd.f32 0.0, %v2458
      %v2460 = vpop.f32.mrb[0].mxu0
      %2461 = vmatprep.mubr.f32.mxu0 0.0
      %2462 = vmatmul.mubr.f32.gmra.mrb[0].mxu0 %v2306
      %v2463 = vpop.f32.mrb[0].mxu0
      %v2464 = vadd.f32 0.0, %v2463
      %v2465 = vpop.f32.mrb[0].mxu0
      %2466 = vmatprep.mubr.f32.mxu0 0.0
      %2467 = vmatmul.mubr.f32.gmra.mrb[0].mxu0 %v2308
      %v2468 = vpop.f32.mrb[0].mxu0
      %v2469 = vadd.f32 0.0, %v2468
      %v2470 = vpop.f32.mrb[0].mxu0
      %2471 = vmatprep.mubr.f32.mxu0 0.0
      %2472 = vmatmul.mubr.f32.gmra.mrb[0].mxu0 %v2310
      %v2473 = vpop.f32.mrb[0].mxu0
      %v2474 = vadd.f32 0.0, %v2473
      %v2475 = vpop.f32.mrb[0].mxu0
      %2476 = vmatprep.mubr.f32.mxu0 0.0
      %2477 = vmatmul.mubr.f32.gmra.mrb[0].mxu0 %v2312
      %v2478 = vpop.f32.mrb[0].mxu0
      %v2479 = vadd.f32 0.0, %v2478
      %v2480 = vpop.f32.mrb[0].mxu0
      %2481 = vmatprep.mubr.f32.mxu0 0.0
      %2482 = vmatmul.mubr.f32.gmra.mrb[0].mxu0 %v2314
      %v2483 = vpop.f32.mrb[0].mxu0
      %v2484 = vadd.f32 0.0, %v2483
      %v2485 = vpop.f32.mrb[0].mxu0
      %2486 = vmatprep.mubr.f32.mxu0 0.0
      %2487 = vmatmul.mubr.f32.gmra.mrb[0].mxu0 %v2316
      %v2488 = vpop.f32.mrb[0].mxu0
      %v2489 = vadd.f32 0.0, %v2488
      %v2490 = vpop.f32.mrb[0].mxu0
      %2491 = vmatprep.mubr.f32.mxu0 0.0
      %2492 = vmatmul.mubr.f32.gmra.mrb[0].mxu0 %v2318
      %v2493 = vpop.f32.mrb[0].mxu0
      %v2494 = vadd.f32 0.0, %v2493
      %v2495 = vpop.f32.mrb[0].mxu0
      %2496 = vmatprep.mubr.f32.mxu0 0.0
      %2497 = vmatmul.mubr.f32.gmra.mrb[0].mxu0 %v2320
      %v2498 = vpop.f32.mrb[0].mxu0
      %v2499 = vadd.f32 0.0, %v2498
      %v2500 = vpop.f32.mrb[0].mxu0
      %2501 = vmatprep.mubr.f32.mxu0 0.0
      %2502 = vmatmul.mubr.f32.gmra.mrb[0].mxu0 %v2322
      %v2503 = vpop.f32.mrb[0].mxu0
      %v2504 = vadd.f32 0.0, %v2503
      %v2505 = vpop.f32.mrb[0].mxu0
      %2506 = vmatprep.mubr.f32.mxu0 0.0
      %2507 = vmatmul.mubr.f32.gmra.mrb[0].mxu0 %v2324
      %v2508 = vpop.f32.mrb[0].mxu0
      %v2509 = vadd.f32 0.0, %v2508
      %v2510 = vpop.f32.mrb[0].mxu0
      %2511 = vmatprep.mubr.f32.mxu0 0.0
      %2512 = vmatmul.mubr.f32.gmra.mrb[0].mxu0 %v2326
      %v2513 = vpop.f32.mrb[0].mxu0
      %v2514 = vadd.f32 0.0, %v2513
      %v2515 = vpop.f32.mrb[0].mxu0
      %2516 = vmatprep.mubr.f32.mxu0 0.0
      %2517 = vmatmul.mubr.f32.gmra.mrb[0].mxu0 %v2328
      %v2518 = vpop.f32.mrb[0].mxu0
      %v2519 = vadd.f32 0.0, %v2518
      %v2520 = vpop.f32.mrb[0].mxu0
      %2521 = vmatprep.mubr.f32.mxu0 0.0
      %2522 = vmatmul.mubr.f32.gmra.mrb[0].mxu0 %v2330
      %v2523 = vpop.f32.mrb[0].mxu0
      %v2524 = vadd.f32 0.0, %v2523
      %v2525 = vpop.f32.mrb[0].mxu0
      %2526 = vmatprep.mubr.f32.mxu0 0.0
      %2527 = vmatmul.mubr.f32.gmra.mrb[0].mxu0 %v2332
      %v2528 = vpop.f32.mrb[0].mxu0
      %v2529 = vadd.f32 0.0, %v2528
      %v2530 = vpop.f32.mrb[0].mxu0
      %2531 = vmatprep.mubr.f32.mxu0 0.0
      %2532 = vmatmul.mubr.f32.gmra.mrb[0].mxu0 %v2334
      %v2533 = vpop.f32.mrb[0].mxu0
      %v2534 = vadd.f32 0.0, %v2533
      %v2535 = vpop.f32.mrb[0].mxu0
      %2536 = vmatprep.mubr.f32.mxu0 0.0
      %2537 = vmatmul.mubr.f32.gmra.mrb[0].mxu0 %v2336
      %v2538 = vpop.f32.mrb[0].mxu0
      %v2539 = vadd.f32 0.0, %v2538
      %v2540 = vpop.f32.mrb[0].mxu0
      %2541 = vmatprep.mubr.f32.mxu0 0.0
      %2542 = vmatmul.mubr.f32.gmra.mrb[0].mxu0 %v2338
      %v2543 = vpop.f32.mrb[0].mxu0
      %v2544 = vadd.f32 0.0, %v2543
      %v2545 = vpop.f32.mrb[0].mxu0
      %2546 = vmatprep.mubr.f32.mxu0 0.0
      %2547 = vmatmul.mubr.f32.gmra.mrb[0].mxu0 %v2340
      %v2548 = vpop.f32.mrb[0].mxu0
      %v2549 = vadd.f32 0.0, %v2548
      %v2550 = vpop.f32.mrb[0].mxu0
      %2551 = vmatprep.mubr.f32.mxu0 0.0
      %2552 = vmatmul.mubr.f32.gmra.mrb[0].mxu0 %v2342
      %v2553 = vpop.f32.mrb[0].mxu0
      %v2554 = vadd.f32 0.0, %v2553
      %v2555 = vpop.f32.mrb[0].mxu0
      %2556 = vmatprep.mubr.f32.mxu0 0.0
      %2557 = vmatmul.mubr.f32.gmra.mrb[0].mxu0 %v2344
      %v2558 = vpop.f32.mrb[0].mxu0
      %v2559 = vadd.f32 0.0, %v2558
      %v2560 = vpop.f32.mrb[0].mxu0
      %2561 = vmatprep.mubr.f32.mxu0 0.0
      %2562 = vmatmul.mubr.f32.gmra.mrb[0].mxu0 %v2346
      %v2563 = vpop.f32.mrb[0].mxu0
      %v2564 = vadd.f32 0.0, %v2563
      %v2565 = vpop.f32.mrb[0].mxu0
      %2566 = vmatprep.mubr.f32.mxu0 0.0
      %2567 = vmatmul.mubr.f32.gmra.mrb[0].mxu0 %v2348
      %v2568 = vpop.f32.mrb[0].mxu0
      %v2569 = vadd.f32 0.0, %v2568
      %v2570 = vpop.f32.mrb[0].mxu0
      %2571 = vmatprep.mubr.f32.mxu0 0.0
      %2572 = vmatmul.mubr.f32.gmra.mrb[0].mxu0 %v2350
      %v2573 = vpop.f32.mrb[0].mxu0
      %v2574 = vadd.f32 0.0, %v2573
      %v2575 = vpop.f32.mrb[0].mxu0
      %2576 = vmatprep.mubr.f32.mxu0 0.0
      %2577 = vmatmul.mubr.f32.gmra.mrb[0].mxu0 %v2352
      %v2578 = vpop.f32.mrb[0].mxu0
      %v2579 = vadd.f32 0.0, %v2578
      %v2580 = vpop.f32.mrb[0].mxu0
      %2581 = vdwg.mxu0
      %v2582 = vadd.f32 %v2165, %v2424
      %v2583 = vadd.f32 %v2166, %v2429
      %v2584 = vadd.f32 %v2167, %v2434
      %v2585 = vadd.f32 %v2168, %v2439
      %v2586 = vadd.f32 %v2169, %v2444
      %v2587 = vadd.f32 %v2170, %v2449
      %v2588 = vadd.f32 %v2171, %v2454
      %v2589 = vadd.f32 %v2172, %v2459
      %v2590 = vadd.f32 %v2173, %v2464
      %v2591 = vadd.f32 %v2174, %v2469
      %v2592 = vadd.f32 %v2175, %v2474
      %v2593 = vadd.f32 %v2176, %v2479
      %v2594 = vadd.f32 %v2177, %v2484
      %v2595 = vadd.f32 %v2178, %v2489
      %v2596 = vadd.f32 %v2179, %v2494
      %v2597 = vadd.f32 %v2180, %v2499
      %v2598 = vadd.f32 %v2181, %v2504
      %v2599 = vadd.f32 %v2182, %v2509
      %v2600 = vadd.f32 %v2183, %v2514
      %v2601 = vadd.f32 %v2184, %v2519
      %v2602 = vadd.f32 %v2185, %v2524
      %v2603 = vadd.f32 %v2186, %v2529
      %v2604 = vadd.f32 %v2187, %v2534
      %v2605 = vadd.f32 %v2188, %v2539
      %v2606 = vadd.f32 %v2189, %v2544
      %v2607 = vadd.f32 %v2190, %v2549
      %v2608 = vadd.f32 %v2191, %v2554
      %v2609 = vadd.f32 %v2192, %v2559
      %v2610 = vadd.f32 %v2193, %v2564
      %v2611 = vadd.f32 %v2194, %v2569
      %v2612 = vadd.f32 %v2195, %v2574
      %v2613 = vadd.f32 %v2196, %v2579
      %s2614 = scalar_lea.vmem %s1, 20
      %v2615 = vld [vmem:[%s2614] sm:$0xf]
      %v2616 = vsel %vm257, %v2280, 0
      %v2618 = vsel %vm257, %v2282, 0
      %v2621 = vsel %vm499, %v2615, 0
      %2623 = vmatprep.subr.mxu0 0.0
      %2624 = vmatpush1.msra.mxu0 %v2621
      %2625 = vmatprep.subr.mxu0 0.0
      %2626 = vmatpush1.msra.mxu0 0.0
      %2627 = vmatprep.subr.mxu0 0.0
      %2628 = vmatpush1.msra.mxu0 0.0
      %2629 = vmatprep.subr.mxu0 0.0
      %2630 = vmatpush1.msra.mxu0 0.0
      %2631 = vmatprep.subr.mxu0 0.0
      %2632 = vmatpush1.msra.mxu0 0.0
      %2633 = vmatprep.subr.mxu0 0.0
      %2634 = vmatpush1.msra.mxu0 0.0
      %2635 = vmatprep.subr.mxu0 0.0
      %2636 = vmatpush1.msra.mxu0 0.0
      %2637 = vmatprep.subr.mxu0 0.0
      %2638 = vmatpush1.msra.mxu0 0.0
      %2639 = vmatprep.subr.mxu0 0.0
      %2640 = vmatpush1.msra.mxu0 0.0
      %2641 = vmatprep.subr.mxu0 0.0
      %2642 = vmatpush1.msra.mxu0 0.0
      %2643 = vmatprep.subr.mxu0 0.0
      %2644 = vmatpush1.msra.mxu0 0.0
      %2645 = vmatprep.subr.mxu0 0.0
      %2646 = vmatpush1.msra.mxu0 0.0
      %2647 = vmatprep.subr.mxu0 0.0
      %2648 = vmatpush1.msra.mxu0 0.0
      %2649 = vmatprep.subr.mxu0 0.0
      %2650 = vmatpush1.msra.mxu0 0.0
      %2651 = vmatprep.subr.mxu0 0.0
      %2652 = vmatpush1.msra.mxu0 0.0
      %2653 = vmatprep.subr.mxu0 0.0
      %2654 = vmatpush1.msra.mxu0 0.0
      %2655 = vmatprep.subr.mxu0 0.0
      %2656 = vmatpush1.msra.mxu0 0.0
      %2657 = vmatprep.subr.mxu0 0.0
      %2658 = vmatpush1.msra.mxu0 0.0
      %2659 = vmatprep.subr.mxu0 0.0
      %2660 = vmatpush1.msra.mxu0 0.0
      %2661 = vmatprep.subr.mxu0 0.0
      %2662 = vmatpush1.msra.mxu0 0.0
      %2663 = vmatprep.subr.mxu0 0.0
      %2664 = vmatpush1.msra.mxu0 0.0
      %2665 = vmatprep.subr.mxu0 0.0
      %2666 = vmatpush1.msra.mxu0 0.0
      %2667 = vmatprep.subr.mxu0 0.0
      %2668 = vmatpush1.msra.mxu0 0.0
      %2669 = vmatprep.subr.mxu0 0.0
      %2670 = vmatpush1.msra.mxu0 0.0
      %2671 = vmatprep.subr.mxu0 0.0
      %2672 = vmatpush1.msra.mxu0 0.0
      %2673 = vmatprep.subr.mxu0 0.0
      %2674 = vmatpush1.msra.mxu0 0.0
      %2675 = vmatprep.subr.mxu0 0.0
      %2676 = vmatpush1.msra.mxu0 0.0
      %2677 = vmatprep.subr.mxu0 0.0
      %2678 = vmatpush1.msra.mxu0 0.0
      %2679 = vmatprep.subr.mxu0 0.0
      %2680 = vmatpush1.msra.mxu0 0.0
      %2681 = vmatprep.subr.mxu0 0.0
      %2682 = vmatpush1.msra.mxu0 0.0
      %2683 = vmatprep.subr.mxu0 0.0
      %2684 = vmatpush1.msra.mxu0 0.0
      %2685 = vmatprep.subr.mxu0 0.0
      %2686 = vmatpush1.msra.mxu0 0.0
      %2687 = vmatprep.mubr.f32.mxu0 0.0
      %2688 = vmatmul.mubr.f32.gmra.mrb[0].mxu0 %v2294
      %v2689 = vpop.f32.mrb[0].mxu0
      %v2690 = vadd.f32 0.0, %v2689
      %v2691 = vpop.f32.mrb[0].mxu0
      %2692 = vmatprep.mubr.f32.mxu0 0.0
      %2693 = vmatmul.mubr.f32.gmra.mrb[0].mxu0 %v2296
      %v2694 = vpop.f32.mrb[0].mxu0
      %v2695 = vadd.f32 0.0, %v2694
      %v2696 = vpop.f32.mrb[0].mxu0
      %2697 = vmatprep.mubr.f32.mxu0 0.0
      %2698 = vmatmul.mubr.f32.gmra.mrb[0].mxu0 %v2298
      %v2699 = vpop.f32.mrb[0].mxu0
      %v2700 = vadd.f32 0.0, %v2699
      %v2701 = vpop.f32.mrb[0].mxu0
      %2702 = vmatprep.mubr.f32.mxu0 0.0
      %2703 = vmatmul.mubr.f32.gmra.mrb[0].mxu0 %v2300
      %v2704 = vpop.f32.mrb[0].mxu0
      %v2705 = vadd.f32 0.0, %v2704
      %v2706 = vpop.f32.mrb[0].mxu0
      %2707 = vmatprep.mubr.f32.mxu0 0.0
      %2708 = vmatmul.mubr.f32.gmra.mrb[0].mxu0 %v2302
      %v2709 = vpop.f32.mrb[0].mxu0
      %v2710 = vadd.f32 0.0, %v2709
      %v2711 = vpop.f32.mrb[0].mxu0
      %2712 = vmatprep.mubr.f32.mxu0 0.0
      %2713 = vmatmul.mubr.f32.gmra.mrb[0].mxu0 %v2304
      %v2714 = vpop.f32.mrb[0].mxu0
      %v2715 = vadd.f32 0.0, %v2714
      %v2716 = vpop.f32.mrb[0].mxu0
      %2717 = vmatprep.mubr.f32.mxu0 0.0
      %2718 = vmatmul.mubr.f32.gmra.mrb[0].mxu0 %v2306
      %v2719 = vpop.f32.mrb[0].mxu0
      %v2720 = vadd.f32 0.0, %v2719
      %v2721 = vpop.f32.mrb[0].mxu0
      %2722 = vmatprep.mubr.f32.mxu0 0.0
      %2723 = vmatmul.mubr.f32.gmra.mrb[0].mxu0 %v2308
      %v2724 = vpop.f32.mrb[0].mxu0
      %v2725 = vadd.f32 0.0, %v2724
      %v2726 = vpop.f32.mrb[0].mxu0
      %2727 = vmatprep.mubr.f32.mxu0 0.0
      %2728 = vmatmul.mubr.f32.gmra.mrb[0].mxu0 %v2310
      %v2729 = vpop.f32.mrb[0].mxu0
      %v2730 = vadd.f32 0.0, %v2729
      %v2731 = vpop.f32.mrb[0].mxu0
      %2732 = vmatprep.mubr.f32.mxu0 0.0
      %2733 = vmatmul.mubr.f32.gmra.mrb[0].mxu0 %v2312
      %v2734 = vpop.f32.mrb[0].mxu0
      %v2735 = vadd.f32 0.0, %v2734
      %v2736 = vpop.f32.mrb[0].mxu0
      %2737 = vmatprep.mubr.f32.mxu0 0.0
      %2738 = vmatmul.mubr.f32.gmra.mrb[0].mxu0 %v2314
      %v2739 = vpop.f32.mrb[0].mxu0
      %v2740 = vadd.f32 0.0, %v2739
      %v2741 = vpop.f32.mrb[0].mxu0
      %2742 = vmatprep.mubr.f32.mxu0 0.0
      %2743 = vmatmul.mubr.f32.gmra.mrb[0].mxu0 %v2316
      %v2744 = vpop.f32.mrb[0].mxu0
      %v2745 = vadd.f32 0.0, %v2744
      %v2746 = vpop.f32.mrb[0].mxu0
      %2747 = vmatprep.mubr.f32.mxu0 0.0
      %2748 = vmatmul.mubr.f32.gmra.mrb[0].mxu0 %v2318
      %v2749 = vpop.f32.mrb[0].mxu0
      %v2750 = vadd.f32 0.0, %v2749
      %v2751 = vpop.f32.mrb[0].mxu0
      %2752 = vmatprep.mubr.f32.mxu0 0.0
      %2753 = vmatmul.mubr.f32.gmra.mrb[0].mxu0 %v2320
      %v2754 = vpop.f32.mrb[0].mxu0
      %v2755 = vadd.f32 0.0, %v2754
      %v2756 = vpop.f32.mrb[0].mxu0
      %2757 = vmatprep.mubr.f32.mxu0 0.0
      %2758 = vmatmul.mubr.f32.gmra.mrb[0].mxu0 %v2322
      %v2759 = vpop.f32.mrb[0].mxu0
      %v2760 = vadd.f32 0.0, %v2759
      %v2761 = vpop.f32.mrb[0].mxu0
      %2762 = vmatprep.mubr.f32.mxu0 0.0
      %2763 = vmatmul.mubr.f32.gmra.mrb[0].mxu0 %v2324
      %v2764 = vpop.f32.mrb[0].mxu0
      %v2765 = vadd.f32 0.0, %v2764
      %v2766 = vpop.f32.mrb[0].mxu0
      %2767 = vmatprep.mubr.f32.mxu0 0.0
      %2768 = vmatmul.mubr.f32.gmra.mrb[0].mxu0 %v2326
      %v2769 = vpop.f32.mrb[0].mxu0
      %v2770 = vadd.f32 0.0, %v2769
      %v2771 = vpop.f32.mrb[0].mxu0
      %2772 = vmatprep.mubr.f32.mxu0 0.0
      %2773 = vmatmul.mubr.f32.gmra.mrb[0].mxu0 %v2328
      %v2774 = vpop.f32.mrb[0].mxu0
      %v2775 = vadd.f32 0.0, %v2774
      %v2776 = vpop.f32.mrb[0].mxu0
      %2777 = vmatprep.mubr.f32.mxu0 0.0
      %2778 = vmatmul.mubr.f32.gmra.mrb[0].mxu0 %v2330
      %v2779 = vpop.f32.mrb[0].mxu0
      %v2780 = vadd.f32 0.0, %v2779
      %v2781 = vpop.f32.mrb[0].mxu0
      %2782 = vmatprep.mubr.f32.mxu0 0.0
      %2783 = vmatmul.mubr.f32.gmra.mrb[0].mxu0 %v2332
      %v2784 = vpop.f32.mrb[0].mxu0
      %v2785 = vadd.f32 0.0, %v2784
      %v2786 = vpop.f32.mrb[0].mxu0
      %2787 = vmatprep.mubr.f32.mxu0 0.0
      %2788 = vmatmul.mubr.f32.gmra.mrb[0].mxu0 %v2334
      %v2789 = vpop.f32.mrb[0].mxu0
      %v2790 = vadd.f32 0.0, %v2789
      %v2791 = vpop.f32.mrb[0].mxu0
      %2792 = vmatprep.mubr.f32.mxu0 0.0
      %2793 = vmatmul.mubr.f32.gmra.mrb[0].mxu0 %v2336
      %v2794 = vpop.f32.mrb[0].mxu0
      %v2795 = vadd.f32 0.0, %v2794
      %v2796 = vpop.f32.mrb[0].mxu0
      %2797 = vmatprep.mubr.f32.mxu0 0.0
      %2798 = vmatmul.mubr.f32.gmra.mrb[0].mxu0 %v2338
      %v2799 = vpop.f32.mrb[0].mxu0
      %v2800 = vadd.f32 0.0, %v2799
      %v2801 = vpop.f32.mrb[0].mxu0
      %2802 = vmatprep.mubr.f32.mxu0 0.0
      %2803 = vmatmul.mubr.f32.gmra.mrb[0].mxu0 %v2340
      %v2804 = vpop.f32.mrb[0].mxu0
      %v2805 = vadd.f32 0.0, %v2804
      %v2806 = vpop.f32.mrb[0].mxu0
      %2807 = vmatprep.mubr.f32.mxu0 0.0
      %2808 = vmatmul.mubr.f32.gmra.mrb[0].mxu0 %v2342
      %v2809 = vpop.f32.mrb[0].mxu0
      %v2810 = vadd.f32 0.0, %v2809
      %v2811 = vpop.f32.mrb[0].mxu0
      %2812 = vmatprep.mubr.f32.mxu0 0.0
      %2813 = vmatmul.mubr.f32.gmra.mrb[0].mxu0 %v2344
      %v2814 = vpop.f32.mrb[0].mxu0
      %v2815 = vadd.f32 0.0, %v2814
      %v2816 = vpop.f32.mrb[0].mxu0
      %2817 = vmatprep.mubr.f32.mxu0 0.0
      %2818 = vmatmul.mubr.f32.gmra.mrb[0].mxu0 %v2346
      %v2819 = vpop.f32.mrb[0].mxu0
      %v2820 = vadd.f32 0.0, %v2819
      %v2821 = vpop.f32.mrb[0].mxu0
      %2822 = vmatprep.mubr.f32.mxu0 0.0
      %2823 = vmatmul.mubr.f32.gmra.mrb[0].mxu0 %v2348
      %v2824 = vpop.f32.mrb[0].mxu0
      %v2825 = vadd.f32 0.0, %v2824
      %v2826 = vpop.f32.mrb[0].mxu0
      %2827 = vmatprep.mubr.f32.mxu0 0.0
      %2828 = vmatmul.mubr.f32.gmra.mrb[0].mxu0 %v2350
      %v2829 = vpop.f32.mrb[0].mxu0
      %v2830 = vadd.f32 0.0, %v2829
      %v2831 = vpop.f32.mrb[0].mxu0
      %2832 = vmatprep.mubr.f32.mxu0 0.0
      %2833 = vmatmul.mubr.f32.gmra.mrb[0].mxu0 %v2352
      %v2834 = vpop.f32.mrb[0].mxu0
      %v2835 = vadd.f32 0.0, %v2834
      %v2836 = vpop.f32.mrb[0].mxu0
      %2837 = vmatprep.mubr.f32.mxu0 0.0
      %2838 = vmatmul.mubr.f32.gmra.mrb[0].mxu0 %v2616
      %v2839 = vpop.f32.mrb[0].mxu0
      %v2840 = vadd.f32 0.0, %v2839
      %v2841 = vpop.f32.mrb[0].mxu0
      %2842 = vmatprep.mubr.f32.mxu0 0.0
      %2843 = vmatmul.mubr.f32.gmra.mrb[0].mxu0 %v2618
      %v2844 = vpop.f32.mrb[0].mxu0
      %v2845 = vadd.f32 0.0, %v2844
      %v2846 = vpop.f32.mrb[0].mxu0
      %2847 = vdwg.mxu0
      %v2848 = vadd.f32 %v2582, %v2690
      %v2849 = vadd.f32 %v2583, %v2695
      %v2850 = vadd.f32 %v2584, %v2700
      %v2851 = vadd.f32 %v2585, %v2705
      %v2852 = vadd.f32 %v2586, %v2710
      %v2853 = vadd.f32 %v2587, %v2715
      %v2854 = vadd.f32 %v2588, %v2720
      %v2855 = vadd.f32 %v2589, %v2725
      %v2856 = vadd.f32 %v2590, %v2730
      %v2857 = vadd.f32 %v2591, %v2735
      %v2858 = vadd.f32 %v2592, %v2740
      %v2859 = vadd.f32 %v2593, %v2745
      %v2860 = vadd.f32 %v2594, %v2750
      %v2861 = vadd.f32 %v2595, %v2755
      %v2862 = vadd.f32 %v2596, %v2760
      %v2863 = vadd.f32 %v2597, %v2765
      %v2864 = vadd.f32 %v2598, %v2770
      %v2865 = vadd.f32 %v2599, %v2775
      %v2866 = vadd.f32 %v2600, %v2780
      %v2867 = vadd.f32 %v2601, %v2785
      %v2868 = vadd.f32 %v2602, %v2790
      %v2869 = vadd.f32 %v2603, %v2795
      %v2870 = vadd.f32 %v2604, %v2800
      %v2871 = vadd.f32 %v2605, %v2805
      %v2872 = vadd.f32 %v2606, %v2810
      %v2873 = vadd.f32 %v2607, %v2815
      %v2874 = vadd.f32 %v2608, %v2820
      %v2875 = vadd.f32 %v2609, %v2825
      %v2876 = vadd.f32 %v2610, %v2830
      %v2877 = vadd.f32 %v2611, %v2835
      %v2878 = vadd.f32 %v2612, %v2840
      %v2879 = vadd.f32 %v2613, %v2845
      %s2880 = scalar_lea.vmem %s1, 32
      %v2881 = vld [vmem:[%s2880] sm:$0xf]
      %v2882 = vsel %vm257, %v2285, 0
      %v2884 = vsel %vm257, %v2287, 0
      %v2887 = vsel %vm499, %v2881, 0
      %2889 = vmatprep.subr.mxu0 0.0
      %2890 = vmatpush1.msra.mxu0 %v2887
      %2891 = vmatprep.subr.mxu0 0.0
      %2892 = vmatpush1.msra.mxu0 0.0
      %2893 = vmatprep.subr.mxu0 0.0
      %2894 = vmatpush1.msra.mxu0 0.0
      %2895 = vmatprep.subr.mxu0 0.0
      %2896 = vmatpush1.msra.mxu0 0.0
      %2897 = vmatprep.subr.mxu0 0.0
      %2898 = vmatpush1.msra.mxu0 0.0
      %2899 = vmatprep.subr.mxu0 0.0
      %2900 = vmatpush1.msra.mxu0 0.0
      %2901 = vmatprep.subr.mxu0 0.0
      %2902 = vmatpush1.msra.mxu0 0.0
      %2903 = vmatprep.subr.mxu0 0.0
      %2904 = vmatpush1.msra.mxu0 0.0
      %2905 = vmatprep.subr.mxu0 0.0
      %2906 = vmatpush1.msra.mxu0 0.0
      %2907 = vmatprep.subr.mxu0 0.0
      %2908 = vmatpush1.msra.mxu0 0.0
      %2909 = vmatprep.subr.mxu0 0.0
      %2910 = vmatpush1.msra.mxu0 0.0
      %2911 = vmatprep.subr.mxu0 0.0
      %2912 = vmatpush1.msra.mxu0 0.0
      %2913 = vmatprep.subr.mxu0 0.0
      %2914 = vmatpush1.msra.mxu0 0.0
      %2915 = vmatprep.subr.mxu0 0.0
      %2916 = vmatpush1.msra.mxu0 0.0
      %2917 = vmatprep.subr.mxu0 0.0
      %2918 = vmatpush1.msra.mxu0 0.0
      %2919 = vmatprep.subr.mxu0 0.0
      %2920 = vmatpush1.msra.mxu0 0.0
      %2921 = vmatprep.subr.mxu0 0.0
      %2922 = vmatpush1.msra.mxu0 0.0
      %2923 = vmatprep.subr.mxu0 0.0
      %2924 = vmatpush1.msra.mxu0 0.0
      %2925 = vmatprep.subr.mxu0 0.0
      %2926 = vmatpush1.msra.mxu0 0.0
      %2927 = vmatprep.subr.mxu0 0.0
      %2928 = vmatpush1.msra.mxu0 0.0
      %2929 = vmatprep.subr.mxu0 0.0
      %2930 = vmatpush1.msra.mxu0 0.0
      %2931 = vmatprep.subr.mxu0 0.0
      %2932 = vmatpush1.msra.mxu0 0.0
      %2933 = vmatprep.subr.mxu0 0.0
      %2934 = vmatpush1.msra.mxu0 0.0
      %2935 = vmatprep.subr.mxu0 0.0
      %2936 = vmatpush1.msra.mxu0 0.0
      %2937 = vmatprep.subr.mxu0 0.0
      %2938 = vmatpush1.msra.mxu0 0.0
      %2939 = vmatprep.subr.mxu0 0.0
      %2940 = vmatpush1.msra.mxu0 0.0
      %2941 = vmatprep.subr.mxu0 0.0
      %2942 = vmatpush1.msra.mxu0 0.0
      %2943 = vmatprep.subr.mxu0 0.0
      %2944 = vmatpush1.msra.mxu0 0.0
      %2945 = vmatprep.subr.mxu0 0.0
      %2946 = vmatpush1.msra.mxu0 0.0
      %2947 = vmatprep.subr.mxu0 0.0
      %2948 = vmatpush1.msra.mxu0 0.0
      %2949 = vmatprep.subr.mxu0 0.0
      %2950 = vmatpush1.msra.mxu0 0.0
      %2951 = vmatprep.subr.mxu0 0.0
      %2952 = vmatpush1.msra.mxu0 0.0
      %2953 = vmatprep.mubr.f32.mxu0 0.0
      %2954 = vmatmul.mubr.f32.gmra.mrb[0].mxu0 %v2298
      %v2955 = vpop.f32.mrb[0].mxu0
      %v2956 = vadd.f32 0.0, %v2955
      %v2957 = vpop.f32.mrb[0].mxu0
      %2958 = vmatprep.mubr.f32.mxu0 0.0
      %2959 = vmatmul.mubr.f32.gmra.mrb[0].mxu0 %v2300
      %v2960 = vpop.f32.mrb[0].mxu0
      %v2961 = vadd.f32 0.0, %v2960
      %v2962 = vpop.f32.mrb[0].mxu0
      %2963 = vmatprep.mubr.f32.mxu0 0.0
      %2964 = vmatmul.mubr.f32.gmra.mrb[0].mxu0 %v2302
      %v2965 = vpop.f32.mrb[0].mxu0
      %v2966 = vadd.f32 0.0, %v2965
      %v2967 = vpop.f32.mrb[0].mxu0
      %2968 = vmatprep.mubr.f32.mxu0 0.0
      %2969 = vmatmul.mubr.f32.gmra.mrb[0].mxu0 %v2304
      %v2970 = vpop.f32.mrb[0].mxu0
      %v2971 = vadd.f32 0.0, %v2970
      %v2972 = vpop.f32.mrb[0].mxu0
      %2973 = vmatprep.mubr.f32.mxu0 0.0
      %2974 = vmatmul.mubr.f32.gmra.mrb[0].mxu0 %v2306
      %v2975 = vpop.f32.mrb[0].mxu0
      %v2976 = vadd.f32 0.0, %v2975
      %v2977 = vpop.f32.mrb[0].mxu0
      %2978 = vmatprep.mubr.f32.mxu0 0.0
      %2979 = vmatmul.mubr.f32.gmra.mrb[0].mxu0 %v2308
      %v2980 = vpop.f32.mrb[0].mxu0
      %v2981 = vadd.f32 0.0, %v2980
      %v2982 = vpop.f32.mrb[0].mxu0
      %2983 = vmatprep.mubr.f32.mxu0 0.0
      %2984 = vmatmul.mubr.f32.gmra.mrb[0].mxu0 %v2310
      %v2985 = vpop.f32.mrb[0].mxu0
      %v2986 = vadd.f32 0.0, %v2985
      %v2987 = vpop.f32.mrb[0].mxu0
      %2988 = vmatprep.mubr.f32.mxu0 0.0
      %2989 = vmatmul.mubr.f32.gmra.mrb[0].mxu0 %v2312
      %v2990 = vpop.f32.mrb[0].mxu0
      %v2991 = vadd.f32 0.0, %v2990
      %v2992 = vpop.f32.mrb[0].mxu0
      %2993 = vmatprep.mubr.f32.mxu0 0.0
      %2994 = vmatmul.mubr.f32.gmra.mrb[0].mxu0 %v2314
      %v2995 = vpop.f32.mrb[0].mxu0
      %v2996 = vadd.f32 0.0, %v2995
      %v2997 = vpop.f32.mrb[0].mxu0
      %2998 = vmatprep.mubr.f32.mxu0 0.0
      %2999 = vmatmul.mubr.f32.gmra.mrb[0].mxu0 %v2316
      %v3000 = vpop.f32.mrb[0].mxu0
      %v3001 = vadd.f32 0.0, %v3000
      %v3002 = vpop.f32.mrb[0].mxu0
      %3003 = vmatprep.mubr.f32.mxu0 0.0
      %3004 = vmatmul.mubr.f32.gmra.mrb[0].mxu0 %v2318
      %v3005 = vpop.f32.mrb[0].mxu0
      %v3006 = vadd.f32 0.0, %v3005
      %v3007 = vpop.f32.mrb[0].mxu0
      %3008 = vmatprep.mubr.f32.mxu0 0.0
      %3009 = vmatmul.mubr.f32.gmra.mrb[0].mxu0 %v2320
      %v3010 = vpop.f32.mrb[0].mxu0
      %v3011 = vadd.f32 0.0, %v3010
      %v3012 = vpop.f32.mrb[0].mxu0
      %3013 = vmatprep.mubr.f32.mxu0 0.0
      %3014 = vmatmul.mubr.f32.gmra.mrb[0].mxu0 %v2322
      %v3015 = vpop.f32.mrb[0].mxu0
      %v3016 = vadd.f32 0.0, %v3015
      %v3017 = vpop.f32.mrb[0].mxu0
      %3018 = vmatprep.mubr.f32.mxu0 0.0
      %3019 = vmatmul.mubr.f32.gmra.mrb[0].mxu0 %v2324
      %v3020 = vpop.f32.mrb[0].mxu0
      %v3021 = vadd.f32 0.0, %v3020
      %v3022 = vpop.f32.mrb[0].mxu0
      %3023 = vmatprep.mubr.f32.mxu0 0.0
      %3024 = vmatmul.mubr.f32.gmra.mrb[0].mxu0 %v2326
      %v3025 = vpop.f32.mrb[0].mxu0
      %v3026 = vadd.f32 0.0, %v3025
      %v3027 = vpop.f32.mrb[0].mxu0
      %3028 = vmatprep.mubr.f32.mxu0 0.0
      %3029 = vmatmul.mubr.f32.gmra.mrb[0].mxu0 %v2328
      %v3030 = vpop.f32.mrb[0].mxu0
      %v3031 = vadd.f32 0.0, %v3030
      %v3032 = vpop.f32.mrb[0].mxu0
      %3033 = vmatprep.mubr.f32.mxu0 0.0
      %3034 = vmatmul.mubr.f32.gmra.mrb[0].mxu0 %v2330
      %v3035 = vpop.f32.mrb[0].mxu0
      %v3036 = vadd.f32 0.0, %v3035
      %v3037 = vpop.f32.mrb[0].mxu0
      %3038 = vmatprep.mubr.f32.mxu0 0.0
      %3039 = vmatmul.mubr.f32.gmra.mrb[0].mxu0 %v2332
      %v3040 = vpop.f32.mrb[0].mxu0
      %v3041 = vadd.f32 0.0, %v3040
      %v3042 = vpop.f32.mrb[0].mxu0
      %3043 = vmatprep.mubr.f32.mxu0 0.0
      %3044 = vmatmul.mubr.f32.gmra.mrb[0].mxu0 %v2334
      %v3045 = vpop.f32.mrb[0].mxu0
      %v3046 = vadd.f32 0.0, %v3045
      %v3047 = vpop.f32.mrb[0].mxu0
      %3048 = vmatprep.mubr.f32.mxu0 0.0
      %3049 = vmatmul.mubr.f32.gmra.mrb[0].mxu0 %v2336
      %v3050 = vpop.f32.mrb[0].mxu0
      %v3051 = vadd.f32 0.0, %v3050
      %v3052 = vpop.f32.mrb[0].mxu0
      %3053 = vmatprep.mubr.f32.mxu0 0.0
      %3054 = vmatmul.mubr.f32.gmra.mrb[0].mxu0 %v2338
      %v3055 = vpop.f32.mrb[0].mxu0
      %v3056 = vadd.f32 0.0, %v3055
      %v3057 = vpop.f32.mrb[0].mxu0
      %3058 = vmatprep.mubr.f32.mxu0 0.0
      %3059 = vmatmul.mubr.f32.gmra.mrb[0].mxu0 %v2340
      %v3060 = vpop.f32.mrb[0].mxu0
      %v3061 = vadd.f32 0.0, %v3060
      %v3062 = vpop.f32.mrb[0].mxu0
      %3063 = vmatprep.mubr.f32.mxu0 0.0
      %3064 = vmatmul.mubr.f32.gmra.mrb[0].mxu0 %v2342
      %v3065 = vpop.f32.mrb[0].mxu0
      %v3066 = vadd.f32 0.0, %v3065
      %v3067 = vpop.f32.mrb[0].mxu0
      %3068 = vmatprep.mubr.f32.mxu0 0.0
      %3069 = vmatmul.mubr.f32.gmra.mrb[0].mxu0 %v2344
      %v3070 = vpop.f32.mrb[0].mxu0
      %v3071 = vadd.f32 0.0, %v3070
      %v3072 = vpop.f32.mrb[0].mxu0
      %3073 = vmatprep.mubr.f32.mxu0 0.0
      %3074 = vmatmul.mubr.f32.gmra.mrb[0].mxu0 %v2346
      %v3075 = vpop.f32.mrb[0].mxu0
      %v3076 = vadd.f32 0.0, %v3075
      %v3077 = vpop.f32.mrb[0].mxu0
      %3078 = vmatprep.mubr.f32.mxu0 0.0
      %3079 = vmatmul.mubr.f32.gmra.mrb[0].mxu0 %v2348
      %v3080 = vpop.f32.mrb[0].mxu0
      %v3081 = vadd.f32 0.0, %v3080
      %v3082 = vpop.f32.mrb[0].mxu0
      %3083 = vmatprep.mubr.f32.mxu0 0.0
      %3084 = vmatmul.mubr.f32.gmra.mrb[0].mxu0 %v2350
      %v3085 = vpop.f32.mrb[0].mxu0
      %v3086 = vadd.f32 0.0, %v3085
      %v3087 = vpop.f32.mrb[0].mxu0
      %3088 = vmatprep.mubr.f32.mxu0 0.0
      %3089 = vmatmul.mubr.f32.gmra.mrb[0].mxu0 %v2352
      %v3090 = vpop.f32.mrb[0].mxu0
      %v3091 = vadd.f32 0.0, %v3090
      %v3092 = vpop.f32.mrb[0].mxu0
      %3093 = vmatprep.mubr.f32.mxu0 0.0
      %3094 = vmatmul.mubr.f32.gmra.mrb[0].mxu0 %v2616
      %v3095 = vpop.f32.mrb[0].mxu0
      %v3096 = vadd.f32 0.0, %v3095
      %v3097 = vpop.f32.mrb[0].mxu0
      %3098 = vmatprep.mubr.f32.mxu0 0.0
      %3099 = vmatmul.mubr.f32.gmra.mrb[0].mxu0 %v2618
      %v3100 = vpop.f32.mrb[0].mxu0
      %v3101 = vadd.f32 0.0, %v3100
      %v3102 = vpop.f32.mrb[0].mxu0
      %3103 = vmatprep.mubr.f32.mxu0 0.0
      %3104 = vmatmul.mubr.f32.gmra.mrb[0].mxu0 %v2882
      %v3105 = vpop.f32.mrb[0].mxu0
      %v3106 = vadd.f32 0.0, %v3105
      %v3107 = vpop.f32.mrb[0].mxu0
      %3108 = vmatprep.mubr.f32.mxu0 0.0
      %3109 = vmatmul.mubr.f32.gmra.mrb[0].mxu0 %v2884
      %v3110 = vpop.f32.mrb[0].mxu0
      %v3111 = vadd.f32 0.0, %v3110
      %v3112 = vpop.f32.mrb[0].mxu0
      %3113 = vdwg.mxu0
      %v3114 = vadd.f32 %v2848, %v2956
      %v3115 = vadd.f32 %v2849, %v2961
      %v3116 = vadd.f32 %v2850, %v2966
      %v3117 = vadd.f32 %v2851, %v2971
      %v3118 = vadd.f32 %v2852, %v2976
      %v3119 = vadd.f32 %v2853, %v2981
      %v3120 = vadd.f32 %v2854, %v2986
      %v3121 = vadd.f32 %v2855, %v2991
      %v3122 = vadd.f32 %v2856, %v2996
      %v3123 = vadd.f32 %v2857, %v3001
      %v3124 = vadd.f32 %v2858, %v3006
      %v3125 = vadd.f32 %v2859, %v3011
      %v3126 = vadd.f32 %v2860, %v3016
      %v3127 = vadd.f32 %v2861, %v3021
      %v3128 = vadd.f32 %v2862, %v3026
      %v3129 = vadd.f32 %v2863, %v3031
      %v3130 = vadd.f32 %v2864, %v3036
      %v3131 = vadd.f32 %v2865, %v3041
      %v3132 = vadd.f32 %v2866, %v3046
      %v3133 = vadd.f32 %v2867, %v3051
      %v3134 = vadd.f32 %v2868, %v3056
      %v3135 = vadd.f32 %v2869, %v3061
      %v3136 = vadd.f32 %v2870, %v3066
      %v3137 = vadd.f32 %v2871, %v3071
      %v3138 = vadd.f32 %v2872, %v3076
      %v3139 = vadd.f32 %v2873, %v3081
      %v3140 = vadd.f32 %v2874, %v3086
      %v3141 = vadd.f32 %v2875, %v3091
      %v3142 = vadd.f32 %v2876, %v3096
      %v3143 = vadd.f32 %v2877, %v3101
      %v3144 = vadd.f32 %v2878, %v3106
      %v3145 = vadd.f32 %v2879, %v3111
      %v3146 = vld [vmem:[%s2] sm:$0x1]
      %v3148 = vlaneseq
      %v3149 = vshrl.u32 %v3148, 7
      %v3150 = vsub.s32 0, %v3149
      %v3151 = vrot.slane %v3146, %v3150
      %v3153 = vadd.f32 %v3114, %v3151
      %v3154 = vadd.f32 %v3115, %v3151
      %v3155 = vadd.f32 %v3116, %v3151
      %v3156 = vadd.f32 %v3117, %v3151
      %v3157 = vadd.f32 %v3118, %v3151
      %v3158 = vadd.f32 %v3119, %v3151
      %v3159 = vadd.f32 %v3120, %v3151
      %v3160 = vadd.f32 %v3121, %v3151
      %v3161 = vadd.f32 %v3122, %v3151
      %v3162 = vadd.f32 %v3123, %v3151
      %v3163 = vadd.f32 %v3124, %v3151
      %v3164 = vadd.f32 %v3125, %v3151
      %v3165 = vadd.f32 %v3126, %v3151
      %v3166 = vadd.f32 %v3127, %v3151
      %v3167 = vadd.f32 %v3128, %v3151
      %v3168 = vadd.f32 %v3129, %v3151
      %v3169 = vadd.f32 %v3130, %v3151
      %v3170 = vadd.f32 %v3131, %v3151
      %v3171 = vadd.f32 %v3132, %v3151
      %v3172 = vadd.f32 %v3133, %v3151
      %v3173 = vadd.f32 %v3134, %v3151
      %v3174 = vadd.f32 %v3135, %v3151
      %v3175 = vadd.f32 %v3136, %v3151
      %v3176 = vadd.f32 %v3137, %v3151
      %v3177 = vadd.f32 %v3138, %v3151
      %v3178 = vadd.f32 %v3139, %v3151
      %v3179 = vadd.f32 %v3140, %v3151
      %v3180 = vadd.f32 %v3141, %v3151
      %v3181 = vadd.f32 %v3142, %v3151
      %v3182 = vadd.f32 %v3143, %v3151
      %v3183 = vadd.f32 %v3144, %v3151
      %v3184 = vadd.f32 %v3145, %v3151
      %v3185 = vmax.f32 %v3153, 0.0
      %v3186 = vmax.f32 %v3154, 0.0
      %v3187 = vmax.f32 %v3155, 0.0
      %v3188 = vmax.f32 %v3156, 0.0
      %v3189 = vmax.f32 %v3157, 0.0
      %v3190 = vmax.f32 %v3158, 0.0
      %v3191 = vmax.f32 %v3159, 0.0
      %v3192 = vmax.f32 %v3160, 0.0
      %v3193 = vmax.f32 %v3161, 0.0
      %v3194 = vmax.f32 %v3162, 0.0
      %v3195 = vmax.f32 %v3163, 0.0
      %v3196 = vmax.f32 %v3164, 0.0
      %v3197 = vmax.f32 %v3165, 0.0
      %v3198 = vmax.f32 %v3166, 0.0
      %v3199 = vmax.f32 %v3167, 0.0
      %v3200 = vmax.f32 %v3168, 0.0
      %v3201 = vmax.f32 %v3169, 0.0
      %v3202 = vmax.f32 %v3170, 0.0
      %v3203 = vmax.f32 %v3171, 0.0
      %v3204 = vmax.f32 %v3172, 0.0
      %v3205 = vmax.f32 %v3173, 0.0
      %v3206 = vmax.f32 %v3174, 0.0
      %v3207 = vmax.f32 %v3175, 0.0
      %v3208 = vmax.f32 %v3176, 0.0
      %v3209 = vmax.f32 %v3177, 0.0
      %v3210 = vmax.f32 %v3178, 0.0
      %v3211 = vmax.f32 %v3179, 0.0
      %v3212 = vmax.f32 %v3180, 0.0
      %v3213 = vmax.f32 %v3181, 0.0
      %v3214 = vmax.f32 %v3182, 0.0
      %v3215 = vmax.f32 %v3183, 0.0
      %v3216 = vmax.f32 %v3184, 0.0
      %3217 = vst.msk [vmem:[#allocation3] sm:$0xff] %vm257, 0.0
      %3218 = vst.msk [vmem:[#allocation3 + $0x8] sm:$0xff] %vm257, 0.0
      %3219 = vst.msk [vmem:[#allocation3 + $0x10] sm:$0x3] %vm260, 0.0
      %3220 = vst.msk [vmem:[#allocation3 + $0x18] sm:$0xff] %vm257, 0.0
      %3221 = vst.msk [vmem:[#allocation3 + $0x20] sm:$0xff] %vm257, 0.0
      %3222 = vst.msk [vmem:[#allocation3 + $0x28] sm:$0x3] %vm260, 0.0
      %3223 = vst.msk [vmem:[#allocation3 + $0x30] sm:$0xff] %vm257, 0.0
      %3224 = vst.msk [vmem:[#allocation3 + $0x38] sm:$0xff] %vm257, 0.0
      %3225 = vst.msk [vmem:[#allocation3 + $0x40] sm:$0x3] %vm260, 0.0
      %3226 = vst.msk [vmem:[#allocation3 + $0x48] sm:$0xff] %vm257, 0.0
      %3227 = vst.msk [vmem:[#allocation3 + $0x50] sm:$0xff] %vm257, 0.0
      %3228 = vst.msk [vmem:[#allocation3 + $0x58] sm:$0x3] %vm260, 0.0
      %3229 = vst.msk [vmem:[#allocation3 + $0x60] sm:$0xff] %vm257, 0.0
      %3230 = vst.msk [vmem:[#allocation3 + $0x68] sm:$0xff] %vm257, 0.0
      %3231 = vst.msk [vmem:[#allocation3 + $0x70] sm:$0x3] %vm260, 0.0
      %3232 = vst.msk [vmem:[#allocation3 + $0x78] sm:$0xff] %vm257, 0.0
      %3233 = vst.msk [vmem:[#allocation3 + $0x80] sm:$0xff] %vm257, 0.0
      %3234 = vst.msk [vmem:[#allocation3 + $0x88] sm:$0x3] %vm260, 0.0
      %3235 = vst.msk [vmem:[#allocation3 + $0x90] sm:$0xff] %vm257, 0.0
      %3236 = vst.msk [vmem:[#allocation3 + $0x98] sm:$0xff] %vm257, 0.0
      %3237 = vst.msk [vmem:[#allocation3 + $0xa0] sm:$0x3] %vm260, 0.0
      %3238 = vst.msk [vmem:[#allocation3 + $0xa8] sm:$0xff] %vm257, 0.0
      %3239 = vst.msk [vmem:[#allocation3 + $0xb0] sm:$0xff] %vm257, 0.0
      %3240 = vst.msk [vmem:[#allocation3 + $0xb8] sm:$0x3] %vm260, 0.0
      %3241 = vst.msk [vmem:[#allocation3 + $0xc0] sm:$0xff] %vm257, 0.0
      %3242 = vst.msk [vmem:[#allocation3 + $0xc8] sm:$0xff] %vm257, 0.0
      %3243 = vst.msk [vmem:[#allocation3 + $0xd0] sm:$0x3] %vm260, 0.0
      %3244 = vst.msk [vmem:[#allocation3 + $0xd8] sm:$0xff] %vm257, 0.0
      %3245 = vst.msk [vmem:[#allocation3 + $0xe0] sm:$0xff] %vm257, 0.0
      %3246 = vst.msk [vmem:[#allocation3 + $0xe8] sm:$0x3] %vm260, 0.0
      %3247 = vst.msk [vmem:[#allocation3 + $0xf0] sm:$0xff] %vm257, 0.0
      %3248 = vst.msk [vmem:[#allocation3 + $0xf8] sm:$0xff] %vm257, 0.0
      %3249 = vst.msk [vmem:[#allocation3 + $0x100] sm:$0x3] %vm260, 0.0
      %3250 = vst.msk [vmem:[#allocation3 + $0x108] sm:$0xff] %vm257, 0.0
      %3251 = vst.msk [vmem:[#allocation3 + $0x110] sm:$0xff] %vm257, 0.0
      %3252 = vst.msk [vmem:[#allocation3 + $0x118] sm:$0x3] %vm260, 0.0
      %3253 = vst.msk [vmem:[#allocation3 + $0x120] sm:$0xff] %vm257, 0.0
      %3254 = vst.msk [vmem:[#allocation3 + $0x128] sm:$0xff] %vm257, 0.0
      %3255 = vst.msk [vmem:[#allocation3 + $0x130] sm:$0x3] %vm260, 0.0
      %3256 = vst.msk [vmem:[#allocation3 + $0x138] sm:$0xff] %vm257, 0.0
      %3257 = vst.msk [vmem:[#allocation3 + $0x140] sm:$0xff] %vm257, 0.0
      %3258 = vst.msk [vmem:[#allocation3 + $0x148] sm:$0x3] %vm260, 0.0
      %3259 = vst.msk [vmem:[#allocation3 + $0x150] sm:$0xff] %vm257, 0.0
      %3260 = vst.msk [vmem:[#allocation3 + $0x158] sm:$0xff] %vm257, 0.0
      %3261 = vst.msk [vmem:[#allocation3 + $0x160] sm:$0x3] %vm260, 0.0
      %3262 = vst.msk [vmem:[#allocation3 + $0x168] sm:$0xff] %vm257, 0.0
      %3263 = vst.msk [vmem:[#allocation3 + $0x170] sm:$0xff] %vm257, 0.0
      %3264 = vst.msk [vmem:[#allocation3 + $0x178] sm:$0x3] %vm260, 0.0
      %3265 = vst.msk [vmem:[#allocation3 + $0x180] sm:$0xff] %vm257, 0.0
      %3266 = vst.msk [vmem:[#allocation3 + $0x188] sm:$0xff] %vm257, 0.0
      %3267 = vst.msk [vmem:[#allocation3 + $0x190] sm:$0x3] %vm260, 0.0
      %3268 = vst.msk [vmem:[#allocation3 + $0x198] sm:$0xff] %vm257, 0.0
      %3269 = vst.msk [vmem:[#allocation3 + $0x1a0] sm:$0xff] %vm257, 0.0
      %3270 = vst.msk [vmem:[#allocation3 + $0x1a8] sm:$0x3] %vm260, 0.0
      %s3271 = scalar_lea.vmem [#allocation3], 24
      %3272 = vst.msk [vmem:[%s3271 + $0x1] sm:$0xff] %vm257, %v3185
      %3273 = vst.msk [vmem:[%s3271 + $0x9] sm:$0xff] %vm257, %v3186
      %3274 = vst.msk [vmem:[%s3271 + $0x19] sm:$0xff] %vm257, %v3187
      %3275 = vst.msk [vmem:[%s3271 + $0x21] sm:$0xff] %vm257, %v3188
      %3276 = vst.msk [vmem:[%s3271 + $0x31] sm:$0xff] %vm257, %v3189
      %3277 = vst.msk [vmem:[%s3271 + $0x39] sm:$0xff] %vm257, %v3190
      %3278 = vst.msk [vmem:[%s3271 + $0x49] sm:$0xff] %vm257, %v3191
      %3279 = vst.msk [vmem:[%s3271 + $0x51] sm:$0xff] %vm257, %v3192
      %3280 = vst.msk [vmem:[%s3271 + $0x61] sm:$0xff] %vm257, %v3193
      %3281 = vst.msk [vmem:[%s3271 + $0x69] sm:$0xff] %vm257, %v3194
      %3282 = vst.msk [vmem:[%s3271 + $0x79] sm:$0xff] %vm257, %v3195
      %3283 = vst.msk [vmem:[%s3271 + $0x81] sm:$0xff] %vm257, %v3196
      %3284 = vst.msk [vmem:[%s3271 + $0x91] sm:$0xff] %vm257, %v3197
      %3285 = vst.msk [vmem:[%s3271 + $0x99] sm:$0xff] %vm257, %v3198
      %3286 = vst.msk [vmem:[%s3271 + $0xa9] sm:$0xff] %vm257, %v3199
      %3287 = vst.msk [vmem:[%s3271 + $0xb1] sm:$0xff] %vm257, %v3200
      %3288 = vst.msk [vmem:[%s3271 + $0xc1] sm:$0xff] %vm257, %v3201
      %3289 = vst.msk [vmem:[%s3271 + $0xc9] sm:$0xff] %vm257, %v3202
      %3290 = vst.msk [vmem:[%s3271 + $0xd9] sm:$0xff] %vm257, %v3203
      %3291 = vst.msk [vmem:[%s3271 + $0xe1] sm:$0xff] %vm257, %v3204
      %3292 = vst.msk [vmem:[%s3271 + $0xf1] sm:$0xff] %vm257, %v3205
      %3293 = vst.msk [vmem:[%s3271 + $0xf9] sm:$0xff] %vm257, %v3206
      %3294 = vst.msk [vmem:[%s3271 + $0x109] sm:$0xff] %vm257, %v3207
      %3295 = vst.msk [vmem:[%s3271 + $0x111] sm:$0xff] %vm257, %v3208
      %3296 = vst.msk [vmem:[%s3271 + $0x121] sm:$0xff] %vm257, %v3209
      %3297 = vst.msk [vmem:[%s3271 + $0x129] sm:$0xff] %vm257, %v3210
      %3298 = vst.msk [vmem:[%s3271 + $0x139] sm:$0xff] %vm257, %v3211
      %3299 = vst.msk [vmem:[%s3271 + $0x141] sm:$0xff] %vm257, %v3212
      %3300 = vst.msk [vmem:[%s3271 + $0x151] sm:$0xff] %vm257, %v3213
      %3301 = vst.msk [vmem:[%s3271 + $0x159] sm:$0xff] %vm257, %v3214
      %3302 = vst.msk [vmem:[%s3271 + $0x169] sm:$0xff] %vm257, %v3215
      %3303 = vst.msk [vmem:[%s3271 + $0x171] sm:$0xff] %vm257, %v3216
      %v3304 = vld [vmem:[#allocation3] sm:$0xff]
      %v3305 = vld [vmem:[#allocation3 + $0x8] sm:$0xff]
      %v3306 = vld [vmem:[#allocation3 + $0x10] sm:$0x3]
      %v3307 = vld [vmem:[#allocation3 + $0x18] sm:$0xff]
      %v3308 = vld [vmem:[#allocation3 + $0x20] sm:$0xff]
      %v3309 = vld [vmem:[#allocation3 + $0x28] sm:$0x3]
      %v3310 = vld [vmem:[#allocation3 + $0x30] sm:$0xff]
      %v3311 = vld [vmem:[#allocation3 + $0x38] sm:$0xff]
      %v3312 = vld [vmem:[#allocation3 + $0x40] sm:$0x3]
      %v3313 = vld [vmem:[#allocation3 + $0x48] sm:$0xff]
      %v3314 = vld [vmem:[#allocation3 + $0x50] sm:$0xff]
      %v3315 = vld [vmem:[#allocation3 + $0x58] sm:$0x3]
      %v3316 = vld [vmem:[#allocation3 + $0x60] sm:$0xff]
      %v3317 = vld [vmem:[#allocation3 + $0x68] sm:$0xff]
      %v3318 = vld [vmem:[#allocation3 + $0x70] sm:$0x3]
      %v3319 = vld [vmem:[#allocation3 + $0x78] sm:$0xff]
      %v3320 = vld [vmem:[#allocation3 + $0x80] sm:$0xff]
      %v3321 = vld [vmem:[#allocation3 + $0x88] sm:$0x3]
      %v3322 = vld [vmem:[#allocation3 + $0x90] sm:$0xff]
      %v3323 = vld [vmem:[#allocation3 + $0x98] sm:$0xff]
      %v3324 = vld [vmem:[#allocation3 + $0xa0] sm:$0x3]
      %v3325 = vld [vmem:[#allocation3 + $0xa8] sm:$0xff]
      %v3326 = vld [vmem:[#allocation3 + $0xb0] sm:$0xff]
      %v3327 = vld [vmem:[#allocation3 + $0xb8] sm:$0x3]
      %v3328 = vld [vmem:[#allocation3 + $0xc0] sm:$0xff]
      %v3329 = vld [vmem:[#allocation3 + $0xc8] sm:$0xff]
      %v3330 = vld [vmem:[#allocation3 + $0xd0] sm:$0x3]
      %v3331 = vld [vmem:[#allocation3 + $0xd8] sm:$0xff]
      %v3332 = vld [vmem:[#allocation3 + $0xe0] sm:$0xff]
      %v3333 = vld [vmem:[#allocation3 + $0xe8] sm:$0x3]
      %v3334 = vld [vmem:[#allocation3 + $0xf0] sm:$0xff]
      %v3335 = vld [vmem:[#allocation3 + $0xf8] sm:$0xff]
      %v3336 = vld [vmem:[#allocation3 + $0x100] sm:$0x3]
      %v3337 = vld [vmem:[#allocation3 + $0x108] sm:$0xff]
      %v3338 = vld [vmem:[#allocation3 + $0x110] sm:$0xff]
      %v3339 = vld [vmem:[#allocation3 + $0x118] sm:$0x3]
      %v3340 = vld [vmem:[#allocation3 + $0x120] sm:$0xff]
      %v3341 = vld [vmem:[#allocation3 + $0x128] sm:$0xff]
      %v3342 = vld [vmem:[#allocation3 + $0x130] sm:$0x3]
      %v3343 = vld [vmem:[#allocation3 + $0x138] sm:$0xff]
      %v3344 = vld [vmem:[#allocation3 + $0x140] sm:$0xff]
      %v3345 = vld [vmem:[#allocation3 + $0x148] sm:$0x3]
      %v3346 = vld [vmem:[#allocation3 + $0x150] sm:$0xff]
      %v3347 = vld [vmem:[#allocation3 + $0x158] sm:$0xff]
      %v3348 = vld [vmem:[#allocation3 + $0x160] sm:$0x3]
      %v3349 = vld [vmem:[#allocation3 + $0x168] sm:$0xff]
      %v3350 = vld [vmem:[#allocation3 + $0x170] sm:$0xff]
      %v3351 = vld [vmem:[#allocation3 + $0x178] sm:$0x3]
      %v3352 = vld [vmem:[#allocation3 + $0x180] sm:$0xff]
      %v3353 = vld [vmem:[#allocation3 + $0x188] sm:$0xff]
      %v3354 = vld [vmem:[#allocation3 + $0x190] sm:$0x3]
      %v3355 = vld [vmem:[#allocation3 + $0x198] sm:$0xff]
      %v3356 = vld [vmem:[#allocation3 + $0x1a0] sm:$0xff]
      %v3357 = vld [vmem:[#allocation3 + $0x1a8] sm:$0x3]
      %v3358 = vld [vmem:[%s3] sm:$0xf]
      %s3359 = scalar_lea.vmem %s3, 12
      %v3360 = vld [vmem:[%s3359] sm:$0xf]
      %v3362 = vsel %vm257, %v3307, 0
      %v3365 = vsel %vm257, %v3308, 0
      %v3368 = vsel %vm257, %v3310, 0
      %v3371 = vsel %vm257, %v3311, 0
      %v3374 = vsel %vm257, %v3313, 0
      %v3377 = vsel %vm257, %v3314, 0
      %v3380 = vsel %vm257, %v3316, 0
      %v3383 = vsel %vm257, %v3317, 0
      %v3386 = vsel %vm257, %v3319, 0
      %v3389 = vsel %vm257, %v3320, 0
      %v3392 = vsel %vm257, %v3322, 0
      %v3395 = vsel %vm257, %v3323, 0
      %v3398 = vsel %vm257, %v3325, 0
      %v3401 = vsel %vm257, %v3326, 0
      %v3404 = vsel %vm257, %v3328, 0
      %v3407 = vsel %vm257, %v3329, 0
      %v3410 = vsel %vm257, %v3331, 0
      %v3413 = vsel %vm257, %v3332, 0
      %v3416 = vsel %vm257, %v3334, 0
      %v3419 = vsel %vm257, %v3335, 0
      %v3422 = vsel %vm257, %v3337, 0
      %v3425 = vsel %vm257, %v3338, 0
      %v3428 = vsel %vm257, %v3340, 0
      %v3431 = vsel %vm257, %v3341, 0
      %v3434 = vsel %vm257, %v3343, 0
      %v3437 = vsel %vm257, %v3344, 0
      %v3440 = vsel %vm257, %v3346, 0
      %v3443 = vsel %vm257, %v3347, 0
      %v3446 = vsel %vm257, %v3349, 0
      %v3449 = vsel %vm257, %v3350, 0
      %v3452 = vsel %vm257, %v3352, 0
      %v3455 = vsel %vm257, %v3353, 0
      %v3458 = vsel %vm499, %v3360, 0
      %3460 = vmatprep.subr.mxu0 0.0
      %3461 = vmatpush1.msra.mxu0 %v3458
      %3462 = vmatprep.subr.mxu0 0.0
      %3463 = vmatpush1.msra.mxu0 0.0
      %3464 = vmatprep.subr.mxu0 0.0
      %3465 = vmatpush1.msra.mxu0 0.0
      %3466 = vmatprep.subr.mxu0 0.0
      %3467 = vmatpush1.msra.mxu0 0.0
      %3468 = vmatprep.subr.mxu0 0.0
      %3469 = vmatpush1.msra.mxu0 0.0
      %3470 = vmatprep.subr.mxu0 0.0
      %3471 = vmatpush1.msra.mxu0 0.0
      %3472 = vmatprep.subr.mxu0 0.0
      %3473 = vmatpush1.msra.mxu0 0.0
      %3474 = vmatprep.subr.mxu0 0.0
      %3475 = vmatpush1.msra.mxu0 0.0
      %3476 = vmatprep.subr.mxu0 0.0
      %3477 = vmatpush1.msra.mxu0 0.0
      %3478 = vmatprep.subr.mxu0 0.0
      %3479 = vmatpush1.msra.mxu0 0.0
      %3480 = vmatprep.subr.mxu0 0.0
      %3481 = vmatpush1.msra.mxu0 0.0
      %3482 = vmatprep.subr.mxu0 0.0
      %3483 = vmatpush1.msra.mxu0 0.0
      %3484 = vmatprep.subr.mxu0 0.0
      %3485 = vmatpush1.msra.mxu0 0.0
      %3486 = vmatprep.subr.mxu0 0.0
      %3487 = vmatpush1.msra.mxu0 0.0
      %3488 = vmatprep.subr.mxu0 0.0
      %3489 = vmatpush1.msra.mxu0 0.0
      %3490 = vmatprep.subr.mxu0 0.0
      %3491 = vmatpush1.msra.mxu0 0.0
      %3492 = vmatprep.subr.mxu0 0.0
      %3493 = vmatpush1.msra.mxu0 0.0
      %3494 = vmatprep.subr.mxu0 0.0
      %3495 = vmatpush1.msra.mxu0 0.0
      %3496 = vmatprep.subr.mxu0 0.0
      %3497 = vmatpush1.msra.mxu0 0.0
      %3498 = vmatprep.subr.mxu0 0.0
      %3499 = vmatpush1.msra.mxu0 0.0
      %3500 = vmatprep.subr.mxu0 0.0
      %3501 = vmatpush1.msra.mxu0 0.0
      %3502 = vmatprep.subr.mxu0 0.0
      %3503 = vmatpush1.msra.mxu0 0.0
      %3504 = vmatprep.subr.mxu0 0.0
      %3505 = vmatpush1.msra.mxu0 0.0
      %3506 = vmatprep.subr.mxu0 0.0
      %3507 = vmatpush1.msra.mxu0 0.0
      %3508 = vmatprep.subr.mxu0 0.0
      %3509 = vmatpush1.msra.mxu0 0.0
      %3510 = vmatprep.subr.mxu0 0.0
      %3511 = vmatpush1.msra.mxu0 0.0
      %3512 = vmatprep.subr.mxu0 0.0
      %3513 = vmatpush1.msra.mxu0 0.0
      %3514 = vmatprep.subr.mxu0 0.0
      %3515 = vmatpush1.msra.mxu0 0.0
      %3516 = vmatprep.subr.mxu0 0.0
      %3517 = vmatpush1.msra.mxu0 0.0
      %3518 = vmatprep.subr.mxu0 0.0
      %3519 = vmatpush1.msra.mxu0 0.0
      %3520 = vmatprep.subr.mxu0 0.0
      %3521 = vmatpush1.msra.mxu0 0.0
      %3522 = vmatprep.subr.mxu0 0.0
      %3523 = vmatpush1.msra.mxu0 0.0
      %3524 = vmatprep.mubr.f32.mxu0 0.0
      %3525 = vmatmul.mubr.f32.gmra.mrb[0].mxu0 %v3362
      %v3526 = vpop.f32.mrb[0].mxu0
      %v3527 = vadd.f32 0.0, %v3526
      %v3528 = vpop.f32.mrb[0].mxu0
      %3529 = vmatprep.mubr.f32.mxu0 0.0
      %3530 = vmatmul.mubr.f32.gmra.mrb[0].mxu0 %v3365
      %v3531 = vpop.f32.mrb[0].mxu0
      %v3532 = vadd.f32 0.0, %v3531
      %v3533 = vpop.f32.mrb[0].mxu0
      %3534 = vmatprep.mubr.f32.mxu0 0.0
      %3535 = vmatmul.mubr.f32.gmra.mrb[0].mxu0 %v3368
      %v3536 = vpop.f32.mrb[0].mxu0
      %v3537 = vadd.f32 0.0, %v3536
      %v3538 = vpop.f32.mrb[0].mxu0
      %3539 = vmatprep.mubr.f32.mxu0 0.0
      %3540 = vmatmul.mubr.f32.gmra.mrb[0].mxu0 %v3371
      %v3541 = vpop.f32.mrb[0].mxu0
      %v3542 = vadd.f32 0.0, %v3541
      %v3543 = vpop.f32.mrb[0].mxu0
      %3544 = vmatprep.mubr.f32.mxu0 0.0
      %3545 = vmatmul.mubr.f32.gmra.mrb[0].mxu0 %v3374
      %v3546 = vpop.f32.mrb[0].mxu0
      %v3547 = vadd.f32 0.0, %v3546
      %v3548 = vpop.f32.mrb[0].mxu0
      %3549 = vmatprep.mubr.f32.mxu0 0.0
      %3550 = vmatmul.mubr.f32.gmra.mrb[0].mxu0 %v3377
      %v3551 = vpop.f32.mrb[0].mxu0
      %v3552 = vadd.f32 0.0, %v3551
      %v3553 = vpop.f32.mrb[0].mxu0
      %3554 = vmatprep.mubr.f32.mxu0 0.0
      %3555 = vmatmul.mubr.f32.gmra.mrb[0].mxu0 %v3380
      %v3556 = vpop.f32.mrb[0].mxu0
      %v3557 = vadd.f32 0.0, %v3556
      %v3558 = vpop.f32.mrb[0].mxu0
      %3559 = vmatprep.mubr.f32.mxu0 0.0
      %3560 = vmatmul.mubr.f32.gmra.mrb[0].mxu0 %v3383
      %v3561 = vpop.f32.mrb[0].mxu0
      %v3562 = vadd.f32 0.0, %v3561
      %v3563 = vpop.f32.mrb[0].mxu0
      %3564 = vmatprep.mubr.f32.mxu0 0.0
      %3565 = vmatmul.mubr.f32.gmra.mrb[0].mxu0 %v3386
      %v3566 = vpop.f32.mrb[0].mxu0
      %v3567 = vadd.f32 0.0, %v3566
      %v3568 = vpop.f32.mrb[0].mxu0
      %3569 = vmatprep.mubr.f32.mxu0 0.0
      %3570 = vmatmul.mubr.f32.gmra.mrb[0].mxu0 %v3389
      %v3571 = vpop.f32.mrb[0].mxu0
      %v3572 = vadd.f32 0.0, %v3571
      %v3573 = vpop.f32.mrb[0].mxu0
      %3574 = vmatprep.mubr.f32.mxu0 0.0
      %3575 = vmatmul.mubr.f32.gmra.mrb[0].mxu0 %v3392
      %v3576 = vpop.f32.mrb[0].mxu0
      %v3577 = vadd.f32 0.0, %v3576
      %v3578 = vpop.f32.mrb[0].mxu0
      %3579 = vmatprep.mubr.f32.mxu0 0.0
      %3580 = vmatmul.mubr.f32.gmra.mrb[0].mxu0 %v3395
      %v3581 = vpop.f32.mrb[0].mxu0
      %v3582 = vadd.f32 0.0, %v3581
      %v3583 = vpop.f32.mrb[0].mxu0
      %3584 = vmatprep.mubr.f32.mxu0 0.0
      %3585 = vmatmul.mubr.f32.gmra.mrb[0].mxu0 %v3398
      %v3586 = vpop.f32.mrb[0].mxu0
      %v3587 = vadd.f32 0.0, %v3586
      %v3588 = vpop.f32.mrb[0].mxu0
      %3589 = vmatprep.mubr.f32.mxu0 0.0
      %3590 = vmatmul.mubr.f32.gmra.mrb[0].mxu0 %v3401
      %v3591 = vpop.f32.mrb[0].mxu0
      %v3592 = vadd.f32 0.0, %v3591
      %v3593 = vpop.f32.mrb[0].mxu0
      %3594 = vmatprep.mubr.f32.mxu0 0.0
      %3595 = vmatmul.mubr.f32.gmra.mrb[0].mxu0 %v3404
      %v3596 = vpop.f32.mrb[0].mxu0
      %v3597 = vadd.f32 0.0, %v3596
      %v3598 = vpop.f32.mrb[0].mxu0
      %3599 = vmatprep.mubr.f32.mxu0 0.0
      %3600 = vmatmul.mubr.f32.gmra.mrb[0].mxu0 %v3407
      %v3601 = vpop.f32.mrb[0].mxu0
      %v3602 = vadd.f32 0.0, %v3601
      %v3603 = vpop.f32.mrb[0].mxu0
      %3604 = vmatprep.mubr.f32.mxu0 0.0
      %3605 = vmatmul.mubr.f32.gmra.mrb[0].mxu0 %v3410
      %v3606 = vpop.f32.mrb[0].mxu0
      %v3607 = vadd.f32 0.0, %v3606
      %v3608 = vpop.f32.mrb[0].mxu0
      %3609 = vmatprep.mubr.f32.mxu0 0.0
      %3610 = vmatmul.mubr.f32.gmra.mrb[0].mxu0 %v3413
      %v3611 = vpop.f32.mrb[0].mxu0
      %v3612 = vadd.f32 0.0, %v3611
      %v3613 = vpop.f32.mrb[0].mxu0
      %3614 = vmatprep.mubr.f32.mxu0 0.0
      %3615 = vmatmul.mubr.f32.gmra.mrb[0].mxu0 %v3416
      %v3616 = vpop.f32.mrb[0].mxu0
      %v3617 = vadd.f32 0.0, %v3616
      %v3618 = vpop.f32.mrb[0].mxu0
      %3619 = vmatprep.mubr.f32.mxu0 0.0
      %3620 = vmatmul.mubr.f32.gmra.mrb[0].mxu0 %v3419
      %v3621 = vpop.f32.mrb[0].mxu0
      %v3622 = vadd.f32 0.0, %v3621
      %v3623 = vpop.f32.mrb[0].mxu0
      %3624 = vmatprep.mubr.f32.mxu0 0.0
      %3625 = vmatmul.mubr.f32.gmra.mrb[0].mxu0 %v3422
      %v3626 = vpop.f32.mrb[0].mxu0
      %v3627 = vadd.f32 0.0, %v3626
      %v3628 = vpop.f32.mrb[0].mxu0
      %3629 = vmatprep.mubr.f32.mxu0 0.0
      %3630 = vmatmul.mubr.f32.gmra.mrb[0].mxu0 %v3425
      %v3631 = vpop.f32.mrb[0].mxu0
      %v3632 = vadd.f32 0.0, %v3631
      %v3633 = vpop.f32.mrb[0].mxu0
      %3634 = vmatprep.mubr.f32.mxu0 0.0
      %3635 = vmatmul.mubr.f32.gmra.mrb[0].mxu0 %v3428
      %v3636 = vpop.f32.mrb[0].mxu0
      %v3637 = vadd.f32 0.0, %v3636
      %v3638 = vpop.f32.mrb[0].mxu0
      %3639 = vmatprep.mubr.f32.mxu0 0.0
      %3640 = vmatmul.mubr.f32.gmra.mrb[0].mxu0 %v3431
      %v3641 = vpop.f32.mrb[0].mxu0
      %v3642 = vadd.f32 0.0, %v3641
      %v3643 = vpop.f32.mrb[0].mxu0
      %3644 = vmatprep.mubr.f32.mxu0 0.0
      %3645 = vmatmul.mubr.f32.gmra.mrb[0].mxu0 %v3434
      %v3646 = vpop.f32.mrb[0].mxu0
      %v3647 = vadd.f32 0.0, %v3646
      %v3648 = vpop.f32.mrb[0].mxu0
      %3649 = vmatprep.mubr.f32.mxu0 0.0
      %3650 = vmatmul.mubr.f32.gmra.mrb[0].mxu0 %v3437
      %v3651 = vpop.f32.mrb[0].mxu0
      %v3652 = vadd.f32 0.0, %v3651
      %v3653 = vpop.f32.mrb[0].mxu0
      %3654 = vmatprep.mubr.f32.mxu0 0.0
      %3655 = vmatmul.mubr.f32.gmra.mrb[0].mxu0 %v3440
      %v3656 = vpop.f32.mrb[0].mxu0
      %v3657 = vadd.f32 0.0, %v3656
      %v3658 = vpop.f32.mrb[0].mxu0
      %3659 = vmatprep.mubr.f32.mxu0 0.0
      %3660 = vmatmul.mubr.f32.gmra.mrb[0].mxu0 %v3443
      %v3661 = vpop.f32.mrb[0].mxu0
      %v3662 = vadd.f32 0.0, %v3661
      %v3663 = vpop.f32.mrb[0].mxu0
      %3664 = vmatprep.mubr.f32.mxu0 0.0
      %3665 = vmatmul.mubr.f32.gmra.mrb[0].mxu0 %v3446
      %v3666 = vpop.f32.mrb[0].mxu0
      %v3667 = vadd.f32 0.0, %v3666
      %v3668 = vpop.f32.mrb[0].mxu0
      %3669 = vmatprep.mubr.f32.mxu0 0.0
      %3670 = vmatmul.mubr.f32.gmra.mrb[0].mxu0 %v3449
      %v3671 = vpop.f32.mrb[0].mxu0
      %v3672 = vadd.f32 0.0, %v3671
      %v3673 = vpop.f32.mrb[0].mxu0
      %3674 = vmatprep.mubr.f32.mxu0 0.0
      %3675 = vmatmul.mubr.f32.gmra.mrb[0].mxu0 %v3452
      %v3676 = vpop.f32.mrb[0].mxu0
      %v3677 = vadd.f32 0.0, %v3676
      %v3678 = vpop.f32.mrb[0].mxu0
      %3679 = vmatprep.mubr.f32.mxu0 0.0
      %3680 = vmatmul.mubr.f32.gmra.mrb[0].mxu0 %v3455
      %v3681 = vpop.f32.mrb[0].mxu0
      %v3682 = vadd.f32 0.0, %v3681
      %v3683 = vpop.f32.mrb[0].mxu0
      %3684 = vdwg.mxu0
      %v3686 = vsel %vm257, %v3304, 0
      %v3689 = vsel %vm257, %v3305, 0
      %v3692 = vsel %vm499, %v3358, 0
      %3694 = vmatprep.subr.mxu0 0.0
      %3695 = vmatpush1.msra.mxu0 %v3692
      %3696 = vmatprep.subr.mxu0 0.0
      %3697 = vmatpush1.msra.mxu0 0.0
      %3698 = vmatprep.subr.mxu0 0.0
      %3699 = vmatpush1.msra.mxu0 0.0
      %3700 = vmatprep.subr.mxu0 0.0
      %3701 = vmatpush1.msra.mxu0 0.0
      %3702 = vmatprep.subr.mxu0 0.0
      %3703 = vmatpush1.msra.mxu0 0.0
      %3704 = vmatprep.subr.mxu0 0.0
      %3705 = vmatpush1.msra.mxu0 0.0
      %3706 = vmatprep.subr.mxu0 0.0
      %3707 = vmatpush1.msra.mxu0 0.0
      %3708 = vmatprep.subr.mxu0 0.0
      %3709 = vmatpush1.msra.mxu0 0.0
      %3710 = vmatprep.subr.mxu0 0.0
      %3711 = vmatpush1.msra.mxu0 0.0
      %3712 = vmatprep.subr.mxu0 0.0
      %3713 = vmatpush1.msra.mxu0 0.0
      %3714 = vmatprep.subr.mxu0 0.0
      %3715 = vmatpush1.msra.mxu0 0.0
      %3716 = vmatprep.subr.mxu0 0.0
      %3717 = vmatpush1.msra.mxu0 0.0
      %3718 = vmatprep.subr.mxu0 0.0
      %3719 = vmatpush1.msra.mxu0 0.0
      %3720 = vmatprep.subr.mxu0 0.0
      %3721 = vmatpush1.msra.mxu0 0.0
      %3722 = vmatprep.subr.mxu0 0.0
      %3723 = vmatpush1.msra.mxu0 0.0
      %3724 = vmatprep.subr.mxu0 0.0
      %3725 = vmatpush1.msra.mxu0 0.0
      %3726 = vmatprep.subr.mxu0 0.0
      %3727 = vmatpush1.msra.mxu0 0.0
      %3728 = vmatprep.subr.mxu0 0.0
      %3729 = vmatpush1.msra.mxu0 0.0
      %3730 = vmatprep.subr.mxu0 0.0
      %3731 = vmatpush1.msra.mxu0 0.0
      %3732 = vmatprep.subr.mxu0 0.0
      %3733 = vmatpush1.msra.mxu0 0.0
      %3734 = vmatprep.subr.mxu0 0.0
      %3735 = vmatpush1.msra.mxu0 0.0
      %3736 = vmatprep.subr.mxu0 0.0
      %3737 = vmatpush1.msra.mxu0 0.0
      %3738 = vmatprep.subr.mxu0 0.0
      %3739 = vmatpush1.msra.mxu0 0.0
      %3740 = vmatprep.subr.mxu0 0.0
      %3741 = vmatpush1.msra.mxu0 0.0
      %3742 = vmatprep.subr.mxu0 0.0
      %3743 = vmatpush1.msra.mxu0 0.0
      %3744 = vmatprep.subr.mxu0 0.0
      %3745 = vmatpush1.msra.mxu0 0.0
      %3746 = vmatprep.subr.mxu0 0.0
      %3747 = vmatpush1.msra.mxu0 0.0
      %3748 = vmatprep.subr.mxu0 0.0
      %3749 = vmatpush1.msra.mxu0 0.0
      %3750 = vmatprep.subr.mxu0 0.0
      %3751 = vmatpush1.msra.mxu0 0.0
      %3752 = vmatprep.subr.mxu0 0.0
      %3753 = vmatpush1.msra.mxu0 0.0
      %3754 = vmatprep.subr.mxu0 0.0
      %3755 = vmatpush1.msra.mxu0 0.0
      %3756 = vmatprep.subr.mxu0 0.0
      %3757 = vmatpush1.msra.mxu0 0.0
      %3758 = vmatprep.mubr.f32.mxu0 0.0
      %3759 = vmatmul.mubr.f32.gmra.mrb[0].mxu0 %v3686
      %v3760 = vpop.f32.mrb[0].mxu0
      %v3761 = vadd.f32 %v3527, %v3760
      %v3762 = vpop.f32.mrb[0].mxu0
      %3763 = vmatprep.mubr.f32.mxu0 0.0
      %3764 = vmatmul.mubr.f32.gmra.mrb[0].mxu0 %v3689
      %v3765 = vpop.f32.mrb[0].mxu0
      %v3766 = vadd.f32 %v3532, %v3765
      %v3767 = vpop.f32.mrb[0].mxu0
      %3768 = vmatprep.mubr.f32.mxu0 0.0
      %3769 = vmatmul.mubr.f32.gmra.mrb[0].mxu0 %v3362
      %v3770 = vpop.f32.mrb[0].mxu0
      %v3771 = vadd.f32 %v3537, %v3770
      %v3772 = vpop.f32.mrb[0].mxu0
      %3773 = vmatprep.mubr.f32.mxu0 0.0
      %3774 = vmatmul.mubr.f32.gmra.mrb[0].mxu0 %v3365
      %v3775 = vpop.f32.mrb[0].mxu0
      %v3776 = vadd.f32 %v3542, %v3775
      %v3777 = vpop.f32.mrb[0].mxu0
      %3778 = vmatprep.mubr.f32.mxu0 0.0
      %3779 = vmatmul.mubr.f32.gmra.mrb[0].mxu0 %v3368
      %v3780 = vpop.f32.mrb[0].mxu0
      %v3781 = vadd.f32 %v3547, %v3780
      %v3782 = vpop.f32.mrb[0].mxu0
      %3783 = vmatprep.mubr.f32.mxu0 0.0
      %3784 = vmatmul.mubr.f32.gmra.mrb[0].mxu0 %v3371
      %v3785 = vpop.f32.mrb[0].mxu0
      %v3786 = vadd.f32 %v3552, %v3785
      %v3787 = vpop.f32.mrb[0].mxu0
      %3788 = vmatprep.mubr.f32.mxu0 0.0
      %3789 = vmatmul.mubr.f32.gmra.mrb[0].mxu0 %v3374
      %v3790 = vpop.f32.mrb[0].mxu0
      %v3791 = vadd.f32 %v3557, %v3790
      %v3792 = vpop.f32.mrb[0].mxu0
      %3793 = vmatprep.mubr.f32.mxu0 0.0
      %3794 = vmatmul.mubr.f32.gmra.mrb[0].mxu0 %v3377
      %v3795 = vpop.f32.mrb[0].mxu0
      %v3796 = vadd.f32 %v3562, %v3795
      %v3797 = vpop.f32.mrb[0].mxu0
      %3798 = vmatprep.mubr.f32.mxu0 0.0
      %3799 = vmatmul.mubr.f32.gmra.mrb[0].mxu0 %v3380
      %v3800 = vpop.f32.mrb[0].mxu0
      %v3801 = vadd.f32 %v3567, %v3800
      %v3802 = vpop.f32.mrb[0].mxu0
      %3803 = vmatprep.mubr.f32.mxu0 0.0
      %3804 = vmatmul.mubr.f32.gmra.mrb[0].mxu0 %v3383
      %v3805 = vpop.f32.mrb[0].mxu0
      %v3806 = vadd.f32 %v3572, %v3805
      %v3807 = vpop.f32.mrb[0].mxu0
      %3808 = vmatprep.mubr.f32.mxu0 0.0
      %3809 = vmatmul.mubr.f32.gmra.mrb[0].mxu0 %v3386
      %v3810 = vpop.f32.mrb[0].mxu0
      %v3811 = vadd.f32 %v3577, %v3810
      %v3812 = vpop.f32.mrb[0].mxu0
      %3813 = vmatprep.mubr.f32.mxu0 0.0
      %3814 = vmatmul.mubr.f32.gmra.mrb[0].mxu0 %v3389
      %v3815 = vpop.f32.mrb[0].mxu0
      %v3816 = vadd.f32 %v3582, %v3815
      %v3817 = vpop.f32.mrb[0].mxu0
      %3818 = vmatprep.mubr.f32.mxu0 0.0
      %3819 = vmatmul.mubr.f32.gmra.mrb[0].mxu0 %v3392
      %v3820 = vpop.f32.mrb[0].mxu0
      %v3821 = vadd.f32 %v3587, %v3820
      %v3822 = vpop.f32.mrb[0].mxu0
      %3823 = vmatprep.mubr.f32.mxu0 0.0
      %3824 = vmatmul.mubr.f32.gmra.mrb[0].mxu0 %v3395
      %v3825 = vpop.f32.mrb[0].mxu0
      %v3826 = vadd.f32 %v3592, %v3825
      %v3827 = vpop.f32.mrb[0].mxu0
      %3828 = vmatprep.mubr.f32.mxu0 0.0
      %3829 = vmatmul.mubr.f32.gmra.mrb[0].mxu0 %v3398
      %v3830 = vpop.f32.mrb[0].mxu0
      %v3831 = vadd.f32 %v3597, %v3830
      %v3832 = vpop.f32.mrb[0].mxu0
      %3833 = vmatprep.mubr.f32.mxu0 0.0
      %3834 = vmatmul.mubr.f32.gmra.mrb[0].mxu0 %v3401
      %v3835 = vpop.f32.mrb[0].mxu0
      %v3836 = vadd.f32 %v3602, %v3835
      %v3837 = vpop.f32.mrb[0].mxu0
      %3838 = vmatprep.mubr.f32.mxu0 0.0
      %3839 = vmatmul.mubr.f32.gmra.mrb[0].mxu0 %v3404
      %v3840 = vpop.f32.mrb[0].mxu0
      %v3841 = vadd.f32 %v3607, %v3840
      %v3842 = vpop.f32.mrb[0].mxu0
      %3843 = vmatprep.mubr.f32.mxu0 0.0
      %3844 = vmatmul.mubr.f32.gmra.mrb[0].mxu0 %v3407
      %v3845 = vpop.f32.mrb[0].mxu0
      %v3846 = vadd.f32 %v3612, %v3845
      %v3847 = vpop.f32.mrb[0].mxu0
      %3848 = vmatprep.mubr.f32.mxu0 0.0
      %3849 = vmatmul.mubr.f32.gmra.mrb[0].mxu0 %v3410
      %v3850 = vpop.f32.mrb[0].mxu0
      %v3851 = vadd.f32 %v3617, %v3850
      %v3852 = vpop.f32.mrb[0].mxu0
      %3853 = vmatprep.mubr.f32.mxu0 0.0
      %3854 = vmatmul.mubr.f32.gmra.mrb[0].mxu0 %v3413
      %v3855 = vpop.f32.mrb[0].mxu0
      %v3856 = vadd.f32 %v3622, %v3855
      %v3857 = vpop.f32.mrb[0].mxu0
      %3858 = vmatprep.mubr.f32.mxu0 0.0
      %3859 = vmatmul.mubr.f32.gmra.mrb[0].mxu0 %v3416
      %v3860 = vpop.f32.mrb[0].mxu0
      %v3861 = vadd.f32 %v3627, %v3860
      %v3862 = vpop.f32.mrb[0].mxu0
      %3863 = vmatprep.mubr.f32.mxu0 0.0
      %3864 = vmatmul.mubr.f32.gmra.mrb[0].mxu0 %v3419
      %v3865 = vpop.f32.mrb[0].mxu0
      %v3866 = vadd.f32 %v3632, %v3865
      %v3867 = vpop.f32.mrb[0].mxu0
      %3868 = vmatprep.mubr.f32.mxu0 0.0
      %3869 = vmatmul.mubr.f32.gmra.mrb[0].mxu0 %v3422
      %v3870 = vpop.f32.mrb[0].mxu0
      %v3871 = vadd.f32 %v3637, %v3870
      %v3872 = vpop.f32.mrb[0].mxu0
      %3873 = vmatprep.mubr.f32.mxu0 0.0
      %3874 = vmatmul.mubr.f32.gmra.mrb[0].mxu0 %v3425
      %v3875 = vpop.f32.mrb[0].mxu0
      %v3876 = vadd.f32 %v3642, %v3875
      %v3877 = vpop.f32.mrb[0].mxu0
      %3878 = vmatprep.mubr.f32.mxu0 0.0
      %3879 = vmatmul.mubr.f32.gmra.mrb[0].mxu0 %v3428
      %v3880 = vpop.f32.mrb[0].mxu0
      %v3881 = vadd.f32 %v3647, %v3880
      %v3882 = vpop.f32.mrb[0].mxu0
      %3883 = vmatprep.mubr.f32.mxu0 0.0
      %3884 = vmatmul.mubr.f32.gmra.mrb[0].mxu0 %v3431
      %v3885 = vpop.f32.mrb[0].mxu0
      %v3886 = vadd.f32 %v3652, %v3885
      %v3887 = vpop.f32.mrb[0].mxu0
      %3888 = vmatprep.mubr.f32.mxu0 0.0
      %3889 = vmatmul.mubr.f32.gmra.mrb[0].mxu0 %v3434
      %v3890 = vpop.f32.mrb[0].mxu0
      %v3891 = vadd.f32 %v3657, %v3890
      %v3892 = vpop.f32.mrb[0].mxu0
      %3893 = vmatprep.mubr.f32.mxu0 0.0
      %3894 = vmatmul.mubr.f32.gmra.mrb[0].mxu0 %v3437
      %v3895 = vpop.f32.mrb[0].mxu0
      %v3896 = vadd.f32 %v3662, %v3895
      %v3897 = vpop.f32.mrb[0].mxu0
      %3898 = vmatprep.mubr.f32.mxu0 0.0
      %3899 = vmatmul.mubr.f32.gmra.mrb[0].mxu0 %v3440
      %v3900 = vpop.f32.mrb[0].mxu0
      %v3901 = vadd.f32 %v3667, %v3900
      %v3902 = vpop.f32.mrb[0].mxu0
      %3903 = vmatprep.mubr.f32.mxu0 0.0
      %3904 = vmatmul.mubr.f32.gmra.mrb[0].mxu0 %v3443
      %v3905 = vpop.f32.mrb[0].mxu0
      %v3906 = vadd.f32 %v3672, %v3905
      %v3907 = vpop.f32.mrb[0].mxu0
      %3908 = vmatprep.mubr.f32.mxu0 0.0
      %3909 = vmatmul.mubr.f32.gmra.mrb[0].mxu0 %v3446
      %v3910 = vpop.f32.mrb[0].mxu0
      %v3911 = vadd.f32 %v3677, %v3910
      %v3912 = vpop.f32.mrb[0].mxu0
      %3913 = vmatprep.mubr.f32.mxu0 0.0
      %3914 = vmatmul.mubr.f32.gmra.mrb[0].mxu0 %v3449
      %v3915 = vpop.f32.mrb[0].mxu0
      %v3916 = vadd.f32 %v3682, %v3915
      %v3917 = vpop.f32.mrb[0].mxu0
      %3918 = vdwg.mxu0
      %s3919 = scalar_lea.vmem %s3, 24
      %v3920 = vld [vmem:[%s3919] sm:$0xf]
      %v3922 = vsel %vm257, %v3355, 0
      %v3925 = vsel %vm257, %v3356, 0
      %v3928 = vsel %vm499, %v3920, 0
      %3930 = vmatprep.subr.mxu0 0.0
      %3931 = vmatpush1.msra.mxu0 %v3928
      %3932 = vmatprep.subr.mxu0 0.0
      %3933 = vmatpush1.msra.mxu0 0.0
      %3934 = vmatprep.subr.mxu0 0.0
      %3935 = vmatpush1.msra.mxu0 0.0
      %3936 = vmatprep.subr.mxu0 0.0
      %3937 = vmatpush1.msra.mxu0 0.0
      %3938 = vmatprep.subr.mxu0 0.0
      %3939 = vmatpush1.msra.mxu0 0.0
      %3940 = vmatprep.subr.mxu0 0.0
      %3941 = vmatpush1.msra.mxu0 0.0
      %3942 = vmatprep.subr.mxu0 0.0
      %3943 = vmatpush1.msra.mxu0 0.0
      %3944 = vmatprep.subr.mxu0 0.0
      %3945 = vmatpush1.msra.mxu0 0.0
      %3946 = vmatprep.subr.mxu0 0.0
      %3947 = vmatpush1.msra.mxu0 0.0
      %3948 = vmatprep.subr.mxu0 0.0
      %3949 = vmatpush1.msra.mxu0 0.0
      %3950 = vmatprep.subr.mxu0 0.0
      %3951 = vmatpush1.msra.mxu0 0.0
      %3952 = vmatprep.subr.mxu0 0.0
      %3953 = vmatpush1.msra.mxu0 0.0
      %3954 = vmatprep.subr.mxu0 0.0
      %3955 = vmatpush1.msra.mxu0 0.0
      %3956 = vmatprep.subr.mxu0 0.0
      %3957 = vmatpush1.msra.mxu0 0.0
      %3958 = vmatprep.subr.mxu0 0.0
      %3959 = vmatpush1.msra.mxu0 0.0
      %3960 = vmatprep.subr.mxu0 0.0
      %3961 = vmatpush1.msra.mxu0 0.0
      %3962 = vmatprep.subr.mxu0 0.0
      %3963 = vmatpush1.msra.mxu0 0.0
      %3964 = vmatprep.subr.mxu0 0.0
      %3965 = vmatpush1.msra.mxu0 0.0
      %3966 = vmatprep.subr.mxu0 0.0
      %3967 = vmatpush1.msra.mxu0 0.0
      %3968 = vmatprep.subr.mxu0 0.0
      %3969 = vmatpush1.msra.mxu0 0.0
      %3970 = vmatprep.subr.mxu0 0.0
      %3971 = vmatpush1.msra.mxu0 0.0
      %3972 = vmatprep.subr.mxu0 0.0
      %3973 = vmatpush1.msra.mxu0 0.0
      %3974 = vmatprep.subr.mxu0 0.0
      %3975 = vmatpush1.msra.mxu0 0.0
      %3976 = vmatprep.subr.mxu0 0.0
      %3977 = vmatpush1.msra.mxu0 0.0
      %3978 = vmatprep.subr.mxu0 0.0
      %3979 = vmatpush1.msra.mxu0 0.0
      %3980 = vmatprep.subr.mxu0 0.0
      %3981 = vmatpush1.msra.mxu0 0.0
      %3982 = vmatprep.subr.mxu0 0.0
      %3983 = vmatpush1.msra.mxu0 0.0
      %3984 = vmatprep.subr.mxu0 0.0
      %3985 = vmatpush1.msra.mxu0 0.0
      %3986 = vmatprep.subr.mxu0 0.0
      %3987 = vmatpush1.msra.mxu0 0.0
      %3988 = vmatprep.subr.mxu0 0.0
      %3989 = vmatpush1.msra.mxu0 0.0
      %3990 = vmatprep.subr.mxu0 0.0
      %3991 = vmatpush1.msra.mxu0 0.0
      %3992 = vmatprep.subr.mxu0 0.0
      %3993 = vmatpush1.msra.mxu0 0.0
      %3994 = vmatprep.mubr.f32.mxu0 0.0
      %3995 = vmatmul.mubr.f32.gmra.mrb[0].mxu0 %v3368
      %v3996 = vpop.f32.mrb[0].mxu0
      %v3997 = vadd.f32 0.0, %v3996
      %v3998 = vpop.f32.mrb[0].mxu0
      %3999 = vmatprep.mubr.f32.mxu0 0.0
      %4000 = vmatmul.mubr.f32.gmra.mrb[0].mxu0 %v3371
      %v4001 = vpop.f32.mrb[0].mxu0
      %v4002 = vadd.f32 0.0, %v4001
      %v4003 = vpop.f32.mrb[0].mxu0
      %4004 = vmatprep.mubr.f32.mxu0 0.0
      %4005 = vmatmul.mubr.f32.gmra.mrb[0].mxu0 %v3374
      %v4006 = vpop.f32.mrb[0].mxu0
      %v4007 = vadd.f32 0.0, %v4006
      %v4008 = vpop.f32.mrb[0].mxu0
      %4009 = vmatprep.mubr.f32.mxu0 0.0
      %4010 = vmatmul.mubr.f32.gmra.mrb[0].mxu0 %v3377
      %v4011 = vpop.f32.mrb[0].mxu0
      %v4012 = vadd.f32 0.0, %v4011
      %v4013 = vpop.f32.mrb[0].mxu0
      %4014 = vmatprep.mubr.f32.mxu0 0.0
      %4015 = vmatmul.mubr.f32.gmra.mrb[0].mxu0 %v3380
      %v4016 = vpop.f32.mrb[0].mxu0
      %v4017 = vadd.f32 0.0, %v4016
      %v4018 = vpop.f32.mrb[0].mxu0
      %4019 = vmatprep.mubr.f32.mxu0 0.0
      %4020 = vmatmul.mubr.f32.gmra.mrb[0].mxu0 %v3383
      %v4021 = vpop.f32.mrb[0].mxu0
      %v4022 = vadd.f32 0.0, %v4021
      %v4023 = vpop.f32.mrb[0].mxu0
      %4024 = vmatprep.mubr.f32.mxu0 0.0
      %4025 = vmatmul.mubr.f32.gmra.mrb[0].mxu0 %v3386
      %v4026 = vpop.f32.mrb[0].mxu0
      %v4027 = vadd.f32 0.0, %v4026
      %v4028 = vpop.f32.mrb[0].mxu0
      %4029 = vmatprep.mubr.f32.mxu0 0.0
      %4030 = vmatmul.mubr.f32.gmra.mrb[0].mxu0 %v3389
      %v4031 = vpop.f32.mrb[0].mxu0
      %v4032 = vadd.f32 0.0, %v4031
      %v4033 = vpop.f32.mrb[0].mxu0
      %4034 = vmatprep.mubr.f32.mxu0 0.0
      %4035 = vmatmul.mubr.f32.gmra.mrb[0].mxu0 %v3392
      %v4036 = vpop.f32.mrb[0].mxu0
      %v4037 = vadd.f32 0.0, %v4036
      %v4038 = vpop.f32.mrb[0].mxu0
      %4039 = vmatprep.mubr.f32.mxu0 0.0
      %4040 = vmatmul.mubr.f32.gmra.mrb[0].mxu0 %v3395
      %v4041 = vpop.f32.mrb[0].mxu0
      %v4042 = vadd.f32 0.0, %v4041
      %v4043 = vpop.f32.mrb[0].mxu0
      %4044 = vmatprep.mubr.f32.mxu0 0.0
      %4045 = vmatmul.mubr.f32.gmra.mrb[0].mxu0 %v3398
      %v4046 = vpop.f32.mrb[0].mxu0
      %v4047 = vadd.f32 0.0, %v4046
      %v4048 = vpop.f32.mrb[0].mxu0
      %4049 = vmatprep.mubr.f32.mxu0 0.0
      %4050 = vmatmul.mubr.f32.gmra.mrb[0].mxu0 %v3401
      %v4051 = vpop.f32.mrb[0].mxu0
      %v4052 = vadd.f32 0.0, %v4051
      %v4053 = vpop.f32.mrb[0].mxu0
      %4054 = vmatprep.mubr.f32.mxu0 0.0
      %4055 = vmatmul.mubr.f32.gmra.mrb[0].mxu0 %v3404
      %v4056 = vpop.f32.mrb[0].mxu0
      %v4057 = vadd.f32 0.0, %v4056
      %v4058 = vpop.f32.mrb[0].mxu0
      %4059 = vmatprep.mubr.f32.mxu0 0.0
      %4060 = vmatmul.mubr.f32.gmra.mrb[0].mxu0 %v3407
      %v4061 = vpop.f32.mrb[0].mxu0
      %v4062 = vadd.f32 0.0, %v4061
      %v4063 = vpop.f32.mrb[0].mxu0
      %4064 = vmatprep.mubr.f32.mxu0 0.0
      %4065 = vmatmul.mubr.f32.gmra.mrb[0].mxu0 %v3410
      %v4066 = vpop.f32.mrb[0].mxu0
      %v4067 = vadd.f32 0.0, %v4066
      %v4068 = vpop.f32.mrb[0].mxu0
      %4069 = vmatprep.mubr.f32.mxu0 0.0
      %4070 = vmatmul.mubr.f32.gmra.mrb[0].mxu0 %v3413
      %v4071 = vpop.f32.mrb[0].mxu0
      %v4072 = vadd.f32 0.0, %v4071
      %v4073 = vpop.f32.mrb[0].mxu0
      %4074 = vmatprep.mubr.f32.mxu0 0.0
      %4075 = vmatmul.mubr.f32.gmra.mrb[0].mxu0 %v3416
      %v4076 = vpop.f32.mrb[0].mxu0
      %v4077 = vadd.f32 0.0, %v4076
      %v4078 = vpop.f32.mrb[0].mxu0
      %4079 = vmatprep.mubr.f32.mxu0 0.0
      %4080 = vmatmul.mubr.f32.gmra.mrb[0].mxu0 %v3419
      %v4081 = vpop.f32.mrb[0].mxu0
      %v4082 = vadd.f32 0.0, %v4081
      %v4083 = vpop.f32.mrb[0].mxu0
      %4084 = vmatprep.mubr.f32.mxu0 0.0
      %4085 = vmatmul.mubr.f32.gmra.mrb[0].mxu0 %v3422
      %v4086 = vpop.f32.mrb[0].mxu0
      %v4087 = vadd.f32 0.0, %v4086
      %v4088 = vpop.f32.mrb[0].mxu0
      %4089 = vmatprep.mubr.f32.mxu0 0.0
      %4090 = vmatmul.mubr.f32.gmra.mrb[0].mxu0 %v3425
      %v4091 = vpop.f32.mrb[0].mxu0
      %v4092 = vadd.f32 0.0, %v4091
      %v4093 = vpop.f32.mrb[0].mxu0
      %4094 = vmatprep.mubr.f32.mxu0 0.0
      %4095 = vmatmul.mubr.f32.gmra.mrb[0].mxu0 %v3428
      %v4096 = vpop.f32.mrb[0].mxu0
      %v4097 = vadd.f32 0.0, %v4096
      %v4098 = vpop.f32.mrb[0].mxu0
      %4099 = vmatprep.mubr.f32.mxu0 0.0
      %4100 = vmatmul.mubr.f32.gmra.mrb[0].mxu0 %v3431
      %v4101 = vpop.f32.mrb[0].mxu0
      %v4102 = vadd.f32 0.0, %v4101
      %v4103 = vpop.f32.mrb[0].mxu0
      %4104 = vmatprep.mubr.f32.mxu0 0.0
      %4105 = vmatmul.mubr.f32.gmra.mrb[0].mxu0 %v3434
      %v4106 = vpop.f32.mrb[0].mxu0
      %v4107 = vadd.f32 0.0, %v4106
      %v4108 = vpop.f32.mrb[0].mxu0
      %4109 = vmatprep.mubr.f32.mxu0 0.0
      %4110 = vmatmul.mubr.f32.gmra.mrb[0].mxu0 %v3437
      %v4111 = vpop.f32.mrb[0].mxu0
      %v4112 = vadd.f32 0.0, %v4111
      %v4113 = vpop.f32.mrb[0].mxu0
      %4114 = vmatprep.mubr.f32.mxu0 0.0
      %4115 = vmatmul.mubr.f32.gmra.mrb[0].mxu0 %v3440
      %v4116 = vpop.f32.mrb[0].mxu0
      %v4117 = vadd.f32 0.0, %v4116
      %v4118 = vpop.f32.mrb[0].mxu0
      %4119 = vmatprep.mubr.f32.mxu0 0.0
      %4120 = vmatmul.mubr.f32.gmra.mrb[0].mxu0 %v3443
      %v4121 = vpop.f32.mrb[0].mxu0
      %v4122 = vadd.f32 0.0, %v4121
      %v4123 = vpop.f32.mrb[0].mxu0
      %4124 = vmatprep.mubr.f32.mxu0 0.0
      %4125 = vmatmul.mubr.f32.gmra.mrb[0].mxu0 %v3446
      %v4126 = vpop.f32.mrb[0].mxu0
      %v4127 = vadd.f32 0.0, %v4126
      %v4128 = vpop.f32.mrb[0].mxu0
      %4129 = vmatprep.mubr.f32.mxu0 0.0
      %4130 = vmatmul.mubr.f32.gmra.mrb[0].mxu0 %v3449
      %v4131 = vpop.f32.mrb[0].mxu0
      %v4132 = vadd.f32 0.0, %v4131
      %v4133 = vpop.f32.mrb[0].mxu0
      %4134 = vmatprep.mubr.f32.mxu0 0.0
      %4135 = vmatmul.mubr.f32.gmra.mrb[0].mxu0 %v3452
      %v4136 = vpop.f32.mrb[0].mxu0
      %v4137 = vadd.f32 0.0, %v4136
      %v4138 = vpop.f32.mrb[0].mxu0
      %4139 = vmatprep.mubr.f32.mxu0 0.0
      %4140 = vmatmul.mubr.f32.gmra.mrb[0].mxu0 %v3455
      %v4141 = vpop.f32.mrb[0].mxu0
      %v4142 = vadd.f32 0.0, %v4141
      %v4143 = vpop.f32.mrb[0].mxu0
      %4144 = vmatprep.mubr.f32.mxu0 0.0
      %4145 = vmatmul.mubr.f32.gmra.mrb[0].mxu0 %v3922
      %v4146 = vpop.f32.mrb[0].mxu0
      %v4147 = vadd.f32 0.0, %v4146
      %v4148 = vpop.f32.mrb[0].mxu0
      %4149 = vmatprep.mubr.f32.mxu0 0.0
      %4150 = vmatmul.mubr.f32.gmra.mrb[0].mxu0 %v3925
      %v4151 = vpop.f32.mrb[0].mxu0
      %v4152 = vadd.f32 0.0, %v4151
      %v4153 = vpop.f32.mrb[0].mxu0
      %4154 = vdwg.mxu0
      %v4155 = vadd.f32 %v3761, %v3997
      %v4156 = vadd.f32 %v3766, %v4002
      %v4157 = vadd.f32 %v3771, %v4007
      %v4158 = vadd.f32 %v3776, %v4012
      %v4159 = vadd.f32 %v3781, %v4017
      %v4160 = vadd.f32 %v3786, %v4022
      %v4161 = vadd.f32 %v3791, %v4027
      %v4162 = vadd.f32 %v3796, %v4032
      %v4163 = vadd.f32 %v3801, %v4037
      %v4164 = vadd.f32 %v3806, %v4042
      %v4165 = vadd.f32 %v3811, %v4047
      %v4166 = vadd.f32 %v3816, %v4052
      %v4167 = vadd.f32 %v3821, %v4057
      %v4168 = vadd.f32 %v3826, %v4062
      %v4169 = vadd.f32 %v3831, %v4067
      %v4170 = vadd.f32 %v3836, %v4072
      %v4171 = vadd.f32 %v3841, %v4077
      %v4172 = vadd.f32 %v3846, %v4082
      %v4173 = vadd.f32 %v3851, %v4087
      %v4174 = vadd.f32 %v3856, %v4092
      %v4175 = vadd.f32 %v3861, %v4097
      %v4176 = vadd.f32 %v3866, %v4102
      %v4177 = vadd.f32 %v3871, %v4107
      %v4178 = vadd.f32 %v3876, %v4112
      %v4179 = vadd.f32 %v3881, %v4117
      %v4180 = vadd.f32 %v3886, %v4122
      %v4181 = vadd.f32 %v3891, %v4127
      %v4182 = vadd.f32 %v3896, %v4132
      %v4183 = vadd.f32 %v3901, %v4137
      %v4184 = vadd.f32 %v3906, %v4142
      %v4185 = vadd.f32 %v3911, %v4147
      %v4186 = vadd.f32 %v3916, %v4152
      %v4205 = vrot.slane %v3304, 1
      %v4206 = vrot.slane %v3305, 1
      %v4207 = vsel %vm1248, %v4205, %v4206
      %v4208 = vrot.slane %v3306, 1
      %v4209 = vsel %vm1248, %v4206, %v4208
      %v4210 = vrot.slane %v3307, 1
      %v4211 = vrot.slane %v3308, 1
      %v4212 = vsel %vm1248, %v4210, %v4211
      %v4213 = vrot.slane %v3309, 1
      %v4214 = vsel %vm1248, %v4211, %v4213
      %v4215 = vrot.slane %v3310, 1
      %v4216 = vrot.slane %v3311, 1
      %v4217 = vsel %vm1248, %v4215, %v4216
      %v4218 = vrot.slane %v3312, 1
      %v4219 = vsel %vm1248, %v4216, %v4218
      %v4220 = vrot.slane %v3313, 1
      %v4221 = vrot.slane %v3314, 1
      %v4222 = vsel %vm1248, %v4220, %v4221
      %v4223 = vrot.slane %v3315, 1
      %v4224 = vsel %vm1248, %v4221, %v4223
      %v4225 = vrot.slane %v3316, 1
      %v4226 = vrot.slane %v3317, 1
      %v4227 = vsel %vm1248, %v4225, %v4226
      %v4228 = vrot.slane %v3318, 1
      %v4229 = vsel %vm1248, %v4226, %v4228
      %v4230 = vrot.slane %v3319, 1
      %v4231 = vrot.slane %v3320, 1
      %v4232 = vsel %vm1248, %v4230, %v4231
      %v4233 = vrot.slane %v3321, 1
      %v4234 = vsel %vm1248, %v4231, %v4233
      %v4235 = vrot.slane %v3322, 1
      %v4236 = vrot.slane %v3323, 1
      %v4237 = vsel %vm1248, %v4235, %v4236
      %v4238 = vrot.slane %v3324, 1
      %v4239 = vsel %vm1248, %v4236, %v4238
      %v4240 = vrot.slane %v3325, 1
      %v4241 = vrot.slane %v3326, 1
      %v4242 = vsel %vm1248, %v4240, %v4241
      %v4243 = vrot.slane %v3327, 1
      %v4244 = vsel %vm1248, %v4241, %v4243
      %v4245 = vrot.slane %v3328, 1
      %v4246 = vrot.slane %v3329, 1
      %v4247 = vsel %vm1248, %v4245, %v4246
      %v4248 = vrot.slane %v3330, 1
      %v4249 = vsel %vm1248, %v4246, %v4248
      %v4250 = vrot.slane %v3331, 1
      %v4251 = vrot.slane %v3332, 1
      %v4252 = vsel %vm1248, %v4250, %v4251
      %v4253 = vrot.slane %v3333, 1
      %v4254 = vsel %vm1248, %v4251, %v4253
      %v4255 = vrot.slane %v3334, 1
      %v4256 = vrot.slane %v3335, 1
      %v4257 = vsel %vm1248, %v4255, %v4256
      %v4258 = vrot.slane %v3336, 1
      %v4259 = vsel %vm1248, %v4256, %v4258
      %v4260 = vrot.slane %v3337, 1
      %v4261 = vrot.slane %v3338, 1
      %v4262 = vsel %vm1248, %v4260, %v4261
      %v4263 = vrot.slane %v3339, 1
      %v4264 = vsel %vm1248, %v4261, %v4263
      %v4265 = vrot.slane %v3340, 1
      %v4266 = vrot.slane %v3341, 1
      %v4267 = vsel %vm1248, %v4265, %v4266
      %v4268 = vrot.slane %v3342, 1
      %v4269 = vsel %vm1248, %v4266, %v4268
      %v4270 = vrot.slane %v3343, 1
      %v4271 = vrot.slane %v3344, 1
      %v4272 = vsel %vm1248, %v4270, %v4271
      %v4273 = vrot.slane %v3345, 1
      %v4274 = vsel %vm1248, %v4271, %v4273
      %v4275 = vrot.slane %v3346, 1
      %v4276 = vrot.slane %v3347, 1
      %v4277 = vsel %vm1248, %v4275, %v4276
      %v4278 = vrot.slane %v3348, 1
      %v4279 = vsel %vm1248, %v4276, %v4278
      %v4280 = vrot.slane %v3349, 1
      %v4281 = vrot.slane %v3350, 1
      %v4282 = vsel %vm1248, %v4280, %v4281
      %v4283 = vrot.slane %v3351, 1
      %v4284 = vsel %vm1248, %v4281, %v4283
      %v4285 = vrot.slane %v3352, 1
      %v4286 = vrot.slane %v3353, 1
      %v4287 = vsel %vm1248, %v4285, %v4286
      %v4288 = vrot.slane %v3354, 1
      %v4289 = vsel %vm1248, %v4286, %v4288
      %v4290 = vrot.slane %v3355, 1
      %v4291 = vrot.slane %v3356, 1
      %v4292 = vsel %vm1248, %v4290, %v4291
      %v4293 = vrot.slane %v3357, 1
      %v4294 = vsel %vm1248, %v4291, %v4293
      %s4295 = scalar_lea.vmem %s3, 4
      %v4296 = vld [vmem:[%s4295] sm:$0xf]
      %v4297 = vsel %vm257, %v4207, 0
      %v4299 = vsel %vm257, %v4209, 0
      %v4301 = vsel %vm257, %v4212, 0
      %v4303 = vsel %vm257, %v4214, 0
      %v4305 = vsel %vm257, %v4217, 0
      %v4307 = vsel %vm257, %v4219, 0
      %v4309 = vsel %vm257, %v4222, 0
      %v4311 = vsel %vm257, %v4224, 0
      %v4313 = vsel %vm257, %v4227, 0
      %v4315 = vsel %vm257, %v4229, 0
      %v4317 = vsel %vm257, %v4232, 0
      %v4319 = vsel %vm257, %v4234, 0
      %v4321 = vsel %vm257, %v4237, 0
      %v4323 = vsel %vm257, %v4239, 0
      %v4325 = vsel %vm257, %v4242, 0
      %v4327 = vsel %vm257, %v4244, 0
      %v4329 = vsel %vm257, %v4247, 0
      %v4331 = vsel %vm257, %v4249, 0
      %v4333 = vsel %vm257, %v4252, 0
      %v4335 = vsel %vm257, %v4254, 0
      %v4337 = vsel %vm257, %v4257, 0
      %v4339 = vsel %vm257, %v4259, 0
      %v4341 = vsel %vm257, %v4262, 0
      %v4343 = vsel %vm257, %v4264, 0
      %v4345 = vsel %vm257, %v4267, 0
      %v4347 = vsel %vm257, %v4269, 0
      %v4349 = vsel %vm257, %v4272, 0
      %v4351 = vsel %vm257, %v4274, 0
      %v4353 = vsel %vm257, %v4277, 0
      %v4355 = vsel %vm257, %v4279, 0
      %v4357 = vsel %vm257, %v4282, 0
      %v4359 = vsel %vm257, %v4284, 0
      %v4362 = vsel %vm499, %v4296, 0
      %4364 = vmatprep.subr.mxu0 0.0
      %4365 = vmatpush1.msra.mxu0 %v4362
      %4366 = vmatprep.subr.mxu0 0.0
      %4367 = vmatpush1.msra.mxu0 0.0
      %4368 = vmatprep.subr.mxu0 0.0
      %4369 = vmatpush1.msra.mxu0 0.0
      %4370 = vmatprep.subr.mxu0 0.0
      %4371 = vmatpush1.msra.mxu0 0.0
      %4372 = vmatprep.subr.mxu0 0.0
      %4373 = vmatpush1.msra.mxu0 0.0
      %4374 = vmatprep.subr.mxu0 0.0
      %4375 = vmatpush1.msra.mxu0 0.0
      %4376 = vmatprep.subr.mxu0 0.0
      %4377 = vmatpush1.msra.mxu0 0.0
      %4378 = vmatprep.subr.mxu0 0.0
      %4379 = vmatpush1.msra.mxu0 0.0
      %4380 = vmatprep.subr.mxu0 0.0
      %4381 = vmatpush1.msra.mxu0 0.0
      %4382 = vmatprep.subr.mxu0 0.0
      %4383 = vmatpush1.msra.mxu0 0.0
      %4384 = vmatprep.subr.mxu0 0.0
      %4385 = vmatpush1.msra.mxu0 0.0
      %4386 = vmatprep.subr.mxu0 0.0
      %4387 = vmatpush1.msra.mxu0 0.0
      %4388 = vmatprep.subr.mxu0 0.0
      %4389 = vmatpush1.msra.mxu0 0.0
      %4390 = vmatprep.subr.mxu0 0.0
      %4391 = vmatpush1.msra.mxu0 0.0
      %4392 = vmatprep.subr.mxu0 0.0
      %4393 = vmatpush1.msra.mxu0 0.0
      %4394 = vmatprep.subr.mxu0 0.0
      %4395 = vmatpush1.msra.mxu0 0.0
      %4396 = vmatprep.subr.mxu0 0.0
      %4397 = vmatpush1.msra.mxu0 0.0
      %4398 = vmatprep.subr.mxu0 0.0
      %4399 = vmatpush1.msra.mxu0 0.0
      %4400 = vmatprep.subr.mxu0 0.0
      %4401 = vmatpush1.msra.mxu0 0.0
      %4402 = vmatprep.subr.mxu0 0.0
      %4403 = vmatpush1.msra.mxu0 0.0
      %4404 = vmatprep.subr.mxu0 0.0
      %4405 = vmatpush1.msra.mxu0 0.0
      %4406 = vmatprep.subr.mxu0 0.0
      %4407 = vmatpush1.msra.mxu0 0.0
      %4408 = vmatprep.subr.mxu0 0.0
      %4409 = vmatpush1.msra.mxu0 0.0
      %4410 = vmatprep.subr.mxu0 0.0
      %4411 = vmatpush1.msra.mxu0 0.0
      %4412 = vmatprep.subr.mxu0 0.0
      %4413 = vmatpush1.msra.mxu0 0.0
      %4414 = vmatprep.subr.mxu0 0.0
      %4415 = vmatpush1.msra.mxu0 0.0
      %4416 = vmatprep.subr.mxu0 0.0
      %4417 = vmatpush1.msra.mxu0 0.0
      %4418 = vmatprep.subr.mxu0 0.0
      %4419 = vmatpush1.msra.mxu0 0.0
      %4420 = vmatprep.subr.mxu0 0.0
      %4421 = vmatpush1.msra.mxu0 0.0
      %4422 = vmatprep.subr.mxu0 0.0
      %4423 = vmatpush1.msra.mxu0 0.0
      %4424 = vmatprep.subr.mxu0 0.0
      %4425 = vmatpush1.msra.mxu0 0.0
      %4426 = vmatprep.subr.mxu0 0.0
      %4427 = vmatpush1.msra.mxu0 0.0
      %4428 = vmatprep.mubr.f32.mxu0 0.0
      %4429 = vmatmul.mubr.f32.gmra.mrb[0].mxu0 %v4297
      %v4430 = vpop.f32.mrb[0].mxu0
      %v4431 = vadd.f32 0.0, %v4430
      %v4432 = vpop.f32.mrb[0].mxu0
      %4433 = vmatprep.mubr.f32.mxu0 0.0
      %4434 = vmatmul.mubr.f32.gmra.mrb[0].mxu0 %v4299
      %v4435 = vpop.f32.mrb[0].mxu0
      %v4436 = vadd.f32 0.0, %v4435
      %v4437 = vpop.f32.mrb[0].mxu0
      %4438 = vmatprep.mubr.f32.mxu0 0.0
      %4439 = vmatmul.mubr.f32.gmra.mrb[0].mxu0 %v4301
      %v4440 = vpop.f32.mrb[0].mxu0
      %v4441 = vadd.f32 0.0, %v4440
      %v4442 = vpop.f32.mrb[0].mxu0
      %4443 = vmatprep.mubr.f32.mxu0 0.0
      %4444 = vmatmul.mubr.f32.gmra.mrb[0].mxu0 %v4303
      %v4445 = vpop.f32.mrb[0].mxu0
      %v4446 = vadd.f32 0.0, %v4445
      %v4447 = vpop.f32.mrb[0].mxu0
      %4448 = vmatprep.mubr.f32.mxu0 0.0
      %4449 = vmatmul.mubr.f32.gmra.mrb[0].mxu0 %v4305
      %v4450 = vpop.f32.mrb[0].mxu0
      %v4451 = vadd.f32 0.0, %v4450
      %v4452 = vpop.f32.mrb[0].mxu0
      %4453 = vmatprep.mubr.f32.mxu0 0.0
      %4454 = vmatmul.mubr.f32.gmra.mrb[0].mxu0 %v4307
      %v4455 = vpop.f32.mrb[0].mxu0
      %v4456 = vadd.f32 0.0, %v4455
      %v4457 = vpop.f32.mrb[0].mxu0
      %4458 = vmatprep.mubr.f32.mxu0 0.0
      %4459 = vmatmul.mubr.f32.gmra.mrb[0].mxu0 %v4309
      %v4460 = vpop.f32.mrb[0].mxu0
      %v4461 = vadd.f32 0.0, %v4460
      %v4462 = vpop.f32.mrb[0].mxu0
      %4463 = vmatprep.mubr.f32.mxu0 0.0
      %4464 = vmatmul.mubr.f32.gmra.mrb[0].mxu0 %v4311
      %v4465 = vpop.f32.mrb[0].mxu0
      %v4466 = vadd.f32 0.0, %v4465
      %v4467 = vpop.f32.mrb[0].mxu0
      %4468 = vmatprep.mubr.f32.mxu0 0.0
      %4469 = vmatmul.mubr.f32.gmra.mrb[0].mxu0 %v4313
      %v4470 = vpop.f32.mrb[0].mxu0
      %v4471 = vadd.f32 0.0, %v4470
      %v4472 = vpop.f32.mrb[0].mxu0
      %4473 = vmatprep.mubr.f32.mxu0 0.0
      %4474 = vmatmul.mubr.f32.gmra.mrb[0].mxu0 %v4315
      %v4475 = vpop.f32.mrb[0].mxu0
      %v4476 = vadd.f32 0.0, %v4475
      %v4477 = vpop.f32.mrb[0].mxu0
      %4478 = vmatprep.mubr.f32.mxu0 0.0
      %4479 = vmatmul.mubr.f32.gmra.mrb[0].mxu0 %v4317
      %v4480 = vpop.f32.mrb[0].mxu0
      %v4481 = vadd.f32 0.0, %v4480
      %v4482 = vpop.f32.mrb[0].mxu0
      %4483 = vmatprep.mubr.f32.mxu0 0.0
      %4484 = vmatmul.mubr.f32.gmra.mrb[0].mxu0 %v4319
      %v4485 = vpop.f32.mrb[0].mxu0
      %v4486 = vadd.f32 0.0, %v4485
      %v4487 = vpop.f32.mrb[0].mxu0
      %4488 = vmatprep.mubr.f32.mxu0 0.0
      %4489 = vmatmul.mubr.f32.gmra.mrb[0].mxu0 %v4321
      %v4490 = vpop.f32.mrb[0].mxu0
      %v4491 = vadd.f32 0.0, %v4490
      %v4492 = vpop.f32.mrb[0].mxu0
      %4493 = vmatprep.mubr.f32.mxu0 0.0
      %4494 = vmatmul.mubr.f32.gmra.mrb[0].mxu0 %v4323
      %v4495 = vpop.f32.mrb[0].mxu0
      %v4496 = vadd.f32 0.0, %v4495
      %v4497 = vpop.f32.mrb[0].mxu0
      %4498 = vmatprep.mubr.f32.mxu0 0.0
      %4499 = vmatmul.mubr.f32.gmra.mrb[0].mxu0 %v4325
      %v4500 = vpop.f32.mrb[0].mxu0
      %v4501 = vadd.f32 0.0, %v4500
      %v4502 = vpop.f32.mrb[0].mxu0
      %4503 = vmatprep.mubr.f32.mxu0 0.0
      %4504 = vmatmul.mubr.f32.gmra.mrb[0].mxu0 %v4327
      %v4505 = vpop.f32.mrb[0].mxu0
      %v4506 = vadd.f32 0.0, %v4505
      %v4507 = vpop.f32.mrb[0].mxu0
      %4508 = vmatprep.mubr.f32.mxu0 0.0
      %4509 = vmatmul.mubr.f32.gmra.mrb[0].mxu0 %v4329
      %v4510 = vpop.f32.mrb[0].mxu0
      %v4511 = vadd.f32 0.0, %v4510
      %v4512 = vpop.f32.mrb[0].mxu0
      %4513 = vmatprep.mubr.f32.mxu0 0.0
      %4514 = vmatmul.mubr.f32.gmra.mrb[0].mxu0 %v4331
      %v4515 = vpop.f32.mrb[0].mxu0
      %v4516 = vadd.f32 0.0, %v4515
      %v4517 = vpop.f32.mrb[0].mxu0
      %4518 = vmatprep.mubr.f32.mxu0 0.0
      %4519 = vmatmul.mubr.f32.gmra.mrb[0].mxu0 %v4333
      %v4520 = vpop.f32.mrb[0].mxu0
      %v4521 = vadd.f32 0.0, %v4520
      %v4522 = vpop.f32.mrb[0].mxu0
      %4523 = vmatprep.mubr.f32.mxu0 0.0
      %4524 = vmatmul.mubr.f32.gmra.mrb[0].mxu0 %v4335
      %v4525 = vpop.f32.mrb[0].mxu0
      %v4526 = vadd.f32 0.0, %v4525
      %v4527 = vpop.f32.mrb[0].mxu0
      %4528 = vmatprep.mubr.f32.mxu0 0.0
      %4529 = vmatmul.mubr.f32.gmra.mrb[0].mxu0 %v4337
      %v4530 = vpop.f32.mrb[0].mxu0
      %v4531 = vadd.f32 0.0, %v4530
      %v4532 = vpop.f32.mrb[0].mxu0
      %4533 = vmatprep.mubr.f32.mxu0 0.0
      %4534 = vmatmul.mubr.f32.gmra.mrb[0].mxu0 %v4339
      %v4535 = vpop.f32.mrb[0].mxu0
      %v4536 = vadd.f32 0.0, %v4535
      %v4537 = vpop.f32.mrb[0].mxu0
      %4538 = vmatprep.mubr.f32.mxu0 0.0
      %4539 = vmatmul.mubr.f32.gmra.mrb[0].mxu0 %v4341
      %v4540 = vpop.f32.mrb[0].mxu0
      %v4541 = vadd.f32 0.0, %v4540
      %v4542 = vpop.f32.mrb[0].mxu0
      %4543 = vmatprep.mubr.f32.mxu0 0.0
      %4544 = vmatmul.mubr.f32.gmra.mrb[0].mxu0 %v4343
      %v4545 = vpop.f32.mrb[0].mxu0
      %v4546 = vadd.f32 0.0, %v4545
      %v4547 = vpop.f32.mrb[0].mxu0
      %4548 = vmatprep.mubr.f32.mxu0 0.0
      %4549 = vmatmul.mubr.f32.gmra.mrb[0].mxu0 %v4345
      %v4550 = vpop.f32.mrb[0].mxu0
      %v4551 = vadd.f32 0.0, %v4550
      %v4552 = vpop.f32.mrb[0].mxu0
      %4553 = vmatprep.mubr.f32.mxu0 0.0
      %4554 = vmatmul.mubr.f32.gmra.mrb[0].mxu0 %v4347
      %v4555 = vpop.f32.mrb[0].mxu0
      %v4556 = vadd.f32 0.0, %v4555
      %v4557 = vpop.f32.mrb[0].mxu0
      %4558 = vmatprep.mubr.f32.mxu0 0.0
      %4559 = vmatmul.mubr.f32.gmra.mrb[0].mxu0 %v4349
      %v4560 = vpop.f32.mrb[0].mxu0
      %v4561 = vadd.f32 0.0, %v4560
      %v4562 = vpop.f32.mrb[0].mxu0
      %4563 = vmatprep.mubr.f32.mxu0 0.0
      %4564 = vmatmul.mubr.f32.gmra.mrb[0].mxu0 %v4351
      %v4565 = vpop.f32.mrb[0].mxu0
      %v4566 = vadd.f32 0.0, %v4565
      %v4567 = vpop.f32.mrb[0].mxu0
      %4568 = vmatprep.mubr.f32.mxu0 0.0
      %4569 = vmatmul.mubr.f32.gmra.mrb[0].mxu0 %v4353
      %v4570 = vpop.f32.mrb[0].mxu0
      %v4571 = vadd.f32 0.0, %v4570
      %v4572 = vpop.f32.mrb[0].mxu0
      %4573 = vmatprep.mubr.f32.mxu0 0.0
      %4574 = vmatmul.mubr.f32.gmra.mrb[0].mxu0 %v4355
      %v4575 = vpop.f32.mrb[0].mxu0
      %v4576 = vadd.f32 0.0, %v4575
      %v4577 = vpop.f32.mrb[0].mxu0
      %4578 = vmatprep.mubr.f32.mxu0 0.0
      %4579 = vmatmul.mubr.f32.gmra.mrb[0].mxu0 %v4357
      %v4580 = vpop.f32.mrb[0].mxu0
      %v4581 = vadd.f32 0.0, %v4580
      %v4582 = vpop.f32.mrb[0].mxu0
      %4583 = vmatprep.mubr.f32.mxu0 0.0
      %4584 = vmatmul.mubr.f32.gmra.mrb[0].mxu0 %v4359
      %v4585 = vpop.f32.mrb[0].mxu0
      %v4586 = vadd.f32 0.0, %v4585
      %v4587 = vpop.f32.mrb[0].mxu0
      %4588 = vdwg.mxu0
      %v4589 = vadd.f32 %v4155, %v4431
      %v4590 = vadd.f32 %v4156, %v4436
      %v4591 = vadd.f32 %v4157, %v4441
      %v4592 = vadd.f32 %v4158, %v4446
      %v4593 = vadd.f32 %v4159, %v4451
      %v4594 = vadd.f32 %v4160, %v4456
      %v4595 = vadd.f32 %v4161, %v4461
      %v4596 = vadd.f32 %v4162, %v4466
      %v4597 = vadd.f32 %v4163, %v4471
      %v4598 = vadd.f32 %v4164, %v4476
      %v4599 = vadd.f32 %v4165, %v4481
      %v4600 = vadd.f32 %v4166, %v4486
      %v4601 = vadd.f32 %v4167, %v4491
      %v4602 = vadd.f32 %v4168, %v4496
      %v4603 = vadd.f32 %v4169, %v4501
      %v4604 = vadd.f32 %v4170, %v4506
      %v4605 = vadd.f32 %v4171, %v4511
      %v4606 = vadd.f32 %v4172, %v4516
      %v4607 = vadd.f32 %v4173, %v4521
      %v4608 = vadd.f32 %v4174, %v4526
      %v4609 = vadd.f32 %v4175, %v4531
      %v4610 = vadd.f32 %v4176, %v4536
      %v4611 = vadd.f32 %v4177, %v4541
      %v4612 = vadd.f32 %v4178, %v4546
      %v4613 = vadd.f32 %v4179, %v4551
      %v4614 = vadd.f32 %v4180, %v4556
      %v4615 = vadd.f32 %v4181, %v4561
      %v4616 = vadd.f32 %v4182, %v4566
      %v4617 = vadd.f32 %v4183, %v4571
      %v4618 = vadd.f32 %v4184, %v4576
      %v4619 = vadd.f32 %v4185, %v4581
      %v4620 = vadd.f32 %v4186, %v4586
      %s4621 = scalar_lea.vmem %s3, 16
      %v4622 = vld [vmem:[%s4621] sm:$0xf]
      %v4623 = vsel %vm257, %v4287, 0
      %v4625 = vsel %vm257, %v4289, 0
      %v4628 = vsel %vm499, %v4622, 0
      %4630 = vmatprep.subr.mxu0 0.0
      %4631 = vmatpush1.msra.mxu0 %v4628
      %4632 = vmatprep.subr.mxu0 0.0
      %4633 = vmatpush1.msra.mxu0 0.0
      %4634 = vmatprep.subr.mxu0 0.0
      %4635 = vmatpush1.msra.mxu0 0.0
      %4636 = vmatprep.subr.mxu0 0.0
      %4637 = vmatpush1.msra.mxu0 0.0
      %4638 = vmatprep.subr.mxu0 0.0
      %4639 = vmatpush1.msra.mxu0 0.0
      %4640 = vmatprep.subr.mxu0 0.0
      %4641 = vmatpush1.msra.mxu0 0.0
      %4642 = vmatprep.subr.mxu0 0.0
      %4643 = vmatpush1.msra.mxu0 0.0
      %4644 = vmatprep.subr.mxu0 0.0
      %4645 = vmatpush1.msra.mxu0 0.0
      %4646 = vmatprep.subr.mxu0 0.0
      %4647 = vmatpush1.msra.mxu0 0.0
      %4648 = vmatprep.subr.mxu0 0.0
      %4649 = vmatpush1.msra.mxu0 0.0
      %4650 = vmatprep.subr.mxu0 0.0
      %4651 = vmatpush1.msra.mxu0 0.0
      %4652 = vmatprep.subr.mxu0 0.0
      %4653 = vmatpush1.msra.mxu0 0.0
      %4654 = vmatprep.subr.mxu0 0.0
      %4655 = vmatpush1.msra.mxu0 0.0
      %4656 = vmatprep.subr.mxu0 0.0
      %4657 = vmatpush1.msra.mxu0 0.0
      %4658 = vmatprep.subr.mxu0 0.0
      %4659 = vmatpush1.msra.mxu0 0.0
      %4660 = vmatprep.subr.mxu0 0.0
      %4661 = vmatpush1.msra.mxu0 0.0
      %4662 = vmatprep.subr.mxu0 0.0
      %4663 = vmatpush1.msra.mxu0 0.0
      %4664 = vmatprep.subr.mxu0 0.0
      %4665 = vmatpush1.msra.mxu0 0.0
      %4666 = vmatprep.subr.mxu0 0.0
      %4667 = vmatpush1.msra.mxu0 0.0
      %4668 = vmatprep.subr.mxu0 0.0
      %4669 = vmatpush1.msra.mxu0 0.0
      %4670 = vmatprep.subr.mxu0 0.0
      %4671 = vmatpush1.msra.mxu0 0.0
      %4672 = vmatprep.subr.mxu0 0.0
      %4673 = vmatpush1.msra.mxu0 0.0
      %4674 = vmatprep.subr.mxu0 0.0
      %4675 = vmatpush1.msra.mxu0 0.0
      %4676 = vmatprep.subr.mxu0 0.0
      %4677 = vmatpush1.msra.mxu0 0.0
      %4678 = vmatprep.subr.mxu0 0.0
      %4679 = vmatpush1.msra.mxu0 0.0
      %4680 = vmatprep.subr.mxu0 0.0
      %4681 = vmatpush1.msra.mxu0 0.0
      %4682 = vmatprep.subr.mxu0 0.0
      %4683 = vmatpush1.msra.mxu0 0.0
      %4684 = vmatprep.subr.mxu0 0.0
      %4685 = vmatpush1.msra.mxu0 0.0
      %4686 = vmatprep.subr.mxu0 0.0
      %4687 = vmatpush1.msra.mxu0 0.0
      %4688 = vmatprep.subr.mxu0 0.0
      %4689 = vmatpush1.msra.mxu0 0.0
      %4690 = vmatprep.subr.mxu0 0.0
      %4691 = vmatpush1.msra.mxu0 0.0
      %4692 = vmatprep.subr.mxu0 0.0
      %4693 = vmatpush1.msra.mxu0 0.0
      %4694 = vmatprep.mubr.f32.mxu0 0.0
      %4695 = vmatmul.mubr.f32.gmra.mrb[0].mxu0 %v4301
      %v4696 = vpop.f32.mrb[0].mxu0
      %v4697 = vadd.f32 0.0, %v4696
      %v4698 = vpop.f32.mrb[0].mxu0
      %4699 = vmatprep.mubr.f32.mxu0 0.0
      %4700 = vmatmul.mubr.f32.gmra.mrb[0].mxu0 %v4303
      %v4701 = vpop.f32.mrb[0].mxu0
      %v4702 = vadd.f32 0.0, %v4701
      %v4703 = vpop.f32.mrb[0].mxu0
      %4704 = vmatprep.mubr.f32.mxu0 0.0
      %4705 = vmatmul.mubr.f32.gmra.mrb[0].mxu0 %v4305
      %v4706 = vpop.f32.mrb[0].mxu0
      %v4707 = vadd.f32 0.0, %v4706
      %v4708 = vpop.f32.mrb[0].mxu0
      %4709 = vmatprep.mubr.f32.mxu0 0.0
      %4710 = vmatmul.mubr.f32.gmra.mrb[0].mxu0 %v4307
      %v4711 = vpop.f32.mrb[0].mxu0
      %v4712 = vadd.f32 0.0, %v4711
      %v4713 = vpop.f32.mrb[0].mxu0
      %4714 = vmatprep.mubr.f32.mxu0 0.0
      %4715 = vmatmul.mubr.f32.gmra.mrb[0].mxu0 %v4309
      %v4716 = vpop.f32.mrb[0].mxu0
      %v4717 = vadd.f32 0.0, %v4716
      %v4718 = vpop.f32.mrb[0].mxu0
      %4719 = vmatprep.mubr.f32.mxu0 0.0
      %4720 = vmatmul.mubr.f32.gmra.mrb[0].mxu0 %v4311
      %v4721 = vpop.f32.mrb[0].mxu0
      %v4722 = vadd.f32 0.0, %v4721
      %v4723 = vpop.f32.mrb[0].mxu0
      %4724 = vmatprep.mubr.f32.mxu0 0.0
      %4725 = vmatmul.mubr.f32.gmra.mrb[0].mxu0 %v4313
      %v4726 = vpop.f32.mrb[0].mxu0
      %v4727 = vadd.f32 0.0, %v4726
      %v4728 = vpop.f32.mrb[0].mxu0
      %4729 = vmatprep.mubr.f32.mxu0 0.0
      %4730 = vmatmul.mubr.f32.gmra.mrb[0].mxu0 %v4315
      %v4731 = vpop.f32.mrb[0].mxu0
      %v4732 = vadd.f32 0.0, %v4731
      %v4733 = vpop.f32.mrb[0].mxu0
      %4734 = vmatprep.mubr.f32.mxu0 0.0
      %4735 = vmatmul.mubr.f32.gmra.mrb[0].mxu0 %v4317
      %v4736 = vpop.f32.mrb[0].mxu0
      %v4737 = vadd.f32 0.0, %v4736
      %v4738 = vpop.f32.mrb[0].mxu0
      %4739 = vmatprep.mubr.f32.mxu0 0.0
      %4740 = vmatmul.mubr.f32.gmra.mrb[0].mxu0 %v4319
      %v4741 = vpop.f32.mrb[0].mxu0
      %v4742 = vadd.f32 0.0, %v4741
      %v4743 = vpop.f32.mrb[0].mxu0
      %4744 = vmatprep.mubr.f32.mxu0 0.0
      %4745 = vmatmul.mubr.f32.gmra.mrb[0].mxu0 %v4321
      %v4746 = vpop.f32.mrb[0].mxu0
      %v4747 = vadd.f32 0.0, %v4746
      %v4748 = vpop.f32.mrb[0].mxu0
      %4749 = vmatprep.mubr.f32.mxu0 0.0
      %4750 = vmatmul.mubr.f32.gmra.mrb[0].mxu0 %v4323
      %v4751 = vpop.f32.mrb[0].mxu0
      %v4752 = vadd.f32 0.0, %v4751
      %v4753 = vpop.f32.mrb[0].mxu0
      %4754 = vmatprep.mubr.f32.mxu0 0.0
      %4755 = vmatmul.mubr.f32.gmra.mrb[0].mxu0 %v4325
      %v4756 = vpop.f32.mrb[0].mxu0
      %v4757 = vadd.f32 0.0, %v4756
      %v4758 = vpop.f32.mrb[0].mxu0
      %4759 = vmatprep.mubr.f32.mxu0 0.0
      %4760 = vmatmul.mubr.f32.gmra.mrb[0].mxu0 %v4327
      %v4761 = vpop.f32.mrb[0].mxu0
      %v4762 = vadd.f32 0.0, %v4761
      %v4763 = vpop.f32.mrb[0].mxu0
      %4764 = vmatprep.mubr.f32.mxu0 0.0
      %4765 = vmatmul.mubr.f32.gmra.mrb[0].mxu0 %v4329
      %v4766 = vpop.f32.mrb[0].mxu0
      %v4767 = vadd.f32 0.0, %v4766
      %v4768 = vpop.f32.mrb[0].mxu0
      %4769 = vmatprep.mubr.f32.mxu0 0.0
      %4770 = vmatmul.mubr.f32.gmra.mrb[0].mxu0 %v4331
      %v4771 = vpop.f32.mrb[0].mxu0
      %v4772 = vadd.f32 0.0, %v4771
      %v4773 = vpop.f32.mrb[0].mxu0
      %4774 = vmatprep.mubr.f32.mxu0 0.0
      %4775 = vmatmul.mubr.f32.gmra.mrb[0].mxu0 %v4333
      %v4776 = vpop.f32.mrb[0].mxu0
      %v4777 = vadd.f32 0.0, %v4776
      %v4778 = vpop.f32.mrb[0].mxu0
      %4779 = vmatprep.mubr.f32.mxu0 0.0
      %4780 = vmatmul.mubr.f32.gmra.mrb[0].mxu0 %v4335
      %v4781 = vpop.f32.mrb[0].mxu0
      %v4782 = vadd.f32 0.0, %v4781
      %v4783 = vpop.f32.mrb[0].mxu0
      %4784 = vmatprep.mubr.f32.mxu0 0.0
      %4785 = vmatmul.mubr.f32.gmra.mrb[0].mxu0 %v4337
      %v4786 = vpop.f32.mrb[0].mxu0
      %v4787 = vadd.f32 0.0, %v4786
      %v4788 = vpop.f32.mrb[0].mxu0
      %4789 = vmatprep.mubr.f32.mxu0 0.0
      %4790 = vmatmul.mubr.f32.gmra.mrb[0].mxu0 %v4339
      %v4791 = vpop.f32.mrb[0].mxu0
      %v4792 = vadd.f32 0.0, %v4791
      %v4793 = vpop.f32.mrb[0].mxu0
      %4794 = vmatprep.mubr.f32.mxu0 0.0
      %4795 = vmatmul.mubr.f32.gmra.mrb[0].mxu0 %v4341
      %v4796 = vpop.f32.mrb[0].mxu0
      %v4797 = vadd.f32 0.0, %v4796
      %v4798 = vpop.f32.mrb[0].mxu0
      %4799 = vmatprep.mubr.f32.mxu0 0.0
      %4800 = vmatmul.mubr.f32.gmra.mrb[0].mxu0 %v4343
      %v4801 = vpop.f32.mrb[0].mxu0
      %v4802 = vadd.f32 0.0, %v4801
      %v4803 = vpop.f32.mrb[0].mxu0
      %4804 = vmatprep.mubr.f32.mxu0 0.0
      %4805 = vmatmul.mubr.f32.gmra.mrb[0].mxu0 %v4345
      %v4806 = vpop.f32.mrb[0].mxu0
      %v4807 = vadd.f32 0.0, %v4806
      %v4808 = vpop.f32.mrb[0].mxu0
      %4809 = vmatprep.mubr.f32.mxu0 0.0
      %4810 = vmatmul.mubr.f32.gmra.mrb[0].mxu0 %v4347
      %v4811 = vpop.f32.mrb[0].mxu0
      %v4812 = vadd.f32 0.0, %v4811
      %v4813 = vpop.f32.mrb[0].mxu0
      %4814 = vmatprep.mubr.f32.mxu0 0.0
      %4815 = vmatmul.mubr.f32.gmra.mrb[0].mxu0 %v4349
      %v4816 = vpop.f32.mrb[0].mxu0
      %v4817 = vadd.f32 0.0, %v4816
      %v4818 = vpop.f32.mrb[0].mxu0
      %4819 = vmatprep.mubr.f32.mxu0 0.0
      %4820 = vmatmul.mubr.f32.gmra.mrb[0].mxu0 %v4351
      %v4821 = vpop.f32.mrb[0].mxu0
      %v4822 = vadd.f32 0.0, %v4821
      %v4823 = vpop.f32.mrb[0].mxu0
      %4824 = vmatprep.mubr.f32.mxu0 0.0
      %4825 = vmatmul.mubr.f32.gmra.mrb[0].mxu0 %v4353
      %v4826 = vpop.f32.mrb[0].mxu0
      %v4827 = vadd.f32 0.0, %v4826
      %v4828 = vpop.f32.mrb[0].mxu0
      %4829 = vmatprep.mubr.f32.mxu0 0.0
      %4830 = vmatmul.mubr.f32.gmra.mrb[0].mxu0 %v4355
      %v4831 = vpop.f32.mrb[0].mxu0
      %v4832 = vadd.f32 0.0, %v4831
      %v4833 = vpop.f32.mrb[0].mxu0
      %4834 = vmatprep.mubr.f32.mxu0 0.0
      %4835 = vmatmul.mubr.f32.gmra.mrb[0].mxu0 %v4357
      %v4836 = vpop.f32.mrb[0].mxu0
      %v4837 = vadd.f32 0.0, %v4836
      %v4838 = vpop.f32.mrb[0].mxu0
      %4839 = vmatprep.mubr.f32.mxu0 0.0
      %4840 = vmatmul.mubr.f32.gmra.mrb[0].mxu0 %v4359
      %v4841 = vpop.f32.mrb[0].mxu0
      %v4842 = vadd.f32 0.0, %v4841
      %v4843 = vpop.f32.mrb[0].mxu0
      %4844 = vmatprep.mubr.f32.mxu0 0.0
      %4845 = vmatmul.mubr.f32.gmra.mrb[0].mxu0 %v4623
      %v4846 = vpop.f32.mrb[0].mxu0
      %v4847 = vadd.f32 0.0, %v4846
      %v4848 = vpop.f32.mrb[0].mxu0
      %4849 = vmatprep.mubr.f32.mxu0 0.0
      %4850 = vmatmul.mubr.f32.gmra.mrb[0].mxu0 %v4625
      %v4851 = vpop.f32.mrb[0].mxu0
      %v4852 = vadd.f32 0.0, %v4851
      %v4853 = vpop.f32.mrb[0].mxu0
      %4854 = vdwg.mxu0
      %v4855 = vadd.f32 %v4589, %v4697
      %v4856 = vadd.f32 %v4590, %v4702
      %v4857 = vadd.f32 %v4591, %v4707
      %v4858 = vadd.f32 %v4592, %v4712
      %v4859 = vadd.f32 %v4593, %v4717
      %v4860 = vadd.f32 %v4594, %v4722
      %v4861 = vadd.f32 %v4595, %v4727
      %v4862 = vadd.f32 %v4596, %v4732
      %v4863 = vadd.f32 %v4597, %v4737
      %v4864 = vadd.f32 %v4598, %v4742
      %v4865 = vadd.f32 %v4599, %v4747
      %v4866 = vadd.f32 %v4600, %v4752
      %v4867 = vadd.f32 %v4601, %v4757
      %v4868 = vadd.f32 %v4602, %v4762
      %v4869 = vadd.f32 %v4603, %v4767
      %v4870 = vadd.f32 %v4604, %v4772
      %v4871 = vadd.f32 %v4605, %v4777
      %v4872 = vadd.f32 %v4606, %v4782
      %v4873 = vadd.f32 %v4607, %v4787
      %v4874 = vadd.f32 %v4608, %v4792
      %v4875 = vadd.f32 %v4609, %v4797
      %v4876 = vadd.f32 %v4610, %v4802
      %v4877 = vadd.f32 %v4611, %v4807
      %v4878 = vadd.f32 %v4612, %v4812
      %v4879 = vadd.f32 %v4613, %v4817
      %v4880 = vadd.f32 %v4614, %v4822
      %v4881 = vadd.f32 %v4615, %v4827
      %v4882 = vadd.f32 %v4616, %v4832
      %v4883 = vadd.f32 %v4617, %v4837
      %v4884 = vadd.f32 %v4618, %v4842
      %v4885 = vadd.f32 %v4619, %v4847
      %v4886 = vadd.f32 %v4620, %v4852
      %s4887 = scalar_lea.vmem %s3, 28
      %v4888 = vld [vmem:[%s4887] sm:$0xf]
      %v4889 = vsel %vm257, %v4292, 0
      %v4891 = vsel %vm257, %v4294, 0
      %v4894 = vsel %vm499, %v4888, 0
      %4896 = vmatprep.subr.mxu0 0.0
      %4897 = vmatpush1.msra.mxu0 %v4894
      %4898 = vmatprep.subr.mxu0 0.0
      %4899 = vmatpush1.msra.mxu0 0.0
      %4900 = vmatprep.subr.mxu0 0.0
      %4901 = vmatpush1.msra.mxu0 0.0
      %4902 = vmatprep.subr.mxu0 0.0
      %4903 = vmatpush1.msra.mxu0 0.0
      %4904 = vmatprep.subr.mxu0 0.0
      %4905 = vmatpush1.msra.mxu0 0.0
      %4906 = vmatprep.subr.mxu0 0.0
      %4907 = vmatpush1.msra.mxu0 0.0
      %4908 = vmatprep.subr.mxu0 0.0
      %4909 = vmatpush1.msra.mxu0 0.0
      %4910 = vmatprep.subr.mxu0 0.0
      %4911 = vmatpush1.msra.mxu0 0.0
      %4912 = vmatprep.subr.mxu0 0.0
      %4913 = vmatpush1.msra.mxu0 0.0
      %4914 = vmatprep.subr.mxu0 0.0
      %4915 = vmatpush1.msra.mxu0 0.0
      %4916 = vmatprep.subr.mxu0 0.0
      %4917 = vmatpush1.msra.mxu0 0.0
      %4918 = vmatprep.subr.mxu0 0.0
      %4919 = vmatpush1.msra.mxu0 0.0
      %4920 = vmatprep.subr.mxu0 0.0
      %4921 = vmatpush1.msra.mxu0 0.0
      %4922 = vmatprep.subr.mxu0 0.0
      %4923 = vmatpush1.msra.mxu0 0.0
      %4924 = vmatprep.subr.mxu0 0.0
      %4925 = vmatpush1.msra.mxu0 0.0
      %4926 = vmatprep.subr.mxu0 0.0
      %4927 = vmatpush1.msra.mxu0 0.0
      %4928 = vmatprep.subr.mxu0 0.0
      %4929 = vmatpush1.msra.mxu0 0.0
      %4930 = vmatprep.subr.mxu0 0.0
      %4931 = vmatpush1.msra.mxu0 0.0
      %4932 = vmatprep.subr.mxu0 0.0
      %4933 = vmatpush1.msra.mxu0 0.0
      %4934 = vmatprep.subr.mxu0 0.0
      %4935 = vmatpush1.msra.mxu0 0.0
      %4936 = vmatprep.subr.mxu0 0.0
      %4937 = vmatpush1.msra.mxu0 0.0
      %4938 = vmatprep.subr.mxu0 0.0
      %4939 = vmatpush1.msra.mxu0 0.0
      %4940 = vmatprep.subr.mxu0 0.0
      %4941 = vmatpush1.msra.mxu0 0.0
      %4942 = vmatprep.subr.mxu0 0.0
      %4943 = vmatpush1.msra.mxu0 0.0
      %4944 = vmatprep.subr.mxu0 0.0
      %4945 = vmatpush1.msra.mxu0 0.0
      %4946 = vmatprep.subr.mxu0 0.0
      %4947 = vmatpush1.msra.mxu0 0.0
      %4948 = vmatprep.subr.mxu0 0.0
      %4949 = vmatpush1.msra.mxu0 0.0
      %4950 = vmatprep.subr.mxu0 0.0
      %4951 = vmatpush1.msra.mxu0 0.0
      %4952 = vmatprep.subr.mxu0 0.0
      %4953 = vmatpush1.msra.mxu0 0.0
      %4954 = vmatprep.subr.mxu0 0.0
      %4955 = vmatpush1.msra.mxu0 0.0
      %4956 = vmatprep.subr.mxu0 0.0
      %4957 = vmatpush1.msra.mxu0 0.0
      %4958 = vmatprep.subr.mxu0 0.0
      %4959 = vmatpush1.msra.mxu0 0.0
      %4960 = vmatprep.mubr.f32.mxu0 0.0
      %4961 = vmatmul.mubr.f32.gmra.mrb[0].mxu0 %v4305
      %v4962 = vpop.f32.mrb[0].mxu0
      %v4963 = vadd.f32 0.0, %v4962
      %v4964 = vpop.f32.mrb[0].mxu0
      %4965 = vmatprep.mubr.f32.mxu0 0.0
      %4966 = vmatmul.mubr.f32.gmra.mrb[0].mxu0 %v4307
      %v4967 = vpop.f32.mrb[0].mxu0
      %v4968 = vadd.f32 0.0, %v4967
      %v4969 = vpop.f32.mrb[0].mxu0
      %4970 = vmatprep.mubr.f32.mxu0 0.0
      %4971 = vmatmul.mubr.f32.gmra.mrb[0].mxu0 %v4309
      %v4972 = vpop.f32.mrb[0].mxu0
      %v4973 = vadd.f32 0.0, %v4972
      %v4974 = vpop.f32.mrb[0].mxu0
      %4975 = vmatprep.mubr.f32.mxu0 0.0
      %4976 = vmatmul.mubr.f32.gmra.mrb[0].mxu0 %v4311
      %v4977 = vpop.f32.mrb[0].mxu0
      %v4978 = vadd.f32 0.0, %v4977
      %v4979 = vpop.f32.mrb[0].mxu0
      %4980 = vmatprep.mubr.f32.mxu0 0.0
      %4981 = vmatmul.mubr.f32.gmra.mrb[0].mxu0 %v4313
      %v4982 = vpop.f32.mrb[0].mxu0
      %v4983 = vadd.f32 0.0, %v4982
      %v4984 = vpop.f32.mrb[0].mxu0
      %4985 = vmatprep.mubr.f32.mxu0 0.0
      %4986 = vmatmul.mubr.f32.gmra.mrb[0].mxu0 %v4315
      %v4987 = vpop.f32.mrb[0].mxu0
      %v4988 = vadd.f32 0.0, %v4987
      %v4989 = vpop.f32.mrb[0].mxu0
      %4990 = vmatprep.mubr.f32.mxu0 0.0
      %4991 = vmatmul.mubr.f32.gmra.mrb[0].mxu0 %v4317
      %v4992 = vpop.f32.mrb[0].mxu0
      %v4993 = vadd.f32 0.0, %v4992
      %v4994 = vpop.f32.mrb[0].mxu0
      %4995 = vmatprep.mubr.f32.mxu0 0.0
      %4996 = vmatmul.mubr.f32.gmra.mrb[0].mxu0 %v4319
      %v4997 = vpop.f32.mrb[0].mxu0
      %v4998 = vadd.f32 0.0, %v4997
      %v4999 = vpop.f32.mrb[0].mxu0
      %5000 = vmatprep.mubr.f32.mxu0 0.0
      %5001 = vmatmul.mubr.f32.gmra.mrb[0].mxu0 %v4321
      %v5002 = vpop.f32.mrb[0].mxu0
      %v5003 = vadd.f32 0.0, %v5002
      %v5004 = vpop.f32.mrb[0].mxu0
      %5005 = vmatprep.mubr.f32.mxu0 0.0
      %5006 = vmatmul.mubr.f32.gmra.mrb[0].mxu0 %v4323
      %v5007 = vpop.f32.mrb[0].mxu0
      %v5008 = vadd.f32 0.0, %v5007
      %v5009 = vpop.f32.mrb[0].mxu0
      %5010 = vmatprep.mubr.f32.mxu0 0.0
      %5011 = vmatmul.mubr.f32.gmra.mrb[0].mxu0 %v4325
      %v5012 = vpop.f32.mrb[0].mxu0
      %v5013 = vadd.f32 0.0, %v5012
      %v5014 = vpop.f32.mrb[0].mxu0
      %5015 = vmatprep.mubr.f32.mxu0 0.0
      %5016 = vmatmul.mubr.f32.gmra.mrb[0].mxu0 %v4327
      %v5017 = vpop.f32.mrb[0].mxu0
      %v5018 = vadd.f32 0.0, %v5017
      %v5019 = vpop.f32.mrb[0].mxu0
      %5020 = vmatprep.mubr.f32.mxu0 0.0
      %5021 = vmatmul.mubr.f32.gmra.mrb[0].mxu0 %v4329
      %v5022 = vpop.f32.mrb[0].mxu0
      %v5023 = vadd.f32 0.0, %v5022
      %v5024 = vpop.f32.mrb[0].mxu0
      %5025 = vmatprep.mubr.f32.mxu0 0.0
      %5026 = vmatmul.mubr.f32.gmra.mrb[0].mxu0 %v4331
      %v5027 = vpop.f32.mrb[0].mxu0
      %v5028 = vadd.f32 0.0, %v5027
      %v5029 = vpop.f32.mrb[0].mxu0
      %5030 = vmatprep.mubr.f32.mxu0 0.0
      %5031 = vmatmul.mubr.f32.gmra.mrb[0].mxu0 %v4333
      %v5032 = vpop.f32.mrb[0].mxu0
      %v5033 = vadd.f32 0.0, %v5032
      %v5034 = vpop.f32.mrb[0].mxu0
      %5035 = vmatprep.mubr.f32.mxu0 0.0
      %5036 = vmatmul.mubr.f32.gmra.mrb[0].mxu0 %v4335
      %v5037 = vpop.f32.mrb[0].mxu0
      %v5038 = vadd.f32 0.0, %v5037
      %v5039 = vpop.f32.mrb[0].mxu0
      %5040 = vmatprep.mubr.f32.mxu0 0.0
      %5041 = vmatmul.mubr.f32.gmra.mrb[0].mxu0 %v4337
      %v5042 = vpop.f32.mrb[0].mxu0
      %v5043 = vadd.f32 0.0, %v5042
      %v5044 = vpop.f32.mrb[0].mxu0
      %5045 = vmatprep.mubr.f32.mxu0 0.0
      %5046 = vmatmul.mubr.f32.gmra.mrb[0].mxu0 %v4339
      %v5047 = vpop.f32.mrb[0].mxu0
      %v5048 = vadd.f32 0.0, %v5047
      %v5049 = vpop.f32.mrb[0].mxu0
      %5050 = vmatprep.mubr.f32.mxu0 0.0
      %5051 = vmatmul.mubr.f32.gmra.mrb[0].mxu0 %v4341
      %v5052 = vpop.f32.mrb[0].mxu0
      %v5053 = vadd.f32 0.0, %v5052
      %v5054 = vpop.f32.mrb[0].mxu0
      %5055 = vmatprep.mubr.f32.mxu0 0.0
      %5056 = vmatmul.mubr.f32.gmra.mrb[0].mxu0 %v4343
      %v5057 = vpop.f32.mrb[0].mxu0
      %v5058 = vadd.f32 0.0, %v5057
      %v5059 = vpop.f32.mrb[0].mxu0
      %5060 = vmatprep.mubr.f32.mxu0 0.0
      %5061 = vmatmul.mubr.f32.gmra.mrb[0].mxu0 %v4345
      %v5062 = vpop.f32.mrb[0].mxu0
      %v5063 = vadd.f32 0.0, %v5062
      %v5064 = vpop.f32.mrb[0].mxu0
      %5065 = vmatprep.mubr.f32.mxu0 0.0
      %5066 = vmatmul.mubr.f32.gmra.mrb[0].mxu0 %v4347
      %v5067 = vpop.f32.mrb[0].mxu0
      %v5068 = vadd.f32 0.0, %v5067
      %v5069 = vpop.f32.mrb[0].mxu0
      %5070 = vmatprep.mubr.f32.mxu0 0.0
      %5071 = vmatmul.mubr.f32.gmra.mrb[0].mxu0 %v4349
      %v5072 = vpop.f32.mrb[0].mxu0
      %v5073 = vadd.f32 0.0, %v5072
      %v5074 = vpop.f32.mrb[0].mxu0
      %5075 = vmatprep.mubr.f32.mxu0 0.0
      %5076 = vmatmul.mubr.f32.gmra.mrb[0].mxu0 %v4351
      %v5077 = vpop.f32.mrb[0].mxu0
      %v5078 = vadd.f32 0.0, %v5077
      %v5079 = vpop.f32.mrb[0].mxu0
      %5080 = vmatprep.mubr.f32.mxu0 0.0
      %5081 = vmatmul.mubr.f32.gmra.mrb[0].mxu0 %v4353
      %v5082 = vpop.f32.mrb[0].mxu0
      %v5083 = vadd.f32 0.0, %v5082
      %v5084 = vpop.f32.mrb[0].mxu0
      %5085 = vmatprep.mubr.f32.mxu0 0.0
      %5086 = vmatmul.mubr.f32.gmra.mrb[0].mxu0 %v4355
      %v5087 = vpop.f32.mrb[0].mxu0
      %v5088 = vadd.f32 0.0, %v5087
      %v5089 = vpop.f32.mrb[0].mxu0
      %5090 = vmatprep.mubr.f32.mxu0 0.0
      %5091 = vmatmul.mubr.f32.gmra.mrb[0].mxu0 %v4357
      %v5092 = vpop.f32.mrb[0].mxu0
      %v5093 = vadd.f32 0.0, %v5092
      %v5094 = vpop.f32.mrb[0].mxu0
      %5095 = vmatprep.mubr.f32.mxu0 0.0
      %5096 = vmatmul.mubr.f32.gmra.mrb[0].mxu0 %v4359
      %v5097 = vpop.f32.mrb[0].mxu0
      %v5098 = vadd.f32 0.0, %v5097
      %v5099 = vpop.f32.mrb[0].mxu0
      %5100 = vmatprep.mubr.f32.mxu0 0.0
      %5101 = vmatmul.mubr.f32.gmra.mrb[0].mxu0 %v4623
      %v5102 = vpop.f32.mrb[0].mxu0
      %v5103 = vadd.f32 0.0, %v5102
      %v5104 = vpop.f32.mrb[0].mxu0
      %5105 = vmatprep.mubr.f32.mxu0 0.0
      %5106 = vmatmul.mubr.f32.gmra.mrb[0].mxu0 %v4625
      %v5107 = vpop.f32.mrb[0].mxu0
      %v5108 = vadd.f32 0.0, %v5107
      %v5109 = vpop.f32.mrb[0].mxu0
      %5110 = vmatprep.mubr.f32.mxu0 0.0
      %5111 = vmatmul.mubr.f32.gmra.mrb[0].mxu0 %v4889
      %v5112 = vpop.f32.mrb[0].mxu0
      %v5113 = vadd.f32 0.0, %v5112
      %v5114 = vpop.f32.mrb[0].mxu0
      %5115 = vmatprep.mubr.f32.mxu0 0.0
      %5116 = vmatmul.mubr.f32.gmra.mrb[0].mxu0 %v4891
      %v5117 = vpop.f32.mrb[0].mxu0
      %v5118 = vadd.f32 0.0, %v5117
      %v5119 = vpop.f32.mrb[0].mxu0
      %5120 = vdwg.mxu0
      %v5121 = vadd.f32 %v4855, %v4963
      %v5122 = vadd.f32 %v4856, %v4968
      %v5123 = vadd.f32 %v4857, %v4973
      %v5124 = vadd.f32 %v4858, %v4978
      %v5125 = vadd.f32 %v4859, %v4983
      %v5126 = vadd.f32 %v4860, %v4988
      %v5127 = vadd.f32 %v4861, %v4993
      %v5128 = vadd.f32 %v4862, %v4998
      %v5129 = vadd.f32 %v4863, %v5003
      %v5130 = vadd.f32 %v4864, %v5008
      %v5131 = vadd.f32 %v4865, %v5013
      %v5132 = vadd.f32 %v4866, %v5018
      %v5133 = vadd.f32 %v4867, %v5023
      %v5134 = vadd.f32 %v4868, %v5028
      %v5135 = vadd.f32 %v4869, %v5033
      %v5136 = vadd.f32 %v4870, %v5038
      %v5137 = vadd.f32 %v4871, %v5043
      %v5138 = vadd.f32 %v4872, %v5048
      %v5139 = vadd.f32 %v4873, %v5053
      %v5140 = vadd.f32 %v4874, %v5058
      %v5141 = vadd.f32 %v4875, %v5063
      %v5142 = vadd.f32 %v4876, %v5068
      %v5143 = vadd.f32 %v4877, %v5073
      %v5144 = vadd.f32 %v4878, %v5078
      %v5145 = vadd.f32 %v4879, %v5083
      %v5146 = vadd.f32 %v4880, %v5088
      %v5147 = vadd.f32 %v4881, %v5093
      %v5148 = vadd.f32 %v4882, %v5098
      %v5149 = vadd.f32 %v4883, %v5103
      %v5150 = vadd.f32 %v4884, %v5108
      %v5151 = vadd.f32 %v4885, %v5113
      %v5152 = vadd.f32 %v4886, %v5118
      %v5153 = vrot.slane %v3304, 2
      %v5154 = vrot.slane %v3305, 2
      %v5155 = vsel %vm2197, %v5153, %v5154
      %v5156 = vrot.slane %v3306, 2
      %v5157 = vsel %vm2197, %v5154, %v5156
      %v5158 = vrot.slane %v3307, 2
      %v5159 = vrot.slane %v3308, 2
      %v5160 = vsel %vm2197, %v5158, %v5159
      %v5161 = vrot.slane %v3309, 2
      %v5162 = vsel %vm2197, %v5159, %v5161
      %v5163 = vrot.slane %v3310, 2
      %v5164 = vrot.slane %v3311, 2
      %v5165 = vsel %vm2197, %v5163, %v5164
      %v5166 = vrot.slane %v3312, 2
      %v5167 = vsel %vm2197, %v5164, %v5166
      %v5168 = vrot.slane %v3313, 2
      %v5169 = vrot.slane %v3314, 2
      %v5170 = vsel %vm2197, %v5168, %v5169
      %v5171 = vrot.slane %v3315, 2
      %v5172 = vsel %vm2197, %v5169, %v5171
      %v5173 = vrot.slane %v3316, 2
      %v5174 = vrot.slane %v3317, 2
      %v5175 = vsel %vm2197, %v5173, %v5174
      %v5176 = vrot.slane %v3318, 2
      %v5177 = vsel %vm2197, %v5174, %v5176
      %v5178 = vrot.slane %v3319, 2
      %v5179 = vrot.slane %v3320, 2
      %v5180 = vsel %vm2197, %v5178, %v5179
      %v5181 = vrot.slane %v3321, 2
      %v5182 = vsel %vm2197, %v5179, %v5181
      %v5183 = vrot.slane %v3322, 2
      %v5184 = vrot.slane %v3323, 2
      %v5185 = vsel %vm2197, %v5183, %v5184
      %v5186 = vrot.slane %v3324, 2
      %v5187 = vsel %vm2197, %v5184, %v5186
      %v5188 = vrot.slane %v3325, 2
      %v5189 = vrot.slane %v3326, 2
      %v5190 = vsel %vm2197, %v5188, %v5189
      %v5191 = vrot.slane %v3327, 2
      %v5192 = vsel %vm2197, %v5189, %v5191
      %v5193 = vrot.slane %v3328, 2
      %v5194 = vrot.slane %v3329, 2
      %v5195 = vsel %vm2197, %v5193, %v5194
      %v5196 = vrot.slane %v3330, 2
      %v5197 = vsel %vm2197, %v5194, %v5196
      %v5198 = vrot.slane %v3331, 2
      %v5199 = vrot.slane %v3332, 2
      %v5200 = vsel %vm2197, %v5198, %v5199
      %v5201 = vrot.slane %v3333, 2
      %v5202 = vsel %vm2197, %v5199, %v5201
      %v5203 = vrot.slane %v3334, 2
      %v5204 = vrot.slane %v3335, 2
      %v5205 = vsel %vm2197, %v5203, %v5204
      %v5206 = vrot.slane %v3336, 2
      %v5207 = vsel %vm2197, %v5204, %v5206
      %v5208 = vrot.slane %v3337, 2
      %v5209 = vrot.slane %v3338, 2
      %v5210 = vsel %vm2197, %v5208, %v5209
      %v5211 = vrot.slane %v3339, 2
      %v5212 = vsel %vm2197, %v5209, %v5211
      %v5213 = vrot.slane %v3340, 2
      %v5214 = vrot.slane %v3341, 2
      %v5215 = vsel %vm2197, %v5213, %v5214
      %v5216 = vrot.slane %v3342, 2
      %v5217 = vsel %vm2197, %v5214, %v5216
      %v5218 = vrot.slane %v3343, 2
      %v5219 = vrot.slane %v3344, 2
      %v5220 = vsel %vm2197, %v5218, %v5219
      %v5221 = vrot.slane %v3345, 2
      %v5222 = vsel %vm2197, %v5219, %v5221
      %v5223 = vrot.slane %v3346, 2
      %v5224 = vrot.slane %v3347, 2
      %v5225 = vsel %vm2197, %v5223, %v5224
      %v5226 = vrot.slane %v3348, 2
      %v5227 = vsel %vm2197, %v5224, %v5226
      %v5228 = vrot.slane %v3349, 2
      %v5229 = vrot.slane %v3350, 2
      %v5230 = vsel %vm2197, %v5228, %v5229
      %v5231 = vrot.slane %v3351, 2
      %v5232 = vsel %vm2197, %v5229, %v5231
      %v5233 = vrot.slane %v3352, 2
      %v5234 = vrot.slane %v3353, 2
      %v5235 = vsel %vm2197, %v5233, %v5234
      %v5236 = vrot.slane %v3354, 2
      %v5237 = vsel %vm2197, %v5234, %v5236
      %v5238 = vrot.slane %v3355, 2
      %v5239 = vrot.slane %v3356, 2
      %v5240 = vsel %vm2197, %v5238, %v5239
      %v5241 = vrot.slane %v3357, 2
      %v5242 = vsel %vm2197, %v5239, %v5241
      %s5243 = scalar_lea.vmem %s3, 8
      %v5244 = vld [vmem:[%s5243] sm:$0xf]
      %v5245 = vsel %vm257, %v5155, 0
      %v5247 = vsel %vm257, %v5157, 0
      %v5249 = vsel %vm257, %v5160, 0
      %v5251 = vsel %vm257, %v5162, 0
      %v5253 = vsel %vm257, %v5165, 0
      %v5255 = vsel %vm257, %v5167, 0
      %v5257 = vsel %vm257, %v5170, 0
      %v5259 = vsel %vm257, %v5172, 0
      %v5261 = vsel %vm257, %v5175, 0
      %v5263 = vsel %vm257, %v5177, 0
      %v5265 = vsel %vm257, %v5180, 0
      %v5267 = vsel %vm257, %v5182, 0
      %v5269 = vsel %vm257, %v5185, 0
      %v5271 = vsel %vm257, %v5187, 0
      %v5273 = vsel %vm257, %v5190, 0
      %v5275 = vsel %vm257, %v5192, 0
      %v5277 = vsel %vm257, %v5195, 0
      %v5279 = vsel %vm257, %v5197, 0
      %v5281 = vsel %vm257, %v5200, 0
      %v5283 = vsel %vm257, %v5202, 0
      %v5285 = vsel %vm257, %v5205, 0
      %v5287 = vsel %vm257, %v5207, 0
      %v5289 = vsel %vm257, %v5210, 0
      %v5291 = vsel %vm257, %v5212, 0
      %v5293 = vsel %vm257, %v5215, 0
      %v5295 = vsel %vm257, %v5217, 0
      %v5297 = vsel %vm257, %v5220, 0
      %v5299 = vsel %vm257, %v5222, 0
      %v5301 = vsel %vm257, %v5225, 0
      %v5303 = vsel %vm257, %v5227, 0
      %v5305 = vsel %vm257, %v5230, 0
      %v5307 = vsel %vm257, %v5232, 0
      %v5310 = vsel %vm499, %v5244, 0
      %5312 = vmatprep.subr.mxu0 0.0
      %5313 = vmatpush1.msra.mxu0 %v5310
      %5314 = vmatprep.subr.mxu0 0.0
      %5315 = vmatpush1.msra.mxu0 0.0
      %5316 = vmatprep.subr.mxu0 0.0
      %5317 = vmatpush1.msra.mxu0 0.0
      %5318 = vmatprep.subr.mxu0 0.0
      %5319 = vmatpush1.msra.mxu0 0.0
      %5320 = vmatprep.subr.mxu0 0.0
      %5321 = vmatpush1.msra.mxu0 0.0
      %5322 = vmatprep.subr.mxu0 0.0
      %5323 = vmatpush1.msra.mxu0 0.0
      %5324 = vmatprep.subr.mxu0 0.0
      %5325 = vmatpush1.msra.mxu0 0.0
      %5326 = vmatprep.subr.mxu0 0.0
      %5327 = vmatpush1.msra.mxu0 0.0
      %5328 = vmatprep.subr.mxu0 0.0
      %5329 = vmatpush1.msra.mxu0 0.0
      %5330 = vmatprep.subr.mxu0 0.0
      %5331 = vmatpush1.msra.mxu0 0.0
      %5332 = vmatprep.subr.mxu0 0.0
      %5333 = vmatpush1.msra.mxu0 0.0
      %5334 = vmatprep.subr.mxu0 0.0
      %5335 = vmatpush1.msra.mxu0 0.0
      %5336 = vmatprep.subr.mxu0 0.0
      %5337 = vmatpush1.msra.mxu0 0.0
      %5338 = vmatprep.subr.mxu0 0.0
      %5339 = vmatpush1.msra.mxu0 0.0
      %5340 = vmatprep.subr.mxu0 0.0
      %5341 = vmatpush1.msra.mxu0 0.0
      %5342 = vmatprep.subr.mxu0 0.0
      %5343 = vmatpush1.msra.mxu0 0.0
      %5344 = vmatprep.subr.mxu0 0.0
      %5345 = vmatpush1.msra.mxu0 0.0
      %5346 = vmatprep.subr.mxu0 0.0
      %5347 = vmatpush1.msra.mxu0 0.0
      %5348 = vmatprep.subr.mxu0 0.0
      %5349 = vmatpush1.msra.mxu0 0.0
      %5350 = vmatprep.subr.mxu0 0.0
      %5351 = vmatpush1.msra.mxu0 0.0
      %5352 = vmatprep.subr.mxu0 0.0
      %5353 = vmatpush1.msra.mxu0 0.0
      %5354 = vmatprep.subr.mxu0 0.0
      %5355 = vmatpush1.msra.mxu0 0.0
      %5356 = vmatprep.subr.mxu0 0.0
      %5357 = vmatpush1.msra.mxu0 0.0
      %5358 = vmatprep.subr.mxu0 0.0
      %5359 = vmatpush1.msra.mxu0 0.0
      %5360 = vmatprep.subr.mxu0 0.0
      %5361 = vmatpush1.msra.mxu0 0.0
      %5362 = vmatprep.subr.mxu0 0.0
      %5363 = vmatpush1.msra.mxu0 0.0
      %5364 = vmatprep.subr.mxu0 0.0
      %5365 = vmatpush1.msra.mxu0 0.0
      %5366 = vmatprep.subr.mxu0 0.0
      %5367 = vmatpush1.msra.mxu0 0.0
      %5368 = vmatprep.subr.mxu0 0.0
      %5369 = vmatpush1.msra.mxu0 0.0
      %5370 = vmatprep.subr.mxu0 0.0
      %5371 = vmatpush1.msra.mxu0 0.0
      %5372 = vmatprep.subr.mxu0 0.0
      %5373 = vmatpush1.msra.mxu0 0.0
      %5374 = vmatprep.subr.mxu0 0.0
      %5375 = vmatpush1.msra.mxu0 0.0
      %5376 = vmatprep.mubr.f32.mxu0 0.0
      %5377 = vmatmul.mubr.f32.gmra.mrb[0].mxu0 %v5245
      %v5378 = vpop.f32.mrb[0].mxu0
      %v5379 = vadd.f32 0.0, %v5378
      %v5380 = vpop.f32.mrb[0].mxu0
      %5381 = vmatprep.mubr.f32.mxu0 0.0
      %5382 = vmatmul.mubr.f32.gmra.mrb[0].mxu0 %v5247
      %v5383 = vpop.f32.mrb[0].mxu0
      %v5384 = vadd.f32 0.0, %v5383
      %v5385 = vpop.f32.mrb[0].mxu0
      %5386 = vmatprep.mubr.f32.mxu0 0.0
      %5387 = vmatmul.mubr.f32.gmra.mrb[0].mxu0 %v5249
      %v5388 = vpop.f32.mrb[0].mxu0
      %v5389 = vadd.f32 0.0, %v5388
      %v5390 = vpop.f32.mrb[0].mxu0
      %5391 = vmatprep.mubr.f32.mxu0 0.0
      %5392 = vmatmul.mubr.f32.gmra.mrb[0].mxu0 %v5251
      %v5393 = vpop.f32.mrb[0].mxu0
      %v5394 = vadd.f32 0.0, %v5393
      %v5395 = vpop.f32.mrb[0].mxu0
      %5396 = vmatprep.mubr.f32.mxu0 0.0
      %5397 = vmatmul.mubr.f32.gmra.mrb[0].mxu0 %v5253
      %v5398 = vpop.f32.mrb[0].mxu0
      %v5399 = vadd.f32 0.0, %v5398
      %v5400 = vpop.f32.mrb[0].mxu0
      %5401 = vmatprep.mubr.f32.mxu0 0.0
      %5402 = vmatmul.mubr.f32.gmra.mrb[0].mxu0 %v5255
      %v5403 = vpop.f32.mrb[0].mxu0
      %v5404 = vadd.f32 0.0, %v5403
      %v5405 = vpop.f32.mrb[0].mxu0
      %5406 = vmatprep.mubr.f32.mxu0 0.0
      %5407 = vmatmul.mubr.f32.gmra.mrb[0].mxu0 %v5257
      %v5408 = vpop.f32.mrb[0].mxu0
      %v5409 = vadd.f32 0.0, %v5408
      %v5410 = vpop.f32.mrb[0].mxu0
      %5411 = vmatprep.mubr.f32.mxu0 0.0
      %5412 = vmatmul.mubr.f32.gmra.mrb[0].mxu0 %v5259
      %v5413 = vpop.f32.mrb[0].mxu0
      %v5414 = vadd.f32 0.0, %v5413
      %v5415 = vpop.f32.mrb[0].mxu0
      %5416 = vmatprep.mubr.f32.mxu0 0.0
      %5417 = vmatmul.mubr.f32.gmra.mrb[0].mxu0 %v5261
      %v5418 = vpop.f32.mrb[0].mxu0
      %v5419 = vadd.f32 0.0, %v5418
      %v5420 = vpop.f32.mrb[0].mxu0
      %5421 = vmatprep.mubr.f32.mxu0 0.0
      %5422 = vmatmul.mubr.f32.gmra.mrb[0].mxu0 %v5263
      %v5423 = vpop.f32.mrb[0].mxu0
      %v5424 = vadd.f32 0.0, %v5423
      %v5425 = vpop.f32.mrb[0].mxu0
      %5426 = vmatprep.mubr.f32.mxu0 0.0
      %5427 = vmatmul.mubr.f32.gmra.mrb[0].mxu0 %v5265
      %v5428 = vpop.f32.mrb[0].mxu0
      %v5429 = vadd.f32 0.0, %v5428
      %v5430 = vpop.f32.mrb[0].mxu0
      %5431 = vmatprep.mubr.f32.mxu0 0.0
      %5432 = vmatmul.mubr.f32.gmra.mrb[0].mxu0 %v5267
      %v5433 = vpop.f32.mrb[0].mxu0
      %v5434 = vadd.f32 0.0, %v5433
      %v5435 = vpop.f32.mrb[0].mxu0
      %5436 = vmatprep.mubr.f32.mxu0 0.0
      %5437 = vmatmul.mubr.f32.gmra.mrb[0].mxu0 %v5269
      %v5438 = vpop.f32.mrb[0].mxu0
      %v5439 = vadd.f32 0.0, %v5438
      %v5440 = vpop.f32.mrb[0].mxu0
      %5441 = vmatprep.mubr.f32.mxu0 0.0
      %5442 = vmatmul.mubr.f32.gmra.mrb[0].mxu0 %v5271
      %v5443 = vpop.f32.mrb[0].mxu0
      %v5444 = vadd.f32 0.0, %v5443
      %v5445 = vpop.f32.mrb[0].mxu0
      %5446 = vmatprep.mubr.f32.mxu0 0.0
      %5447 = vmatmul.mubr.f32.gmra.mrb[0].mxu0 %v5273
      %v5448 = vpop.f32.mrb[0].mxu0
      %v5449 = vadd.f32 0.0, %v5448
      %v5450 = vpop.f32.mrb[0].mxu0
      %5451 = vmatprep.mubr.f32.mxu0 0.0
      %5452 = vmatmul.mubr.f32.gmra.mrb[0].mxu0 %v5275
      %v5453 = vpop.f32.mrb[0].mxu0
      %v5454 = vadd.f32 0.0, %v5453
      %v5455 = vpop.f32.mrb[0].mxu0
      %5456 = vmatprep.mubr.f32.mxu0 0.0
      %5457 = vmatmul.mubr.f32.gmra.mrb[0].mxu0 %v5277
      %v5458 = vpop.f32.mrb[0].mxu0
      %v5459 = vadd.f32 0.0, %v5458
      %v5460 = vpop.f32.mrb[0].mxu0
      %5461 = vmatprep.mubr.f32.mxu0 0.0
      %5462 = vmatmul.mubr.f32.gmra.mrb[0].mxu0 %v5279
      %v5463 = vpop.f32.mrb[0].mxu0
      %v5464 = vadd.f32 0.0, %v5463
      %v5465 = vpop.f32.mrb[0].mxu0
      %5466 = vmatprep.mubr.f32.mxu0 0.0
      %5467 = vmatmul.mubr.f32.gmra.mrb[0].mxu0 %v5281
      %v5468 = vpop.f32.mrb[0].mxu0
      %v5469 = vadd.f32 0.0, %v5468
      %v5470 = vpop.f32.mrb[0].mxu0
      %5471 = vmatprep.mubr.f32.mxu0 0.0
      %5472 = vmatmul.mubr.f32.gmra.mrb[0].mxu0 %v5283
      %v5473 = vpop.f32.mrb[0].mxu0
      %v5474 = vadd.f32 0.0, %v5473
      %v5475 = vpop.f32.mrb[0].mxu0
      %5476 = vmatprep.mubr.f32.mxu0 0.0
      %5477 = vmatmul.mubr.f32.gmra.mrb[0].mxu0 %v5285
      %v5478 = vpop.f32.mrb[0].mxu0
      %v5479 = vadd.f32 0.0, %v5478
      %v5480 = vpop.f32.mrb[0].mxu0
      %5481 = vmatprep.mubr.f32.mxu0 0.0
      %5482 = vmatmul.mubr.f32.gmra.mrb[0].mxu0 %v5287
      %v5483 = vpop.f32.mrb[0].mxu0
      %v5484 = vadd.f32 0.0, %v5483
      %v5485 = vpop.f32.mrb[0].mxu0
      %5486 = vmatprep.mubr.f32.mxu0 0.0
      %5487 = vmatmul.mubr.f32.gmra.mrb[0].mxu0 %v5289
      %v5488 = vpop.f32.mrb[0].mxu0
      %v5489 = vadd.f32 0.0, %v5488
      %v5490 = vpop.f32.mrb[0].mxu0
      %5491 = vmatprep.mubr.f32.mxu0 0.0
      %5492 = vmatmul.mubr.f32.gmra.mrb[0].mxu0 %v5291
      %v5493 = vpop.f32.mrb[0].mxu0
      %v5494 = vadd.f32 0.0, %v5493
      %v5495 = vpop.f32.mrb[0].mxu0
      %5496 = vmatprep.mubr.f32.mxu0 0.0
      %5497 = vmatmul.mubr.f32.gmra.mrb[0].mxu0 %v5293
      %v5498 = vpop.f32.mrb[0].mxu0
      %v5499 = vadd.f32 0.0, %v5498
      %v5500 = vpop.f32.mrb[0].mxu0
      %5501 = vmatprep.mubr.f32.mxu0 0.0
      %5502 = vmatmul.mubr.f32.gmra.mrb[0].mxu0 %v5295
      %v5503 = vpop.f32.mrb[0].mxu0
      %v5504 = vadd.f32 0.0, %v5503
      %v5505 = vpop.f32.mrb[0].mxu0
      %5506 = vmatprep.mubr.f32.mxu0 0.0
      %5507 = vmatmul.mubr.f32.gmra.mrb[0].mxu0 %v5297
      %v5508 = vpop.f32.mrb[0].mxu0
      %v5509 = vadd.f32 0.0, %v5508
      %v5510 = vpop.f32.mrb[0].mxu0
      %5511 = vmatprep.mubr.f32.mxu0 0.0
      %5512 = vmatmul.mubr.f32.gmra.mrb[0].mxu0 %v5299
      %v5513 = vpop.f32.mrb[0].mxu0
      %v5514 = vadd.f32 0.0, %v5513
      %v5515 = vpop.f32.mrb[0].mxu0
      %5516 = vmatprep.mubr.f32.mxu0 0.0
      %5517 = vmatmul.mubr.f32.gmra.mrb[0].mxu0 %v5301
      %v5518 = vpop.f32.mrb[0].mxu0
      %v5519 = vadd.f32 0.0, %v5518
      %v5520 = vpop.f32.mrb[0].mxu0
      %5521 = vmatprep.mubr.f32.mxu0 0.0
      %5522 = vmatmul.mubr.f32.gmra.mrb[0].mxu0 %v5303
      %v5523 = vpop.f32.mrb[0].mxu0
      %v5524 = vadd.f32 0.0, %v5523
      %v5525 = vpop.f32.mrb[0].mxu0
      %5526 = vmatprep.mubr.f32.mxu0 0.0
      %5527 = vmatmul.mubr.f32.gmra.mrb[0].mxu0 %v5305
      %v5528 = vpop.f32.mrb[0].mxu0
      %v5529 = vadd.f32 0.0, %v5528
      %v5530 = vpop.f32.mrb[0].mxu0
      %5531 = vmatprep.mubr.f32.mxu0 0.0
      %5532 = vmatmul.mubr.f32.gmra.mrb[0].mxu0 %v5307
      %v5533 = vpop.f32.mrb[0].mxu0
      %v5534 = vadd.f32 0.0, %v5533
      %v5535 = vpop.f32.mrb[0].mxu0
      %5536 = vdwg.mxu0
      %v5537 = vadd.f32 %v5121, %v5379
      %v5538 = vadd.f32 %v5122, %v5384
      %v5539 = vadd.f32 %v5123, %v5389
      %v5540 = vadd.f32 %v5124, %v5394
      %v5541 = vadd.f32 %v5125, %v5399
      %v5542 = vadd.f32 %v5126, %v5404
      %v5543 = vadd.f32 %v5127, %v5409
      %v5544 = vadd.f32 %v5128, %v5414
      %v5545 = vadd.f32 %v5129, %v5419
      %v5546 = vadd.f32 %v5130, %v5424
      %v5547 = vadd.f32 %v5131, %v5429
      %v5548 = vadd.f32 %v5132, %v5434
      %v5549 = vadd.f32 %v5133, %v5439
      %v5550 = vadd.f32 %v5134, %v5444
      %v5551 = vadd.f32 %v5135, %v5449
      %v5552 = vadd.f32 %v5136, %v5454
      %v5553 = vadd.f32 %v5137, %v5459
      %v5554 = vadd.f32 %v5138, %v5464
      %v5555 = vadd.f32 %v5139, %v5469
      %v5556 = vadd.f32 %v5140, %v5474
      %v5557 = vadd.f32 %v5141, %v5479
      %v5558 = vadd.f32 %v5142, %v5484
      %v5559 = vadd.f32 %v5143, %v5489
      %v5560 = vadd.f32 %v5144, %v5494
      %v5561 = vadd.f32 %v5145, %v5499
      %v5562 = vadd.f32 %v5146, %v5504
      %v5563 = vadd.f32 %v5147, %v5509
      %v5564 = vadd.f32 %v5148, %v5514
      %v5565 = vadd.f32 %v5149, %v5519
      %v5566 = vadd.f32 %v5150, %v5524
      %v5567 = vadd.f32 %v5151, %v5529
      %v5568 = vadd.f32 %v5152, %v5534
      %s5569 = scalar_lea.vmem %s3, 20
      %v5570 = vld [vmem:[%s5569] sm:$0xf]
      %v5571 = vsel %vm257, %v5235, 0
      %v5573 = vsel %vm257, %v5237, 0
      %v5576 = vsel %vm499, %v5570, 0
      %5578 = vmatprep.subr.mxu0 0.0
      %5579 = vmatpush1.msra.mxu0 %v5576
      %5580 = vmatprep.subr.mxu0 0.0
      %5581 = vmatpush1.msra.mxu0 0.0
      %5582 = vmatprep.subr.mxu0 0.0
      %5583 = vmatpush1.msra.mxu0 0.0
      %5584 = vmatprep.subr.mxu0 0.0
      %5585 = vmatpush1.msra.mxu0 0.0
      %5586 = vmatprep.subr.mxu0 0.0
      %5587 = vmatpush1.msra.mxu0 0.0
      %5588 = vmatprep.subr.mxu0 0.0
      %5589 = vmatpush1.msra.mxu0 0.0
      %5590 = vmatprep.subr.mxu0 0.0
      %5591 = vmatpush1.msra.mxu0 0.0
      %5592 = vmatprep.subr.mxu0 0.0
      %5593 = vmatpush1.msra.mxu0 0.0
      %5594 = vmatprep.subr.mxu0 0.0
      %5595 = vmatpush1.msra.mxu0 0.0
      %5596 = vmatprep.subr.mxu0 0.0
      %5597 = vmatpush1.msra.mxu0 0.0
      %5598 = vmatprep.subr.mxu0 0.0
      %5599 = vmatpush1.msra.mxu0 0.0
      %5600 = vmatprep.subr.mxu0 0.0
      %5601 = vmatpush1.msra.mxu0 0.0
      %5602 = vmatprep.subr.mxu0 0.0
      %5603 = vmatpush1.msra.mxu0 0.0
      %5604 = vmatprep.subr.mxu0 0.0
      %5605 = vmatpush1.msra.mxu0 0.0
      %5606 = vmatprep.subr.mxu0 0.0
      %5607 = vmatpush1.msra.mxu0 0.0
      %5608 = vmatprep.subr.mxu0 0.0
      %5609 = vmatpush1.msra.mxu0 0.0
      %5610 = vmatprep.subr.mxu0 0.0
      %5611 = vmatpush1.msra.mxu0 0.0
      %5612 = vmatprep.subr.mxu0 0.0
      %5613 = vmatpush1.msra.mxu0 0.0
      %5614 = vmatprep.subr.mxu0 0.0
      %5615 = vmatpush1.msra.mxu0 0.0
      %5616 = vmatprep.subr.mxu0 0.0
      %5617 = vmatpush1.msra.mxu0 0.0
      %5618 = vmatprep.subr.mxu0 0.0
      %5619 = vmatpush1.msra.mxu0 0.0
      %5620 = vmatprep.subr.mxu0 0.0
      %5621 = vmatpush1.msra.mxu0 0.0
      %5622 = vmatprep.subr.mxu0 0.0
      %5623 = vmatpush1.msra.mxu0 0.0
      %5624 = vmatprep.subr.mxu0 0.0
      %5625 = vmatpush1.msra.mxu0 0.0
      %5626 = vmatprep.subr.mxu0 0.0
      %5627 = vmatpush1.msra.mxu0 0.0
      %5628 = vmatprep.subr.mxu0 0.0
      %5629 = vmatpush1.msra.mxu0 0.0
      %5630 = vmatprep.subr.mxu0 0.0
      %5631 = vmatpush1.msra.mxu0 0.0
      %5632 = vmatprep.subr.mxu0 0.0
      %5633 = vmatpush1.msra.mxu0 0.0
      %5634 = vmatprep.subr.mxu0 0.0
      %5635 = vmatpush1.msra.mxu0 0.0
      %5636 = vmatprep.subr.mxu0 0.0
      %5637 = vmatpush1.msra.mxu0 0.0
      %5638 = vmatprep.subr.mxu0 0.0
      %5639 = vmatpush1.msra.mxu0 0.0
      %5640 = vmatprep.subr.mxu0 0.0
      %5641 = vmatpush1.msra.mxu0 0.0
      %5642 = vmatprep.mubr.f32.mxu0 0.0
      %5643 = vmatmul.mubr.f32.gmra.mrb[0].mxu0 %v5249
      %v5644 = vpop.f32.mrb[0].mxu0
      %v5645 = vadd.f32 0.0, %v5644
      %v5646 = vpop.f32.mrb[0].mxu0
      %5647 = vmatprep.mubr.f32.mxu0 0.0
      %5648 = vmatmul.mubr.f32.gmra.mrb[0].mxu0 %v5251
      %v5649 = vpop.f32.mrb[0].mxu0
      %v5650 = vadd.f32 0.0, %v5649
      %v5651 = vpop.f32.mrb[0].mxu0
      %5652 = vmatprep.mubr.f32.mxu0 0.0
      %5653 = vmatmul.mubr.f32.gmra.mrb[0].mxu0 %v5253
      %v5654 = vpop.f32.mrb[0].mxu0
      %v5655 = vadd.f32 0.0, %v5654
      %v5656 = vpop.f32.mrb[0].mxu0
      %5657 = vmatprep.mubr.f32.mxu0 0.0
      %5658 = vmatmul.mubr.f32.gmra.mrb[0].mxu0 %v5255
      %v5659 = vpop.f32.mrb[0].mxu0
      %v5660 = vadd.f32 0.0, %v5659
      %v5661 = vpop.f32.mrb[0].mxu0
      %5662 = vmatprep.mubr.f32.mxu0 0.0
      %5663 = vmatmul.mubr.f32.gmra.mrb[0].mxu0 %v5257
      %v5664 = vpop.f32.mrb[0].mxu0
      %v5665 = vadd.f32 0.0, %v5664
      %v5666 = vpop.f32.mrb[0].mxu0
      %5667 = vmatprep.mubr.f32.mxu0 0.0
      %5668 = vmatmul.mubr.f32.gmra.mrb[0].mxu0 %v5259
      %v5669 = vpop.f32.mrb[0].mxu0
      %v5670 = vadd.f32 0.0, %v5669
      %v5671 = vpop.f32.mrb[0].mxu0
      %5672 = vmatprep.mubr.f32.mxu0 0.0
      %5673 = vmatmul.mubr.f32.gmra.mrb[0].mxu0 %v5261
      %v5674 = vpop.f32.mrb[0].mxu0
      %v5675 = vadd.f32 0.0, %v5674
      %v5676 = vpop.f32.mrb[0].mxu0
      %5677 = vmatprep.mubr.f32.mxu0 0.0
      %5678 = vmatmul.mubr.f32.gmra.mrb[0].mxu0 %v5263
      %v5679 = vpop.f32.mrb[0].mxu0
      %v5680 = vadd.f32 0.0, %v5679
      %v5681 = vpop.f32.mrb[0].mxu0
      %5682 = vmatprep.mubr.f32.mxu0 0.0
      %5683 = vmatmul.mubr.f32.gmra.mrb[0].mxu0 %v5265
      %v5684 = vpop.f32.mrb[0].mxu0
      %v5685 = vadd.f32 0.0, %v5684
      %v5686 = vpop.f32.mrb[0].mxu0
      %5687 = vmatprep.mubr.f32.mxu0 0.0
      %5688 = vmatmul.mubr.f32.gmra.mrb[0].mxu0 %v5267
      %v5689 = vpop.f32.mrb[0].mxu0
      %v5690 = vadd.f32 0.0, %v5689
      %v5691 = vpop.f32.mrb[0].mxu0
      %5692 = vmatprep.mubr.f32.mxu0 0.0
      %5693 = vmatmul.mubr.f32.gmra.mrb[0].mxu0 %v5269
      %v5694 = vpop.f32.mrb[0].mxu0
      %v5695 = vadd.f32 0.0, %v5694
      %v5696 = vpop.f32.mrb[0].mxu0
      %5697 = vmatprep.mubr.f32.mxu0 0.0
      %5698 = vmatmul.mubr.f32.gmra.mrb[0].mxu0 %v5271
      %v5699 = vpop.f32.mrb[0].mxu0
      %v5700 = vadd.f32 0.0, %v5699
      %v5701 = vpop.f32.mrb[0].mxu0
      %5702 = vmatprep.mubr.f32.mxu0 0.0
      %5703 = vmatmul.mubr.f32.gmra.mrb[0].mxu0 %v5273
      %v5704 = vpop.f32.mrb[0].mxu0
      %v5705 = vadd.f32 0.0, %v5704
      %v5706 = vpop.f32.mrb[0].mxu0
      %5707 = vmatprep.mubr.f32.mxu0 0.0
      %5708 = vmatmul.mubr.f32.gmra.mrb[0].mxu0 %v5275
      %v5709 = vpop.f32.mrb[0].mxu0
      %v5710 = vadd.f32 0.0, %v5709
      %v5711 = vpop.f32.mrb[0].mxu0
      %5712 = vmatprep.mubr.f32.mxu0 0.0
      %5713 = vmatmul.mubr.f32.gmra.mrb[0].mxu0 %v5277
      %v5714 = vpop.f32.mrb[0].mxu0
      %v5715 = vadd.f32 0.0, %v5714
      %v5716 = vpop.f32.mrb[0].mxu0
      %5717 = vmatprep.mubr.f32.mxu0 0.0
      %5718 = vmatmul.mubr.f32.gmra.mrb[0].mxu0 %v5279
      %v5719 = vpop.f32.mrb[0].mxu0
      %v5720 = vadd.f32 0.0, %v5719
      %v5721 = vpop.f32.mrb[0].mxu0
      %5722 = vmatprep.mubr.f32.mxu0 0.0
      %5723 = vmatmul.mubr.f32.gmra.mrb[0].mxu0 %v5281
      %v5724 = vpop.f32.mrb[0].mxu0
      %v5725 = vadd.f32 0.0, %v5724
      %v5726 = vpop.f32.mrb[0].mxu0
      %5727 = vmatprep.mubr.f32.mxu0 0.0
      %5728 = vmatmul.mubr.f32.gmra.mrb[0].mxu0 %v5283
      %v5729 = vpop.f32.mrb[0].mxu0
      %v5730 = vadd.f32 0.0, %v5729
      %v5731 = vpop.f32.mrb[0].mxu0
      %5732 = vmatprep.mubr.f32.mxu0 0.0
      %5733 = vmatmul.mubr.f32.gmra.mrb[0].mxu0 %v5285
      %v5734 = vpop.f32.mrb[0].mxu0
      %v5735 = vadd.f32 0.0, %v5734
      %v5736 = vpop.f32.mrb[0].mxu0
      %5737 = vmatprep.mubr.f32.mxu0 0.0
      %5738 = vmatmul.mubr.f32.gmra.mrb[0].mxu0 %v5287
      %v5739 = vpop.f32.mrb[0].mxu0
      %v5740 = vadd.f32 0.0, %v5739
      %v5741 = vpop.f32.mrb[0].mxu0
      %5742 = vmatprep.mubr.f32.mxu0 0.0
      %5743 = vmatmul.mubr.f32.gmra.mrb[0].mxu0 %v5289
      %v5744 = vpop.f32.mrb[0].mxu0
      %v5745 = vadd.f32 0.0, %v5744
      %v5746 = vpop.f32.mrb[0].mxu0
      %5747 = vmatprep.mubr.f32.mxu0 0.0
      %5748 = vmatmul.mubr.f32.gmra.mrb[0].mxu0 %v5291
      %v5749 = vpop.f32.mrb[0].mxu0
      %v5750 = vadd.f32 0.0, %v5749
      %v5751 = vpop.f32.mrb[0].mxu0
      %5752 = vmatprep.mubr.f32.mxu0 0.0
      %5753 = vmatmul.mubr.f32.gmra.mrb[0].mxu0 %v5293
      %v5754 = vpop.f32.mrb[0].mxu0
      %v5755 = vadd.f32 0.0, %v5754
      %v5756 = vpop.f32.mrb[0].mxu0
      %5757 = vmatprep.mubr.f32.mxu0 0.0
      %5758 = vmatmul.mubr.f32.gmra.mrb[0].mxu0 %v5295
      %v5759 = vpop.f32.mrb[0].mxu0
      %v5760 = vadd.f32 0.0, %v5759
      %v5761 = vpop.f32.mrb[0].mxu0
      %5762 = vmatprep.mubr.f32.mxu0 0.0
      %5763 = vmatmul.mubr.f32.gmra.mrb[0].mxu0 %v5297
      %v5764 = vpop.f32.mrb[0].mxu0
      %v5765 = vadd.f32 0.0, %v5764
      %v5766 = vpop.f32.mrb[0].mxu0
      %5767 = vmatprep.mubr.f32.mxu0 0.0
      %5768 = vmatmul.mubr.f32.gmra.mrb[0].mxu0 %v5299
      %v5769 = vpop.f32.mrb[0].mxu0
      %v5770 = vadd.f32 0.0, %v5769
      %v5771 = vpop.f32.mrb[0].mxu0
      %5772 = vmatprep.mubr.f32.mxu0 0.0
      %5773 = vmatmul.mubr.f32.gmra.mrb[0].mxu0 %v5301
      %v5774 = vpop.f32.mrb[0].mxu0
      %v5775 = vadd.f32 0.0, %v5774
      %v5776 = vpop.f32.mrb[0].mxu0
      %5777 = vmatprep.mubr.f32.mxu0 0.0
      %5778 = vmatmul.mubr.f32.gmra.mrb[0].mxu0 %v5303
      %v5779 = vpop.f32.mrb[0].mxu0
      %v5780 = vadd.f32 0.0, %v5779
      %v5781 = vpop.f32.mrb[0].mxu0
      %5782 = vmatprep.mubr.f32.mxu0 0.0
      %5783 = vmatmul.mubr.f32.gmra.mrb[0].mxu0 %v5305
      %v5784 = vpop.f32.mrb[0].mxu0
      %v5785 = vadd.f32 0.0, %v5784
      %v5786 = vpop.f32.mrb[0].mxu0
      %5787 = vmatprep.mubr.f32.mxu0 0.0
      %5788 = vmatmul.mubr.f32.gmra.mrb[0].mxu0 %v5307
      %v5789 = vpop.f32.mrb[0].mxu0
      %v5790 = vadd.f32 0.0, %v5789
      %v5791 = vpop.f32.mrb[0].mxu0
      %5792 = vmatprep.mubr.f32.mxu0 0.0
      %5793 = vmatmul.mubr.f32.gmra.mrb[0].mxu0 %v5571
      %v5794 = vpop.f32.mrb[0].mxu0
      %v5795 = vadd.f32 0.0, %v5794
      %v5796 = vpop.f32.mrb[0].mxu0
      %5797 = vmatprep.mubr.f32.mxu0 0.0
      %5798 = vmatmul.mubr.f32.gmra.mrb[0].mxu0 %v5573
      %v5799 = vpop.f32.mrb[0].mxu0
      %v5800 = vadd.f32 0.0, %v5799
      %v5801 = vpop.f32.mrb[0].mxu0
      %5802 = vdwg.mxu0
      %v5803 = vadd.f32 %v5537, %v5645
      %v5804 = vadd.f32 %v5538, %v5650
      %v5805 = vadd.f32 %v5539, %v5655
      %v5806 = vadd.f32 %v5540, %v5660
      %v5807 = vadd.f32 %v5541, %v5665
      %v5808 = vadd.f32 %v5542, %v5670
      %v5809 = vadd.f32 %v5543, %v5675
      %v5810 = vadd.f32 %v5544, %v5680
      %v5811 = vadd.f32 %v5545, %v5685
      %v5812 = vadd.f32 %v5546, %v5690
      %v5813 = vadd.f32 %v5547, %v5695
      %v5814 = vadd.f32 %v5548, %v5700
      %v5815 = vadd.f32 %v5549, %v5705
      %v5816 = vadd.f32 %v5550, %v5710
      %v5817 = vadd.f32 %v5551, %v5715
      %v5818 = vadd.f32 %v5552, %v5720
      %v5819 = vadd.f32 %v5553, %v5725
      %v5820 = vadd.f32 %v5554, %v5730
      %v5821 = vadd.f32 %v5555, %v5735
      %v5822 = vadd.f32 %v5556, %v5740
      %v5823 = vadd.f32 %v5557, %v5745
      %v5824 = vadd.f32 %v5558, %v5750
      %v5825 = vadd.f32 %v5559, %v5755
      %v5826 = vadd.f32 %v5560, %v5760
      %v5827 = vadd.f32 %v5561, %v5765
      %v5828 = vadd.f32 %v5562, %v5770
      %v5829 = vadd.f32 %v5563, %v5775
      %v5830 = vadd.f32 %v5564, %v5780
      %v5831 = vadd.f32 %v5565, %v5785
      %v5832 = vadd.f32 %v5566, %v5790
      %v5833 = vadd.f32 %v5567, %v5795
      %v5834 = vadd.f32 %v5568, %v5800
      %s5835 = scalar_lea.vmem %s3, 32
      %v5836 = vld [vmem:[%s5835] sm:$0xf]
      %v5837 = vsel %vm257, %v5240, 0
      %v5839 = vsel %vm257, %v5242, 0
      %v5842 = vsel %vm499, %v5836, 0
      %5844 = vmatprep.subr.mxu0 0.0
      %5845 = vmatpush1.msra.mxu0 %v5842
      %5846 = vmatprep.subr.mxu0 0.0
      %5847 = vmatpush1.msra.mxu0 0.0
      %5848 = vmatprep.subr.mxu0 0.0
      %5849 = vmatpush1.msra.mxu0 0.0
      %5850 = vmatprep.subr.mxu0 0.0
      %5851 = vmatpush1.msra.mxu0 0.0
      %5852 = vmatprep.subr.mxu0 0.0
      %5853 = vmatpush1.msra.mxu0 0.0
      %5854 = vmatprep.subr.mxu0 0.0
      %5855 = vmatpush1.msra.mxu0 0.0
      %5856 = vmatprep.subr.mxu0 0.0
      %5857 = vmatpush1.msra.mxu0 0.0
      %5858 = vmatprep.subr.mxu0 0.0
      %5859 = vmatpush1.msra.mxu0 0.0
      %5860 = vmatprep.subr.mxu0 0.0
      %5861 = vmatpush1.msra.mxu0 0.0
      %5862 = vmatprep.subr.mxu0 0.0
      %5863 = vmatpush1.msra.mxu0 0.0
      %5864 = vmatprep.subr.mxu0 0.0
      %5865 = vmatpush1.msra.mxu0 0.0
      %5866 = vmatprep.subr.mxu0 0.0
      %5867 = vmatpush1.msra.mxu0 0.0
      %5868 = vmatprep.subr.mxu0 0.0
      %5869 = vmatpush1.msra.mxu0 0.0
      %5870 = vmatprep.subr.mxu0 0.0
      %5871 = vmatpush1.msra.mxu0 0.0
      %5872 = vmatprep.subr.mxu0 0.0
      %5873 = vmatpush1.msra.mxu0 0.0
      %5874 = vmatprep.subr.mxu0 0.0
      %5875 = vmatpush1.msra.mxu0 0.0
      %5876 = vmatprep.subr.mxu0 0.0
      %5877 = vmatpush1.msra.mxu0 0.0
      %5878 = vmatprep.subr.mxu0 0.0
      %5879 = vmatpush1.msra.mxu0 0.0
      %5880 = vmatprep.subr.mxu0 0.0
      %5881 = vmatpush1.msra.mxu0 0.0
      %5882 = vmatprep.subr.mxu0 0.0
      %5883 = vmatpush1.msra.mxu0 0.0
      %5884 = vmatprep.subr.mxu0 0.0
      %5885 = vmatpush1.msra.mxu0 0.0
      %5886 = vmatprep.subr.mxu0 0.0
      %5887 = vmatpush1.msra.mxu0 0.0
      %5888 = vmatprep.subr.mxu0 0.0
      %5889 = vmatpush1.msra.mxu0 0.0
      %5890 = vmatprep.subr.mxu0 0.0
      %5891 = vmatpush1.msra.mxu0 0.0
      %5892 = vmatprep.subr.mxu0 0.0
      %5893 = vmatpush1.msra.mxu0 0.0
      %5894 = vmatprep.subr.mxu0 0.0
      %5895 = vmatpush1.msra.mxu0 0.0
      %5896 = vmatprep.subr.mxu0 0.0
      %5897 = vmatpush1.msra.mxu0 0.0
      %5898 = vmatprep.subr.mxu0 0.0
      %5899 = vmatpush1.msra.mxu0 0.0
      %5900 = vmatprep.subr.mxu0 0.0
      %5901 = vmatpush1.msra.mxu0 0.0
      %5902 = vmatprep.subr.mxu0 0.0
      %5903 = vmatpush1.msra.mxu0 0.0
      %5904 = vmatprep.subr.mxu0 0.0
      %5905 = vmatpush1.msra.mxu0 0.0
      %5906 = vmatprep.subr.mxu0 0.0
      %5907 = vmatpush1.msra.mxu0 0.0
      %5908 = vmatprep.mubr.f32.mxu0 0.0
      %5909 = vmatmul.mubr.f32.gmra.mrb[0].mxu0 %v5253
      %v5910 = vpop.f32.mrb[0].mxu0
      %v5911 = vadd.f32 0.0, %v5910
      %v5912 = vpop.f32.mrb[0].mxu0
      %5913 = vmatprep.mubr.f32.mxu0 0.0
      %5914 = vmatmul.mubr.f32.gmra.mrb[0].mxu0 %v5255
      %v5915 = vpop.f32.mrb[0].mxu0
      %v5916 = vadd.f32 0.0, %v5915
      %v5917 = vpop.f32.mrb[0].mxu0
      %5918 = vmatprep.mubr.f32.mxu0 0.0
      %5919 = vmatmul.mubr.f32.gmra.mrb[0].mxu0 %v5257
      %v5920 = vpop.f32.mrb[0].mxu0
      %v5921 = vadd.f32 0.0, %v5920
      %v5922 = vpop.f32.mrb[0].mxu0
      %5923 = vmatprep.mubr.f32.mxu0 0.0
      %5924 = vmatmul.mubr.f32.gmra.mrb[0].mxu0 %v5259
      %v5925 = vpop.f32.mrb[0].mxu0
      %v5926 = vadd.f32 0.0, %v5925
      %v5927 = vpop.f32.mrb[0].mxu0
      %5928 = vmatprep.mubr.f32.mxu0 0.0
      %5929 = vmatmul.mubr.f32.gmra.mrb[0].mxu0 %v5261
      %v5930 = vpop.f32.mrb[0].mxu0
      %v5931 = vadd.f32 0.0, %v5930
      %v5932 = vpop.f32.mrb[0].mxu0
      %5933 = vmatprep.mubr.f32.mxu0 0.0
      %5934 = vmatmul.mubr.f32.gmra.mrb[0].mxu0 %v5263
      %v5935 = vpop.f32.mrb[0].mxu0
      %v5936 = vadd.f32 0.0, %v5935
      %v5937 = vpop.f32.mrb[0].mxu0
      %5938 = vmatprep.mubr.f32.mxu0 0.0
      %5939 = vmatmul.mubr.f32.gmra.mrb[0].mxu0 %v5265
      %v5940 = vpop.f32.mrb[0].mxu0
      %v5941 = vadd.f32 0.0, %v5940
      %v5942 = vpop.f32.mrb[0].mxu0
      %5943 = vmatprep.mubr.f32.mxu0 0.0
      %5944 = vmatmul.mubr.f32.gmra.mrb[0].mxu0 %v5267
      %v5945 = vpop.f32.mrb[0].mxu0
      %v5946 = vadd.f32 0.0, %v5945
      %v5947 = vpop.f32.mrb[0].mxu0
      %5948 = vmatprep.mubr.f32.mxu0 0.0
      %5949 = vmatmul.mubr.f32.gmra.mrb[0].mxu0 %v5269
      %v5950 = vpop.f32.mrb[0].mxu0
      %v5951 = vadd.f32 0.0, %v5950
      %v5952 = vpop.f32.mrb[0].mxu0
      %5953 = vmatprep.mubr.f32.mxu0 0.0
      %5954 = vmatmul.mubr.f32.gmra.mrb[0].mxu0 %v5271
      %v5955 = vpop.f32.mrb[0].mxu0
      %v5956 = vadd.f32 0.0, %v5955
      %v5957 = vpop.f32.mrb[0].mxu0
      %5958 = vmatprep.mubr.f32.mxu0 0.0
      %5959 = vmatmul.mubr.f32.gmra.mrb[0].mxu0 %v5273
      %v5960 = vpop.f32.mrb[0].mxu0
      %v5961 = vadd.f32 0.0, %v5960
      %v5962 = vpop.f32.mrb[0].mxu0
      %5963 = vmatprep.mubr.f32.mxu0 0.0
      %5964 = vmatmul.mubr.f32.gmra.mrb[0].mxu0 %v5275
      %v5965 = vpop.f32.mrb[0].mxu0
      %v5966 = vadd.f32 0.0, %v5965
      %v5967 = vpop.f32.mrb[0].mxu0
      %5968 = vmatprep.mubr.f32.mxu0 0.0
      %5969 = vmatmul.mubr.f32.gmra.mrb[0].mxu0 %v5277
      %v5970 = vpop.f32.mrb[0].mxu0
      %v5971 = vadd.f32 0.0, %v5970
      %v5972 = vpop.f32.mrb[0].mxu0
      %5973 = vmatprep.mubr.f32.mxu0 0.0
      %5974 = vmatmul.mubr.f32.gmra.mrb[0].mxu0 %v5279
      %v5975 = vpop.f32.mrb[0].mxu0
      %v5976 = vadd.f32 0.0, %v5975
      %v5977 = vpop.f32.mrb[0].mxu0
      %5978 = vmatprep.mubr.f32.mxu0 0.0
      %5979 = vmatmul.mubr.f32.gmra.mrb[0].mxu0 %v5281
      %v5980 = vpop.f32.mrb[0].mxu0
      %v5981 = vadd.f32 0.0, %v5980
      %v5982 = vpop.f32.mrb[0].mxu0
      %5983 = vmatprep.mubr.f32.mxu0 0.0
      %5984 = vmatmul.mubr.f32.gmra.mrb[0].mxu0 %v5283
      %v5985 = vpop.f32.mrb[0].mxu0
      %v5986 = vadd.f32 0.0, %v5985
      %v5987 = vpop.f32.mrb[0].mxu0
      %5988 = vmatprep.mubr.f32.mxu0 0.0
      %5989 = vmatmul.mubr.f32.gmra.mrb[0].mxu0 %v5285
      %v5990 = vpop.f32.mrb[0].mxu0
      %v5991 = vadd.f32 0.0, %v5990
      %v5992 = vpop.f32.mrb[0].mxu0
      %5993 = vmatprep.mubr.f32.mxu0 0.0
      %5994 = vmatmul.mubr.f32.gmra.mrb[0].mxu0 %v5287
      %v5995 = vpop.f32.mrb[0].mxu0
      %v5996 = vadd.f32 0.0, %v5995
      %v5997 = vpop.f32.mrb[0].mxu0
      %5998 = vmatprep.mubr.f32.mxu0 0.0
      %5999 = vmatmul.mubr.f32.gmra.mrb[0].mxu0 %v5289
      %v6000 = vpop.f32.mrb[0].mxu0
      %v6001 = vadd.f32 0.0, %v6000
      %v6002 = vpop.f32.mrb[0].mxu0
      %6003 = vmatprep.mubr.f32.mxu0 0.0
      %6004 = vmatmul.mubr.f32.gmra.mrb[0].mxu0 %v5291
      %v6005 = vpop.f32.mrb[0].mxu0
      %v6006 = vadd.f32 0.0, %v6005
      %v6007 = vpop.f32.mrb[0].mxu0
      %6008 = vmatprep.mubr.f32.mxu0 0.0
      %6009 = vmatmul.mubr.f32.gmra.mrb[0].mxu0 %v5293
      %v6010 = vpop.f32.mrb[0].mxu0
      %v6011 = vadd.f32 0.0, %v6010
      %v6012 = vpop.f32.mrb[0].mxu0
      %6013 = vmatprep.mubr.f32.mxu0 0.0
      %6014 = vmatmul.mubr.f32.gmra.mrb[0].mxu0 %v5295
      %v6015 = vpop.f32.mrb[0].mxu0
      %v6016 = vadd.f32 0.0, %v6015
      %v6017 = vpop.f32.mrb[0].mxu0
      %6018 = vmatprep.mubr.f32.mxu0 0.0
      %6019 = vmatmul.mubr.f32.gmra.mrb[0].mxu0 %v5297
      %v6020 = vpop.f32.mrb[0].mxu0
      %v6021 = vadd.f32 0.0, %v6020
      %v6022 = vpop.f32.mrb[0].mxu0
      %6023 = vmatprep.mubr.f32.mxu0 0.0
      %6024 = vmatmul.mubr.f32.gmra.mrb[0].mxu0 %v5299
      %v6025 = vpop.f32.mrb[0].mxu0
      %v6026 = vadd.f32 0.0, %v6025
      %v6027 = vpop.f32.mrb[0].mxu0
      %6028 = vmatprep.mubr.f32.mxu0 0.0
      %6029 = vmatmul.mubr.f32.gmra.mrb[0].mxu0 %v5301
      %v6030 = vpop.f32.mrb[0].mxu0
      %v6031 = vadd.f32 0.0, %v6030
      %v6032 = vpop.f32.mrb[0].mxu0
      %6033 = vmatprep.mubr.f32.mxu0 0.0
      %6034 = vmatmul.mubr.f32.gmra.mrb[0].mxu0 %v5303
      %v6035 = vpop.f32.mrb[0].mxu0
      %v6036 = vadd.f32 0.0, %v6035
      %v6037 = vpop.f32.mrb[0].mxu0
      %6038 = vmatprep.mubr.f32.mxu0 0.0
      %6039 = vmatmul.mubr.f32.gmra.mrb[0].mxu0 %v5305
      %v6040 = vpop.f32.mrb[0].mxu0
      %v6041 = vadd.f32 0.0, %v6040
      %v6042 = vpop.f32.mrb[0].mxu0
      %6043 = vmatprep.mubr.f32.mxu0 0.0
      %6044 = vmatmul.mubr.f32.gmra.mrb[0].mxu0 %v5307
      %v6045 = vpop.f32.mrb[0].mxu0
      %v6046 = vadd.f32 0.0, %v6045
      %v6047 = vpop.f32.mrb[0].mxu0
      %6048 = vmatprep.mubr.f32.mxu0 0.0
      %6049 = vmatmul.mubr.f32.gmra.mrb[0].mxu0 %v5571
      %v6050 = vpop.f32.mrb[0].mxu0
      %v6051 = vadd.f32 0.0, %v6050
      %v6052 = vpop.f32.mrb[0].mxu0
      %6053 = vmatprep.mubr.f32.mxu0 0.0
      %6054 = vmatmul.mubr.f32.gmra.mrb[0].mxu0 %v5573
      %v6055 = vpop.f32.mrb[0].mxu0
      %v6056 = vadd.f32 0.0, %v6055
      %v6057 = vpop.f32.mrb[0].mxu0
      %6058 = vmatprep.mubr.f32.mxu0 0.0
      %6059 = vmatmul.mubr.f32.gmra.mrb[0].mxu0 %v5837
      %v6060 = vpop.f32.mrb[0].mxu0
      %v6061 = vadd.f32 0.0, %v6060
      %v6062 = vpop.f32.mrb[0].mxu0
      %6063 = vmatprep.mubr.f32.mxu0 0.0
      %6064 = vmatmul.mubr.f32.gmra.mrb[0].mxu0 %v5839
      %v6065 = vpop.f32.mrb[0].mxu0
      %v6066 = vadd.f32 0.0, %v6065
      %v6067 = vpop.f32.mrb[0].mxu0
      %6068 = vdwg.mxu0
      %v6069 = vadd.f32 %v5803, %v5911
      %v6070 = vadd.f32 %v5804, %v5916
      %v6071 = vadd.f32 %v5805, %v5921
      %v6072 = vadd.f32 %v5806, %v5926
      %v6073 = vadd.f32 %v5807, %v5931
      %v6074 = vadd.f32 %v5808, %v5936
      %v6075 = vadd.f32 %v5809, %v5941
      %v6076 = vadd.f32 %v5810, %v5946
      %v6077 = vadd.f32 %v5811, %v5951
      %v6078 = vadd.f32 %v5812, %v5956
      %v6079 = vadd.f32 %v5813, %v5961
      %v6080 = vadd.f32 %v5814, %v5966
      %v6081 = vadd.f32 %v5815, %v5971
      %v6082 = vadd.f32 %v5816, %v5976
      %v6083 = vadd.f32 %v5817, %v5981
      %v6084 = vadd.f32 %v5818, %v5986
      %v6085 = vadd.f32 %v5819, %v5991
      %v6086 = vadd.f32 %v5820, %v5996
      %v6087 = vadd.f32 %v5821, %v6001
      %v6088 = vadd.f32 %v5822, %v6006
      %v6089 = vadd.f32 %v5823, %v6011
      %v6090 = vadd.f32 %v5824, %v6016
      %v6091 = vadd.f32 %v5825, %v6021
      %v6092 = vadd.f32 %v5826, %v6026
      %v6093 = vadd.f32 %v5827, %v6031
      %v6094 = vadd.f32 %v5828, %v6036
      %v6095 = vadd.f32 %v5829, %v6041
      %v6096 = vadd.f32 %v5830, %v6046
      %v6097 = vadd.f32 %v5831, %v6051
      %v6098 = vadd.f32 %v5832, %v6056
      %v6099 = vadd.f32 %v5833, %v6061
      %v6100 = vadd.f32 %v5834, %v6066
      %v6101 = vld [vmem:[%s4] sm:$0x1]
      %v6103 = vlaneseq
      %v6104 = vshrl.u32 %v6103, 7
      %v6105 = vsub.s32 0, %v6104
      %v6106 = vrot.slane %v6101, %v6105
      %v6108 = vadd.f32 %v6069, %v6106
      %v6109 = vadd.f32 %v6070, %v6106
      %v6110 = vadd.f32 %v6071, %v6106
      %v6111 = vadd.f32 %v6072, %v6106
      %v6112 = vadd.f32 %v6073, %v6106
      %v6113 = vadd.f32 %v6074, %v6106
      %v6114 = vadd.f32 %v6075, %v6106
      %v6115 = vadd.f32 %v6076, %v6106
      %v6116 = vadd.f32 %v6077, %v6106
      %v6117 = vadd.f32 %v6078, %v6106
      %v6118 = vadd.f32 %v6079, %v6106
      %v6119 = vadd.f32 %v6080, %v6106
      %v6120 = vadd.f32 %v6081, %v6106
      %v6121 = vadd.f32 %v6082, %v6106
      %v6122 = vadd.f32 %v6083, %v6106
      %v6123 = vadd.f32 %v6084, %v6106
      %v6124 = vadd.f32 %v6085, %v6106
      %v6125 = vadd.f32 %v6086, %v6106
      %v6126 = vadd.f32 %v6087, %v6106
      %v6127 = vadd.f32 %v6088, %v6106
      %v6128 = vadd.f32 %v6089, %v6106
      %v6129 = vadd.f32 %v6090, %v6106
      %v6130 = vadd.f32 %v6091, %v6106
      %v6131 = vadd.f32 %v6092, %v6106
      %v6132 = vadd.f32 %v6093, %v6106
      %v6133 = vadd.f32 %v6094, %v6106
      %v6134 = vadd.f32 %v6095, %v6106
      %v6135 = vadd.f32 %v6096, %v6106
      %v6136 = vadd.f32 %v6097, %v6106
      %v6137 = vadd.f32 %v6098, %v6106
      %v6138 = vadd.f32 %v6099, %v6106
      %v6139 = vadd.f32 %v6100, %v6106
      %v6140 = vadd.f32 %v6108, %v225
      %v6141 = vadd.f32 %v6109, %v226
      %v6142 = vadd.f32 %v6110, %v227
      %v6143 = vadd.f32 %v6111, %v228
      %v6144 = vadd.f32 %v6112, %v229
      %v6145 = vadd.f32 %v6113, %v230
      %v6146 = vadd.f32 %v6114, %v231
      %v6147 = vadd.f32 %v6115, %v232
      %v6148 = vadd.f32 %v6116, %v233
      %v6149 = vadd.f32 %v6117, %v234
      %v6150 = vadd.f32 %v6118, %v235
      %v6151 = vadd.f32 %v6119, %v236
      %v6152 = vadd.f32 %v6120, %v237
      %v6153 = vadd.f32 %v6121, %v238
      %v6154 = vadd.f32 %v6122, %v239
      %v6155 = vadd.f32 %v6123, %v240
      %v6156 = vadd.f32 %v6124, %v241
      %v6157 = vadd.f32 %v6125, %v242
      %v6158 = vadd.f32 %v6126, %v243
      %v6159 = vadd.f32 %v6127, %v244
      %v6160 = vadd.f32 %v6128, %v245
      %v6161 = vadd.f32 %v6129, %v246
      %v6162 = vadd.f32 %v6130, %v247
      %v6163 = vadd.f32 %v6131, %v248
      %v6164 = vadd.f32 %v6132, %v249
      %v6165 = vadd.f32 %v6133, %v250
      %v6166 = vadd.f32 %v6134, %v251
      %v6167 = vadd.f32 %v6135, %v252
      %v6168 = vadd.f32 %v6136, %v253
      %v6169 = vadd.f32 %v6137, %v254
      %v6170 = vadd.f32 %v6138, %v255
      %v6171 = vadd.f32 %v6139, %v256
      %v6172 = vmax.f32 %v6140, 0.0
      %v6173 = vmax.f32 %v6141, 0.0
      %v6174 = vmax.f32 %v6142, 0.0
      %v6175 = vmax.f32 %v6143, 0.0
      %v6176 = vmax.f32 %v6144, 0.0
      %v6177 = vmax.f32 %v6145, 0.0
      %v6178 = vmax.f32 %v6146, 0.0
      %v6179 = vmax.f32 %v6147, 0.0
      %v6180 = vmax.f32 %v6148, 0.0
      %v6181 = vmax.f32 %v6149, 0.0
      %v6182 = vmax.f32 %v6150, 0.0
      %v6183 = vmax.f32 %v6151, 0.0
      %v6184 = vmax.f32 %v6152, 0.0
      %v6185 = vmax.f32 %v6153, 0.0
      %v6186 = vmax.f32 %v6154, 0.0
      %v6187 = vmax.f32 %v6155, 0.0
      %v6188 = vmax.f32 %v6156, 0.0
      %v6189 = vmax.f32 %v6157, 0.0
      %v6190 = vmax.f32 %v6158, 0.0
      %v6191 = vmax.f32 %v6159, 0.0
      %v6192 = vmax.f32 %v6160, 0.0
      %v6193 = vmax.f32 %v6161, 0.0
      %v6194 = vmax.f32 %v6162, 0.0
      %v6195 = vmax.f32 %v6163, 0.0
      %v6196 = vmax.f32 %v6164, 0.0
      %v6197 = vmax.f32 %v6165, 0.0
      %v6198 = vmax.f32 %v6166, 0.0
      %v6199 = vmax.f32 %v6167, 0.0
      %v6200 = vmax.f32 %v6168, 0.0
      %v6201 = vmax.f32 %v6169, 0.0
      %v6202 = vmax.f32 %v6170, 0.0
      %v6203 = vmax.f32 %v6171, 0.0
      %6204 = vst.msk [vmem:[%s224] sm:$0xff] %vm257, %v6172
      %6205 = vst.msk [vmem:[%s224 + $0x8] sm:$0xff] %vm257, %v6173
      %6206 = vst.msk [vmem:[%s224 + $0x10] sm:$0xff] %vm257, %v6174
      %6207 = vst.msk [vmem:[%s224 + $0x18] sm:$0xff] %vm257, %v6175
      %6208 = vst.msk [vmem:[%s224 + $0x20] sm:$0xff] %vm257, %v6176
      %6209 = vst.msk [vmem:[%s224 + $0x28] sm:$0xff] %vm257, %v6177
      %6210 = vst.msk [vmem:[%s224 + $0x30] sm:$0xff] %vm257, %v6178
      %6211 = vst.msk [vmem:[%s224 + $0x38] sm:$0xff] %vm257, %v6179
      %6212 = vst.msk [vmem:[%s224 + $0x40] sm:$0xff] %vm257, %v6180
      %6213 = vst.msk [vmem:[%s224 + $0x48] sm:$0xff] %vm257, %v6181
      %6214 = vst.msk [vmem:[%s224 + $0x50] sm:$0xff] %vm257, %v6182
      %6215 = vst.msk [vmem:[%s224 + $0x58] sm:$0xff] %vm257, %v6183
      %6216 = vst.msk [vmem:[%s224 + $0x60] sm:$0xff] %vm257, %v6184
      %6217 = vst.msk [vmem:[%s224 + $0x68] sm:$0xff] %vm257, %v6185
      %6218 = vst.msk [vmem:[%s224 + $0x70] sm:$0xff] %vm257, %v6186
      %6219 = vst.msk [vmem:[%s224 + $0x78] sm:$0xff] %vm257, %v6187
      %6220 = vst.msk [vmem:[%s224 + $0x80] sm:$0xff] %vm257, %v6188
      %6221 = vst.msk [vmem:[%s224 + $0x88] sm:$0xff] %vm257, %v6189
      %6222 = vst.msk [vmem:[%s224 + $0x90] sm:$0xff] %vm257, %v6190
      %6223 = vst.msk [vmem:[%s224 + $0x98] sm:$0xff] %vm257, %v6191
      %6224 = vst.msk [vmem:[%s224 + $0xa0] sm:$0xff] %vm257, %v6192
      %6225 = vst.msk [vmem:[%s224 + $0xa8] sm:$0xff] %vm257, %v6193
      %6226 = vst.msk [vmem:[%s224 + $0xb0] sm:$0xff] %vm257, %v6194
      %6227 = vst.msk [vmem:[%s224 + $0xb8] sm:$0xff] %vm257, %v6195
      %6228 = vst.msk [vmem:[%s224 + $0xc0] sm:$0xff] %vm257, %v6196
      %6229 = vst.msk [vmem:[%s224 + $0xc8] sm:$0xff] %vm257, %v6197
      %6230 = vst.msk [vmem:[%s224 + $0xd0] sm:$0xff] %vm257, %v6198
      %6231 = vst.msk [vmem:[%s224 + $0xd8] sm:$0xff] %vm257, %v6199
      %6232 = vst.msk [vmem:[%s224 + $0xe0] sm:$0xff] %vm257, %v6200
      %6233 = vst.msk [vmem:[%s224 + $0xe8] sm:$0xff] %vm257, %v6201
      %6234 = vst.msk [vmem:[%s224 + $0xf0] sm:$0xff] %vm257, %v6202
      %6235 = vst.msk [vmem:[%s224 + $0xf8] sm:$0xff] %vm257, %v6203
      %p6236 = scmp.lt.s32.totalorder %s16, 1
      %s6237 = scalar_select %p6236, %s16, 1
      %s6238 = smul.addr %s6237, 32
      %s6239 = smul.addr %s6238, 8
      %s6240 = scalar_lea.vmem %s5, %s6239
      // Predicated region
      $region41: #{basic_block_forward.1} parent=39 // pred_check
        %p6241 = pneg %p144
      $region42: #{basic_block_forward.1} parent=39 // pred_check_branch
        %6243 = sbr.rel (%p6241) target = $region44
      $region43: #{basic_block_forward.1} parent=39 // pred_region
        _
      $region44: #{basic_block_forward.1} parent=39 // pred_fallthru
        _
    $region40: #{basic_block_forward.1} parent=5 // pred_fallthru
      _
    %p6244 = scmp.le.s32.totalorder 2, %s11
    // Predicated region
    $region45: #{basic_block_forward.1} parent=5 // pred_check
      %p6245 = pneg %p6244
    $region46: #{basic_block_forward.1} parent=5 // pred_check_branch
      %6247 = sbr.rel (%p6245) target = $region48
    $region47: #{basic_block_forward.1} parent=5 // pred_region
      %s6248 = ssub.s32 %s11, 2
      // Predicated region
      $region49: #{basic_block_forward.1} parent=47 // pred_check
        %p6249 = pneg %p150
      $region50: #{basic_block_forward.1} parent=47 // pred_check_branch
        %6251 = sbr.rel (%p6249) target = $region52
      $region51: #{basic_block_forward.1} parent=47 // pred_region
        %p6252 = scmp.lt.s32.totalorder %s17, 1
        %s6253 = scalar_select %p6252, %s17, 1
        %s6254 = smul.addr %s6253, 32
        %s6255 = smul.addr %s6254, 8
        %s6256 = scalar_lea.vmem %s5, %s6255
      $region52: #{basic_block_forward.1} parent=47 // pred_fallthru
        _
    $region48: #{basic_block_forward.1} parent=5 // pred_fallthru
      _
  $region6: #{basic_block_forward.1} parent=0 // loop_footer
    %s15 = sadd.s32 1, %s11
  $region7: #{basic_block_forward.1} parent=0 // loop_footer_branch
    %10 = sbr.rel target = $region3
  $region8: #{basic_block_forward.1} parent=0 // loop_exit
    _

</llo_original>
